<compile_context>
chip_gen: v6e
topology: v6e:2x2x1
jax: 0.10.0
libtpu: 0.0.40
codegen_flags: <defaults>
</compile_context>

<pallas_src>
import functools

import numpy as np
import jax
import jax.numpy as jnp
from jax.experimental import pallas as pl
from jax.experimental.pallas import tpu as pltpu

# ------------------------------- configuration -------------------------------
B, C, H, W = 2, 4, 16, 16          # images (B, C, H, W) in PyTorch NCHW terms
HIDDEN = 32                        # unet hidden channels
TEMB_DIM = 32                      # sinusoidal time-embedding dim
NUM_CLASSES = 10
T_TRAIN = 1000
NOISE_LEVEL = 100
STEPS = 10
STACK = 1
CLIP = False                       # DefenseDiff(clip=False) default

NPIX = B * H * W                   # 512: batch folded into the spatial/lane axis

# -------------------- DDPM scheduler constants (host, static) ----------------
_num_inference_steps = T_TRAIN // (NOISE_LEVEL // STEPS)               # 100
_step_ratio = T_TRAIN // _num_inference_steps                          # 10
_timesteps = (np.arange(0, _num_inference_steps) * _step_ratio).round()[::-1].astype(np.int64)
TAIL_TIMESTEPS = _timesteps[-STEPS:]                                   # [90, 80, ..., 0]

_betas = np.linspace(1e-4, 0.02, T_TRAIN, dtype=np.float64)
_acp = np.cumprod(1.0 - _betas)                                        # alphas_cumprod

SQRT_ACP_NL = float(np.sqrt(_acp[NOISE_LEVEL]))                        # add_noise @ t=noise_level
SQRT_1M_ACP_NL = float(np.sqrt(1.0 - _acp[NOISE_LEVEL]))


def _ddpm_step_coeffs(t):
    """Static per-timestep constants of DDPMScheduler.step (epsilon prediction)."""
    prev_t = t - _step_ratio
    a_t = _acp[t]
    a_prev = _acp[prev_t] if prev_t >= 0 else 1.0
    beta_prod = 1.0 - a_t
    beta_prod_prev = 1.0 - a_prev
    cur_a = a_t / a_prev
    cur_b = 1.0 - cur_a
    po = np.sqrt(a_prev) * cur_b / beta_prod          # pred_x0 coefficient
    cs = np.sqrt(cur_a) * beta_prod_prev / beta_prod  # current-sample coefficient
    var = max((1.0 - a_prev) / (1.0 - a_t) * cur_b, 1e-20)
    std = np.sqrt(var) if t > 0 else 0.0
    # [1/sqrt(acp_t), sqrt(1-acp_t), po, cs, std]
    return np.array([1.0 / np.sqrt(a_t), np.sqrt(beta_prod), po, cs, std], np.float32)


STEP_COEFFS = np.stack([_ddpm_step_coeffs(int(t)) for t in TAIL_TIMESTEPS])   # (STEPS, 5)


def _sin_embedding(t):
    half = TEMB_DIM // 2
    freqs = np.exp(-np.log(10000.0) * np.arange(half) / half)
    ang = float(t) * freqs
    return np.concatenate([np.sin(ang), np.cos(ang)]).astype(np.float32)


SIN_TABLE = np.stack([_sin_embedding(int(t)) for t in TAIL_TIMESTEPS])        # (STEPS, TEMB_DIM)

# 3x3 tap offsets (tap = (dy+1)*3 + (dx+1)) and validity masks in the flat
# (b*H*W + h*W + w) lane index.  A mask zeroes neighbours that fall outside
# their own image (spatial edge, or another batch element after folding).
TAP_OFFSETS = [(dy, dx) for dy in (-1, 0, 1) for dx in (-1, 0, 1)]


def _make_tap_masks():
    hh, ww = np.meshgrid(np.arange(H), np.arange(W), indexing="ij")
    masks = np.zeros((9, NPIX), np.float32)
    for tap, (dy, dx) in enumerate(TAP_OFFSETS):
        valid = ((hh + dy >= 0) & (hh + dy < H) &
                 (ww + dx >= 0) & (ww + dx < W)).astype(np.float32).reshape(-1)
        masks[tap] = np.tile(valid, B)                 # same pattern for every batch image
    return masks


TAP_MASKS = _make_tap_masks()


# =============================== Pallas kernel ================================

def _conv3x3(x, w_ref, mask_ref):
    """3x3 'same' conv in the lane-dense (Cin, B*H*W) activation layout.

    w_ref   : (9, Cout, Cin) resident VMEM weights, one tap per leading index.
    mask_ref: (9, 1, NPIX) resident tap-validity masks.
    Each tap is ONE small MXU matmul on a pltpu.roll-shifted, mask-zeroed copy
    of x; rolls never leak wrong data into unmasked positions because any
    in-bounds (h+dy, w+dx) neighbour stays inside its own image's lane range.
    """
    acc = None
    for tap, (dy, dx) in enumerate(TAP_OFFSETS):
        off = dy * W + dx
        if off == 0:
            xt = x                                                  # centre tap: mask all-ones
        else:
            xt = pltpu.roll(x, (-off) % NPIX, axis=1) * mask_ref[tap]
        contrib = jnp.dot(w_ref[tap], xt, preferred_element_type=jnp.float32)
        acc = contrib if acc is None else acc + contrib
    return acc


def _fused_kernel(coeff_ref, x0_ref, noise0_ref, snoise_ref, sin_ref,
                  wt_ref, bt_ref, w1_ref, b1_ref, w2_ref, b2_ref, mask_ref,
                  *rest, apply_scaler, apply_inv_scaler, fuse_classifier, final_clip):
    """One DDPM denoising step per grid iteration; all state stays in VMEM."""
    if fuse_classifier:
        wcl_ref, bcf_ref, out_ref, prev_ref = rest
    else:
        out_ref, prev_ref = rest

    step = pl.program_id(0)

    # ---- step 0: fuse scaler (2x - 1) into scheduler.add_noise ---------------
    @pl.when(step == 0)
    def _init():
        x = x0_ref[...]
        n = noise0_ref[...]
        if apply_scaler:   # sqrt(acp)*(2x - 1) + sqrt(1 - acp)*noise
            prev_ref[...] = (2.0 * SQRT_ACP_NL) * x + SQRT_1M_ACP_NL * n - SQRT_ACP_NL
        else:              # sqrt(acp)*x + sqrt(1 - acp)*noise
            prev_ref[...] = SQRT_ACP_NL * x + SQRT_1M_ACP_NL * n

    prev = prev_ref[...]                                   # (C, NPIX), VMEM resident

    # ---- time-embedding MLP for this step's (static) timestep ----------------
    temb = jnp.dot(wt_ref[...], sin_ref[0],
                   preferred_element_type=jnp.float32) + bt_ref[...]   # (HIDDEN, 1)
    temb = temb * jax.nn.sigmoid(temb)                                  # SiLU

    # ---- UNet: conv3x3 -> +bias +temb -> SiLU -> conv3x3 -> +bias (epsilon) --
    h = _conv3x3(prev, w1_ref, mask_ref) + (b1_ref[...] + temb)
    h = h * jax.nn.sigmoid(h)                                           # SiLU
    eps = _conv3x3(h, w2_ref, mask_ref) + b2_ref[...]

    # ---- fused DDPM scheduler.step (scalars from resident SMEM table) --------
    base = step * 5
    inv_sqrt_acp = coeff_ref[base + 0]
    sqrt_bprod = coeff_ref[base + 1]
    po = coeff_ref[base + 2]
    cs = coeff_ref[base + 3]
    std = coeff_ref[base + 4]
    pred_x0 = jnp.clip((prev - sqrt_bprod * eps) * inv_sqrt_acp, -1.0, 1.0)
    new_prev = po * pred_x0 + cs * prev + std * snoise_ref[0]
    prev_ref[...] = new_prev

    # ---- last step: fuse inv_scaler (+clamp) and the classifier --------------
    @pl.when(step == STEPS - 1)
    def _finalize():
        res = new_prev
        if apply_inv_scaler:
            res = 0.5 * res + 0.5
            if final_clip:
                res = jnp.clip(res, 0.0, 1.0)
        if fuse_classifier:
            logits = bcf_ref[...]                          # (1, B*NUM_CLASSES)
            for c in range(C):                             # per-channel MXU accumulation
                logits = logits + jnp.dot(res[c:c + 1, :], wcl_ref[c],
                                          preferred_element_type=jnp.float32)
            out_ref[...] = logits
        else:
            out_ref[...] = res


def fused_defense(coeffs, x0, noise0, step_noises, sin_cols, wt_t, bt_col,
                  w1, b1, w2, b2, masks, wcl, bc_flat, *,
                  apply_scaler, apply_inv_scaler, fuse_classifier, final_clip):
    kern = functools.partial(_fused_kernel,
                             apply_scaler=apply_scaler,
                             apply_inv_scaler=apply_inv_scaler,
                             fuse_classifier=fuse_classifier,
                             final_clip=final_clip)
    in_specs = [
        pl.BlockSpec(memory_space=pltpu.MemorySpace.SMEM),        # DDPM coeff table (STEPS*5,)
        pl.BlockSpec((C, NPIX), lambda s: (0, 0)),                # input images
        pl.BlockSpec((C, NPIX), lambda s: (0, 0)),                # add_noise noise
        pl.BlockSpec((1, C, NPIX), lambda s: (s, 0, 0)),          # per-step noise (streamed)
        pl.BlockSpec((1, TEMB_DIM, 1), lambda s: (s, 0, 0)),      # per-step sin-embedding column
        pl.BlockSpec((HIDDEN, TEMB_DIM), lambda s: (0, 0)),       # temb MLP weight (transposed)
        pl.BlockSpec((HIDDEN, 1), lambda s: (0, 0)),              # temb MLP bias (column)
        pl.BlockSpec((9, HIDDEN, C), lambda s: (0, 0, 0)),        # conv1 per-tap weights
        pl.BlockSpec((HIDDEN, 1), lambda s: (0, 0)),              # conv1 bias
        pl.BlockSpec((9, C, HIDDEN), lambda s: (0, 0, 0)),        # conv2 per-tap weights
        pl.BlockSpec((C, 1), lambda s: (0, 0)),                   # conv2 bias
        pl.BlockSpec((9, 1, NPIX), lambda s: (0, 0, 0)),          # 3x3 tap validity masks
    ]
    args = [coeffs, x0, noise0, step_noises, sin_cols, wt_t, bt_col,
            w1, b1, w2, b2, masks]
    if fuse_classifier:
        in_specs += [pl.BlockSpec((C, NPIX, B * NUM_CLASSES), lambda s: (0, 0, 0)),
                     pl.BlockSpec((1, B * NUM_CLASSES), lambda s: (0, 0))]
        args += [wcl, bc_flat]
        out_shape = jax.ShapeDtypeStruct((1, B * NUM_CLASSES), jnp.float32)
        out_spec = pl.BlockSpec((1, B * NUM_CLASSES), lambda s: (0, 0))
    else:
        out_shape = jax.ShapeDtypeStruct((C, NPIX), jnp.float32)
        out_spec = pl.BlockSpec((C, NPIX), lambda s: (0, 0))

    return pl.pallas_call(
        kern,
        out_shape=out_shape,
        grid=(STEPS,),
        in_specs=in_specs,
        out_specs=out_spec,
        scratch_shapes=[pltpu.VMEM((C, NPIX), jnp.float32)],      # running sample `prev`
        compiler_params=pltpu.CompilerParams(
            dimension_semantics=("arbitrary",)),                  # steps are sequential
    )(*args)


# ================================ model glue ==================================

def defense_diff_forward(params, images_nchw, init_noise, step_noises):
    # NCHW -> internal lane-dense (channels, B*H*W) layout, done once.
    x_cp = jnp.transpose(images_nchw.astype(jnp.float32), (1, 0, 2, 3)).reshape(C, NPIX)

    coeffs = jnp.asarray(STEP_COEFFS.reshape(-1))                       # (STEPS*5,) f32
    masks = jnp.asarray(TAP_MASKS).reshape(9, 1, NPIX)
    sin_cols = jnp.asarray(SIN_TABLE).reshape(STEPS, TEMB_DIM, 1)

    wt_t = params['wt'].T                                               # (HIDDEN, TEMB_DIM)
    bt_col = params['bt'].reshape(HIDDEN, 1)

    # Classifier weights rearranged for the lane-dense layout (batch block-diag):
    #   wcl[c, b*HW + p, b*K + k] = wc[c*HW + p, k], zero off the batch diagonal.
    wc_r = params['wc'].reshape(C, H * W, NUM_CLASSES)
    wcl = jnp.einsum('cpk,bd->cbpdk', wc_r, jnp.eye(B, dtype=jnp.float32))
    wcl = wcl.reshape(C, NPIX, B * NUM_CLASSES)
    bc_flat = jnp.tile(params['bc'].reshape(1, NUM_CLASSES), (1, B))    # (1, B*K)

    out = x_cp
    for s in range(STACK):
        out = fused_defense(
            coeffs, out, init_noise[s], step_noises[s], sin_cols, wt_t, bt_col,
            params['w1'], params['b1'], params['w2'], params['b2'], masks,
            wcl, bc_flat,
            apply_scaler=(s == 0),                 # self.scaler, fused into add_noise
            apply_inv_scaler=(s == STACK - 1),     # self.inv_scaler, fused into last step
            fuse_classifier=(s == STACK - 1),      # self.classifier, fused into last step
            final_clip=CLIP)
    return out.reshape(B, NUM_CLASSES)


# ============================ NumPy reference (check) =========================

def reference_forward(params, images, init_noise, step_noises):
    """Pure-NumPy float64 NCHW reference of the same forward pass."""
    p = {k: np.asarray(v, np.float64) for k, v in params.items()}
    x = np.asarray(images, np.float64)
    init_n = np.asarray(init_noise, np.float64)
    step_n = np.asarray(step_noises, np.float64)

    def to_nchw(cp):
        return cp.reshape(C, B, H, W).transpose(1, 0, 2, 3)

    def silu(v):
        return v / (1.0 + np.exp(-v))

    def conv3x3(xb, wf, bias):
        cout = wf.shape[1]
        xp = np.pad(xb, ((0, 0), (0, 0), (1, 1), (1, 1)))
        out = np.zeros((B, cout, H, W))
        for tap, (dy, dx) in enumerate(TAP_OFFSETS):
            ky, kx = dy + 1, dx + 1
            out += np.einsum('oc,bchw->bohw', wf[tap], xp[:, :, ky:ky + H, kx:kx + W])
        return out + bias.reshape(1, cout, 1, 1)

    x = 2.0 * x - 1.0                                                  # scaler
    for s in range(STACK):
        prev = SQRT_ACP_NL * x + SQRT_1M_ACP_NL * to_nchw(init_n[s])   # add_noise
        for i, t in enumerate(TAIL_TIMESTEPS):
            temb = silu(_sin_embedding(int(t)).astype(np.float64) @ p['wt'] + p['bt'])
            h = silu(conv3x3(prev, p['w1'], p['b1']) + temb.reshape(1, HIDDEN, 1, 1))
            eps = conv3x3(h, p['w2'], p['b2'])
            c = STEP_COEFFS[i].astype(np.float64)
            pred_x0 = np.clip((prev - c[1] * eps) * c[0], -1.0, 1.0)
            prev = c[2] * pred_x0 + c[3] * prev + c[4] * to_nchw(step_n[s, i])
        x = prev
    x = (x + 1.0) / 2.0                                                # inv_scaler
    if CLIP:
        x = np.clip(x, 0.0, 1.0)
    return x.reshape(B, C * H * W) @ p['wc'] + p['bc']                 # classifier (NCHW flatten)


# =================================== main =====================================

if __name__ == "__main__":
    key = jax.random.PRNGKey(0)
    (k_img, k_w1, k_b1, k_wt, k_bt, k_w2, k_b2,
     k_wc, k_bc, k_n0, k_n1) = jax.random.split(key, 11)

    params = {
        # conv weights stored per-tap: (9, Cout, Cin), tap = (ky*3 + kx)
        'w1': jax.random.normal(k_w1, (9, HIDDEN, C), jnp.float32) * 0.1,
        'b1': jax.random.normal(k_b1, (HIDDEN, 1), jnp.float32) * 0.1,
        'wt': jax.random.normal(k_wt, (TEMB_DIM, HIDDEN), jnp.float32) * 0.1,
        'bt': jax.random.normal(k_bt, (1, HIDDEN), jnp.float32) * 0.1,
        'w2': jax.random.normal(k_w2, (9, C, HIDDEN), jnp.float32) * 0.1,
        'b2': jax.random.normal(k_b2, (C, 1), jnp.float32) * 0.1,
        'wc': jax.random.normal(k_wc, (C * H * W, NUM_CLASSES), jnp.float32) * 0.05,
        'bc': jax.random.normal(k_bc, (1, NUM_CLASSES), jnp.float32) * 0.1,
    }

    images = jax.random.uniform(k_img, (B, C, H, W), jnp.float32)         # NCHW input
    # torch.randn_like replacements (deterministic), generated directly in the
    # kernel's lane-dense (channels, B*H*W) layout (i.i.d. normal either way).
    init_noise = jax.random.normal(k_n0, (STACK, C, NPIX), jnp.float32)
    step_noises = jax.random.normal(k_n1, (STACK, STEPS, C, NPIX), jnp.float32)

    logits = jax.jit(defense_diff_forward)(params, images, init_noise, step_noises)
    logits = jax.block_until_ready(logits)

    assert logits.shape == (B, NUM_CLASSES), logits.shape
    assert bool(jnp.all(jnp.isfinite(logits)))

    ref_logits = reference_forward(params, images, init_noise, step_noises)
    np.testing.assert_allclose(np.asarray(logits), ref_logits, rtol=2e-2, atol=2e-2)

    print("KERNEL_OK")
</pallas_src>

<mosaic_0001>
module attributes {stable_mosaic.version = 11 : i64} {
  func.func @_fused_kernel(%arg0: i32, %arg1: memref<50xf32, #tpu.memory_space<smem>>, %arg2: memref<4x512xf32, #tpu.memory_space<vmem>>, %arg3: memref<4x512xf32, #tpu.memory_space<vmem>>, %arg4: memref<1x4x512xf32, #tpu.memory_space<vmem>>, %arg5: memref<1x32x1xf32, #tpu.memory_space<vmem>>, %arg6: memref<32x32xf32, #tpu.memory_space<vmem>>, %arg7: memref<32x1xf32, #tpu.memory_space<vmem>>, %arg8: memref<9x32x4xf32, #tpu.memory_space<vmem>>, %arg9: memref<32x1xf32, #tpu.memory_space<vmem>>, %arg10: memref<9x4x32xf32, #tpu.memory_space<vmem>>, %arg11: memref<4x1xf32, #tpu.memory_space<vmem>>, %arg12: memref<9x1x512xf32, #tpu.memory_space<vmem>>, %arg13: memref<4x512x20xf32, #tpu.memory_space<vmem>>, %arg14: memref<1x20xf32, #tpu.memory_space<vmem>>, %arg15: memref<1x20xf32, #tpu.memory_space<vmem>>, %arg16: memref<4x512xf32, #tpu.memory_space<vmem>>) attributes {dimension_semantics = [#tpu.dimension_semantics<arbitrary>], iteration_bounds = array<i64: 10>, scalar_prefetch = 0 : i64, scratch_operands = 1 : i64, tpu.core_type = #tpu.core_type<tc>, window_params = [{transform_indices = @transform_0, window_bounds = array<i64: 50>}, {pipeline_mode = #tpu.pipeline_mode<synchronous>, transform_indices = @transform_1, window_bounds = array<i64: 4, 512>}, {pipeline_mode = #tpu.pipeline_mode<synchronous>, transform_indices = @transform_2, window_bounds = array<i64: 4, 512>}, {transform_indices = @transform_3, window_bounds = array<i64: 1, 4, 512>}, {transform_indices = @transform_4, window_bounds = array<i64: 1, 32, 1>}, {pipeline_mode = #tpu.pipeline_mode<synchronous>, transform_indices = @transform_5, window_bounds = array<i64: 32, 32>}, {pipeline_mode = #tpu.pipeline_mode<synchronous>, transform_indices = @transform_6, window_bounds = array<i64: 32, 1>}, {pipeline_mode = #tpu.pipeline_mode<synchronous>, transform_indices = @transform_7, window_bounds = array<i64: 9, 32, 4>}, {pipeline_mode = #tpu.pipeline_mode<synchronous>, transform_indices = @transform_8, window_bounds = array<i64: 32, 1>}, {pipeline_mode = #tpu.pipeline_mode<synchronous>, transform_indices = @transform_9, window_bounds = array<i64: 9, 4, 32>}, {pipeline_mode = #tpu.pipeline_mode<synchronous>, transform_indices = @transform_10, window_bounds = array<i64: 4, 1>}, {pipeline_mode = #tpu.pipeline_mode<synchronous>, transform_indices = @transform_11, window_bounds = array<i64: 9, 1, 512>}, {pipeline_mode = #tpu.pipeline_mode<synchronous>, transform_indices = @transform_12, window_bounds = array<i64: 4, 512, 20>}, {pipeline_mode = #tpu.pipeline_mode<synchronous>, transform_indices = @transform_13, window_bounds = array<i64: 1, 20>}, {pipeline_mode = #tpu.pipeline_mode<synchronous>, transform_indices = @transform_14, window_bounds = array<i64: 1, 20>}]} {
    %c0_i32 = arith.constant 0 : i32
    %0 = arith.cmpi eq, %arg0, %c0_i32 : i32
    %1 = arith.extui %0 : i1 to i32
    %c0_i32_0 = arith.constant 0 : i32
    %2 = arith.cmpi ne, %1, %c0_i32_0 : i32
    scf.if %2 {
      %c0_145 = arith.constant 0 : index
      %c0_146 = arith.constant 0 : index
      %218 = vector.load %arg2[%c0_145, %c0_146] : memref<4x512xf32, #tpu.memory_space<vmem>>, vector<4x512xf32>
      %c0_147 = arith.constant 0 : index
      %c0_148 = arith.constant 0 : index
      %219 = vector.load %arg3[%c0_147, %c0_148] : memref<4x512xf32, #tpu.memory_space<vmem>>, vector<4x512xf32>
      %cst_149 = arith.constant 1.8922385 : f32
      %220 = vector.broadcast %cst_149 : f32 to vector<4x512xf32>
      %221 = arith.mulf %220, %218 : vector<4x512xf32>
      %cst_150 = arith.constant 0.323818475 : f32
      %222 = vector.broadcast %cst_150 : f32 to vector<4x512xf32>
      %223 = arith.mulf %222, %219 : vector<4x512xf32>
      %224 = arith.addf %221, %223 : vector<4x512xf32>
      %cst_151 = arith.constant 0.946119248 : f32
      %225 = vector.broadcast %cst_151 : f32 to vector<4x512xf32>
      %226 = arith.subf %224, %225 : vector<4x512xf32>
      %c0_152 = arith.constant 0 : index
      %c0_153 = arith.constant 0 : index
      %227 = vector.load %arg16[%c0_152, %c0_153] : memref<4x512xf32, #tpu.memory_space<vmem>>, vector<4x512xf32>
      tpu.vector_store %arg16[%c0_152, %c0_153], %226 {strides = array<i32>} : memref<4x512xf32, #tpu.memory_space<vmem>>, vector<4x512xf32>,
    } else {
    }
    %c0 = arith.constant 0 : index
    %c0_1 = arith.constant 0 : index
    %3 = vector.load %arg16[%c0, %c0_1] : memref<4x512xf32, #tpu.memory_space<vmem>>, vector<4x512xf32>
    %c0_2 = arith.constant 0 : index
    %c0_3 = arith.constant 0 : index
    %4 = vector.load %arg6[%c0_2, %c0_3] : memref<32x32xf32, #tpu.memory_space<vmem>>, vector<32x32xf32>
    %c0_4 = arith.constant 0 : index
    %c0_5 = arith.constant 0 : index
    %c0_6 = arith.constant 0 : index
    %5 = vector.load %arg5[%c0_4, %c0_5, %c0_6] : memref<1x32x1xf32, #tpu.memory_space<vmem>>, vector<1x32x1xf32>
    %6 = vector.shape_cast %5 : vector<1x32x1xf32> to vector<32x1xf32>
    %cst = arith.constant dense<0.000000e+00> : vector<32x1xf32>
    %7 = tpu.matmul %4, %6, %cst {dimension_numbers = #tpu.dot_dimension_numbers<[1], [0], [0], [1], [0, 0, 1, 1], [], []>} : vector<32x32xf32>, vector<32x1xf32>, vector<32x1xf32> -> vector<32x1xf32>
    %c0_7 = arith.constant 0 : index
    %c0_8 = arith.constant 0 : index
    %8 = vector.load %arg7[%c0_7, %c0_8] : memref<32x1xf32, #tpu.memory_space<vmem>>, vector<32x1xf32>
    %9 = arith.addf %7, %8 : vector<32x1xf32>
    %10 = arith.negf %9 : vector<32x1xf32>
    %11 = math.exp %10 : vector<32x1xf32>
    %cst_9 = arith.constant 1.000000e+00 : f32
    %12 = vector.broadcast %cst_9 : f32 to vector<32x1xf32>
    %13 = arith.addf %12, %11 : vector<32x1xf32>
    %14 = arith.divf %12, %13 : vector<32x1xf32>
    %15 = arith.mulf %9, %14 : vector<32x1xf32>
    %c17_i32 = arith.constant 17 : i32
    %16 = tpu.dynamic_rotate %3 by %c17_i32 dim 1 : vector<4x512xf32>, i32 -> vector<4x512xf32>
    %c0_10 = arith.constant 0 : index
    %c0_11 = arith.constant 0 : index
    %c0_12 = arith.constant 0 : index
    %17 = vector.load %arg12[%c0_10, %c0_11, %c0_12] : memref<9x1x512xf32, #tpu.memory_space<vmem>>, vector<1x1x512xf32>
    %18 = vector.shape_cast %17 : vector<1x1x512xf32> to vector<1x512xf32>
    %19 = vector.broadcast %18 : vector<1x512xf32> to vector<4x512xf32>
    %20 = arith.mulf %16, %19 : vector<4x512xf32>
    %c0_13 = arith.constant 0 : index
    %c0_14 = arith.constant 0 : index
    %c0_15 = arith.constant 0 : index
    %21 = vector.load %arg8[%c0_13, %c0_14, %c0_15] : memref<9x32x4xf32, #tpu.memory_space<vmem>>, vector<1x32x4xf32>
    %22 = vector.shape_cast %21 : vector<1x32x4xf32> to vector<32x4xf32>
    %cst_16 = arith.constant dense<0.000000e+00> : vector<32x512xf32>
    %23 = tpu.matmul %22, %20, %cst_16 {dimension_numbers = #tpu.dot_dimension_numbers<[1], [0], [0], [1], [0, 0, 1, 1], [], []>} : vector<32x4xf32>, vector<4x512xf32>, vector<32x512xf32> -> vector<32x512xf32>
    %c16_i32 = arith.constant 16 : i32
    %24 = tpu.dynamic_rotate %3 by %c16_i32 dim 1 : vector<4x512xf32>, i32 -> vector<4x512xf32>
    %c1 = arith.constant 1 : index
    %c0_17 = arith.constant 0 : index
    %c0_18 = arith.constant 0 : index
    %25 = vector.load %arg12[%c1, %c0_17, %c0_18] : memref<9x1x512xf32, #tpu.memory_space<vmem>>, vector<1x1x512xf32>
    %26 = vector.shape_cast %25 : vector<1x1x512xf32> to vector<1x512xf32>
    %27 = vector.broadcast %26 : vector<1x512xf32> to vector<4x512xf32>
    %28 = arith.mulf %24, %27 : vector<4x512xf32>
    %c1_19 = arith.constant 1 : index
    %c0_20 = arith.constant 0 : index
    %c0_21 = arith.constant 0 : index
    %29 = vector.load %arg8[%c1_19, %c0_20, %c0_21] : memref<9x32x4xf32, #tpu.memory_space<vmem>>, vector<1x32x4xf32>
    %30 = vector.shape_cast %29 : vector<1x32x4xf32> to vector<32x4xf32>
    %cst_22 = arith.constant dense<0.000000e+00> : vector<32x512xf32>
    %31 = tpu.matmul %30, %28, %cst_22 {dimension_numbers = #tpu.dot_dimension_numbers<[1], [0], [0], [1], [0, 0, 1, 1], [], []>} : vector<32x4xf32>, vector<4x512xf32>, vector<32x512xf32> -> vector<32x512xf32>
    %32 = arith.addf %23, %31 : vector<32x512xf32>
    %c15_i32 = arith.constant 15 : i32
    %33 = tpu.dynamic_rotate %3 by %c15_i32 dim 1 : vector<4x512xf32>, i32 -> vector<4x512xf32>
    %c2 = arith.constant 2 : index
    %c0_23 = arith.constant 0 : index
    %c0_24 = arith.constant 0 : index
    %34 = vector.load %arg12[%c2, %c0_23, %c0_24] : memref<9x1x512xf32, #tpu.memory_space<vmem>>, vector<1x1x512xf32>
    %35 = vector.shape_cast %34 : vector<1x1x512xf32> to vector<1x512xf32>
    %36 = vector.broadcast %35 : vector<1x512xf32> to vector<4x512xf32>
    %37 = arith.mulf %33, %36 : vector<4x512xf32>
    %c2_25 = arith.constant 2 : index
    %c0_26 = arith.constant 0 : index
    %c0_27 = arith.constant 0 : index
    %38 = vector.load %arg8[%c2_25, %c0_26, %c0_27] : memref<9x32x4xf32, #tpu.memory_space<vmem>>, vector<1x32x4xf32>
    %39 = vector.shape_cast %38 : vector<1x32x4xf32> to vector<32x4xf32>
    %cst_28 = arith.constant dense<0.000000e+00> : vector<32x512xf32>
    %40 = tpu.matmul %39, %37, %cst_28 {dimension_numbers = #tpu.dot_dimension_numbers<[1], [0], [0], [1], [0, 0, 1, 1], [], []>} : vector<32x4xf32>, vector<4x512xf32>, vector<32x512xf32> -> vector<32x512xf32>
    %41 = arith.addf %32, %40 : vector<32x512xf32>
    %c1_i32 = arith.constant 1 : i32
    %42 = tpu.dynamic_rotate %3 by %c1_i32 dim 1 : vector<4x512xf32>, i32 -> vector<4x512xf32>
    %c3 = arith.constant 3 : index
    %c0_29 = arith.constant 0 : index
    %c0_30 = arith.constant 0 : index
    %43 = vector.load %arg12[%c3, %c0_29, %c0_30] : memref<9x1x512xf32, #tpu.memory_space<vmem>>, vector<1x1x512xf32>
    %44 = vector.shape_cast %43 : vector<1x1x512xf32> to vector<1x512xf32>
    %45 = vector.broadcast %44 : vector<1x512xf32> to vector<4x512xf32>
    %46 = arith.mulf %42, %45 : vector<4x512xf32>
    %c3_31 = arith.constant 3 : index
    %c0_32 = arith.constant 0 : index
    %c0_33 = arith.constant 0 : index
    %47 = vector.load %arg8[%c3_31, %c0_32, %c0_33] : memref<9x32x4xf32, #tpu.memory_space<vmem>>, vector<1x32x4xf32>
    %48 = vector.shape_cast %47 : vector<1x32x4xf32> to vector<32x4xf32>
    %cst_34 = arith.constant dense<0.000000e+00> : vector<32x512xf32>
    %49 = tpu.matmul %48, %46, %cst_34 {dimension_numbers = #tpu.dot_dimension_numbers<[1], [0], [0], [1], [0, 0, 1, 1], [], []>} : vector<32x4xf32>, vector<4x512xf32>, vector<32x512xf32> -> vector<32x512xf32>
    %50 = arith.addf %41, %49 : vector<32x512xf32>
    %c4 = arith.constant 4 : index
    %c0_35 = arith.constant 0 : index
    %c0_36 = arith.constant 0 : index
    %51 = vector.load %arg8[%c4, %c0_35, %c0_36] : memref<9x32x4xf32, #tpu.memory_space<vmem>>, vector<1x32x4xf32>
    %52 = vector.shape_cast %51 : vector<1x32x4xf32> to vector<32x4xf32>
    %cst_37 = arith.constant dense<0.000000e+00> : vector<32x512xf32>
    %53 = tpu.matmul %52, %3, %cst_37 {dimension_numbers = #tpu.dot_dimension_numbers<[1], [0], [0], [1], [0, 0, 1, 1], [], []>} : vector<32x4xf32>, vector<4x512xf32>, vector<32x512xf32> -> vector<32x512xf32>
    %54 = arith.addf %50, %53 : vector<32x512xf32>
    %c511_i32 = arith.constant 511 : i32
    %55 = tpu.dynamic_rotate %3 by %c511_i32 dim 1 : vector<4x512xf32>, i32 -> vector<4x512xf32>
    %c5 = arith.constant 5 : index
    %c0_38 = arith.constant 0 : index
    %c0_39 = arith.constant 0 : index
    %56 = vector.load %arg12[%c5, %c0_38, %c0_39] : memref<9x1x512xf32, #tpu.memory_space<vmem>>, vector<1x1x512xf32>
    %57 = vector.shape_cast %56 : vector<1x1x512xf32> to vector<1x512xf32>
    %58 = vector.broadcast %57 : vector<1x512xf32> to vector<4x512xf32>
    %59 = arith.mulf %55, %58 : vector<4x512xf32>
    %c5_40 = arith.constant 5 : index
    %c0_41 = arith.constant 0 : index
    %c0_42 = arith.constant 0 : index
    %60 = vector.load %arg8[%c5_40, %c0_41, %c0_42] : memref<9x32x4xf32, #tpu.memory_space<vmem>>, vector<1x32x4xf32>
    %61 = vector.shape_cast %60 : vector<1x32x4xf32> to vector<32x4xf32>
    %cst_43 = arith.constant dense<0.000000e+00> : vector<32x512xf32>
    %62 = tpu.matmul %61, %59, %cst_43 {dimension_numbers = #tpu.dot_dimension_numbers<[1], [0], [0], [1], [0, 0, 1, 1], [], []>} : vector<32x4xf32>, vector<4x512xf32>, vector<32x512xf32> -> vector<32x512xf32>
    %63 = arith.addf %54, %62 : vector<32x512xf32>
    %c497_i32 = arith.constant 497 : i32
    %64 = tpu.dynamic_rotate %3 by %c497_i32 dim 1 : vector<4x512xf32>, i32 -> vector<4x512xf32>
    %c6 = arith.constant 6 : index
    %c0_44 = arith.constant 0 : index
    %c0_45 = arith.constant 0 : index
    %65 = vector.load %arg12[%c6, %c0_44, %c0_45] : memref<9x1x512xf32, #tpu.memory_space<vmem>>, vector<1x1x512xf32>
    %66 = vector.shape_cast %65 : vector<1x1x512xf32> to vector<1x512xf32>
    %67 = vector.broadcast %66 : vector<1x512xf32> to vector<4x512xf32>
    %68 = arith.mulf %64, %67 : vector<4x512xf32>
    %c6_46 = arith.constant 6 : index
    %c0_47 = arith.constant 0 : index
    %c0_48 = arith.constant 0 : index
    %69 = vector.load %arg8[%c6_46, %c0_47, %c0_48] : memref<9x32x4xf32, #tpu.memory_space<vmem>>, vector<1x32x4xf32>
    %70 = vector.shape_cast %69 : vector<1x32x4xf32> to vector<32x4xf32>
    %cst_49 = arith.constant dense<0.000000e+00> : vector<32x512xf32>
    %71 = tpu.matmul %70, %68, %cst_49 {dimension_numbers = #tpu.dot_dimension_numbers<[1], [0], [0], [1], [0, 0, 1, 1], [], []>} : vector<32x4xf32>, vector<4x512xf32>, vector<32x512xf32> -> vector<32x512xf32>
    %72 = arith.addf %63, %71 : vector<32x512xf32>
    %c496_i32 = arith.constant 496 : i32
    %73 = tpu.dynamic_rotate %3 by %c496_i32 dim 1 : vector<4x512xf32>, i32 -> vector<4x512xf32>
    %c7 = arith.constant 7 : index
    %c0_50 = arith.constant 0 : index
    %c0_51 = arith.constant 0 : index
    %74 = vector.load %arg12[%c7, %c0_50, %c0_51] : memref<9x1x512xf32, #tpu.memory_space<vmem>>, vector<1x1x512xf32>
    %75 = vector.shape_cast %74 : vector<1x1x512xf32> to vector<1x512xf32>
    %76 = vector.broadcast %75 : vector<1x512xf32> to vector<4x512xf32>
    %77 = arith.mulf %73, %76 : vector<4x512xf32>
    %c7_52 = arith.constant 7 : index
    %c0_53 = arith.constant 0 : index
    %c0_54 = arith.constant 0 : index
    %78 = vector.load %arg8[%c7_52, %c0_53, %c0_54] : memref<9x32x4xf32, #tpu.memory_space<vmem>>, vector<1x32x4xf32>
    %79 = vector.shape_cast %78 : vector<1x32x4xf32> to vector<32x4xf32>
    %cst_55 = arith.constant dense<0.000000e+00> : vector<32x512xf32>
    %80 = tpu.matmul %79, %77, %cst_55 {dimension_numbers = #tpu.dot_dimension_numbers<[1], [0], [0], [1], [0, 0, 1, 1], [], []>} : vector<32x4xf32>, vector<4x512xf32>, vector<32x512xf32> -> vector<32x512xf32>
    %81 = arith.addf %72, %80 : vector<32x512xf32>
    %c495_i32 = arith.constant 495 : i32
    %82 = tpu.dynamic_rotate %3 by %c495_i32 dim 1 : vector<4x512xf32>, i32 -> vector<4x512xf32>
    %c8 = arith.constant 8 : index
    %c0_56 = arith.constant 0 : index
    %c0_57 = arith.constant 0 : index
    %83 = vector.load %arg12[%c8, %c0_56, %c0_57] : memref<9x1x512xf32, #tpu.memory_space<vmem>>, vector<1x1x512xf32>
    %84 = vector.shape_cast %83 : vector<1x1x512xf32> to vector<1x512xf32>
    %85 = vector.broadcast %84 : vector<1x512xf32> to vector<4x512xf32>
    %86 = arith.mulf %82, %85 : vector<4x512xf32>
    %c8_58 = arith.constant 8 : index
    %c0_59 = arith.constant 0 : index
    %c0_60 = arith.constant 0 : index
    %87 = vector.load %arg8[%c8_58, %c0_59, %c0_60] : memref<9x32x4xf32, #tpu.memory_space<vmem>>, vector<1x32x4xf32>
    %88 = vector.shape_cast %87 : vector<1x32x4xf32> to vector<32x4xf32>
    %cst_61 = arith.constant dense<0.000000e+00> : vector<32x512xf32>
    %89 = tpu.matmul %88, %86, %cst_61 {dimension_numbers = #tpu.dot_dimension_numbers<[1], [0], [0], [1], [0, 0, 1, 1], [], []>} : vector<32x4xf32>, vector<4x512xf32>, vector<32x512xf32> -> vector<32x512xf32>
    %90 = arith.addf %81, %89 : vector<32x512xf32>
    %c0_62 = arith.constant 0 : index
    %c0_63 = arith.constant 0 : index
    %91 = vector.load %arg9[%c0_62, %c0_63] : memref<32x1xf32, #tpu.memory_space<vmem>>, vector<32x1xf32>
    %92 = arith.addf %91, %15 : vector<32x1xf32>
    %93 = vector.broadcast %92 : vector<32x1xf32> to vector<32x512xf32>
    %94 = arith.addf %90, %93 : vector<32x512xf32>
    %95 = arith.negf %94 : vector<32x512xf32>
    %96 = math.exp %95 : vector<32x512xf32>
    %cst_64 = arith.constant 1.000000e+00 : f32
    %97 = vector.broadcast %cst_64 : f32 to vector<32x512xf32>
    %98 = arith.addf %97, %96 : vector<32x512xf32>
    %99 = arith.divf %97, %98 : vector<32x512xf32>
    %100 = arith.mulf %94, %99 : vector<32x512xf32>
    %c17_i32_65 = arith.constant 17 : i32
    %101 = tpu.dynamic_rotate %100 by %c17_i32_65 dim 1 : vector<32x512xf32>, i32 -> vector<32x512xf32>
    %c0_66 = arith.constant 0 : index
    %c0_67 = arith.constant 0 : index
    %c0_68 = arith.constant 0 : index
    %102 = vector.load %arg12[%c0_66, %c0_67, %c0_68] : memref<9x1x512xf32, #tpu.memory_space<vmem>>, vector<1x1x512xf32>
    %103 = vector.shape_cast %102 : vector<1x1x512xf32> to vector<1x512xf32>
    %104 = vector.broadcast %103 : vector<1x512xf32> to vector<32x512xf32>
    %105 = arith.mulf %101, %104 : vector<32x512xf32>
    %c0_69 = arith.constant 0 : index
    %c0_70 = arith.constant 0 : index
    %c0_71 = arith.constant 0 : index
    %106 = vector.load %arg10[%c0_69, %c0_70, %c0_71] : memref<9x4x32xf32, #tpu.memory_space<vmem>>, vector<1x4x32xf32>
    %107 = vector.shape_cast %106 : vector<1x4x32xf32> to vector<4x32xf32>
    %cst_72 = arith.constant dense<0.000000e+00> : vector<4x512xf32>
    %108 = tpu.matmul %107, %105, %cst_72 {dimension_numbers = #tpu.dot_dimension_numbers<[1], [0], [0], [1], [0, 0, 1, 1], [], []>} : vector<4x32xf32>, vector<32x512xf32>, vector<4x512xf32> -> vector<4x512xf32>
    %c16_i32_73 = arith.constant 16 : i32
    %109 = tpu.dynamic_rotate %100 by %c16_i32_73 dim 1 : vector<32x512xf32>, i32 -> vector<32x512xf32>
    %c1_74 = arith.constant 1 : index
    %c0_75 = arith.constant 0 : index
    %c0_76 = arith.constant 0 : index
    %110 = vector.load %arg12[%c1_74, %c0_75, %c0_76] : memref<9x1x512xf32, #tpu.memory_space<vmem>>, vector<1x1x512xf32>
    %111 = vector.shape_cast %110 : vector<1x1x512xf32> to vector<1x512xf32>
    %112 = vector.broadcast %111 : vector<1x512xf32> to vector<32x512xf32>
    %113 = arith.mulf %109, %112 : vector<32x512xf32>
    %c1_77 = arith.constant 1 : index
    %c0_78 = arith.constant 0 : index
    %c0_79 = arith.constant 0 : index
    %114 = vector.load %arg10[%c1_77, %c0_78, %c0_79] : memref<9x4x32xf32, #tpu.memory_space<vmem>>, vector<1x4x32xf32>
    %115 = vector.shape_cast %114 : vector<1x4x32xf32> to vector<4x32xf32>
    %cst_80 = arith.constant dense<0.000000e+00> : vector<4x512xf32>
    %116 = tpu.matmul %115, %113, %cst_80 {dimension_numbers = #tpu.dot_dimension_numbers<[1], [0], [0], [1], [0, 0, 1, 1], [], []>} : vector<4x32xf32>, vector<32x512xf32>, vector<4x512xf32> -> vector<4x512xf32>
    %117 = arith.addf %108, %116 : vector<4x512xf32>
    %c15_i32_81 = arith.constant 15 : i32
    %118 = tpu.dynamic_rotate %100 by %c15_i32_81 dim 1 : vector<32x512xf32>, i32 -> vector<32x512xf32>
    %c2_82 = arith.constant 2 : index
    %c0_83 = arith.constant 0 : index
    %c0_84 = arith.constant 0 : index
    %119 = vector.load %arg12[%c2_82, %c0_83, %c0_84] : memref<9x1x512xf32, #tpu.memory_space<vmem>>, vector<1x1x512xf32>
    %120 = vector.shape_cast %119 : vector<1x1x512xf32> to vector<1x512xf32>
    %121 = vector.broadcast %120 : vector<1x512xf32> to vector<32x512xf32>
    %122 = arith.mulf %118, %121 : vector<32x512xf32>
    %c2_85 = arith.constant 2 : index
    %c0_86 = arith.constant 0 : index
    %c0_87 = arith.constant 0 : index
    %123 = vector.load %arg10[%c2_85, %c0_86, %c0_87] : memref<9x4x32xf32, #tpu.memory_space<vmem>>, vector<1x4x32xf32>
    %124 = vector.shape_cast %123 : vector<1x4x32xf32> to vector<4x32xf32>
    %cst_88 = arith.constant dense<0.000000e+00> : vector<4x512xf32>
    %125 = tpu.matmul %124, %122, %cst_88 {dimension_numbers = #tpu.dot_dimension_numbers<[1], [0], [0], [1], [0, 0, 1, 1], [], []>} : vector<4x32xf32>, vector<32x512xf32>, vector<4x512xf32> -> vector<4x512xf32>
    %126 = arith.addf %117, %125 : vector<4x512xf32>
    %c1_i32_89 = arith.constant 1 : i32
    %127 = tpu.dynamic_rotate %100 by %c1_i32_89 dim 1 : vector<32x512xf32>, i32 -> vector<32x512xf32>
    %c3_90 = arith.constant 3 : index
    %c0_91 = arith.constant 0 : index
    %c0_92 = arith.constant 0 : index
    %128 = vector.load %arg12[%c3_90, %c0_91, %c0_92] : memref<9x1x512xf32, #tpu.memory_space<vmem>>, vector<1x1x512xf32>
    %129 = vector.shape_cast %128 : vector<1x1x512xf32> to vector<1x512xf32>
    %130 = vector.broadcast %129 : vector<1x512xf32> to vector<32x512xf32>
    %131 = arith.mulf %127, %130 : vector<32x512xf32>
    %c3_93 = arith.constant 3 : index
    %c0_94 = arith.constant 0 : index
    %c0_95 = arith.constant 0 : index
    %132 = vector.load %arg10[%c3_93, %c0_94, %c0_95] : memref<9x4x32xf32, #tpu.memory_space<vmem>>, vector<1x4x32xf32>
    %133 = vector.shape_cast %132 : vector<1x4x32xf32> to vector<4x32xf32>
    %cst_96 = arith.constant dense<0.000000e+00> : vector<4x512xf32>
    %134 = tpu.matmul %133, %131, %cst_96 {dimension_numbers = #tpu.dot_dimension_numbers<[1], [0], [0], [1], [0, 0, 1, 1], [], []>} : vector<4x32xf32>, vector<32x512xf32>, vector<4x512xf32> -> vector<4x512xf32>
    %135 = arith.addf %126, %134 : vector<4x512xf32>
    %c4_97 = arith.constant 4 : index
    %c0_98 = arith.constant 0 : index
    %c0_99 = arith.constant 0 : index
    %136 = vector.load %arg10[%c4_97, %c0_98, %c0_99] : memref<9x4x32xf32, #tpu.memory_space<vmem>>, vector<1x4x32xf32>
    %137 = vector.shape_cast %136 : vector<1x4x32xf32> to vector<4x32xf32>
    %cst_100 = arith.constant dense<0.000000e+00> : vector<4x512xf32>
    %138 = tpu.matmul %137, %100, %cst_100 {dimension_numbers = #tpu.dot_dimension_numbers<[1], [0], [0], [1], [0, 0, 1, 1], [], []>} : vector<4x32xf32>, vector<32x512xf32>, vector<4x512xf32> -> vector<4x512xf32>
    %139 = arith.addf %135, %138 : vector<4x512xf32>
    %c511_i32_101 = arith.constant 511 : i32
    %140 = tpu.dynamic_rotate %100 by %c511_i32_101 dim 1 : vector<32x512xf32>, i32 -> vector<32x512xf32>
    %c5_102 = arith.constant 5 : index
    %c0_103 = arith.constant 0 : index
    %c0_104 = arith.constant 0 : index
    %141 = vector.load %arg12[%c5_102, %c0_103, %c0_104] : memref<9x1x512xf32, #tpu.memory_space<vmem>>, vector<1x1x512xf32>
    %142 = vector.shape_cast %141 : vector<1x1x512xf32> to vector<1x512xf32>
    %143 = vector.broadcast %142 : vector<1x512xf32> to vector<32x512xf32>
    %144 = arith.mulf %140, %143 : vector<32x512xf32>
    %c5_105 = arith.constant 5 : index
    %c0_106 = arith.constant 0 : index
    %c0_107 = arith.constant 0 : index
    %145 = vector.load %arg10[%c5_105, %c0_106, %c0_107] : memref<9x4x32xf32, #tpu.memory_space<vmem>>, vector<1x4x32xf32>
    %146 = vector.shape_cast %145 : vector<1x4x32xf32> to vector<4x32xf32>
    %cst_108 = arith.constant dense<0.000000e+00> : vector<4x512xf32>
    %147 = tpu.matmul %146, %144, %cst_108 {dimension_numbers = #tpu.dot_dimension_numbers<[1], [0], [0], [1], [0, 0, 1, 1], [], []>} : vector<4x32xf32>, vector<32x512xf32>, vector<4x512xf32> -> vector<4x512xf32>
    %148 = arith.addf %139, %147 : vector<4x512xf32>
    %c497_i32_109 = arith.constant 497 : i32
    %149 = tpu.dynamic_rotate %100 by %c497_i32_109 dim 1 : vector<32x512xf32>, i32 -> vector<32x512xf32>
    %c6_110 = arith.constant 6 : index
    %c0_111 = arith.constant 0 : index
    %c0_112 = arith.constant 0 : index
    %150 = vector.load %arg12[%c6_110, %c0_111, %c0_112] : memref<9x1x512xf32, #tpu.memory_space<vmem>>, vector<1x1x512xf32>
    %151 = vector.shape_cast %150 : vector<1x1x512xf32> to vector<1x512xf32>
    %152 = vector.broadcast %151 : vector<1x512xf32> to vector<32x512xf32>
    %153 = arith.mulf %149, %152 : vector<32x512xf32>
    %c6_113 = arith.constant 6 : index
    %c0_114 = arith.constant 0 : index
    %c0_115 = arith.constant 0 : index
    %154 = vector.load %arg10[%c6_113, %c0_114, %c0_115] : memref<9x4x32xf32, #tpu.memory_space<vmem>>, vector<1x4x32xf32>
    %155 = vector.shape_cast %154 : vector<1x4x32xf32> to vector<4x32xf32>
    %cst_116 = arith.constant dense<0.000000e+00> : vector<4x512xf32>
    %156 = tpu.matmul %155, %153, %cst_116 {dimension_numbers = #tpu.dot_dimension_numbers<[1], [0], [0], [1], [0, 0, 1, 1], [], []>} : vector<4x32xf32>, vector<32x512xf32>, vector<4x512xf32> -> vector<4x512xf32>
    %157 = arith.addf %148, %156 : vector<4x512xf32>
    %c496_i32_117 = arith.constant 496 : i32
    %158 = tpu.dynamic_rotate %100 by %c496_i32_117 dim 1 : vector<32x512xf32>, i32 -> vector<32x512xf32>
    %c7_118 = arith.constant 7 : index
    %c0_119 = arith.constant 0 : index
    %c0_120 = arith.constant 0 : index
    %159 = vector.load %arg12[%c7_118, %c0_119, %c0_120] : memref<9x1x512xf32, #tpu.memory_space<vmem>>, vector<1x1x512xf32>
    %160 = vector.shape_cast %159 : vector<1x1x512xf32> to vector<1x512xf32>
    %161 = vector.broadcast %160 : vector<1x512xf32> to vector<32x512xf32>
    %162 = arith.mulf %158, %161 : vector<32x512xf32>
    %c7_121 = arith.constant 7 : index
    %c0_122 = arith.constant 0 : index
    %c0_123 = arith.constant 0 : index
    %163 = vector.load %arg10[%c7_121, %c0_122, %c0_123] : memref<9x4x32xf32, #tpu.memory_space<vmem>>, vector<1x4x32xf32>
    %164 = vector.shape_cast %163 : vector<1x4x32xf32> to vector<4x32xf32>
    %cst_124 = arith.constant dense<0.000000e+00> : vector<4x512xf32>
    %165 = tpu.matmul %164, %162, %cst_124 {dimension_numbers = #tpu.dot_dimension_numbers<[1], [0], [0], [1], [0, 0, 1, 1], [], []>} : vector<4x32xf32>, vector<32x512xf32>, vector<4x512xf32> -> vector<4x512xf32>
    %166 = arith.addf %157, %165 : vector<4x512xf32>
    %c495_i32_125 = arith.constant 495 : i32
    %167 = tpu.dynamic_rotate %100 by %c495_i32_125 dim 1 : vector<32x512xf32>, i32 -> vector<32x512xf32>
    %c8_126 = arith.constant 8 : index
    %c0_127 = arith.constant 0 : index
    %c0_128 = arith.constant 0 : index
    %168 = vector.load %arg12[%c8_126, %c0_127, %c0_128] : memref<9x1x512xf32, #tpu.memory_space<vmem>>, vector<1x1x512xf32>
    %169 = vector.shape_cast %168 : vector<1x1x512xf32> to vector<1x512xf32>
    %170 = vector.broadcast %169 : vector<1x512xf32> to vector<32x512xf32>
    %171 = arith.mulf %167, %170 : vector<32x512xf32>
    %c8_129 = arith.constant 8 : index
    %c0_130 = arith.constant 0 : index
    %c0_131 = arith.constant 0 : index
    %172 = vector.load %arg10[%c8_129, %c0_130, %c0_131] : memref<9x4x32xf32, #tpu.memory_space<vmem>>, vector<1x4x32xf32>
    %173 = vector.shape_cast %172 : vector<1x4x32xf32> to vector<4x32xf32>
    %cst_132 = arith.constant dense<0.000000e+00> : vector<4x512xf32>
    %174 = tpu.matmul %173, %171, %cst_132 {dimension_numbers = #tpu.dot_dimension_numbers<[1], [0], [0], [1], [0, 0, 1, 1], [], []>} : vector<4x32xf32>, vector<32x512xf32>, vector<4x512xf32> -> vector<4x512xf32>
    %175 = arith.addf %166, %174 : vector<4x512xf32>
    %c0_133 = arith.constant 0 : index
    %c0_134 = arith.constant 0 : index
    %176 = vector.load %arg11[%c0_133, %c0_134] : memref<4x1xf32, #tpu.memory_space<vmem>>, vector<4x1xf32>
    %177 = vector.broadcast %176 : vector<4x1xf32> to vector<4x512xf32>
    %178 = arith.addf %175, %177 : vector<4x512xf32>
    %c5_i32 = arith.constant 5 : i32
    %179 = arith.muli %arg0, %c5_i32 : i32
    %c0_i32_135 = arith.constant 0 : i32
    %180 = arith.addi %179, %c0_i32_135 : i32
    %181 = arith.index_cast %180 : i32 to index
    %182 = memref.load %arg1[%181] : memref<50xf32, #tpu.memory_space<smem>>
    %c1_i32_136 = arith.constant 1 : i32
    %183 = arith.addi %179, %c1_i32_136 : i32
    %184 = arith.index_cast %183 : i32 to index
    %185 = memref.load %arg1[%184] : memref<50xf32, #tpu.memory_space<smem>>
    %c2_i32 = arith.constant 2 : i32
    %186 = arith.addi %179, %c2_i32 : i32
    %187 = arith.index_cast %186 : i32 to index
    %188 = memref.load %arg1[%187] : memref<50xf32, #tpu.memory_space<smem>>
    %c3_i32 = arith.constant 3 : i32
    %189 = arith.addi %179, %c3_i32 : i32
    %190 = arith.index_cast %189 : i32 to index
    %191 = memref.load %arg1[%190] : memref<50xf32, #tpu.memory_space<smem>>
    %c4_i32 = arith.constant 4 : i32
    %192 = arith.addi %179, %c4_i32 : i32
    %193 = arith.index_cast %192 : i32 to index
    %194 = memref.load %arg1[%193] : memref<50xf32, #tpu.memory_space<smem>>
    %195 = vector.broadcast %185 : f32 to vector<4x512xf32>
    %196 = arith.mulf %195, %178 : vector<4x512xf32>
    %197 = arith.subf %3, %196 : vector<4x512xf32>
    %198 = vector.broadcast %182 : f32 to vector<4x512xf32>
    %199 = arith.mulf %197, %198 : vector<4x512xf32>
    %cst_137 = arith.constant -1.000000e+00 : f32
    %cst_138 = arith.constant 1.000000e+00 : f32
    %200 = vector.broadcast %cst_137 : f32 to vector<4x512xf32>
    %201 = arith.maximumf %200, %199 : vector<4x512xf32>
    %202 = vector.broadcast %cst_138 : f32 to vector<4x512xf32>
    %203 = arith.minimumf %202, %201 : vector<4x512xf32>
    %204 = vector.broadcast %188 : f32 to vector<4x512xf32>
    %205 = arith.mulf %204, %203 : vector<4x512xf32>
    %206 = vector.broadcast %191 : f32 to vector<4x512xf32>
    %207 = arith.mulf %206, %3 : vector<4x512xf32>
    %208 = arith.addf %205, %207 : vector<4x512xf32>
    %c0_139 = arith.constant 0 : index
    %c0_140 = arith.constant 0 : index
    %c0_141 = arith.constant 0 : index
    %209 = vector.load %arg4[%c0_139, %c0_140, %c0_141] : memref<1x4x512xf32, #tpu.memory_space<vmem>>, vector<1x4x512xf32>
    %210 = vector.shape_cast %209 : vector<1x4x512xf32> to vector<4x512xf32>
    %211 = vector.broadcast %194 : f32 to vector<4x512xf32>
    %212 = arith.mulf %211, %210 : vector<4x512xf32>
    %213 = arith.addf %208, %212 : vector<4x512xf32>
    %c0_142 = arith.constant 0 : index
    %c0_143 = arith.constant 0 : index
    %214 = vector.load %arg16[%c0_142, %c0_143] : memref<4x512xf32, #tpu.memory_space<vmem>>, vector<4x512xf32>
    tpu.vector_store %arg16[%c0_142, %c0_143], %213 {strides = array<i32>} : memref<4x512xf32, #tpu.memory_space<vmem>>, vector<4x512xf32>,
    %c9_i32 = arith.constant 9 : i32
    %215 = arith.cmpi eq, %arg0, %c9_i32 : i32
    %216 = arith.extui %215 : i1 to i32
    %c0_i32_144 = arith.constant 0 : i32
    %217 = arith.cmpi ne, %216, %c0_i32_144 : i32
    scf.if %217 {
      %cst_145 = arith.constant 5.000000e-01 : f32
      %218 = vector.broadcast %cst_145 : f32 to vector<4x512xf32>
      %219 = arith.mulf %218, %213 : vector<4x512xf32>
      %cst_146 = arith.constant 5.000000e-01 : f32
      %220 = vector.broadcast %cst_146 : f32 to vector<4x512xf32>
      %221 = arith.addf %219, %220 : vector<4x512xf32>
      %c0_147 = arith.constant 0 : index
      %c0_148 = arith.constant 0 : index
      %222 = vector.load %arg14[%c0_147, %c0_148] : memref<1x20xf32, #tpu.memory_space<vmem>>, vector<1x20xf32>
      %223 = vector.extract_strided_slice %221 {offsets = [0, 0], sizes = [1, 512], strides = [1, 1]} : vector<4x512xf32> to vector<1x512xf32>
      %c0_149 = arith.constant 0 : index
      %c0_150 = arith.constant 0 : index
      %c0_151 = arith.constant 0 : index
      %224 = vector.load %arg13[%c0_149, %c0_150, %c0_151] : memref<4x512x20xf32, #tpu.memory_space<vmem>>, vector<1x512x20xf32>
      %225 = vector.shape_cast %224 : vector<1x512x20xf32> to vector<512x20xf32>
      %cst_152 = arith.constant dense<0.000000e+00> : vector<1x20xf32>
      %226 = tpu.matmul %223, %225, %cst_152 {dimension_numbers = #tpu.dot_dimension_numbers<[1], [0], [0], [1], [0, 0, 1, 1], [], []>} : vector<1x512xf32>, vector<512x20xf32>, vector<1x20xf32> -> vector<1x20xf32>
      %227 = arith.addf %222, %226 : vector<1x20xf32>
      %228 = vector.extract_strided_slice %221 {offsets = [1, 0], sizes = [1, 512], strides = [1, 1]} : vector<4x512xf32> to vector<1x512xf32>
      %c1_153 = arith.constant 1 : index
      %c0_154 = arith.constant 0 : index
      %c0_155 = arith.constant 0 : index
      %229 = vector.load %arg13[%c1_153, %c0_154, %c0_155] : memref<4x512x20xf32, #tpu.memory_space<vmem>>, vector<1x512x20xf32>
      %230 = vector.shape_cast %229 : vector<1x512x20xf32> to vector<512x20xf32>
      %cst_156 = arith.constant dense<0.000000e+00> : vector<1x20xf32>
      %231 = tpu.matmul %228, %230, %cst_156 {dimension_numbers = #tpu.dot_dimension_numbers<[1], [0], [0], [1], [0, 0, 1, 1], [], []>} : vector<1x512xf32>, vector<512x20xf32>, vector<1x20xf32> -> vector<1x20xf32>
      %232 = arith.addf %227, %231 : vector<1x20xf32>
      %233 = vector.extract_strided_slice %221 {offsets = [2, 0], sizes = [1, 512], strides = [1, 1]} : vector<4x512xf32> to vector<1x512xf32>
      %c2_157 = arith.constant 2 : index
      %c0_158 = arith.constant 0 : index
      %c0_159 = arith.constant 0 : index
      %234 = vector.load %arg13[%c2_157, %c0_158, %c0_159] : memref<4x512x20xf32, #tpu.memory_space<vmem>>, vector<1x512x20xf32>
      %235 = vector.shape_cast %234 : vector<1x512x20xf32> to vector<512x20xf32>
      %cst_160 = arith.constant dense<0.000000e+00> : vector<1x20xf32>
      %236 = tpu.matmul %233, %235, %cst_160 {dimension_numbers = #tpu.dot_dimension_numbers<[1], [0], [0], [1], [0, 0, 1, 1], [], []>} : vector<1x512xf32>, vector<512x20xf32>, vector<1x20xf32> -> vector<1x20xf32>
      %237 = arith.addf %232, %236 : vector<1x20xf32>
      %238 = vector.extract_strided_slice %221 {offsets = [3, 0], sizes = [1, 512], strides = [1, 1]} : vector<4x512xf32> to vector<1x512xf32>
      %c3_161 = arith.constant 3 : index
      %c0_162 = arith.constant 0 : index
      %c0_163 = arith.constant 0 : index
      %239 = vector.load %arg13[%c3_161, %c0_162, %c0_163] : memref<4x512x20xf32, #tpu.memory_space<vmem>>, vector<1x512x20xf32>
      %240 = vector.shape_cast %239 : vector<1x512x20xf32> to vector<512x20xf32>
      %cst_164 = arith.constant dense<0.000000e+00> : vector<1x20xf32>
      %241 = tpu.matmul %238, %240, %cst_164 {dimension_numbers = #tpu.dot_dimension_numbers<[1], [0], [0], [1], [0, 0, 1, 1], [], []>} : vector<1x512xf32>, vector<512x20xf32>, vector<1x20xf32> -> vector<1x20xf32>
      %242 = arith.addf %237, %241 : vector<1x20xf32>
      %c0_165 = arith.constant 0 : index
      %c0_166 = arith.constant 0 : index
      %243 = vector.load %arg15[%c0_165, %c0_166] : memref<1x20xf32, #tpu.memory_space<vmem>>, vector<1x20xf32>
      tpu.vector_store %arg15[%c0_165, %c0_166], %242 {strides = array<i32>} : memref<1x20xf32, #tpu.memory_space<vmem>>, vector<1x20xf32>,
    } else {
    }
    return
  }
  func.func @transform_0(%arg0: i32) -> i32 {
    %c0_i32 = arith.constant 0 : i32
    %c0_i32_0 = arith.constant 0 : i32
    return %c0_i32 : i32
  }
  func.func @transform_1(%arg0: i32) -> (i32, i32) {
    %c0_i32 = arith.constant 0 : i32
    %c0_i32_0 = arith.constant 0 : i32
    %c0_i32_1 = arith.constant 0 : i32
    return %c0_i32, %c0_i32_0 : i32, i32
  }
  func.func @transform_2(%arg0: i32) -> (i32, i32) {
    %c0_i32 = arith.constant 0 : i32
    %c0_i32_0 = arith.constant 0 : i32
    %c0_i32_1 = arith.constant 0 : i32
    return %c0_i32, %c0_i32_0 : i32, i32
  }
  func.func @transform_3(%arg0: i32) -> (i32, i32, i32) {
    %c0_i32 = arith.constant 0 : i32
    %c0_i32_0 = arith.constant 0 : i32
    %c0_i32_1 = arith.constant 0 : i32
    return %arg0, %c0_i32, %c0_i32_0 : i32, i32, i32
  }
  func.func @transform_4(%arg0: i32) -> (i32, i32, i32) {
    %c0_i32 = arith.constant 0 : i32
    %c0_i32_0 = arith.constant 0 : i32
    %c0_i32_1 = arith.constant 0 : i32
    return %arg0, %c0_i32, %c0_i32_0 : i32, i32, i32
  }
  func.func @transform_5(%arg0: i32) -> (i32, i32) {
    %c0_i32 = arith.constant 0 : i32
    %c0_i32_0 = arith.constant 0 : i32
    %c0_i32_1 = arith.constant 0 : i32
    return %c0_i32, %c0_i32_0 : i32, i32
  }
  func.func @transform_6(%arg0: i32) -> (i32, i32) {
    %c0_i32 = arith.constant 0 : i32
    %c0_i32_0 = arith.constant 0 : i32
    %c0_i32_1 = arith.constant 0 : i32
    return %c0_i32, %c0_i32_0 : i32, i32
  }
  func.func @transform_7(%arg0: i32) -> (i32, i32, i32) {
    %c0_i32 = arith.constant 0 : i32
    %c0_i32_0 = arith.constant 0 : i32
    %c0_i32_1 = arith.constant 0 : i32
    %c0_i32_2 = arith.constant 0 : i32
    return %c0_i32, %c0_i32_0, %c0_i32_1 : i32, i32, i32
  }
  func.func @transform_8(%arg0: i32) -> (i32, i32) {
    %c0_i32 = arith.constant 0 : i32
    %c0_i32_0 = arith.constant 0 : i32
    %c0_i32_1 = arith.constant 0 : i32
    return %c0_i32, %c0_i32_0 : i32, i32
  }
  func.func @transform_9(%arg0: i32) -> (i32, i32, i32) {
    %c0_i32 = arith.constant 0 : i32
    %c0_i32_0 = arith.constant 0 : i32
    %c0_i32_1 = arith.constant 0 : i32
    %c0_i32_2 = arith.constant 0 : i32
    return %c0_i32, %c0_i32_0, %c0_i32_1 : i32, i32, i32
  }
  func.func @transform_10(%arg0: i32) -> (i32, i32) {
    %c0_i32 = arith.constant 0 : i32
    %c0_i32_0 = arith.constant 0 : i32
    %c0_i32_1 = arith.constant 0 : i32
    return %c0_i32, %c0_i32_0 : i32, i32
  }
  func.func @transform_11(%arg0: i32) -> (i32, i32, i32) {
    %c0_i32 = arith.constant 0 : i32
    %c0_i32_0 = arith.constant 0 : i32
    %c0_i32_1 = arith.constant 0 : i32
    %c0_i32_2 = arith.constant 0 : i32
    return %c0_i32, %c0_i32_0, %c0_i32_1 : i32, i32, i32
  }
  func.func @transform_12(%arg0: i32) -> (i32, i32, i32) {
    %c0_i32 = arith.constant 0 : i32
    %c0_i32_0 = arith.constant 0 : i32
    %c0_i32_1 = arith.constant 0 : i32
    %c0_i32_2 = arith.constant 0 : i32
    return %c0_i32, %c0_i32_0, %c0_i32_1 : i32, i32, i32
  }
  func.func @transform_13(%arg0: i32) -> (i32, i32) {
    %c0_i32 = arith.constant 0 : i32
    %c0_i32_0 = arith.constant 0 : i32
    %c0_i32_1 = arith.constant 0 : i32
    return %c0_i32, %c0_i32_0 : i32, i32
  }
  func.func @transform_14(%arg0: i32) -> (i32, i32) {
    %c0_i32 = arith.constant 0 : i32
    %c0_i32_0 = arith.constant 0 : i32
    %c0_i32_1 = arith.constant 0 : i32
    return %c0_i32, %c0_i32_0 : i32, i32
  }
}

</mosaic_0001>

<llo_original>
// kernel: defense_diff_forward.1
$region0: #{defense_diff_forward.1}
  #allocation0 [shape = 'u32[]', space=smem, size = 0x4, offset = 0x4, fixed_abs, tag = 'smem constant byte address 0x4 - core index']
  #allocation1 [shape = 'u32[144,128]{1,0:T(1,128)}', space=vmem, size = 0x12000, scoped, tag = 'internal scratch']
  #allocation2 [shape = 'f32[4,512]{1,0:T(4,128)}', space=vmem, size = 0x2000, scoped, tag = 'scratch operand']
  %s0 = inlined_call_operand.vmem [shape: f32[50], index: 0, kind: input, shape index: {}]
  %s1 = inlined_call_operand.vmem [shape: f32[4,512], index: 1, kind: input, shape index: {}]
  %s2 = inlined_call_operand.vmem [shape: f32[4,512], index: 2, kind: input, shape index: {}]
  %s3 = inlined_call_operand.vmem [shape: f32[10,4,512], index: 3, kind: input, shape index: {}]
  %s4 = inlined_call_operand.vmem [shape: f32[10,32,1], index: 4, kind: input, shape index: {}]
  %s5 = inlined_call_operand.vmem [shape: f32[32,32], index: 5, kind: input, shape index: {}]
  %s6 = inlined_call_operand.vmem [shape: f32[32,1], index: 6, kind: input, shape index: {}]
  %s7 = inlined_call_operand.vmem [shape: f32[9,32,4], index: 7, kind: input, shape index: {}]
  %s8 = inlined_call_operand.vmem [shape: f32[32,1], index: 8, kind: input, shape index: {}]
  %s9 = inlined_call_operand.vmem [shape: f32[9,4,32], index: 9, kind: input, shape index: {}]
  %s10 = inlined_call_operand.vmem [shape: f32[4,1], index: 10, kind: input, shape index: {}]
  %s11 = inlined_call_operand.vmem [shape: f32[9,1,512], index: 11, kind: input, shape index: {}]
  %s12 = inlined_call_operand.vmem [shape: f32[4,512,20], index: 12, kind: input, shape index: {}]
  %s13 = inlined_call_operand.vmem [shape: f32[1,20], index: 13, kind: input, shape index: {}]
  %s14 = inlined_call_operand.vmem [shape: f32[1,20], index: 14, kind: output, shape index: {}]
  %s15 = sld [smem:[#allocation0]]
  $region101: #{defense_diff_forward.1} parent=0
    _
  %s17 = ssub.s32 1, %s15
  %s18 = scalar_select 0, %s17, %s15
  $region1: #{defense_diff_forward.1} parent=0
    #allocation3 [shape = 'u8[512]{0}', space=smem, size = 0x200, scoped, tag = 'input window, operand 0, single buffered']
    #allocation4 [shape = 's32[2]{0}', space=sflag, size = 0x8, scoped, tag = 'scoped memory for defense_diff_forward.1']
    %19 = vsyncpa [#allocation4], 0
    loop: start=0, step=1, limit=12
    $region2: #{defense_diff_forward.1} parent=1 // loop_pre_header
      _
    $region3: #{defense_diff_forward.1} parent=1 // loop_header
      %s21 = sphi 0, %s25
      %p22 = scmp.ge.s32.totalorder %s21, 12
      %s29 = sphi 0, %s29
      %s31 = sphi 0, %s29
      %s32 = sphi 0, %s31
      %s46 = sphi 0, %s32
      %s50 = sphi 0, %s50
      %s52 = sphi 0, %s50
      %s53 = sphi 0, %s52
      %s67 = sphi 0, %s53
      %s71 = sphi 0, %s71
      %s73 = sphi 0, %s71
      %s74 = sphi 0, %s73
      %s88 = sphi 0, %s74
      %s94 = sphi 0, %s96
      %s97 = sphi 0, %s94
      %s98 = sphi 0, %s97
      %s114 = sphi 0, %s98
      %s120 = sphi 0, %s122
      %s123 = sphi 0, %s120
      %s124 = sphi 0, %s123
      %s140 = sphi 0, %s124
      %s144 = sphi 0, %s144
      %s146 = sphi 0, %s144
      %s147 = sphi 0, %s146
      %s161 = sphi 0, %s147
      %s165 = sphi 0, %s165
      %s167 = sphi 0, %s165
      %s168 = sphi 0, %s167
      %s182 = sphi 0, %s168
      %s186 = sphi 0, %s186
      %s188 = sphi 0, %s186
      %s189 = sphi 0, %s188
      %s203 = sphi 0, %s189
      %s207 = sphi 0, %s207
      %s209 = sphi 0, %s207
      %s210 = sphi 0, %s209
      %s224 = sphi 0, %s210
      %s228 = sphi 0, %s228
      %s230 = sphi 0, %s228
      %s231 = sphi 0, %s230
      %s245 = sphi 0, %s231
      %s249 = sphi 0, %s249
      %s251 = sphi 0, %s249
      %s252 = sphi 0, %s251
      %s266 = sphi 0, %s252
      %s270 = sphi 0, %s270
      %s272 = sphi 0, %s270
      %s273 = sphi 0, %s272
      %s287 = sphi 0, %s273
      %s291 = sphi 0, %s291
      %s293 = sphi 0, %s291
      %s294 = sphi 0, %s293
      %s308 = sphi 0, %s294
      %s312 = sphi 0, %s312
      %s314 = sphi 0, %s312
      %s315 = sphi 0, %s314
      %s329 = sphi 0, %s315
      %s333 = sphi 0, %s333
      %s335 = sphi 0, %s333
      %s336 = sphi 0, %s335
      %s350 = sphi 0, %s336
    $region4: #{defense_diff_forward.1} parent=1 // loop_header_branch
      %24 = sbr.rel (%p22) target = $region8
    $region5: #{defense_diff_forward.1} parent=1 // loop_body
      %s26 = ssub.s32 %s21, 1
      %s27 = ssub.s32 %s21, 2
      %s28 = sadd.s32 %s21, 1
      %s30 = sadd.s32 %s29, 1
      %p33 = scmp.eq.s32.totalorder %s21, 9
      %p34 = scmp.ne.s32.totalorder %s29, %s31
      %p35 = scmp.eq.s32.totalorder %s21, 0
      %p36 = por %p34, %p35
      %p37 = scmp.ne.s32.totalorder %s29, %s31
      %p38 = scmp.eq.s32.totalorder %s26, 9
      %p39 = por %p37, %p38
      %p40 = scmp.ne.s32.totalorder %s31, %s32
      %p41 = scmp.eq.s32.totalorder %s26, 0
      %p42 = por %p40, %p41
      %p43 = scmp.ne.s32.totalorder %s31, %s32
      %p44 = scmp.eq.s32.totalorder %s27, 9
      %p45 = por %p43, %p44
      %p47 = scmp.ne.s32.totalorder %s32, %s46
      %p48 = scmp.eq.s32.totalorder %s27, 0
      %p49 = por %p47, %p48
      %s51 = sadd.s32 %s50, 1
      %p54 = scmp.eq.s32.totalorder %s21, 9
      %p55 = scmp.ne.s32.totalorder %s50, %s52
      %p56 = scmp.eq.s32.totalorder %s21, 0
      %p57 = por %p55, %p56
      %p58 = scmp.ne.s32.totalorder %s50, %s52
      %p59 = scmp.eq.s32.totalorder %s26, 9
      %p60 = por %p58, %p59
      %p61 = scmp.ne.s32.totalorder %s52, %s53
      %p62 = scmp.eq.s32.totalorder %s26, 0
      %p63 = por %p61, %p62
      %p64 = scmp.ne.s32.totalorder %s52, %s53
      %p65 = scmp.eq.s32.totalorder %s27, 9
      %p66 = por %p64, %p65
      %p68 = scmp.ne.s32.totalorder %s53, %s67
      %p69 = scmp.eq.s32.totalorder %s27, 0
      %p70 = por %p68, %p69
      %s72 = sadd.s32 %s71, 1
      %p75 = scmp.eq.s32.totalorder %s21, 9
      %p76 = scmp.ne.s32.totalorder %s71, %s73
      %p77 = scmp.eq.s32.totalorder %s21, 0
      %p78 = por %p76, %p77
      %p79 = scmp.ne.s32.totalorder %s71, %s73
      %p80 = scmp.eq.s32.totalorder %s26, 9
      %p81 = por %p79, %p80
      %p82 = scmp.ne.s32.totalorder %s73, %s74
      %p83 = scmp.eq.s32.totalorder %s26, 0
      %p84 = por %p82, %p83
      %p85 = scmp.ne.s32.totalorder %s73, %s74
      %p86 = scmp.eq.s32.totalorder %s27, 9
      %p87 = por %p85, %p86
      %p89 = scmp.ne.s32.totalorder %s74, %s88
      %p90 = scmp.eq.s32.totalorder %s27, 0
      %p91 = por %p89, %p90
      %s92 = ssub.s32 %s21, %s28
      %p93 = scmp.eq.s32.totalorder %s92, 0
      %s95 = sadd.s32 %s94, 1
      %s96 = scalar_select %p93, %s94, %s95
      %p99 = pneg %p93
      %p100 = scmp.eq.s32.totalorder %s21, 9
      %p101 = por %p99, %p100
      %p102 = scmp.ne.s32.totalorder %s94, %s97
      %p103 = scmp.eq.s32.totalorder %s21, 0
      %p104 = por %p102, %p103
      %p105 = scmp.ne.s32.totalorder %s94, %s97
      %p106 = scmp.eq.s32.totalorder %s26, 9
      %p107 = por %p105, %p106
      %p108 = scmp.ne.s32.totalorder %s97, %s98
      %p109 = scmp.eq.s32.totalorder %s26, 0
      %p110 = por %p108, %p109
      %p111 = scmp.ne.s32.totalorder %s97, %s98
      %p112 = scmp.eq.s32.totalorder %s27, 9
      %p113 = por %p111, %p112
      %p115 = scmp.ne.s32.totalorder %s98, %s114
      %p116 = scmp.eq.s32.totalorder %s27, 0
      %p117 = por %p115, %p116
      %s118 = ssub.s32 %s21, %s28
      %p119 = scmp.eq.s32.totalorder %s118, 0
      %s121 = sadd.s32 %s120, 1
      %s122 = scalar_select %p119, %s120, %s121
      %p125 = pneg %p119
      %p126 = scmp.eq.s32.totalorder %s21, 9
      %p127 = por %p125, %p126
      %p128 = scmp.ne.s32.totalorder %s120, %s123
      %p129 = scmp.eq.s32.totalorder %s21, 0
      %p130 = por %p128, %p129
      %p131 = scmp.ne.s32.totalorder %s120, %s123
      %p132 = scmp.eq.s32.totalorder %s26, 9
      %p133 = por %p131, %p132
      %p134 = scmp.ne.s32.totalorder %s123, %s124
      %p135 = scmp.eq.s32.totalorder %s26, 0
      %p136 = por %p134, %p135
      %p137 = scmp.ne.s32.totalorder %s123, %s124
      %p138 = scmp.eq.s32.totalorder %s27, 9
      %p139 = por %p137, %p138
      %p141 = scmp.ne.s32.totalorder %s124, %s140
      %p142 = scmp.eq.s32.totalorder %s27, 0
      %p143 = por %p141, %p142
      %s145 = sadd.s32 %s144, 1
      %p148 = scmp.eq.s32.totalorder %s21, 9
      %p149 = scmp.ne.s32.totalorder %s144, %s146
      %p150 = scmp.eq.s32.totalorder %s21, 0
      %p151 = por %p149, %p150
      %p152 = scmp.ne.s32.totalorder %s144, %s146
      %p153 = scmp.eq.s32.totalorder %s26, 9
      %p154 = por %p152, %p153
      %p155 = scmp.ne.s32.totalorder %s146, %s147
      %p156 = scmp.eq.s32.totalorder %s26, 0
      %p157 = por %p155, %p156
      %p158 = scmp.ne.s32.totalorder %s146, %s147
      %p159 = scmp.eq.s32.totalorder %s27, 9
      %p160 = por %p158, %p159
      %p162 = scmp.ne.s32.totalorder %s147, %s161
      %p163 = scmp.eq.s32.totalorder %s27, 0
      %p164 = por %p162, %p163
      %s166 = sadd.s32 %s165, 1
      %p169 = scmp.eq.s32.totalorder %s21, 9
      %p170 = scmp.ne.s32.totalorder %s165, %s167
      %p171 = scmp.eq.s32.totalorder %s21, 0
      %p172 = por %p170, %p171
      %p173 = scmp.ne.s32.totalorder %s165, %s167
      %p174 = scmp.eq.s32.totalorder %s26, 9
      %p175 = por %p173, %p174
      %p176 = scmp.ne.s32.totalorder %s167, %s168
      %p177 = scmp.eq.s32.totalorder %s26, 0
      %p178 = por %p176, %p177
      %p179 = scmp.ne.s32.totalorder %s167, %s168
      %p180 = scmp.eq.s32.totalorder %s27, 9
      %p181 = por %p179, %p180
      %p183 = scmp.ne.s32.totalorder %s168, %s182
      %p184 = scmp.eq.s32.totalorder %s27, 0
      %p185 = por %p183, %p184
      %s187 = sadd.s32 %s186, 1
      %p190 = scmp.eq.s32.totalorder %s21, 9
      %p191 = scmp.ne.s32.totalorder %s186, %s188
      %p192 = scmp.eq.s32.totalorder %s21, 0
      %p193 = por %p191, %p192
      %p194 = scmp.ne.s32.totalorder %s186, %s188
      %p195 = scmp.eq.s32.totalorder %s26, 9
      %p196 = por %p194, %p195
      %p197 = scmp.ne.s32.totalorder %s188, %s189
      %p198 = scmp.eq.s32.totalorder %s26, 0
      %p199 = por %p197, %p198
      %p200 = scmp.ne.s32.totalorder %s188, %s189
      %p201 = scmp.eq.s32.totalorder %s27, 9
      %p202 = por %p200, %p201
      %p204 = scmp.ne.s32.totalorder %s189, %s203
      %p205 = scmp.eq.s32.totalorder %s27, 0
      %p206 = por %p204, %p205
      %s208 = sadd.s32 %s207, 1
      %p211 = scmp.eq.s32.totalorder %s21, 9
      %p212 = scmp.ne.s32.totalorder %s207, %s209
      %p213 = scmp.eq.s32.totalorder %s21, 0
      %p214 = por %p212, %p213
      %p215 = scmp.ne.s32.totalorder %s207, %s209
      %p216 = scmp.eq.s32.totalorder %s26, 9
      %p217 = por %p215, %p216
      %p218 = scmp.ne.s32.totalorder %s209, %s210
      %p219 = scmp.eq.s32.totalorder %s26, 0
      %p220 = por %p218, %p219
      %p221 = scmp.ne.s32.totalorder %s209, %s210
      %p222 = scmp.eq.s32.totalorder %s27, 9
      %p223 = por %p221, %p222
      %p225 = scmp.ne.s32.totalorder %s210, %s224
      %p226 = scmp.eq.s32.totalorder %s27, 0
      %p227 = por %p225, %p226
      %s229 = sadd.s32 %s228, 1
      %p232 = scmp.eq.s32.totalorder %s21, 9
      %p233 = scmp.ne.s32.totalorder %s228, %s230
      %p234 = scmp.eq.s32.totalorder %s21, 0
      %p235 = por %p233, %p234
      %p236 = scmp.ne.s32.totalorder %s228, %s230
      %p237 = scmp.eq.s32.totalorder %s26, 9
      %p238 = por %p236, %p237
      %p239 = scmp.ne.s32.totalorder %s230, %s231
      %p240 = scmp.eq.s32.totalorder %s26, 0
      %p241 = por %p239, %p240
      %p242 = scmp.ne.s32.totalorder %s230, %s231
      %p243 = scmp.eq.s32.totalorder %s27, 9
      %p244 = por %p242, %p243
      %p246 = scmp.ne.s32.totalorder %s231, %s245
      %p247 = scmp.eq.s32.totalorder %s27, 0
      %p248 = por %p246, %p247
      %s250 = sadd.s32 %s249, 1
      %p253 = scmp.eq.s32.totalorder %s21, 9
      %p254 = scmp.ne.s32.totalorder %s249, %s251
      %p255 = scmp.eq.s32.totalorder %s21, 0
      %p256 = por %p254, %p255
      %p257 = scmp.ne.s32.totalorder %s249, %s251
      %p258 = scmp.eq.s32.totalorder %s26, 9
      %p259 = por %p257, %p258
      %p260 = scmp.ne.s32.totalorder %s251, %s252
      %p261 = scmp.eq.s32.totalorder %s26, 0
      %p262 = por %p260, %p261
      %p263 = scmp.ne.s32.totalorder %s251, %s252
      %p264 = scmp.eq.s32.totalorder %s27, 9
      %p265 = por %p263, %p264
      %p267 = scmp.ne.s32.totalorder %s252, %s266
      %p268 = scmp.eq.s32.totalorder %s27, 0
      %p269 = por %p267, %p268
      %s271 = sadd.s32 %s270, 1
      %p274 = scmp.eq.s32.totalorder %s21, 9
      %p275 = scmp.ne.s32.totalorder %s270, %s272
      %p276 = scmp.eq.s32.totalorder %s21, 0
      %p277 = por %p275, %p276
      %p278 = scmp.ne.s32.totalorder %s270, %s272
      %p279 = scmp.eq.s32.totalorder %s26, 9
      %p280 = por %p278, %p279
      %p281 = scmp.ne.s32.totalorder %s272, %s273
      %p282 = scmp.eq.s32.totalorder %s26, 0
      %p283 = por %p281, %p282
      %p284 = scmp.ne.s32.totalorder %s272, %s273
      %p285 = scmp.eq.s32.totalorder %s27, 9
      %p286 = por %p284, %p285
      %p288 = scmp.ne.s32.totalorder %s273, %s287
      %p289 = scmp.eq.s32.totalorder %s27, 0
      %p290 = por %p288, %p289
      %s292 = sadd.s32 %s291, 1
      %p295 = scmp.eq.s32.totalorder %s21, 9
      %p296 = scmp.ne.s32.totalorder %s291, %s293
      %p297 = scmp.eq.s32.totalorder %s21, 0
      %p298 = por %p296, %p297
      %p299 = scmp.ne.s32.totalorder %s291, %s293
      %p300 = scmp.eq.s32.totalorder %s26, 9
      %p301 = por %p299, %p300
      %p302 = scmp.ne.s32.totalorder %s293, %s294
      %p303 = scmp.eq.s32.totalorder %s26, 0
      %p304 = por %p302, %p303
      %p305 = scmp.ne.s32.totalorder %s293, %s294
      %p306 = scmp.eq.s32.totalorder %s27, 9
      %p307 = por %p305, %p306
      %p309 = scmp.ne.s32.totalorder %s294, %s308
      %p310 = scmp.eq.s32.totalorder %s27, 0
      %p311 = por %p309, %p310
      %s313 = sadd.s32 %s312, 1
      %p316 = scmp.eq.s32.totalorder %s21, 9
      %p317 = scmp.ne.s32.totalorder %s312, %s314
      %p318 = scmp.eq.s32.totalorder %s21, 0
      %p319 = por %p317, %p318
      %p320 = scmp.ne.s32.totalorder %s312, %s314
      %p321 = scmp.eq.s32.totalorder %s26, 9
      %p322 = por %p320, %p321
      %p323 = scmp.ne.s32.totalorder %s314, %s315
      %p324 = scmp.eq.s32.totalorder %s26, 0
      %p325 = por %p323, %p324
      %p326 = scmp.ne.s32.totalorder %s314, %s315
      %p327 = scmp.eq.s32.totalorder %s27, 9
      %p328 = por %p326, %p327
      %p330 = scmp.ne.s32.totalorder %s315, %s329
      %p331 = scmp.eq.s32.totalorder %s27, 0
      %p332 = por %p330, %p331
      %s334 = sadd.s32 %s333, 1
      %p337 = scmp.eq.s32.totalorder %s21, 9
      %p338 = scmp.ne.s32.totalorder %s333, %s335
      %p339 = scmp.eq.s32.totalorder %s21, 0
      %p340 = por %p338, %p339
      %p341 = scmp.ne.s32.totalorder %s333, %s335
      %p342 = scmp.eq.s32.totalorder %s26, 9
      %p343 = por %p341, %p342
      %p344 = scmp.ne.s32.totalorder %s335, %s336
      %p345 = scmp.eq.s32.totalorder %s26, 0
      %p346 = por %p344, %p345
      %p347 = scmp.ne.s32.totalorder %s335, %s336
      %p348 = scmp.eq.s32.totalorder %s27, 9
      %p349 = por %p347, %p348
      %p351 = scmp.ne.s32.totalorder %s336, %s350
      %p352 = scmp.eq.s32.totalorder %s27, 0
      %p353 = por %p351, %p352
      %p354 = scmp.le.s32.totalorder 1, %s21
      %p355 = scmp.lt.s32.totalorder %s21, 11
      %p356 = pnand %p354, %p355
      %p357 = pneg %p356
      // Predicated region
      $region9: #{defense_diff_forward.1} parent=5 // pred_check
        _
      $region10: #{defense_diff_forward.1} parent=5 // pred_check_branch
        %359 = sbr.rel (%p356) target = $region12
      $region11: #{defense_diff_forward.1} parent=5 // pred_region
        %s360 = ssub.s32 %s21, 1
        // Predicated region
        $region13: #{defense_diff_forward.1} parent=11 // pred_check
          %p361 = pneg %p42
        $region14: #{defense_diff_forward.1} parent=11 // pred_check_branch
          %363 = sbr.rel (%p361) target = $region16
        $region15: #{defense_diff_forward.1} parent=11 // pred_region
          %s365 = ssub.s32 16, 16
          %366 = vsyncadd [#allocation4], %s365
          %s368 = sshll.u32 %s0, 4
          %s369 = int_to_ptr.vmem [resolvable:$true] %s368
          %371 = dma.vmem_to_smem %s369, 16, [#allocation3], [#allocation4]
        $region16: #{defense_diff_forward.1} parent=11 // pred_fallthru
          _
        // Predicated region
        $region17: #{defense_diff_forward.1} parent=11 // pred_check
          %p372 = pneg %p63
        $region18: #{defense_diff_forward.1} parent=11 // pred_check_branch
          %374 = sbr.rel (%p372) target = $region20
        $region19: #{defense_diff_forward.1} parent=11 // pred_region
          _
        $region20: #{defense_diff_forward.1} parent=11 // pred_fallthru
          _
        // Predicated region
        $region21: #{defense_diff_forward.1} parent=11 // pred_check
          %p375 = pneg %p84
        $region22: #{defense_diff_forward.1} parent=11 // pred_check_branch
          %377 = sbr.rel (%p375) target = $region24
        $region23: #{defense_diff_forward.1} parent=11 // pred_region
          _
        $region24: #{defense_diff_forward.1} parent=11 // pred_fallthru
          _
        // Predicated region
        $region25: #{defense_diff_forward.1} parent=11 // pred_check
          %p378 = pneg %p157
        $region26: #{defense_diff_forward.1} parent=11 // pred_check_branch
          %380 = sbr.rel (%p378) target = $region28
        $region27: #{defense_diff_forward.1} parent=11 // pred_region
          _
        $region28: #{defense_diff_forward.1} parent=11 // pred_fallthru
          _
        // Predicated region
        $region29: #{defense_diff_forward.1} parent=11 // pred_check
          %p381 = pneg %p178
        $region30: #{defense_diff_forward.1} parent=11 // pred_check_branch
          %383 = sbr.rel (%p381) target = $region32
        $region31: #{defense_diff_forward.1} parent=11 // pred_region
          _
        $region32: #{defense_diff_forward.1} parent=11 // pred_fallthru
          _
        // Predicated region
        $region33: #{defense_diff_forward.1} parent=11 // pred_check
          %p384 = pneg %p199
        $region34: #{defense_diff_forward.1} parent=11 // pred_check_branch
          %386 = sbr.rel (%p384) target = $region36
        $region35: #{defense_diff_forward.1} parent=11 // pred_region
          _
        $region36: #{defense_diff_forward.1} parent=11 // pred_fallthru
          _
        // Predicated region
        $region37: #{defense_diff_forward.1} parent=11 // pred_check
          %p387 = pneg %p220
        $region38: #{defense_diff_forward.1} parent=11 // pred_check_branch
          %389 = sbr.rel (%p387) target = $region40
        $region39: #{defense_diff_forward.1} parent=11 // pred_region
          _
        $region40: #{defense_diff_forward.1} parent=11 // pred_fallthru
          _
        // Predicated region
        $region41: #{defense_diff_forward.1} parent=11 // pred_check
          %p390 = pneg %p241
        $region42: #{defense_diff_forward.1} parent=11 // pred_check_branch
          %392 = sbr.rel (%p390) target = $region44
        $region43: #{defense_diff_forward.1} parent=11 // pred_region
          _
        $region44: #{defense_diff_forward.1} parent=11 // pred_fallthru
          _
        // Predicated region
        $region45: #{defense_diff_forward.1} parent=11 // pred_check
          %p393 = pneg %p262
        $region46: #{defense_diff_forward.1} parent=11 // pred_check_branch
          %395 = sbr.rel (%p393) target = $region48
        $region47: #{defense_diff_forward.1} parent=11 // pred_region
          _
        $region48: #{defense_diff_forward.1} parent=11 // pred_fallthru
          _
        // Predicated region
        $region49: #{defense_diff_forward.1} parent=11 // pred_check
          %p396 = pneg %p283
        $region50: #{defense_diff_forward.1} parent=11 // pred_check_branch
          %398 = sbr.rel (%p396) target = $region52
        $region51: #{defense_diff_forward.1} parent=11 // pred_region
          _
        $region52: #{defense_diff_forward.1} parent=11 // pred_fallthru
          _
        // Predicated region
        $region53: #{defense_diff_forward.1} parent=11 // pred_check
          %p399 = pneg %p304
        $region54: #{defense_diff_forward.1} parent=11 // pred_check_branch
          %401 = sbr.rel (%p399) target = $region56
        $region55: #{defense_diff_forward.1} parent=11 // pred_region
          _
        $region56: #{defense_diff_forward.1} parent=11 // pred_fallthru
          _
        // Predicated region
        $region57: #{defense_diff_forward.1} parent=11 // pred_check
          %p402 = pneg %p325
        $region58: #{defense_diff_forward.1} parent=11 // pred_check_branch
          %404 = sbr.rel (%p402) target = $region60
        $region59: #{defense_diff_forward.1} parent=11 // pred_region
          _
        $region60: #{defense_diff_forward.1} parent=11 // pred_fallthru
          _
      $region12: #{defense_diff_forward.1} parent=5 // pred_fallthru
        _
      %p405 = scmp.lt.s32.totalorder %s21, 10
      // Predicated region
      $region61: #{defense_diff_forward.1} parent=5 // pred_check
        %p406 = pneg %p405
      $region62: #{defense_diff_forward.1} parent=5 // pred_check_branch
        %408 = sbr.rel (%p406) target = $region64
      $region63: #{defense_diff_forward.1} parent=5 // pred_region
        // Predicated region
        $region65: #{defense_diff_forward.1} parent=63 // pred_check
          %p409 = pneg %p104
        $region66: #{defense_diff_forward.1} parent=63 // pred_check_branch
          %411 = sbr.rel (%p409) target = $region68
        $region67: #{defense_diff_forward.1} parent=63 // pred_region
          %p412 = scmp.lt.s32.totalorder %s21, 9
          %s413 = scalar_select %p412, %s21, 9
          %s414 = smul.addr %s413, 4
          %s415 = smul.addr %s414, 4
          %s416 = scalar_lea.vmem %s3, %s415
        $region68: #{defense_diff_forward.1} parent=63 // pred_fallthru
          _
        // Predicated region
        $region69: #{defense_diff_forward.1} parent=63 // pred_check
          %p417 = pneg %p130
        $region70: #{defense_diff_forward.1} parent=63 // pred_check_branch
          %419 = sbr.rel (%p417) target = $region72
        $region71: #{defense_diff_forward.1} parent=63 // pred_region
          %p420 = scmp.lt.s32.totalorder %s21, 9
          %s421 = scalar_select %p420, %s21, 9
          %s422 = smul.addr %s421, 4
          %s423 = smul.addr %s422, 8
          %s424 = scalar_lea.vmem %s4, %s423
        $region72: #{defense_diff_forward.1} parent=63 // pred_fallthru
          _
      $region64: #{defense_diff_forward.1} parent=5 // pred_fallthru
        _
      %p425 = scmp.le.s32.totalorder 1, %s21
      %p426 = scmp.lt.s32.totalorder %s21, 11
      %p427 = pnand %p425, %p426
      %p428 = pneg %p427
      // Predicated region
      $region73: #{defense_diff_forward.1} parent=5 // pred_check
        _
      $region74: #{defense_diff_forward.1} parent=5 // pred_check_branch
        %430 = sbr.rel (%p427) target = $region76
      $region75: #{defense_diff_forward.1} parent=5 // pred_region
        %s431 = ssub.s32 %s21, 1
        // Predicated region
        $region77: #{defense_diff_forward.1} parent=75 // pred_check
          %p432 = pneg %p42
        $region78: #{defense_diff_forward.1} parent=75 // pred_check_branch
          %434 = sbr.rel (%p432) target = $region80
        $region79: #{defense_diff_forward.1} parent=75 // pred_region
          %435 = dma.done [#allocation4], 16
        $region80: #{defense_diff_forward.1} parent=75 // pred_fallthru
          _
        %436 = sfence
        %p437 = pneg %p42
        %p438 = pneg %p39
        %p439 = pneg %p63
        %p440 = pneg %p60
        %p441 = pneg %p84
        %p442 = pneg %p81
        %p443 = scmp.lt.s32.totalorder %s26, 9
        %s444 = scalar_select %p443, %s26, 9
        %s445 = smul.addr %s444, 4
        %s446 = smul.addr %s445, 4
        %s447 = scalar_lea.vmem %s3, %s446
        %p448 = pneg %p110
        %p449 = pneg %p107
        %p450 = scmp.lt.s32.totalorder %s26, 9
        %s451 = scalar_select %p450, %s26, 9
        %s452 = smul.addr %s451, 4
        %s453 = smul.addr %s452, 8
        %s454 = scalar_lea.vmem %s4, %s453
        %p455 = pneg %p136
        %p456 = pneg %p133
        %p457 = pneg %p157
        %p458 = pneg %p154
        %p459 = pneg %p178
        %p460 = pneg %p175
        %p461 = pneg %p199
        %p462 = pneg %p196
        %p463 = pneg %p220
        %p464 = pneg %p217
        %p465 = pneg %p241
        %p466 = pneg %p238
        %p467 = pneg %p262
        %p468 = pneg %p259
        %p469 = pneg %p283
        %p470 = pneg %p280
        %p471 = pneg %p304
        %p472 = pneg %p301
        %p473 = pneg %p325
        %p474 = pneg %p322
        %p475 = pneg %p346
        %p476 = pneg %p343
        %p477 = scmp.lt.s32.totalorder %s26, 9
        %s478 = scalar_select %p477, %s26, 9
        %s479 = smul.addr %s478, 4
        %s480 = smul.addr %s479, 4
        %s481 = scalar_lea.vmem %s3, %s480
        %p482 = scmp.lt.s32.totalorder %s26, 9
        %s483 = scalar_select %p482, %s26, 9
        %s484 = smul.addr %s483, 4
        %s485 = smul.addr %s484, 8
        %s486 = scalar_lea.vmem %s4, %s485
        %p487 = scmp.eq.s32.totalorder %s26, 0
        // Predicated region
        $region81: #{defense_diff_forward.1} parent=75 // pred_check
          %p488 = pneg %p487
        $region82: #{defense_diff_forward.1} parent=75 // pred_check_branch
          %490 = sbr.rel (%p488) target = $region84
        $region83: #{defense_diff_forward.1} parent=75 // pred_region
          %v491 = vld [vmem:[%s1] sm:$0xff]
          %v492 = vld [vmem:[%s1 + $0x8] sm:$0xff]
          %v493 = vld [vmem:[%s2] sm:$0xff]
          %v494 = vld [vmem:[%s2 + $0x8] sm:$0xff]
          %v495 = vmul.f32 %v491, 1.8922385
          %v496 = vmul.f32 %v492, 1.8922385
          %v497 = vmul.f32 %v493, 0.32381848
          %v498 = vmul.f32 %v494, 0.32381848
          %v499 = vadd.f32 %v495, %v497
          %v500 = vadd.f32 %v496, %v498
          %v501 = vsub.f32 %v499, 0.94611925
          %v502 = vsub.f32 %v500, 0.94611925
          %503 = vst [vmem:[#allocation2] sm:$0xff] %v501
          %504 = vst [vmem:[#allocation2 + $0x8] sm:$0xff] %v502
        $region84: #{defense_diff_forward.1} parent=75 // pred_fallthru
          _
        %v505 = vld [vmem:[#allocation2] sm:$0xff]
        %v506 = vld [vmem:[#allocation2 + $0x8] sm:$0xff]
        %v507 = vld [vmem:[%s5] sm:$0xff]
        %v508 = vld [vmem:[%s5 + $0x8] sm:$0xff]
        %v509 = vld [vmem:[%s5 + $0x10] sm:$0xff]
        %v510 = vld [vmem:[%s5 + $0x18] sm:$0xff]
        %v511 = vld [vmem:[%s486] sm:$0xff]
        %v512 = vld [vmem:[%s486 + $0x8] sm:$0xff]
        %v513 = vld [vmem:[%s486 + $0x10] sm:$0xff]
        %v514 = vld [vmem:[%s486 + $0x18] sm:$0xff]
        %v515 = vld [vmem:[%s6] sm:$0xff]
        %v516 = vld [vmem:[%s6 + $0x8] sm:$0xff]
        %v517 = vld [vmem:[%s6 + $0x10] sm:$0xff]
        %v518 = vld [vmem:[%s6 + $0x18] sm:$0xff]
        %vm519 = vcmask 261120
        %v521 = vsel %vm519, %v507, 0
        %v524 = vsel %vm519, %v508, 0
        %v527 = vsel %vm519, %v509, 0
        %v530 = vsel %vm519, %v510, 0
        %532 = vmatprep.subr.mxu0 0.0
        %533 = vmatpush1.msra.mxu0 0.0
        %534 = vmatprep.subr.mxu0 0.0
        %535 = vmatpush1.msra.mxu0 0.0
        %536 = vmatprep.subr.mxu0 0.0
        %537 = vmatpush1.msra.mxu0 0.0
        %538 = vmatprep.subr.mxu0 0.0
        %539 = vmatpush1.msra.mxu0 0.0
        %540 = vmatprep.subr.mxu0 0.0
        %541 = vmatpush1.msra.mxu0 0.0
        %542 = vmatprep.subr.mxu0 0.0
        %543 = vmatpush1.msra.mxu0 0.0
        %544 = vmatprep.subr.mxu0 0.0
        %545 = vmatpush1.msra.mxu0 0.0
        %546 = vmatprep.subr.mxu0 0.0
        %547 = vmatpush1.msra.mxu0 0.0
        %548 = vmatprep.subr.mxu0 0.0
        %549 = vmatpush1.msra.mxu0 0.0
        %550 = vmatprep.subr.mxu0 0.0
        %551 = vmatpush1.msra.mxu0 0.0
        %552 = vmatprep.subr.mxu0 0.0
        %553 = vmatpush1.msra.mxu0 0.0
        %554 = vmatprep.subr.mxu0 0.0
        %555 = vmatpush1.msra.mxu0 0.0
        %556 = vmatprep.subr.mxu0 0.0
        %557 = vmatpush1.msra.mxu0 %v514
        %558 = vmatprep.subr.mxu0 0.0
        %559 = vmatpush1.msra.mxu0 %v513
        %560 = vmatprep.subr.mxu0 0.0
        %561 = vmatpush1.msra.mxu0 %v512
        %562 = vmatprep.subr.mxu0 0.0
        %563 = vmatpush1.msra.mxu0 %v511
        %564 = vmatprep.subr.mxu0 0.0
        %565 = vmatpush2.msra.mxu0 0.0
        %566 = vmatprep.subr.mxu0 0.0
        %567 = vmatpush2.msra.mxu0 0.0
        %568 = vmatprep.subr.mxu0 0.0
        %569 = vmatpush2.msra.mxu0 0.0
        %570 = vmatprep.subr.mxu0 0.0
        %571 = vmatpush2.msra.mxu0 0.0
        %572 = vmatprep.subr.mxu0 0.0
        %573 = vmatpush2.msra.mxu0 0.0
        %574 = vmatprep.subr.mxu0 0.0
        %575 = vmatpush2.msra.mxu0 0.0
        %576 = vmatprep.subr.mxu0 0.0
        %577 = vmatpush2.msra.mxu0 0.0
        %578 = vmatprep.subr.mxu0 0.0
        %579 = vmatpush2.msra.mxu0 0.0
        %580 = vmatprep.subr.mxu0 0.0
        %581 = vmatpush2.msra.mxu0 0.0
        %582 = vmatprep.subr.mxu0 0.0
        %583 = vmatpush2.msra.mxu0 0.0
        %584 = vmatprep.subr.mxu0 0.0
        %585 = vmatpush2.msra.mxu0 0.0
        %586 = vmatprep.subr.mxu0 0.0
        %587 = vmatpush2.msra.mxu0 0.0
        %588 = vmatprep.subr.mxu0 0.0
        %589 = vmatpush2.msra.mxu0 0.0
        %590 = vmatprep.subr.mxu0 0.0
        %591 = vmatpush2.msra.mxu0 0.0
        %592 = vmatprep.subr.mxu0 0.0
        %593 = vmatpush2.msra.mxu0 0.0
        %594 = vmatprep.subr.mxu0 0.0
        %595 = vmatpush2.msra.mxu0 0.0
        %596 = vmatprep.mubr.f32.mxu0 0.0
        %597 = vmatmul.mubr.f32.gmra.mxu0 %v521
        %v598 = vpop.f32.mrf.mxu0
        %v599 = vadd.f32 %v515, %v598
        %v600 = vpop.f32.mrf.mxu0
        %601 = vmatprep.mubr.f32.mxu0 0.0
        %602 = vmatmul.mubr.f32.gmra.mxu0 %v524
        %v603 = vpop.f32.mrf.mxu0
        %v604 = vadd.f32 %v516, %v603
        %v605 = vpop.f32.mrf.mxu0
        %606 = vmatprep.mubr.f32.mxu0 0.0
        %607 = vmatmul.mubr.f32.gmra.mxu0 %v527
        %v608 = vpop.f32.mrf.mxu0
        %v609 = vadd.f32 %v517, %v608
        %v610 = vpop.f32.mrf.mxu0
        %611 = vmatprep.mubr.f32.mxu0 0.0
        %612 = vmatmul.mubr.f32.gmra.mxu0 %v530
        %v613 = vpop.f32.mrf.mxu0
        %v614 = vadd.f32 %v518, %v613
        %v615 = vpop.f32.mrf.mxu0
        %616 = vdwg.mxu0
        %v617 = vxor.u32 %v599, 2147483648
        %v618 = vxor.u32 %v604, 2147483648
        %v619 = vxor.u32 %v609, 2147483648
        %v620 = vxor.u32 %v614, 2147483648
        %v621 = vmul.f32 %v617, 1.442695
        %v622 = vpow.pop %v621
        %v623 = vmul.f32 %v618, 1.442695
        %v624 = vpow.pop %v623
        %v625 = vmul.f32 %v619, 1.442695
        %v626 = vpow.pop %v625
        %v627 = vmul.f32 %v620, 1.442695
        %v628 = vpow.pop %v627
        %v629 = vadd.f32 %v622, 1.0
        %v630 = vadd.f32 %v624, 1.0
        %v631 = vadd.f32 %v626, 1.0
        %v632 = vadd.f32 %v628, 1.0
        %v633 = vrcp.pop %v629
        %v634 = vmul.f32 1.0, %v633
        %v635 = vrcp.pop %v630
        %v636 = vmul.f32 1.0, %v635
        %v637 = vrcp.pop %v631
        %v638 = vmul.f32 1.0, %v637
        %v639 = vrcp.pop %v632
        %v640 = vmul.f32 1.0, %v639
        %v641 = vmul.f32 %v599, %v634
        %v642 = vmul.f32 %v604, %v636
        %v643 = vmul.f32 %v609, %v638
        %v644 = vmul.f32 %v614, %v640
        %v647 = vcombine.high %v505, %v505
        %v648 = vcombine.high %v506, %v506
        %651 = vrot.lane.b32.xlu0 %v505, 17
        %v652 = vpop.permute.xlu0 %651
        %653 = vrot.lane.b32.xlu0 %v647, 17
        %v654 = vpop.permute.xlu0 %653
        %655 = vrot.lane.b32.xlu0 %v506, 17
        %v656 = vpop.permute.xlu0 %655
        %657 = vrot.lane.b32.xlu0 %v648, 17
        %v658 = vpop.permute.xlu0 %657
        %v659 = vlaneseq
        %v660 = vand.u32 %v659, 127
        %vm661 = vcmp.lt.s32.totalorder %v660, 17
        %v662 = vsel %vm661, %v656, %v658
        %v663 = vsel %vm661, %v654, %v656
        %v664 = vsel %vm661, %v652, %v654
        %v665 = vsel %vm661, %v658, %v652
        %v666 = vld [vmem:[%s11] sm:$0xf]
        %v668 = vlaneseq
        %v669 = vshrl.u32 %v668, 7
        %v670 = vsub.s32 0, %v669
        %v671 = vrot.slane %v666, %v670
        %v672 = vlaneseq
        %v673 = vshrl.u32 %v672, 7
        %v674 = vsub.s32 1, %v673
        %v675 = vrot.slane %v666, %v674
        %v676 = vlaneseq
        %v677 = vshrl.u32 %v676, 7
        %v678 = vsub.s32 2, %v677
        %v679 = vrot.slane %v666, %v678
        %v680 = vlaneseq
        %v681 = vshrl.u32 %v680, 7
        %v682 = vsub.s32 3, %v681
        %v683 = vrot.slane %v666, %v682
        %v688 = vmul.f32 %v665, %v671
        %v689 = vmul.f32 %v664, %v675
        %v690 = vmul.f32 %v663, %v679
        %v691 = vmul.f32 %v662, %v683
        %v692 = vld [vmem:[%s7] sm:$0xff]
        %v693 = vld [vmem:[%s7 + $0x8] sm:$0xff]
        %v694 = vld [vmem:[%s7 + $0x10] sm:$0xff]
        %v695 = vld [vmem:[%s7 + $0x18] sm:$0xff]
        %696 = vrot.lane.b32.xlu0 %v505, 16
        %v697 = vpop.permute.xlu0 %696
        %698 = vrot.lane.b32.xlu0 %v647, 16
        %v699 = vpop.permute.xlu0 %698
        %700 = vrot.lane.b32.xlu0 %v506, 16
        %v701 = vpop.permute.xlu0 %700
        %702 = vrot.lane.b32.xlu0 %v648, 16
        %v703 = vpop.permute.xlu0 %702
        %vm704 = vcmp.lt.s32.totalorder %v660, 16
        %v705 = vsel %vm704, %v701, %v703
        %v706 = vsel %vm704, %v699, %v701
        %v707 = vsel %vm704, %v697, %v699
        %v708 = vsel %vm704, %v703, %v697
        %s709 = scalar_lea.vmem %s11, 4
        %v710 = vld [vmem:[%s709] sm:$0xf]
        %v712 = vlaneseq
        %v713 = vshrl.u32 %v712, 7
        %v714 = vsub.s32 0, %v713
        %v715 = vrot.slane %v710, %v714
        %v716 = vlaneseq
        %v717 = vshrl.u32 %v716, 7
        %v718 = vsub.s32 1, %v717
        %v719 = vrot.slane %v710, %v718
        %v720 = vlaneseq
        %v721 = vshrl.u32 %v720, 7
        %v722 = vsub.s32 2, %v721
        %v723 = vrot.slane %v710, %v722
        %v724 = vlaneseq
        %v725 = vshrl.u32 %v724, 7
        %v726 = vsub.s32 3, %v725
        %v727 = vrot.slane %v710, %v726
        %v732 = vmul.f32 %v708, %v715
        %v733 = vmul.f32 %v707, %v719
        %v734 = vmul.f32 %v706, %v723
        %v735 = vmul.f32 %v705, %v727
        %s736 = scalar_lea.vmem %s7, 32
        %v737 = vld [vmem:[%s736] sm:$0xff]
        %v738 = vld [vmem:[%s736 + $0x8] sm:$0xff]
        %v739 = vld [vmem:[%s736 + $0x10] sm:$0xff]
        %v740 = vld [vmem:[%s736 + $0x18] sm:$0xff]
        %vm741 = vcmask 31744
        %v743 = vsel %vm741, %v737, 0
        %v746 = vsel %vm741, %v738, 0
        %v749 = vsel %vm741, %v739, 0
        %v752 = vsel %vm741, %v740, 0
        %vm754 = vcmask 1043456
        %v756 = vsel %vm754, %v732, 0
        %v759 = vsel %vm754, %v733, 0
        %v762 = vsel %vm754, %v734, 0
        %v765 = vsel %vm754, %v735, 0
        %767 = vmatprep.subr.mxu0 0.0
        %768 = vmatpush1.msra.mxu0 0.0
        %769 = vmatprep.subr.mxu0 0.0
        %770 = vmatpush1.msra.mxu0 0.0
        %771 = vmatprep.subr.mxu0 0.0
        %772 = vmatpush1.msra.mxu0 0.0
        %773 = vmatprep.subr.mxu0 0.0
        %774 = vmatpush1.msra.mxu0 0.0
        %775 = vmatprep.subr.mxu0 0.0
        %776 = vmatpush1.msra.mxu0 0.0
        %777 = vmatprep.subr.mxu0 0.0
        %778 = vmatpush1.msra.mxu0 0.0
        %779 = vmatprep.subr.mxu0 0.0
        %780 = vmatpush1.msra.mxu0 0.0
        %781 = vmatprep.subr.mxu0 0.0
        %782 = vmatpush1.msra.mxu0 0.0
        %783 = vmatprep.subr.mxu0 0.0
        %784 = vmatpush1.msra.mxu0 0.0
        %785 = vmatprep.subr.mxu0 0.0
        %786 = vmatpush1.msra.mxu0 0.0
        %787 = vmatprep.subr.mxu0 0.0
        %788 = vmatpush1.msra.mxu0 0.0
        %789 = vmatprep.subr.mxu0 0.0
        %790 = vmatpush1.msra.mxu0 0.0
        %791 = vmatprep.subr.mxu0 0.0
        %792 = vmatpush1.msra.mxu0 0.0
        %793 = vmatprep.subr.mxu0 0.0
        %794 = vmatpush1.msra.mxu0 0.0
        %795 = vmatprep.subr.mxu0 0.0
        %796 = vmatpush1.msra.mxu0 0.0
        %797 = vmatprep.subr.mxu0 %v759
        %798 = vmatpush1.msra.mxu0 %v756
        %799 = vmatprep.subr.mxu0 0.0
        %800 = vmatpush2.msra.mxu0 0.0
        %801 = vmatprep.subr.mxu0 0.0
        %802 = vmatpush2.msra.mxu0 0.0
        %803 = vmatprep.subr.mxu0 0.0
        %804 = vmatpush2.msra.mxu0 0.0
        %805 = vmatprep.subr.mxu0 0.0
        %806 = vmatpush2.msra.mxu0 0.0
        %807 = vmatprep.subr.mxu0 0.0
        %808 = vmatpush2.msra.mxu0 0.0
        %809 = vmatprep.subr.mxu0 0.0
        %810 = vmatpush2.msra.mxu0 0.0
        %811 = vmatprep.subr.mxu0 0.0
        %812 = vmatpush2.msra.mxu0 0.0
        %813 = vmatprep.subr.mxu0 0.0
        %814 = vmatpush2.msra.mxu0 0.0
        %815 = vmatprep.subr.mxu0 0.0
        %816 = vmatpush2.msra.mxu0 0.0
        %817 = vmatprep.subr.mxu0 0.0
        %818 = vmatpush2.msra.mxu0 0.0
        %819 = vmatprep.subr.mxu0 0.0
        %820 = vmatpush2.msra.mxu0 0.0
        %821 = vmatprep.subr.mxu0 0.0
        %822 = vmatpush2.msra.mxu0 0.0
        %823 = vmatprep.subr.mxu0 0.0
        %824 = vmatpush2.msra.mxu0 0.0
        %825 = vmatprep.subr.mxu0 0.0
        %826 = vmatpush2.msra.mxu0 0.0
        %827 = vmatprep.subr.mxu0 0.0
        %828 = vmatpush2.msra.mxu0 0.0
        %829 = vmatprep.subr.mxu0 0.0
        %830 = vmatpush2.msra.mxu0 0.0
        %831 = vmatprep.mubr.f32.mxu0 0.0
        %832 = vmatmul.mubr.f32.gmra.mxu0 %v743
        %v833 = vpop.f32.mrf.mxu0
        %v834 = vadd.f32 0.0, %v833
        %v835 = vpop.f32.mrf.mxu0
        %v836 = vadd.f32 0.0, %v835
        %837 = vmatprep.mubr.f32.mxu0 0.0
        %838 = vmatmul.mubr.f32.gmra.mxu0 %v746
        %v839 = vpop.f32.mrf.mxu0
        %v840 = vadd.f32 0.0, %v839
        %v841 = vpop.f32.mrf.mxu0
        %v842 = vadd.f32 0.0, %v841
        %843 = vmatprep.mubr.f32.mxu0 0.0
        %844 = vmatmul.mubr.f32.gmra.mxu0 %v749
        %v845 = vpop.f32.mrf.mxu0
        %v846 = vadd.f32 0.0, %v845
        %v847 = vpop.f32.mrf.mxu0
        %v848 = vadd.f32 0.0, %v847
        %849 = vmatprep.mubr.f32.mxu0 0.0
        %850 = vmatmul.mubr.f32.gmra.mxu0 %v752
        %v851 = vpop.f32.mrf.mxu0
        %v852 = vadd.f32 0.0, %v851
        %v853 = vpop.f32.mrf.mxu0
        %v854 = vadd.f32 0.0, %v853
        %855 = vdwg.mxu0
        %856 = vmatprep.subr.mxu0 0.0
        %857 = vmatpush1.msra.mxu0 0.0
        %858 = vmatprep.subr.mxu0 0.0
        %859 = vmatpush1.msra.mxu0 0.0
        %860 = vmatprep.subr.mxu0 0.0
        %861 = vmatpush1.msra.mxu0 0.0
        %862 = vmatprep.subr.mxu0 0.0
        %863 = vmatpush1.msra.mxu0 0.0
        %864 = vmatprep.subr.mxu0 0.0
        %865 = vmatpush1.msra.mxu0 0.0
        %866 = vmatprep.subr.mxu0 0.0
        %867 = vmatpush1.msra.mxu0 0.0
        %868 = vmatprep.subr.mxu0 0.0
        %869 = vmatpush1.msra.mxu0 0.0
        %870 = vmatprep.subr.mxu0 0.0
        %871 = vmatpush1.msra.mxu0 0.0
        %872 = vmatprep.subr.mxu0 0.0
        %873 = vmatpush1.msra.mxu0 0.0
        %874 = vmatprep.subr.mxu0 0.0
        %875 = vmatpush1.msra.mxu0 0.0
        %876 = vmatprep.subr.mxu0 0.0
        %877 = vmatpush1.msra.mxu0 0.0
        %878 = vmatprep.subr.mxu0 0.0
        %879 = vmatpush1.msra.mxu0 0.0
        %880 = vmatprep.subr.mxu0 0.0
        %881 = vmatpush1.msra.mxu0 0.0
        %882 = vmatprep.subr.mxu0 0.0
        %883 = vmatpush1.msra.mxu0 0.0
        %884 = vmatprep.subr.mxu0 0.0
        %885 = vmatpush1.msra.mxu0 0.0
        %886 = vmatprep.subr.mxu0 %v765
        %887 = vmatpush1.msra.mxu0 %v762
        %888 = vmatprep.subr.mxu0 0.0
        %889 = vmatpush2.msra.mxu0 0.0
        %890 = vmatprep.subr.mxu0 0.0
        %891 = vmatpush2.msra.mxu0 0.0
        %892 = vmatprep.subr.mxu0 0.0
        %893 = vmatpush2.msra.mxu0 0.0
        %894 = vmatprep.subr.mxu0 0.0
        %895 = vmatpush2.msra.mxu0 0.0
        %896 = vmatprep.subr.mxu0 0.0
        %897 = vmatpush2.msra.mxu0 0.0
        %898 = vmatprep.subr.mxu0 0.0
        %899 = vmatpush2.msra.mxu0 0.0
        %900 = vmatprep.subr.mxu0 0.0
        %901 = vmatpush2.msra.mxu0 0.0
        %902 = vmatprep.subr.mxu0 0.0
        %903 = vmatpush2.msra.mxu0 0.0
        %904 = vmatprep.subr.mxu0 0.0
        %905 = vmatpush2.msra.mxu0 0.0
        %906 = vmatprep.subr.mxu0 0.0
        %907 = vmatpush2.msra.mxu0 0.0
        %908 = vmatprep.subr.mxu0 0.0
        %909 = vmatpush2.msra.mxu0 0.0
        %910 = vmatprep.subr.mxu0 0.0
        %911 = vmatpush2.msra.mxu0 0.0
        %912 = vmatprep.subr.mxu0 0.0
        %913 = vmatpush2.msra.mxu0 0.0
        %914 = vmatprep.subr.mxu0 0.0
        %915 = vmatpush2.msra.mxu0 0.0
        %916 = vmatprep.subr.mxu0 0.0
        %917 = vmatpush2.msra.mxu0 0.0
        %918 = vmatprep.subr.mxu0 0.0
        %919 = vmatpush2.msra.mxu0 0.0
        %920 = vmatprep.mubr.f32.mxu0 0.0
        %921 = vmatmul.mubr.f32.gmra.mxu0 %v743
        %v922 = vpop.f32.mrf.mxu0
        %v923 = vadd.f32 0.0, %v922
        %v924 = vpop.f32.mrf.mxu0
        %v925 = vadd.f32 0.0, %v924
        %926 = vmatprep.mubr.f32.mxu0 0.0
        %927 = vmatmul.mubr.f32.gmra.mxu0 %v746
        %v928 = vpop.f32.mrf.mxu0
        %v929 = vadd.f32 0.0, %v928
        %v930 = vpop.f32.mrf.mxu0
        %v931 = vadd.f32 0.0, %v930
        %932 = vmatprep.mubr.f32.mxu0 0.0
        %933 = vmatmul.mubr.f32.gmra.mxu0 %v749
        %v934 = vpop.f32.mrf.mxu0
        %v935 = vadd.f32 0.0, %v934
        %v936 = vpop.f32.mrf.mxu0
        %v937 = vadd.f32 0.0, %v936
        %938 = vmatprep.mubr.f32.mxu0 0.0
        %939 = vmatmul.mubr.f32.gmra.mxu0 %v752
        %v940 = vpop.f32.mrf.mxu0
        %v941 = vadd.f32 0.0, %v940
        %v942 = vpop.f32.mrf.mxu0
        %v943 = vadd.f32 0.0, %v942
        %944 = vdwg.mxu0
        %v946 = vsel %vm741, %v692, 0
        %v949 = vsel %vm741, %v693, 0
        %v952 = vsel %vm741, %v694, 0
        %v955 = vsel %vm741, %v695, 0
        %v958 = vsel %vm754, %v688, 0
        %v961 = vsel %vm754, %v689, 0
        %v964 = vsel %vm754, %v690, 0
        %v967 = vsel %vm754, %v691, 0
        %969 = vmatprep.subr.mxu0 0.0
        %970 = vmatpush1.msra.mxu0 0.0
        %971 = vmatprep.subr.mxu0 0.0
        %972 = vmatpush1.msra.mxu0 0.0
        %973 = vmatprep.subr.mxu0 0.0
        %974 = vmatpush1.msra.mxu0 0.0
        %975 = vmatprep.subr.mxu0 0.0
        %976 = vmatpush1.msra.mxu0 0.0
        %977 = vmatprep.subr.mxu0 0.0
        %978 = vmatpush1.msra.mxu0 0.0
        %979 = vmatprep.subr.mxu0 0.0
        %980 = vmatpush1.msra.mxu0 0.0
        %981 = vmatprep.subr.mxu0 0.0
        %982 = vmatpush1.msra.mxu0 0.0
        %983 = vmatprep.subr.mxu0 0.0
        %984 = vmatpush1.msra.mxu0 0.0
        %985 = vmatprep.subr.mxu0 0.0
        %986 = vmatpush1.msra.mxu0 0.0
        %987 = vmatprep.subr.mxu0 0.0
        %988 = vmatpush1.msra.mxu0 0.0
        %989 = vmatprep.subr.mxu0 0.0
        %990 = vmatpush1.msra.mxu0 0.0
        %991 = vmatprep.subr.mxu0 0.0
        %992 = vmatpush1.msra.mxu0 0.0
        %993 = vmatprep.subr.mxu0 0.0
        %994 = vmatpush1.msra.mxu0 0.0
        %995 = vmatprep.subr.mxu0 0.0
        %996 = vmatpush1.msra.mxu0 0.0
        %997 = vmatprep.subr.mxu0 0.0
        %998 = vmatpush1.msra.mxu0 0.0
        %999 = vmatprep.subr.mxu0 %v961
        %1000 = vmatpush1.msra.mxu0 %v958
        %1001 = vmatprep.subr.mxu0 0.0
        %1002 = vmatpush2.msra.mxu0 0.0
        %1003 = vmatprep.subr.mxu0 0.0
        %1004 = vmatpush2.msra.mxu0 0.0
        %1005 = vmatprep.subr.mxu0 0.0
        %1006 = vmatpush2.msra.mxu0 0.0
        %1007 = vmatprep.subr.mxu0 0.0
        %1008 = vmatpush2.msra.mxu0 0.0
        %1009 = vmatprep.subr.mxu0 0.0
        %1010 = vmatpush2.msra.mxu0 0.0
        %1011 = vmatprep.subr.mxu0 0.0
        %1012 = vmatpush2.msra.mxu0 0.0
        %1013 = vmatprep.subr.mxu0 0.0
        %1014 = vmatpush2.msra.mxu0 0.0
        %1015 = vmatprep.subr.mxu0 0.0
        %1016 = vmatpush2.msra.mxu0 0.0
        %1017 = vmatprep.subr.mxu0 0.0
        %1018 = vmatpush2.msra.mxu0 0.0
        %1019 = vmatprep.subr.mxu0 0.0
        %1020 = vmatpush2.msra.mxu0 0.0
        %1021 = vmatprep.subr.mxu0 0.0
        %1022 = vmatpush2.msra.mxu0 0.0
        %1023 = vmatprep.subr.mxu0 0.0
        %1024 = vmatpush2.msra.mxu0 0.0
        %1025 = vmatprep.subr.mxu0 0.0
        %1026 = vmatpush2.msra.mxu0 0.0
        %1027 = vmatprep.subr.mxu0 0.0
        %1028 = vmatpush2.msra.mxu0 0.0
        %1029 = vmatprep.subr.mxu0 0.0
        %1030 = vmatpush2.msra.mxu0 0.0
        %1031 = vmatprep.subr.mxu0 0.0
        %1032 = vmatpush2.msra.mxu0 0.0
        %1033 = vmatprep.mubr.f32.mxu0 0.0
        %1034 = vmatmul.mubr.f32.gmra.mxu0 %v946
        %v1035 = vpop.f32.mrf.mxu0
        %v1036 = vadd.f32 %v834, %v1035
        %v1037 = vpop.f32.mrf.mxu0
        %v1038 = vadd.f32 %v836, %v1037
        %1039 = vmatprep.mubr.f32.mxu0 0.0
        %1040 = vmatmul.mubr.f32.gmra.mxu0 %v949
        %v1041 = vpop.f32.mrf.mxu0
        %v1042 = vadd.f32 %v840, %v1041
        %v1043 = vpop.f32.mrf.mxu0
        %v1044 = vadd.f32 %v842, %v1043
        %1045 = vmatprep.mubr.f32.mxu0 0.0
        %1046 = vmatmul.mubr.f32.gmra.mxu0 %v952
        %v1047 = vpop.f32.mrf.mxu0
        %v1048 = vadd.f32 %v846, %v1047
        %v1049 = vpop.f32.mrf.mxu0
        %v1050 = vadd.f32 %v848, %v1049
        %1051 = vmatprep.mubr.f32.mxu0 0.0
        %1052 = vmatmul.mubr.f32.gmra.mxu0 %v955
        %v1053 = vpop.f32.mrf.mxu0
        %v1054 = vadd.f32 %v852, %v1053
        %v1055 = vpop.f32.mrf.mxu0
        %v1056 = vadd.f32 %v854, %v1055
        %1057 = vdwg.mxu0
        %1058 = vmatprep.subr.mxu0 0.0
        %1059 = vmatpush1.msra.mxu0 0.0
        %1060 = vmatprep.subr.mxu0 0.0
        %1061 = vmatpush1.msra.mxu0 0.0
        %1062 = vmatprep.subr.mxu0 0.0
        %1063 = vmatpush1.msra.mxu0 0.0
        %1064 = vmatprep.subr.mxu0 0.0
        %1065 = vmatpush1.msra.mxu0 0.0
        %1066 = vmatprep.subr.mxu0 0.0
        %1067 = vmatpush1.msra.mxu0 0.0
        %1068 = vmatprep.subr.mxu0 0.0
        %1069 = vmatpush1.msra.mxu0 0.0
        %1070 = vmatprep.subr.mxu0 0.0
        %1071 = vmatpush1.msra.mxu0 0.0
        %1072 = vmatprep.subr.mxu0 0.0
        %1073 = vmatpush1.msra.mxu0 0.0
        %1074 = vmatprep.subr.mxu0 0.0
        %1075 = vmatpush1.msra.mxu0 0.0
        %1076 = vmatprep.subr.mxu0 0.0
        %1077 = vmatpush1.msra.mxu0 0.0
        %1078 = vmatprep.subr.mxu0 0.0
        %1079 = vmatpush1.msra.mxu0 0.0
        %1080 = vmatprep.subr.mxu0 0.0
        %1081 = vmatpush1.msra.mxu0 0.0
        %1082 = vmatprep.subr.mxu0 0.0
        %1083 = vmatpush1.msra.mxu0 0.0
        %1084 = vmatprep.subr.mxu0 0.0
        %1085 = vmatpush1.msra.mxu0 0.0
        %1086 = vmatprep.subr.mxu0 0.0
        %1087 = vmatpush1.msra.mxu0 0.0
        %1088 = vmatprep.subr.mxu0 %v967
        %1089 = vmatpush1.msra.mxu0 %v964
        %1090 = vmatprep.subr.mxu0 0.0
        %1091 = vmatpush2.msra.mxu0 0.0
        %1092 = vmatprep.subr.mxu0 0.0
        %1093 = vmatpush2.msra.mxu0 0.0
        %1094 = vmatprep.subr.mxu0 0.0
        %1095 = vmatpush2.msra.mxu0 0.0
        %1096 = vmatprep.subr.mxu0 0.0
        %1097 = vmatpush2.msra.mxu0 0.0
        %1098 = vmatprep.subr.mxu0 0.0
        %1099 = vmatpush2.msra.mxu0 0.0
        %1100 = vmatprep.subr.mxu0 0.0
        %1101 = vmatpush2.msra.mxu0 0.0
        %1102 = vmatprep.subr.mxu0 0.0
        %1103 = vmatpush2.msra.mxu0 0.0
        %1104 = vmatprep.subr.mxu0 0.0
        %1105 = vmatpush2.msra.mxu0 0.0
        %1106 = vmatprep.subr.mxu0 0.0
        %1107 = vmatpush2.msra.mxu0 0.0
        %1108 = vmatprep.subr.mxu0 0.0
        %1109 = vmatpush2.msra.mxu0 0.0
        %1110 = vmatprep.subr.mxu0 0.0
        %1111 = vmatpush2.msra.mxu0 0.0
        %1112 = vmatprep.subr.mxu0 0.0
        %1113 = vmatpush2.msra.mxu0 0.0
        %1114 = vmatprep.subr.mxu0 0.0
        %1115 = vmatpush2.msra.mxu0 0.0
        %1116 = vmatprep.subr.mxu0 0.0
        %1117 = vmatpush2.msra.mxu0 0.0
        %1118 = vmatprep.subr.mxu0 0.0
        %1119 = vmatpush2.msra.mxu0 0.0
        %1120 = vmatprep.subr.mxu0 0.0
        %1121 = vmatpush2.msra.mxu0 0.0
        %1122 = vmatprep.mubr.f32.mxu0 0.0
        %1123 = vmatmul.mubr.f32.gmra.mxu0 %v946
        %v1124 = vpop.f32.mrf.mxu0
        %v1125 = vadd.f32 %v923, %v1124
        %v1126 = vpop.f32.mrf.mxu0
        %v1127 = vadd.f32 %v925, %v1126
        %1128 = vmatprep.mubr.f32.mxu0 0.0
        %1129 = vmatmul.mubr.f32.gmra.mxu0 %v949
        %v1130 = vpop.f32.mrf.mxu0
        %v1131 = vadd.f32 %v929, %v1130
        %v1132 = vpop.f32.mrf.mxu0
        %v1133 = vadd.f32 %v931, %v1132
        %1134 = vmatprep.mubr.f32.mxu0 0.0
        %1135 = vmatmul.mubr.f32.gmra.mxu0 %v952
        %v1136 = vpop.f32.mrf.mxu0
        %v1137 = vadd.f32 %v935, %v1136
        %v1138 = vpop.f32.mrf.mxu0
        %v1139 = vadd.f32 %v937, %v1138
        %1140 = vmatprep.mubr.f32.mxu0 0.0
        %1141 = vmatmul.mubr.f32.gmra.mxu0 %v955
        %v1142 = vpop.f32.mrf.mxu0
        %v1143 = vadd.f32 %v941, %v1142
        %v1144 = vpop.f32.mrf.mxu0
        %v1145 = vadd.f32 %v943, %v1144
        %1146 = vdwg.mxu0
        %1147 = vrot.lane.b32.xlu0 %v505, 15
        %v1148 = vpop.permute.xlu0 %1147
        %1149 = vrot.lane.b32.xlu0 %v647, 15
        %v1150 = vpop.permute.xlu0 %1149
        %1151 = vrot.lane.b32.xlu0 %v506, 15
        %v1152 = vpop.permute.xlu0 %1151
        %1153 = vrot.lane.b32.xlu0 %v648, 15
        %v1154 = vpop.permute.xlu0 %1153
        %vm1155 = vcmp.lt.s32.totalorder %v660, 15
        %v1156 = vsel %vm1155, %v1152, %v1154
        %v1157 = vsel %vm1155, %v1150, %v1152
        %v1158 = vsel %vm1155, %v1148, %v1150
        %v1159 = vsel %vm1155, %v1154, %v1148
        %s1160 = scalar_lea.vmem %s11, 8
        %v1161 = vld [vmem:[%s1160] sm:$0xf]
        %v1163 = vlaneseq
        %v1164 = vshrl.u32 %v1163, 7
        %v1165 = vsub.s32 0, %v1164
        %v1166 = vrot.slane %v1161, %v1165
        %v1167 = vlaneseq
        %v1168 = vshrl.u32 %v1167, 7
        %v1169 = vsub.s32 1, %v1168
        %v1170 = vrot.slane %v1161, %v1169
        %v1171 = vlaneseq
        %v1172 = vshrl.u32 %v1171, 7
        %v1173 = vsub.s32 2, %v1172
        %v1174 = vrot.slane %v1161, %v1173
        %v1175 = vlaneseq
        %v1176 = vshrl.u32 %v1175, 7
        %v1177 = vsub.s32 3, %v1176
        %v1178 = vrot.slane %v1161, %v1177
        %v1183 = vmul.f32 %v1159, %v1166
        %v1184 = vmul.f32 %v1158, %v1170
        %v1185 = vmul.f32 %v1157, %v1174
        %v1186 = vmul.f32 %v1156, %v1178
        %s1187 = scalar_lea.vmem %s7, 64
        %v1188 = vld [vmem:[%s1187] sm:$0xff]
        %v1189 = vld [vmem:[%s1187 + $0x8] sm:$0xff]
        %v1190 = vld [vmem:[%s1187 + $0x10] sm:$0xff]
        %v1191 = vld [vmem:[%s1187 + $0x18] sm:$0xff]
        %v1193 = vsel %vm741, %v1188, 0
        %v1196 = vsel %vm741, %v1189, 0
        %v1199 = vsel %vm741, %v1190, 0
        %v1202 = vsel %vm741, %v1191, 0
        %v1205 = vsel %vm754, %v1183, 0
        %v1208 = vsel %vm754, %v1184, 0
        %v1211 = vsel %vm754, %v1185, 0
        %v1214 = vsel %vm754, %v1186, 0
        %1216 = vmatprep.subr.mxu0 0.0
        %1217 = vmatpush1.msra.mxu0 0.0
        %1218 = vmatprep.subr.mxu0 0.0
        %1219 = vmatpush1.msra.mxu0 0.0
        %1220 = vmatprep.subr.mxu0 0.0
        %1221 = vmatpush1.msra.mxu0 0.0
        %1222 = vmatprep.subr.mxu0 0.0
        %1223 = vmatpush1.msra.mxu0 0.0
        %1224 = vmatprep.subr.mxu0 0.0
        %1225 = vmatpush1.msra.mxu0 0.0
        %1226 = vmatprep.subr.mxu0 0.0
        %1227 = vmatpush1.msra.mxu0 0.0
        %1228 = vmatprep.subr.mxu0 0.0
        %1229 = vmatpush1.msra.mxu0 0.0
        %1230 = vmatprep.subr.mxu0 0.0
        %1231 = vmatpush1.msra.mxu0 0.0
        %1232 = vmatprep.subr.mxu0 0.0
        %1233 = vmatpush1.msra.mxu0 0.0
        %1234 = vmatprep.subr.mxu0 0.0
        %1235 = vmatpush1.msra.mxu0 0.0
        %1236 = vmatprep.subr.mxu0 0.0
        %1237 = vmatpush1.msra.mxu0 0.0
        %1238 = vmatprep.subr.mxu0 0.0
        %1239 = vmatpush1.msra.mxu0 0.0
        %1240 = vmatprep.subr.mxu0 0.0
        %1241 = vmatpush1.msra.mxu0 0.0
        %1242 = vmatprep.subr.mxu0 0.0
        %1243 = vmatpush1.msra.mxu0 0.0
        %1244 = vmatprep.subr.mxu0 0.0
        %1245 = vmatpush1.msra.mxu0 0.0
        %1246 = vmatprep.subr.mxu0 %v1208
        %1247 = vmatpush1.msra.mxu0 %v1205
        %1248 = vmatprep.subr.mxu0 0.0
        %1249 = vmatpush2.msra.mxu0 0.0
        %1250 = vmatprep.subr.mxu0 0.0
        %1251 = vmatpush2.msra.mxu0 0.0
        %1252 = vmatprep.subr.mxu0 0.0
        %1253 = vmatpush2.msra.mxu0 0.0
        %1254 = vmatprep.subr.mxu0 0.0
        %1255 = vmatpush2.msra.mxu0 0.0
        %1256 = vmatprep.subr.mxu0 0.0
        %1257 = vmatpush2.msra.mxu0 0.0
        %1258 = vmatprep.subr.mxu0 0.0
        %1259 = vmatpush2.msra.mxu0 0.0
        %1260 = vmatprep.subr.mxu0 0.0
        %1261 = vmatpush2.msra.mxu0 0.0
        %1262 = vmatprep.subr.mxu0 0.0
        %1263 = vmatpush2.msra.mxu0 0.0
        %1264 = vmatprep.subr.mxu0 0.0
        %1265 = vmatpush2.msra.mxu0 0.0
        %1266 = vmatprep.subr.mxu0 0.0
        %1267 = vmatpush2.msra.mxu0 0.0
        %1268 = vmatprep.subr.mxu0 0.0
        %1269 = vmatpush2.msra.mxu0 0.0
        %1270 = vmatprep.subr.mxu0 0.0
        %1271 = vmatpush2.msra.mxu0 0.0
        %1272 = vmatprep.subr.mxu0 0.0
        %1273 = vmatpush2.msra.mxu0 0.0
        %1274 = vmatprep.subr.mxu0 0.0
        %1275 = vmatpush2.msra.mxu0 0.0
        %1276 = vmatprep.subr.mxu0 0.0
        %1277 = vmatpush2.msra.mxu0 0.0
        %1278 = vmatprep.subr.mxu0 0.0
        %1279 = vmatpush2.msra.mxu0 0.0
        %1280 = vmatprep.mubr.f32.mxu0 0.0
        %1281 = vmatmul.mubr.f32.gmra.mxu0 %v1193
        %v1282 = vpop.f32.mrf.mxu0
        %v1283 = vadd.f32 0.0, %v1282
        %v1284 = vpop.f32.mrf.mxu0
        %v1285 = vadd.f32 0.0, %v1284
        %1286 = vmatprep.mubr.f32.mxu0 0.0
        %1287 = vmatmul.mubr.f32.gmra.mxu0 %v1196
        %v1288 = vpop.f32.mrf.mxu0
        %v1289 = vadd.f32 0.0, %v1288
        %v1290 = vpop.f32.mrf.mxu0
        %v1291 = vadd.f32 0.0, %v1290
        %1292 = vmatprep.mubr.f32.mxu0 0.0
        %1293 = vmatmul.mubr.f32.gmra.mxu0 %v1199
        %v1294 = vpop.f32.mrf.mxu0
        %v1295 = vadd.f32 0.0, %v1294
        %v1296 = vpop.f32.mrf.mxu0
        %v1297 = vadd.f32 0.0, %v1296
        %1298 = vmatprep.mubr.f32.mxu0 0.0
        %1299 = vmatmul.mubr.f32.gmra.mxu0 %v1202
        %v1300 = vpop.f32.mrf.mxu0
        %v1301 = vadd.f32 0.0, %v1300
        %v1302 = vpop.f32.mrf.mxu0
        %v1303 = vadd.f32 0.0, %v1302
        %1304 = vdwg.mxu0
        %1305 = vmatprep.subr.mxu0 0.0
        %1306 = vmatpush1.msra.mxu0 0.0
        %1307 = vmatprep.subr.mxu0 0.0
        %1308 = vmatpush1.msra.mxu0 0.0
        %1309 = vmatprep.subr.mxu0 0.0
        %1310 = vmatpush1.msra.mxu0 0.0
        %1311 = vmatprep.subr.mxu0 0.0
        %1312 = vmatpush1.msra.mxu0 0.0
        %1313 = vmatprep.subr.mxu0 0.0
        %1314 = vmatpush1.msra.mxu0 0.0
        %1315 = vmatprep.subr.mxu0 0.0
        %1316 = vmatpush1.msra.mxu0 0.0
        %1317 = vmatprep.subr.mxu0 0.0
        %1318 = vmatpush1.msra.mxu0 0.0
        %1319 = vmatprep.subr.mxu0 0.0
        %1320 = vmatpush1.msra.mxu0 0.0
        %1321 = vmatprep.subr.mxu0 0.0
        %1322 = vmatpush1.msra.mxu0 0.0
        %1323 = vmatprep.subr.mxu0 0.0
        %1324 = vmatpush1.msra.mxu0 0.0
        %1325 = vmatprep.subr.mxu0 0.0
        %1326 = vmatpush1.msra.mxu0 0.0
        %1327 = vmatprep.subr.mxu0 0.0
        %1328 = vmatpush1.msra.mxu0 0.0
        %1329 = vmatprep.subr.mxu0 0.0
        %1330 = vmatpush1.msra.mxu0 0.0
        %1331 = vmatprep.subr.mxu0 0.0
        %1332 = vmatpush1.msra.mxu0 0.0
        %1333 = vmatprep.subr.mxu0 0.0
        %1334 = vmatpush1.msra.mxu0 0.0
        %1335 = vmatprep.subr.mxu0 %v1214
        %1336 = vmatpush1.msra.mxu0 %v1211
        %1337 = vmatprep.subr.mxu0 0.0
        %1338 = vmatpush2.msra.mxu0 0.0
        %1339 = vmatprep.subr.mxu0 0.0
        %1340 = vmatpush2.msra.mxu0 0.0
        %1341 = vmatprep.subr.mxu0 0.0
        %1342 = vmatpush2.msra.mxu0 0.0
        %1343 = vmatprep.subr.mxu0 0.0
        %1344 = vmatpush2.msra.mxu0 0.0
        %1345 = vmatprep.subr.mxu0 0.0
        %1346 = vmatpush2.msra.mxu0 0.0
        %1347 = vmatprep.subr.mxu0 0.0
        %1348 = vmatpush2.msra.mxu0 0.0
        %1349 = vmatprep.subr.mxu0 0.0
        %1350 = vmatpush2.msra.mxu0 0.0
        %1351 = vmatprep.subr.mxu0 0.0
        %1352 = vmatpush2.msra.mxu0 0.0
        %1353 = vmatprep.subr.mxu0 0.0
        %1354 = vmatpush2.msra.mxu0 0.0
        %1355 = vmatprep.subr.mxu0 0.0
        %1356 = vmatpush2.msra.mxu0 0.0
        %1357 = vmatprep.subr.mxu0 0.0
        %1358 = vmatpush2.msra.mxu0 0.0
        %1359 = vmatprep.subr.mxu0 0.0
        %1360 = vmatpush2.msra.mxu0 0.0
        %1361 = vmatprep.subr.mxu0 0.0
        %1362 = vmatpush2.msra.mxu0 0.0
        %1363 = vmatprep.subr.mxu0 0.0
        %1364 = vmatpush2.msra.mxu0 0.0
        %1365 = vmatprep.subr.mxu0 0.0
        %1366 = vmatpush2.msra.mxu0 0.0
        %1367 = vmatprep.subr.mxu0 0.0
        %1368 = vmatpush2.msra.mxu0 0.0
        %1369 = vmatprep.mubr.f32.mxu0 0.0
        %1370 = vmatmul.mubr.f32.gmra.mxu0 %v1193
        %v1371 = vpop.f32.mrf.mxu0
        %v1372 = vadd.f32 0.0, %v1371
        %v1373 = vpop.f32.mrf.mxu0
        %v1374 = vadd.f32 0.0, %v1373
        %1375 = vmatprep.mubr.f32.mxu0 0.0
        %1376 = vmatmul.mubr.f32.gmra.mxu0 %v1196
        %v1377 = vpop.f32.mrf.mxu0
        %v1378 = vadd.f32 0.0, %v1377
        %v1379 = vpop.f32.mrf.mxu0
        %v1380 = vadd.f32 0.0, %v1379
        %1381 = vmatprep.mubr.f32.mxu0 0.0
        %1382 = vmatmul.mubr.f32.gmra.mxu0 %v1199
        %v1383 = vpop.f32.mrf.mxu0
        %v1384 = vadd.f32 0.0, %v1383
        %v1385 = vpop.f32.mrf.mxu0
        %v1386 = vadd.f32 0.0, %v1385
        %1387 = vmatprep.mubr.f32.mxu0 0.0
        %1388 = vmatmul.mubr.f32.gmra.mxu0 %v1202
        %v1389 = vpop.f32.mrf.mxu0
        %v1390 = vadd.f32 0.0, %v1389
        %v1391 = vpop.f32.mrf.mxu0
        %v1392 = vadd.f32 0.0, %v1391
        %1393 = vdwg.mxu0
        %v1394 = vadd.f32 %v1036, %v1283
        %v1395 = vadd.f32 %v1038, %v1285
        %v1396 = vadd.f32 %v1125, %v1372
        %v1397 = vadd.f32 %v1127, %v1374
        %v1398 = vadd.f32 %v1042, %v1289
        %v1399 = vadd.f32 %v1044, %v1291
        %v1400 = vadd.f32 %v1131, %v1378
        %v1401 = vadd.f32 %v1133, %v1380
        %v1402 = vadd.f32 %v1048, %v1295
        %v1403 = vadd.f32 %v1050, %v1297
        %v1404 = vadd.f32 %v1137, %v1384
        %v1405 = vadd.f32 %v1139, %v1386
        %v1406 = vadd.f32 %v1054, %v1301
        %v1407 = vadd.f32 %v1056, %v1303
        %v1408 = vadd.f32 %v1143, %v1390
        %v1409 = vadd.f32 %v1145, %v1392
        %1410 = vrot.lane.b32.xlu0 %v505, 1
        %v1411 = vpop.permute.xlu0 %1410
        %1412 = vrot.lane.b32.xlu0 %v647, 1
        %v1413 = vpop.permute.xlu0 %1412
        %1414 = vrot.lane.b32.xlu0 %v506, 1
        %v1415 = vpop.permute.xlu0 %1414
        %1416 = vrot.lane.b32.xlu0 %v648, 1
        %v1417 = vpop.permute.xlu0 %1416
        %vm1418 = vcmp.lt.s32.totalorder %v660, 1
        %v1419 = vsel %vm1418, %v1415, %v1417
        %v1420 = vsel %vm1418, %v1413, %v1415
        %v1421 = vsel %vm1418, %v1411, %v1413
        %v1422 = vsel %vm1418, %v1417, %v1411
        %s1423 = scalar_lea.vmem %s11, 12
        %v1424 = vld [vmem:[%s1423] sm:$0xf]
        %v1426 = vlaneseq
        %v1427 = vshrl.u32 %v1426, 7
        %v1428 = vsub.s32 0, %v1427
        %v1429 = vrot.slane %v1424, %v1428
        %v1430 = vlaneseq
        %v1431 = vshrl.u32 %v1430, 7
        %v1432 = vsub.s32 1, %v1431
        %v1433 = vrot.slane %v1424, %v1432
        %v1434 = vlaneseq
        %v1435 = vshrl.u32 %v1434, 7
        %v1436 = vsub.s32 2, %v1435
        %v1437 = vrot.slane %v1424, %v1436
        %v1438 = vlaneseq
        %v1439 = vshrl.u32 %v1438, 7
        %v1440 = vsub.s32 3, %v1439
        %v1441 = vrot.slane %v1424, %v1440
        %v1446 = vmul.f32 %v1422, %v1429
        %v1447 = vmul.f32 %v1421, %v1433
        %v1448 = vmul.f32 %v1420, %v1437
        %v1449 = vmul.f32 %v1419, %v1441
        %s1450 = scalar_lea.vmem %s7, 96
        %v1451 = vld [vmem:[%s1450] sm:$0xff]
        %v1452 = vld [vmem:[%s1450 + $0x8] sm:$0xff]
        %v1453 = vld [vmem:[%s1450 + $0x10] sm:$0xff]
        %v1454 = vld [vmem:[%s1450 + $0x18] sm:$0xff]
        %v1456 = vsel %vm741, %v1451, 0
        %v1459 = vsel %vm741, %v1452, 0
        %v1462 = vsel %vm741, %v1453, 0
        %v1465 = vsel %vm741, %v1454, 0
        %v1468 = vsel %vm754, %v1446, 0
        %v1471 = vsel %vm754, %v1447, 0
        %v1474 = vsel %vm754, %v1448, 0
        %v1477 = vsel %vm754, %v1449, 0
        %1479 = vmatprep.subr.mxu0 0.0
        %1480 = vmatpush1.msra.mxu0 0.0
        %1481 = vmatprep.subr.mxu0 0.0
        %1482 = vmatpush1.msra.mxu0 0.0
        %1483 = vmatprep.subr.mxu0 0.0
        %1484 = vmatpush1.msra.mxu0 0.0
        %1485 = vmatprep.subr.mxu0 0.0
        %1486 = vmatpush1.msra.mxu0 0.0
        %1487 = vmatprep.subr.mxu0 0.0
        %1488 = vmatpush1.msra.mxu0 0.0
        %1489 = vmatprep.subr.mxu0 0.0
        %1490 = vmatpush1.msra.mxu0 0.0
        %1491 = vmatprep.subr.mxu0 0.0
        %1492 = vmatpush1.msra.mxu0 0.0
        %1493 = vmatprep.subr.mxu0 0.0
        %1494 = vmatpush1.msra.mxu0 0.0
        %1495 = vmatprep.subr.mxu0 0.0
        %1496 = vmatpush1.msra.mxu0 0.0
        %1497 = vmatprep.subr.mxu0 0.0
        %1498 = vmatpush1.msra.mxu0 0.0
        %1499 = vmatprep.subr.mxu0 0.0
        %1500 = vmatpush1.msra.mxu0 0.0
        %1501 = vmatprep.subr.mxu0 0.0
        %1502 = vmatpush1.msra.mxu0 0.0
        %1503 = vmatprep.subr.mxu0 0.0
        %1504 = vmatpush1.msra.mxu0 0.0
        %1505 = vmatprep.subr.mxu0 0.0
        %1506 = vmatpush1.msra.mxu0 0.0
        %1507 = vmatprep.subr.mxu0 0.0
        %1508 = vmatpush1.msra.mxu0 0.0
        %1509 = vmatprep.subr.mxu0 %v1471
        %1510 = vmatpush1.msra.mxu0 %v1468
        %1511 = vmatprep.subr.mxu0 0.0
        %1512 = vmatpush2.msra.mxu0 0.0
        %1513 = vmatprep.subr.mxu0 0.0
        %1514 = vmatpush2.msra.mxu0 0.0
        %1515 = vmatprep.subr.mxu0 0.0
        %1516 = vmatpush2.msra.mxu0 0.0
        %1517 = vmatprep.subr.mxu0 0.0
        %1518 = vmatpush2.msra.mxu0 0.0
        %1519 = vmatprep.subr.mxu0 0.0
        %1520 = vmatpush2.msra.mxu0 0.0
        %1521 = vmatprep.subr.mxu0 0.0
        %1522 = vmatpush2.msra.mxu0 0.0
        %1523 = vmatprep.subr.mxu0 0.0
        %1524 = vmatpush2.msra.mxu0 0.0
        %1525 = vmatprep.subr.mxu0 0.0
        %1526 = vmatpush2.msra.mxu0 0.0
        %1527 = vmatprep.subr.mxu0 0.0
        %1528 = vmatpush2.msra.mxu0 0.0
        %1529 = vmatprep.subr.mxu0 0.0
        %1530 = vmatpush2.msra.mxu0 0.0
        %1531 = vmatprep.subr.mxu0 0.0
        %1532 = vmatpush2.msra.mxu0 0.0
        %1533 = vmatprep.subr.mxu0 0.0
        %1534 = vmatpush2.msra.mxu0 0.0
        %1535 = vmatprep.subr.mxu0 0.0
        %1536 = vmatpush2.msra.mxu0 0.0
        %1537 = vmatprep.subr.mxu0 0.0
        %1538 = vmatpush2.msra.mxu0 0.0
        %1539 = vmatprep.subr.mxu0 0.0
        %1540 = vmatpush2.msra.mxu0 0.0
        %1541 = vmatprep.subr.mxu0 0.0
        %1542 = vmatpush2.msra.mxu0 0.0
        %1543 = vmatprep.mubr.f32.mxu0 0.0
        %1544 = vmatmul.mubr.f32.gmra.mxu0 %v1456
        %v1545 = vpop.f32.mrf.mxu0
        %v1546 = vadd.f32 0.0, %v1545
        %v1547 = vpop.f32.mrf.mxu0
        %v1548 = vadd.f32 0.0, %v1547
        %1549 = vmatprep.mubr.f32.mxu0 0.0
        %1550 = vmatmul.mubr.f32.gmra.mxu0 %v1459
        %v1551 = vpop.f32.mrf.mxu0
        %v1552 = vadd.f32 0.0, %v1551
        %v1553 = vpop.f32.mrf.mxu0
        %v1554 = vadd.f32 0.0, %v1553
        %1555 = vmatprep.mubr.f32.mxu0 0.0
        %1556 = vmatmul.mubr.f32.gmra.mxu0 %v1462
        %v1557 = vpop.f32.mrf.mxu0
        %v1558 = vadd.f32 0.0, %v1557
        %v1559 = vpop.f32.mrf.mxu0
        %v1560 = vadd.f32 0.0, %v1559
        %1561 = vmatprep.mubr.f32.mxu0 0.0
        %1562 = vmatmul.mubr.f32.gmra.mxu0 %v1465
        %v1563 = vpop.f32.mrf.mxu0
        %v1564 = vadd.f32 0.0, %v1563
        %v1565 = vpop.f32.mrf.mxu0
        %v1566 = vadd.f32 0.0, %v1565
        %1567 = vdwg.mxu0
        %1568 = vmatprep.subr.mxu0 0.0
        %1569 = vmatpush1.msra.mxu0 0.0
        %1570 = vmatprep.subr.mxu0 0.0
        %1571 = vmatpush1.msra.mxu0 0.0
        %1572 = vmatprep.subr.mxu0 0.0
        %1573 = vmatpush1.msra.mxu0 0.0
        %1574 = vmatprep.subr.mxu0 0.0
        %1575 = vmatpush1.msra.mxu0 0.0
        %1576 = vmatprep.subr.mxu0 0.0
        %1577 = vmatpush1.msra.mxu0 0.0
        %1578 = vmatprep.subr.mxu0 0.0
        %1579 = vmatpush1.msra.mxu0 0.0
        %1580 = vmatprep.subr.mxu0 0.0
        %1581 = vmatpush1.msra.mxu0 0.0
        %1582 = vmatprep.subr.mxu0 0.0
        %1583 = vmatpush1.msra.mxu0 0.0
        %1584 = vmatprep.subr.mxu0 0.0
        %1585 = vmatpush1.msra.mxu0 0.0
        %1586 = vmatprep.subr.mxu0 0.0
        %1587 = vmatpush1.msra.mxu0 0.0
        %1588 = vmatprep.subr.mxu0 0.0
        %1589 = vmatpush1.msra.mxu0 0.0
        %1590 = vmatprep.subr.mxu0 0.0
        %1591 = vmatpush1.msra.mxu0 0.0
        %1592 = vmatprep.subr.mxu0 0.0
        %1593 = vmatpush1.msra.mxu0 0.0
        %1594 = vmatprep.subr.mxu0 0.0
        %1595 = vmatpush1.msra.mxu0 0.0
        %1596 = vmatprep.subr.mxu0 0.0
        %1597 = vmatpush1.msra.mxu0 0.0
        %1598 = vmatprep.subr.mxu0 %v1477
        %1599 = vmatpush1.msra.mxu0 %v1474
        %1600 = vmatprep.subr.mxu0 0.0
        %1601 = vmatpush2.msra.mxu0 0.0
        %1602 = vmatprep.subr.mxu0 0.0
        %1603 = vmatpush2.msra.mxu0 0.0
        %1604 = vmatprep.subr.mxu0 0.0
        %1605 = vmatpush2.msra.mxu0 0.0
        %1606 = vmatprep.subr.mxu0 0.0
        %1607 = vmatpush2.msra.mxu0 0.0
        %1608 = vmatprep.subr.mxu0 0.0
        %1609 = vmatpush2.msra.mxu0 0.0
        %1610 = vmatprep.subr.mxu0 0.0
        %1611 = vmatpush2.msra.mxu0 0.0
        %1612 = vmatprep.subr.mxu0 0.0
        %1613 = vmatpush2.msra.mxu0 0.0
        %1614 = vmatprep.subr.mxu0 0.0
        %1615 = vmatpush2.msra.mxu0 0.0
        %1616 = vmatprep.subr.mxu0 0.0
        %1617 = vmatpush2.msra.mxu0 0.0
        %1618 = vmatprep.subr.mxu0 0.0
        %1619 = vmatpush2.msra.mxu0 0.0
        %1620 = vmatprep.subr.mxu0 0.0
        %1621 = vmatpush2.msra.mxu0 0.0
        %1622 = vmatprep.subr.mxu0 0.0
        %1623 = vmatpush2.msra.mxu0 0.0
        %1624 = vmatprep.subr.mxu0 0.0
        %1625 = vmatpush2.msra.mxu0 0.0
        %1626 = vmatprep.subr.mxu0 0.0
        %1627 = vmatpush2.msra.mxu0 0.0
        %1628 = vmatprep.subr.mxu0 0.0
        %1629 = vmatpush2.msra.mxu0 0.0
        %1630 = vmatprep.subr.mxu0 0.0
        %1631 = vmatpush2.msra.mxu0 0.0
        %1632 = vmatprep.mubr.f32.mxu0 0.0
        %1633 = vmatmul.mubr.f32.gmra.mxu0 %v1456
        %v1634 = vpop.f32.mrf.mxu0
        %v1635 = vadd.f32 0.0, %v1634
        %v1636 = vpop.f32.mrf.mxu0
        %v1637 = vadd.f32 0.0, %v1636
        %1638 = vmatprep.mubr.f32.mxu0 0.0
        %1639 = vmatmul.mubr.f32.gmra.mxu0 %v1459
        %v1640 = vpop.f32.mrf.mxu0
        %v1641 = vadd.f32 0.0, %v1640
        %v1642 = vpop.f32.mrf.mxu0
        %v1643 = vadd.f32 0.0, %v1642
        %1644 = vmatprep.mubr.f32.mxu0 0.0
        %1645 = vmatmul.mubr.f32.gmra.mxu0 %v1462
        %v1646 = vpop.f32.mrf.mxu0
        %v1647 = vadd.f32 0.0, %v1646
        %v1648 = vpop.f32.mrf.mxu0
        %v1649 = vadd.f32 0.0, %v1648
        %1650 = vmatprep.mubr.f32.mxu0 0.0
        %1651 = vmatmul.mubr.f32.gmra.mxu0 %v1465
        %v1652 = vpop.f32.mrf.mxu0
        %v1653 = vadd.f32 0.0, %v1652
        %v1654 = vpop.f32.mrf.mxu0
        %v1655 = vadd.f32 0.0, %v1654
        %1656 = vdwg.mxu0
        %v1657 = vadd.f32 %v1394, %v1546
        %v1658 = vadd.f32 %v1395, %v1548
        %v1659 = vadd.f32 %v1396, %v1635
        %v1660 = vadd.f32 %v1397, %v1637
        %v1661 = vadd.f32 %v1398, %v1552
        %v1662 = vadd.f32 %v1399, %v1554
        %v1663 = vadd.f32 %v1400, %v1641
        %v1664 = vadd.f32 %v1401, %v1643
        %v1665 = vadd.f32 %v1402, %v1558
        %v1666 = vadd.f32 %v1403, %v1560
        %v1667 = vadd.f32 %v1404, %v1647
        %v1668 = vadd.f32 %v1405, %v1649
        %v1669 = vadd.f32 %v1406, %v1564
        %v1670 = vadd.f32 %v1407, %v1566
        %v1671 = vadd.f32 %v1408, %v1653
        %v1672 = vadd.f32 %v1409, %v1655
        %s1673 = scalar_lea.vmem %s7, 128
        %v1674 = vld [vmem:[%s1673] sm:$0xff]
        %v1675 = vld [vmem:[%s1673 + $0x8] sm:$0xff]
        %v1676 = vld [vmem:[%s1673 + $0x10] sm:$0xff]
        %v1677 = vld [vmem:[%s1673 + $0x18] sm:$0xff]
        %v1679 = vsel %vm741, %v1674, 0
        %v1682 = vsel %vm741, %v1675, 0
        %v1685 = vsel %vm741, %v1676, 0
        %v1688 = vsel %vm741, %v1677, 0
        %v1690 = vsel %vm754, %v505, 0
        %v1692 = vsel %vm754, %v647, 0
        %v1694 = vsel %vm754, %v506, 0
        %v1696 = vsel %vm754, %v648, 0
        %1698 = vmatprep.subr.mxu0 0.0
        %1699 = vmatpush1.msra.mxu0 0.0
        %1700 = vmatprep.subr.mxu0 0.0
        %1701 = vmatpush1.msra.mxu0 0.0
        %1702 = vmatprep.subr.mxu0 0.0
        %1703 = vmatpush1.msra.mxu0 0.0
        %1704 = vmatprep.subr.mxu0 0.0
        %1705 = vmatpush1.msra.mxu0 0.0
        %1706 = vmatprep.subr.mxu0 0.0
        %1707 = vmatpush1.msra.mxu0 0.0
        %1708 = vmatprep.subr.mxu0 0.0
        %1709 = vmatpush1.msra.mxu0 0.0
        %1710 = vmatprep.subr.mxu0 0.0
        %1711 = vmatpush1.msra.mxu0 0.0
        %1712 = vmatprep.subr.mxu0 0.0
        %1713 = vmatpush1.msra.mxu0 0.0
        %1714 = vmatprep.subr.mxu0 0.0
        %1715 = vmatpush1.msra.mxu0 0.0
        %1716 = vmatprep.subr.mxu0 0.0
        %1717 = vmatpush1.msra.mxu0 0.0
        %1718 = vmatprep.subr.mxu0 0.0
        %1719 = vmatpush1.msra.mxu0 0.0
        %1720 = vmatprep.subr.mxu0 0.0
        %1721 = vmatpush1.msra.mxu0 0.0
        %1722 = vmatprep.subr.mxu0 0.0
        %1723 = vmatpush1.msra.mxu0 0.0
        %1724 = vmatprep.subr.mxu0 0.0
        %1725 = vmatpush1.msra.mxu0 0.0
        %1726 = vmatprep.subr.mxu0 0.0
        %1727 = vmatpush1.msra.mxu0 0.0
        %1728 = vmatprep.subr.mxu0 %v1692
        %1729 = vmatpush1.msra.mxu0 %v1690
        %1730 = vmatprep.subr.mxu0 0.0
        %1731 = vmatpush2.msra.mxu0 0.0
        %1732 = vmatprep.subr.mxu0 0.0
        %1733 = vmatpush2.msra.mxu0 0.0
        %1734 = vmatprep.subr.mxu0 0.0
        %1735 = vmatpush2.msra.mxu0 0.0
        %1736 = vmatprep.subr.mxu0 0.0
        %1737 = vmatpush2.msra.mxu0 0.0
        %1738 = vmatprep.subr.mxu0 0.0
        %1739 = vmatpush2.msra.mxu0 0.0
        %1740 = vmatprep.subr.mxu0 0.0
        %1741 = vmatpush2.msra.mxu0 0.0
        %1742 = vmatprep.subr.mxu0 0.0
        %1743 = vmatpush2.msra.mxu0 0.0
        %1744 = vmatprep.subr.mxu0 0.0
        %1745 = vmatpush2.msra.mxu0 0.0
        %1746 = vmatprep.subr.mxu0 0.0
        %1747 = vmatpush2.msra.mxu0 0.0
        %1748 = vmatprep.subr.mxu0 0.0
        %1749 = vmatpush2.msra.mxu0 0.0
        %1750 = vmatprep.subr.mxu0 0.0
        %1751 = vmatpush2.msra.mxu0 0.0
        %1752 = vmatprep.subr.mxu0 0.0
        %1753 = vmatpush2.msra.mxu0 0.0
        %1754 = vmatprep.subr.mxu0 0.0
        %1755 = vmatpush2.msra.mxu0 0.0
        %1756 = vmatprep.subr.mxu0 0.0
        %1757 = vmatpush2.msra.mxu0 0.0
        %1758 = vmatprep.subr.mxu0 0.0
        %1759 = vmatpush2.msra.mxu0 0.0
        %1760 = vmatprep.subr.mxu0 0.0
        %1761 = vmatpush2.msra.mxu0 0.0
        %1762 = vmatprep.mubr.f32.mxu0 0.0
        %1763 = vmatmul.mubr.f32.gmra.mxu0 %v1679
        %v1764 = vpop.f32.mrf.mxu0
        %v1765 = vadd.f32 0.0, %v1764
        %v1766 = vpop.f32.mrf.mxu0
        %v1767 = vadd.f32 0.0, %v1766
        %1768 = vmatprep.mubr.f32.mxu0 0.0
        %1769 = vmatmul.mubr.f32.gmra.mxu0 %v1682
        %v1770 = vpop.f32.mrf.mxu0
        %v1771 = vadd.f32 0.0, %v1770
        %v1772 = vpop.f32.mrf.mxu0
        %v1773 = vadd.f32 0.0, %v1772
        %1774 = vmatprep.mubr.f32.mxu0 0.0
        %1775 = vmatmul.mubr.f32.gmra.mxu0 %v1685
        %v1776 = vpop.f32.mrf.mxu0
        %v1777 = vadd.f32 0.0, %v1776
        %v1778 = vpop.f32.mrf.mxu0
        %v1779 = vadd.f32 0.0, %v1778
        %1780 = vmatprep.mubr.f32.mxu0 0.0
        %1781 = vmatmul.mubr.f32.gmra.mxu0 %v1688
        %v1782 = vpop.f32.mrf.mxu0
        %v1783 = vadd.f32 0.0, %v1782
        %v1784 = vpop.f32.mrf.mxu0
        %v1785 = vadd.f32 0.0, %v1784
        %1786 = vdwg.mxu0
        %1787 = vmatprep.subr.mxu0 0.0
        %1788 = vmatpush1.msra.mxu0 0.0
        %1789 = vmatprep.subr.mxu0 0.0
        %1790 = vmatpush1.msra.mxu0 0.0
        %1791 = vmatprep.subr.mxu0 0.0
        %1792 = vmatpush1.msra.mxu0 0.0
        %1793 = vmatprep.subr.mxu0 0.0
        %1794 = vmatpush1.msra.mxu0 0.0
        %1795 = vmatprep.subr.mxu0 0.0
        %1796 = vmatpush1.msra.mxu0 0.0
        %1797 = vmatprep.subr.mxu0 0.0
        %1798 = vmatpush1.msra.mxu0 0.0
        %1799 = vmatprep.subr.mxu0 0.0
        %1800 = vmatpush1.msra.mxu0 0.0
        %1801 = vmatprep.subr.mxu0 0.0
        %1802 = vmatpush1.msra.mxu0 0.0
        %1803 = vmatprep.subr.mxu0 0.0
        %1804 = vmatpush1.msra.mxu0 0.0
        %1805 = vmatprep.subr.mxu0 0.0
        %1806 = vmatpush1.msra.mxu0 0.0
        %1807 = vmatprep.subr.mxu0 0.0
        %1808 = vmatpush1.msra.mxu0 0.0
        %1809 = vmatprep.subr.mxu0 0.0
        %1810 = vmatpush1.msra.mxu0 0.0
        %1811 = vmatprep.subr.mxu0 0.0
        %1812 = vmatpush1.msra.mxu0 0.0
        %1813 = vmatprep.subr.mxu0 0.0
        %1814 = vmatpush1.msra.mxu0 0.0
        %1815 = vmatprep.subr.mxu0 0.0
        %1816 = vmatpush1.msra.mxu0 0.0
        %1817 = vmatprep.subr.mxu0 %v1696
        %1818 = vmatpush1.msra.mxu0 %v1694
        %1819 = vmatprep.subr.mxu0 0.0
        %1820 = vmatpush2.msra.mxu0 0.0
        %1821 = vmatprep.subr.mxu0 0.0
        %1822 = vmatpush2.msra.mxu0 0.0
        %1823 = vmatprep.subr.mxu0 0.0
        %1824 = vmatpush2.msra.mxu0 0.0
        %1825 = vmatprep.subr.mxu0 0.0
        %1826 = vmatpush2.msra.mxu0 0.0
        %1827 = vmatprep.subr.mxu0 0.0
        %1828 = vmatpush2.msra.mxu0 0.0
        %1829 = vmatprep.subr.mxu0 0.0
        %1830 = vmatpush2.msra.mxu0 0.0
        %1831 = vmatprep.subr.mxu0 0.0
        %1832 = vmatpush2.msra.mxu0 0.0
        %1833 = vmatprep.subr.mxu0 0.0
        %1834 = vmatpush2.msra.mxu0 0.0
        %1835 = vmatprep.subr.mxu0 0.0
        %1836 = vmatpush2.msra.mxu0 0.0
        %1837 = vmatprep.subr.mxu0 0.0
        %1838 = vmatpush2.msra.mxu0 0.0
        %1839 = vmatprep.subr.mxu0 0.0
        %1840 = vmatpush2.msra.mxu0 0.0
        %1841 = vmatprep.subr.mxu0 0.0
        %1842 = vmatpush2.msra.mxu0 0.0
        %1843 = vmatprep.subr.mxu0 0.0
        %1844 = vmatpush2.msra.mxu0 0.0
        %1845 = vmatprep.subr.mxu0 0.0
        %1846 = vmatpush2.msra.mxu0 0.0
        %1847 = vmatprep.subr.mxu0 0.0
        %1848 = vmatpush2.msra.mxu0 0.0
        %1849 = vmatprep.subr.mxu0 0.0
        %1850 = vmatpush2.msra.mxu0 0.0
        %1851 = vmatprep.mubr.f32.mxu0 0.0
        %1852 = vmatmul.mubr.f32.gmra.mxu0 %v1679
        %v1853 = vpop.f32.mrf.mxu0
        %v1854 = vadd.f32 0.0, %v1853
        %v1855 = vpop.f32.mrf.mxu0
        %v1856 = vadd.f32 0.0, %v1855
        %1857 = vmatprep.mubr.f32.mxu0 0.0
        %1858 = vmatmul.mubr.f32.gmra.mxu0 %v1682
        %v1859 = vpop.f32.mrf.mxu0
        %v1860 = vadd.f32 0.0, %v1859
        %v1861 = vpop.f32.mrf.mxu0
        %v1862 = vadd.f32 0.0, %v1861
        %1863 = vmatprep.mubr.f32.mxu0 0.0
        %1864 = vmatmul.mubr.f32.gmra.mxu0 %v1685
        %v1865 = vpop.f32.mrf.mxu0
        %v1866 = vadd.f32 0.0, %v1865
        %v1867 = vpop.f32.mrf.mxu0
        %v1868 = vadd.f32 0.0, %v1867
        %1869 = vmatprep.mubr.f32.mxu0 0.0
        %1870 = vmatmul.mubr.f32.gmra.mxu0 %v1688
        %v1871 = vpop.f32.mrf.mxu0
        %v1872 = vadd.f32 0.0, %v1871
        %v1873 = vpop.f32.mrf.mxu0
        %v1874 = vadd.f32 0.0, %v1873
        %1875 = vdwg.mxu0
        %v1876 = vadd.f32 %v1657, %v1765
        %v1877 = vadd.f32 %v1658, %v1767
        %v1878 = vadd.f32 %v1659, %v1854
        %v1879 = vadd.f32 %v1660, %v1856
        %v1880 = vadd.f32 %v1661, %v1771
        %v1881 = vadd.f32 %v1662, %v1773
        %v1882 = vadd.f32 %v1663, %v1860
        %v1883 = vadd.f32 %v1664, %v1862
        %v1884 = vadd.f32 %v1665, %v1777
        %v1885 = vadd.f32 %v1666, %v1779
        %v1886 = vadd.f32 %v1667, %v1866
        %v1887 = vadd.f32 %v1668, %v1868
        %v1888 = vadd.f32 %v1669, %v1783
        %v1889 = vadd.f32 %v1670, %v1785
        %v1890 = vadd.f32 %v1671, %v1872
        %v1891 = vadd.f32 %v1672, %v1874
        %1892 = vrot.lane.b32.xlu0 %v505, 127
        %v1893 = vpop.permute.xlu0 %1892
        %1894 = vrot.lane.b32.xlu0 %v647, 127
        %v1895 = vpop.permute.xlu0 %1894
        %1896 = vrot.lane.b32.xlu0 %v506, 127
        %v1897 = vpop.permute.xlu0 %1896
        %1898 = vrot.lane.b32.xlu0 %v648, 127
        %v1899 = vpop.permute.xlu0 %1898
        %vm1900 = vcmp.lt.s32.totalorder %v660, 127
        %v1901 = vsel %vm1900, %v1897, %v1899
        %v1902 = vsel %vm1900, %v1895, %v1897
        %v1903 = vsel %vm1900, %v1893, %v1895
        %v1904 = vsel %vm1900, %v1899, %v1893
        %s1905 = scalar_lea.vmem %s11, 20
        %v1906 = vld [vmem:[%s1905] sm:$0xf]
        %v1908 = vlaneseq
        %v1909 = vshrl.u32 %v1908, 7
        %v1910 = vsub.s32 0, %v1909
        %v1911 = vrot.slane %v1906, %v1910
        %v1912 = vlaneseq
        %v1913 = vshrl.u32 %v1912, 7
        %v1914 = vsub.s32 1, %v1913
        %v1915 = vrot.slane %v1906, %v1914
        %v1916 = vlaneseq
        %v1917 = vshrl.u32 %v1916, 7
        %v1918 = vsub.s32 2, %v1917
        %v1919 = vrot.slane %v1906, %v1918
        %v1920 = vlaneseq
        %v1921 = vshrl.u32 %v1920, 7
        %v1922 = vsub.s32 3, %v1921
        %v1923 = vrot.slane %v1906, %v1922
        %v1928 = vmul.f32 %v1903, %v1911
        %v1929 = vmul.f32 %v1902, %v1915
        %v1930 = vmul.f32 %v1901, %v1919
        %v1931 = vmul.f32 %v1904, %v1923
        %s1932 = scalar_lea.vmem %s7, 160
        %v1933 = vld [vmem:[%s1932] sm:$0xff]
        %v1934 = vld [vmem:[%s1932 + $0x8] sm:$0xff]
        %v1935 = vld [vmem:[%s1932 + $0x10] sm:$0xff]
        %v1936 = vld [vmem:[%s1932 + $0x18] sm:$0xff]
        %v1938 = vsel %vm741, %v1933, 0
        %v1941 = vsel %vm741, %v1934, 0
        %v1944 = vsel %vm741, %v1935, 0
        %v1947 = vsel %vm741, %v1936, 0
        %v1950 = vsel %vm754, %v1928, 0
        %v1953 = vsel %vm754, %v1929, 0
        %v1956 = vsel %vm754, %v1930, 0
        %v1959 = vsel %vm754, %v1931, 0
        %1961 = vmatprep.subr.mxu0 0.0
        %1962 = vmatpush1.msra.mxu0 0.0
        %1963 = vmatprep.subr.mxu0 0.0
        %1964 = vmatpush1.msra.mxu0 0.0
        %1965 = vmatprep.subr.mxu0 0.0
        %1966 = vmatpush1.msra.mxu0 0.0
        %1967 = vmatprep.subr.mxu0 0.0
        %1968 = vmatpush1.msra.mxu0 0.0
        %1969 = vmatprep.subr.mxu0 0.0
        %1970 = vmatpush1.msra.mxu0 0.0
        %1971 = vmatprep.subr.mxu0 0.0
        %1972 = vmatpush1.msra.mxu0 0.0
        %1973 = vmatprep.subr.mxu0 0.0
        %1974 = vmatpush1.msra.mxu0 0.0
        %1975 = vmatprep.subr.mxu0 0.0
        %1976 = vmatpush1.msra.mxu0 0.0
        %1977 = vmatprep.subr.mxu0 0.0
        %1978 = vmatpush1.msra.mxu0 0.0
        %1979 = vmatprep.subr.mxu0 0.0
        %1980 = vmatpush1.msra.mxu0 0.0
        %1981 = vmatprep.subr.mxu0 0.0
        %1982 = vmatpush1.msra.mxu0 0.0
        %1983 = vmatprep.subr.mxu0 0.0
        %1984 = vmatpush1.msra.mxu0 0.0
        %1985 = vmatprep.subr.mxu0 0.0
        %1986 = vmatpush1.msra.mxu0 0.0
        %1987 = vmatprep.subr.mxu0 0.0
        %1988 = vmatpush1.msra.mxu0 0.0
        %1989 = vmatprep.subr.mxu0 0.0
        %1990 = vmatpush1.msra.mxu0 0.0
        %1991 = vmatprep.subr.mxu0 %v1953
        %1992 = vmatpush1.msra.mxu0 %v1950
        %1993 = vmatprep.subr.mxu0 0.0
        %1994 = vmatpush2.msra.mxu0 0.0
        %1995 = vmatprep.subr.mxu0 0.0
        %1996 = vmatpush2.msra.mxu0 0.0
        %1997 = vmatprep.subr.mxu0 0.0
        %1998 = vmatpush2.msra.mxu0 0.0
        %1999 = vmatprep.subr.mxu0 0.0
        %2000 = vmatpush2.msra.mxu0 0.0
        %2001 = vmatprep.subr.mxu0 0.0
        %2002 = vmatpush2.msra.mxu0 0.0
        %2003 = vmatprep.subr.mxu0 0.0
        %2004 = vmatpush2.msra.mxu0 0.0
        %2005 = vmatprep.subr.mxu0 0.0
        %2006 = vmatpush2.msra.mxu0 0.0
        %2007 = vmatprep.subr.mxu0 0.0
        %2008 = vmatpush2.msra.mxu0 0.0
        %2009 = vmatprep.subr.mxu0 0.0
        %2010 = vmatpush2.msra.mxu0 0.0
        %2011 = vmatprep.subr.mxu0 0.0
        %2012 = vmatpush2.msra.mxu0 0.0
        %2013 = vmatprep.subr.mxu0 0.0
        %2014 = vmatpush2.msra.mxu0 0.0
        %2015 = vmatprep.subr.mxu0 0.0
        %2016 = vmatpush2.msra.mxu0 0.0
        %2017 = vmatprep.subr.mxu0 0.0
        %2018 = vmatpush2.msra.mxu0 0.0
        %2019 = vmatprep.subr.mxu0 0.0
        %2020 = vmatpush2.msra.mxu0 0.0
        %2021 = vmatprep.subr.mxu0 0.0
        %2022 = vmatpush2.msra.mxu0 0.0
        %2023 = vmatprep.subr.mxu0 0.0
        %2024 = vmatpush2.msra.mxu0 0.0
        %2025 = vmatprep.mubr.f32.mxu0 0.0
        %2026 = vmatmul.mubr.f32.gmra.mxu0 %v1938
        %v2027 = vpop.f32.mrf.mxu0
        %v2028 = vadd.f32 0.0, %v2027
        %v2029 = vpop.f32.mrf.mxu0
        %v2030 = vadd.f32 0.0, %v2029
        %2031 = vmatprep.mubr.f32.mxu0 0.0
        %2032 = vmatmul.mubr.f32.gmra.mxu0 %v1941
        %v2033 = vpop.f32.mrf.mxu0
        %v2034 = vadd.f32 0.0, %v2033
        %v2035 = vpop.f32.mrf.mxu0
        %v2036 = vadd.f32 0.0, %v2035
        %2037 = vmatprep.mubr.f32.mxu0 0.0
        %2038 = vmatmul.mubr.f32.gmra.mxu0 %v1944
        %v2039 = vpop.f32.mrf.mxu0
        %v2040 = vadd.f32 0.0, %v2039
        %v2041 = vpop.f32.mrf.mxu0
        %v2042 = vadd.f32 0.0, %v2041
        %2043 = vmatprep.mubr.f32.mxu0 0.0
        %2044 = vmatmul.mubr.f32.gmra.mxu0 %v1947
        %v2045 = vpop.f32.mrf.mxu0
        %v2046 = vadd.f32 0.0, %v2045
        %v2047 = vpop.f32.mrf.mxu0
        %v2048 = vadd.f32 0.0, %v2047
        %2049 = vdwg.mxu0
        %2050 = vmatprep.subr.mxu0 0.0
        %2051 = vmatpush1.msra.mxu0 0.0
        %2052 = vmatprep.subr.mxu0 0.0
        %2053 = vmatpush1.msra.mxu0 0.0
        %2054 = vmatprep.subr.mxu0 0.0
        %2055 = vmatpush1.msra.mxu0 0.0
        %2056 = vmatprep.subr.mxu0 0.0
        %2057 = vmatpush1.msra.mxu0 0.0
        %2058 = vmatprep.subr.mxu0 0.0
        %2059 = vmatpush1.msra.mxu0 0.0
        %2060 = vmatprep.subr.mxu0 0.0
        %2061 = vmatpush1.msra.mxu0 0.0
        %2062 = vmatprep.subr.mxu0 0.0
        %2063 = vmatpush1.msra.mxu0 0.0
        %2064 = vmatprep.subr.mxu0 0.0
        %2065 = vmatpush1.msra.mxu0 0.0
        %2066 = vmatprep.subr.mxu0 0.0
        %2067 = vmatpush1.msra.mxu0 0.0
        %2068 = vmatprep.subr.mxu0 0.0
        %2069 = vmatpush1.msra.mxu0 0.0
        %2070 = vmatprep.subr.mxu0 0.0
        %2071 = vmatpush1.msra.mxu0 0.0
        %2072 = vmatprep.subr.mxu0 0.0
        %2073 = vmatpush1.msra.mxu0 0.0
        %2074 = vmatprep.subr.mxu0 0.0
        %2075 = vmatpush1.msra.mxu0 0.0
        %2076 = vmatprep.subr.mxu0 0.0
        %2077 = vmatpush1.msra.mxu0 0.0
        %2078 = vmatprep.subr.mxu0 0.0
        %2079 = vmatpush1.msra.mxu0 0.0
        %2080 = vmatprep.subr.mxu0 %v1959
        %2081 = vmatpush1.msra.mxu0 %v1956
        %2082 = vmatprep.subr.mxu0 0.0
        %2083 = vmatpush2.msra.mxu0 0.0
        %2084 = vmatprep.subr.mxu0 0.0
        %2085 = vmatpush2.msra.mxu0 0.0
        %2086 = vmatprep.subr.mxu0 0.0
        %2087 = vmatpush2.msra.mxu0 0.0
        %2088 = vmatprep.subr.mxu0 0.0
        %2089 = vmatpush2.msra.mxu0 0.0
        %2090 = vmatprep.subr.mxu0 0.0
        %2091 = vmatpush2.msra.mxu0 0.0
        %2092 = vmatprep.subr.mxu0 0.0
        %2093 = vmatpush2.msra.mxu0 0.0
        %2094 = vmatprep.subr.mxu0 0.0
        %2095 = vmatpush2.msra.mxu0 0.0
        %2096 = vmatprep.subr.mxu0 0.0
        %2097 = vmatpush2.msra.mxu0 0.0
        %2098 = vmatprep.subr.mxu0 0.0
        %2099 = vmatpush2.msra.mxu0 0.0
        %2100 = vmatprep.subr.mxu0 0.0
        %2101 = vmatpush2.msra.mxu0 0.0
        %2102 = vmatprep.subr.mxu0 0.0
        %2103 = vmatpush2.msra.mxu0 0.0
        %2104 = vmatprep.subr.mxu0 0.0
        %2105 = vmatpush2.msra.mxu0 0.0
        %2106 = vmatprep.subr.mxu0 0.0
        %2107 = vmatpush2.msra.mxu0 0.0
        %2108 = vmatprep.subr.mxu0 0.0
        %2109 = vmatpush2.msra.mxu0 0.0
        %2110 = vmatprep.subr.mxu0 0.0
        %2111 = vmatpush2.msra.mxu0 0.0
        %2112 = vmatprep.subr.mxu0 0.0
        %2113 = vmatpush2.msra.mxu0 0.0
        %2114 = vmatprep.mubr.f32.mxu0 0.0
        %2115 = vmatmul.mubr.f32.gmra.mxu0 %v1938
        %v2116 = vpop.f32.mrf.mxu0
        %v2117 = vadd.f32 0.0, %v2116
        %v2118 = vpop.f32.mrf.mxu0
        %v2119 = vadd.f32 0.0, %v2118
        %2120 = vmatprep.mubr.f32.mxu0 0.0
        %2121 = vmatmul.mubr.f32.gmra.mxu0 %v1941
        %v2122 = vpop.f32.mrf.mxu0
        %v2123 = vadd.f32 0.0, %v2122
        %v2124 = vpop.f32.mrf.mxu0
        %v2125 = vadd.f32 0.0, %v2124
        %2126 = vmatprep.mubr.f32.mxu0 0.0
        %2127 = vmatmul.mubr.f32.gmra.mxu0 %v1944
        %v2128 = vpop.f32.mrf.mxu0
        %v2129 = vadd.f32 0.0, %v2128
        %v2130 = vpop.f32.mrf.mxu0
        %v2131 = vadd.f32 0.0, %v2130
        %2132 = vmatprep.mubr.f32.mxu0 0.0
        %2133 = vmatmul.mubr.f32.gmra.mxu0 %v1947
        %v2134 = vpop.f32.mrf.mxu0
        %v2135 = vadd.f32 0.0, %v2134
        %v2136 = vpop.f32.mrf.mxu0
        %v2137 = vadd.f32 0.0, %v2136
        %2138 = vdwg.mxu0
        %v2139 = vadd.f32 %v1876, %v2028
        %v2140 = vadd.f32 %v1877, %v2030
        %v2141 = vadd.f32 %v1878, %v2117
        %v2142 = vadd.f32 %v1879, %v2119
        %v2143 = vadd.f32 %v1880, %v2034
        %v2144 = vadd.f32 %v1881, %v2036
        %v2145 = vadd.f32 %v1882, %v2123
        %v2146 = vadd.f32 %v1883, %v2125
        %v2147 = vadd.f32 %v1884, %v2040
        %v2148 = vadd.f32 %v1885, %v2042
        %v2149 = vadd.f32 %v1886, %v2129
        %v2150 = vadd.f32 %v1887, %v2131
        %v2151 = vadd.f32 %v1888, %v2046
        %v2152 = vadd.f32 %v1889, %v2048
        %v2153 = vadd.f32 %v1890, %v2135
        %v2154 = vadd.f32 %v1891, %v2137
        %2155 = vrot.lane.b32.xlu0 %v505, 113
        %v2156 = vpop.permute.xlu0 %2155
        %2157 = vrot.lane.b32.xlu0 %v647, 113
        %v2158 = vpop.permute.xlu0 %2157
        %2159 = vrot.lane.b32.xlu0 %v506, 113
        %v2160 = vpop.permute.xlu0 %2159
        %2161 = vrot.lane.b32.xlu0 %v648, 113
        %v2162 = vpop.permute.xlu0 %2161
        %vm2163 = vcmp.lt.s32.totalorder %v660, 113
        %v2164 = vsel %vm2163, %v2160, %v2162
        %v2165 = vsel %vm2163, %v2158, %v2160
        %v2166 = vsel %vm2163, %v2156, %v2158
        %v2167 = vsel %vm2163, %v2162, %v2156
        %s2168 = scalar_lea.vmem %s11, 24
        %v2169 = vld [vmem:[%s2168] sm:$0xf]
        %v2171 = vlaneseq
        %v2172 = vshrl.u32 %v2171, 7
        %v2173 = vsub.s32 0, %v2172
        %v2174 = vrot.slane %v2169, %v2173
        %v2175 = vlaneseq
        %v2176 = vshrl.u32 %v2175, 7
        %v2177 = vsub.s32 1, %v2176
        %v2178 = vrot.slane %v2169, %v2177
        %v2179 = vlaneseq
        %v2180 = vshrl.u32 %v2179, 7
        %v2181 = vsub.s32 2, %v2180
        %v2182 = vrot.slane %v2169, %v2181
        %v2183 = vlaneseq
        %v2184 = vshrl.u32 %v2183, 7
        %v2185 = vsub.s32 3, %v2184
        %v2186 = vrot.slane %v2169, %v2185
        %v2191 = vmul.f32 %v2166, %v2174
        %v2192 = vmul.f32 %v2165, %v2178
        %v2193 = vmul.f32 %v2164, %v2182
        %v2194 = vmul.f32 %v2167, %v2186
        %s2195 = scalar_lea.vmem %s7, 192
        %v2196 = vld [vmem:[%s2195] sm:$0xff]
        %v2197 = vld [vmem:[%s2195 + $0x8] sm:$0xff]
        %v2198 = vld [vmem:[%s2195 + $0x10] sm:$0xff]
        %v2199 = vld [vmem:[%s2195 + $0x18] sm:$0xff]
        %v2201 = vsel %vm741, %v2196, 0
        %v2204 = vsel %vm741, %v2197, 0
        %v2207 = vsel %vm741, %v2198, 0
        %v2210 = vsel %vm741, %v2199, 0
        %v2213 = vsel %vm754, %v2191, 0
        %v2216 = vsel %vm754, %v2192, 0
        %v2219 = vsel %vm754, %v2193, 0
        %v2222 = vsel %vm754, %v2194, 0
        %2224 = vmatprep.subr.mxu0 0.0
        %2225 = vmatpush1.msra.mxu0 0.0
        %2226 = vmatprep.subr.mxu0 0.0
        %2227 = vmatpush1.msra.mxu0 0.0
        %2228 = vmatprep.subr.mxu0 0.0
        %2229 = vmatpush1.msra.mxu0 0.0
        %2230 = vmatprep.subr.mxu0 0.0
        %2231 = vmatpush1.msra.mxu0 0.0
        %2232 = vmatprep.subr.mxu0 0.0
        %2233 = vmatpush1.msra.mxu0 0.0
        %2234 = vmatprep.subr.mxu0 0.0
        %2235 = vmatpush1.msra.mxu0 0.0
        %2236 = vmatprep.subr.mxu0 0.0
        %2237 = vmatpush1.msra.mxu0 0.0
        %2238 = vmatprep.subr.mxu0 0.0
        %2239 = vmatpush1.msra.mxu0 0.0
        %2240 = vmatprep.subr.mxu0 0.0
        %2241 = vmatpush1.msra.mxu0 0.0
        %2242 = vmatprep.subr.mxu0 0.0
        %2243 = vmatpush1.msra.mxu0 0.0
        %2244 = vmatprep.subr.mxu0 0.0
        %2245 = vmatpush1.msra.mxu0 0.0
        %2246 = vmatprep.subr.mxu0 0.0
        %2247 = vmatpush1.msra.mxu0 0.0
        %2248 = vmatprep.subr.mxu0 0.0
        %2249 = vmatpush1.msra.mxu0 0.0
        %2250 = vmatprep.subr.mxu0 0.0
        %2251 = vmatpush1.msra.mxu0 0.0
        %2252 = vmatprep.subr.mxu0 0.0
        %2253 = vmatpush1.msra.mxu0 0.0
        %2254 = vmatprep.subr.mxu0 %v2216
        %2255 = vmatpush1.msra.mxu0 %v2213
        %2256 = vmatprep.subr.mxu0 0.0
        %2257 = vmatpush2.msra.mxu0 0.0
        %2258 = vmatprep.subr.mxu0 0.0
        %2259 = vmatpush2.msra.mxu0 0.0
        %2260 = vmatprep.subr.mxu0 0.0
        %2261 = vmatpush2.msra.mxu0 0.0
        %2262 = vmatprep.subr.mxu0 0.0
        %2263 = vmatpush2.msra.mxu0 0.0
        %2264 = vmatprep.subr.mxu0 0.0
        %2265 = vmatpush2.msra.mxu0 0.0
        %2266 = vmatprep.subr.mxu0 0.0
        %2267 = vmatpush2.msra.mxu0 0.0
        %2268 = vmatprep.subr.mxu0 0.0
        %2269 = vmatpush2.msra.mxu0 0.0
        %2270 = vmatprep.subr.mxu0 0.0
        %2271 = vmatpush2.msra.mxu0 0.0
        %2272 = vmatprep.subr.mxu0 0.0
        %2273 = vmatpush2.msra.mxu0 0.0
        %2274 = vmatprep.subr.mxu0 0.0
        %2275 = vmatpush2.msra.mxu0 0.0
        %2276 = vmatprep.subr.mxu0 0.0
        %2277 = vmatpush2.msra.mxu0 0.0
        %2278 = vmatprep.subr.mxu0 0.0
        %2279 = vmatpush2.msra.mxu0 0.0
        %2280 = vmatprep.subr.mxu0 0.0
        %2281 = vmatpush2.msra.mxu0 0.0
        %2282 = vmatprep.subr.mxu0 0.0
        %2283 = vmatpush2.msra.mxu0 0.0
        %2284 = vmatprep.subr.mxu0 0.0
        %2285 = vmatpush2.msra.mxu0 0.0
        %2286 = vmatprep.subr.mxu0 0.0
        %2287 = vmatpush2.msra.mxu0 0.0
        %2288 = vmatprep.mubr.f32.mxu0 0.0
        %2289 = vmatmul.mubr.f32.gmra.mxu0 %v2201
        %v2290 = vpop.f32.mrf.mxu0
        %v2291 = vadd.f32 0.0, %v2290
        %v2292 = vpop.f32.mrf.mxu0
        %v2293 = vadd.f32 0.0, %v2292
        %2294 = vmatprep.mubr.f32.mxu0 0.0
        %2295 = vmatmul.mubr.f32.gmra.mxu0 %v2204
        %v2296 = vpop.f32.mrf.mxu0
        %v2297 = vadd.f32 0.0, %v2296
        %v2298 = vpop.f32.mrf.mxu0
        %v2299 = vadd.f32 0.0, %v2298
        %2300 = vmatprep.mubr.f32.mxu0 0.0
        %2301 = vmatmul.mubr.f32.gmra.mxu0 %v2207
        %v2302 = vpop.f32.mrf.mxu0
        %v2303 = vadd.f32 0.0, %v2302
        %v2304 = vpop.f32.mrf.mxu0
        %v2305 = vadd.f32 0.0, %v2304
        %2306 = vmatprep.mubr.f32.mxu0 0.0
        %2307 = vmatmul.mubr.f32.gmra.mxu0 %v2210
        %v2308 = vpop.f32.mrf.mxu0
        %v2309 = vadd.f32 0.0, %v2308
        %v2310 = vpop.f32.mrf.mxu0
        %v2311 = vadd.f32 0.0, %v2310
        %2312 = vdwg.mxu0
        %2313 = vmatprep.subr.mxu0 0.0
        %2314 = vmatpush1.msra.mxu0 0.0
        %2315 = vmatprep.subr.mxu0 0.0
        %2316 = vmatpush1.msra.mxu0 0.0
        %2317 = vmatprep.subr.mxu0 0.0
        %2318 = vmatpush1.msra.mxu0 0.0
        %2319 = vmatprep.subr.mxu0 0.0
        %2320 = vmatpush1.msra.mxu0 0.0
        %2321 = vmatprep.subr.mxu0 0.0
        %2322 = vmatpush1.msra.mxu0 0.0
        %2323 = vmatprep.subr.mxu0 0.0
        %2324 = vmatpush1.msra.mxu0 0.0
        %2325 = vmatprep.subr.mxu0 0.0
        %2326 = vmatpush1.msra.mxu0 0.0
        %2327 = vmatprep.subr.mxu0 0.0
        %2328 = vmatpush1.msra.mxu0 0.0
        %2329 = vmatprep.subr.mxu0 0.0
        %2330 = vmatpush1.msra.mxu0 0.0
        %2331 = vmatprep.subr.mxu0 0.0
        %2332 = vmatpush1.msra.mxu0 0.0
        %2333 = vmatprep.subr.mxu0 0.0
        %2334 = vmatpush1.msra.mxu0 0.0
        %2335 = vmatprep.subr.mxu0 0.0
        %2336 = vmatpush1.msra.mxu0 0.0
        %2337 = vmatprep.subr.mxu0 0.0
        %2338 = vmatpush1.msra.mxu0 0.0
        %2339 = vmatprep.subr.mxu0 0.0
        %2340 = vmatpush1.msra.mxu0 0.0
        %2341 = vmatprep.subr.mxu0 0.0
        %2342 = vmatpush1.msra.mxu0 0.0
        %2343 = vmatprep.subr.mxu0 %v2222
        %2344 = vmatpush1.msra.mxu0 %v2219
        %2345 = vmatprep.subr.mxu0 0.0
        %2346 = vmatpush2.msra.mxu0 0.0
        %2347 = vmatprep.subr.mxu0 0.0
        %2348 = vmatpush2.msra.mxu0 0.0
        %2349 = vmatprep.subr.mxu0 0.0
        %2350 = vmatpush2.msra.mxu0 0.0
        %2351 = vmatprep.subr.mxu0 0.0
        %2352 = vmatpush2.msra.mxu0 0.0
        %2353 = vmatprep.subr.mxu0 0.0
        %2354 = vmatpush2.msra.mxu0 0.0
        %2355 = vmatprep.subr.mxu0 0.0
        %2356 = vmatpush2.msra.mxu0 0.0
        %2357 = vmatprep.subr.mxu0 0.0
        %2358 = vmatpush2.msra.mxu0 0.0
        %2359 = vmatprep.subr.mxu0 0.0
        %2360 = vmatpush2.msra.mxu0 0.0
        %2361 = vmatprep.subr.mxu0 0.0
        %2362 = vmatpush2.msra.mxu0 0.0
        %2363 = vmatprep.subr.mxu0 0.0
        %2364 = vmatpush2.msra.mxu0 0.0
        %2365 = vmatprep.subr.mxu0 0.0
        %2366 = vmatpush2.msra.mxu0 0.0
        %2367 = vmatprep.subr.mxu0 0.0
        %2368 = vmatpush2.msra.mxu0 0.0
        %2369 = vmatprep.subr.mxu0 0.0
        %2370 = vmatpush2.msra.mxu0 0.0
        %2371 = vmatprep.subr.mxu0 0.0
        %2372 = vmatpush2.msra.mxu0 0.0
        %2373 = vmatprep.subr.mxu0 0.0
        %2374 = vmatpush2.msra.mxu0 0.0
        %2375 = vmatprep.subr.mxu0 0.0
        %2376 = vmatpush2.msra.mxu0 0.0
        %2377 = vmatprep.mubr.f32.mxu0 0.0
        %2378 = vmatmul.mubr.f32.gmra.mxu0 %v2201
        %v2379 = vpop.f32.mrf.mxu0
        %v2380 = vadd.f32 0.0, %v2379
        %v2381 = vpop.f32.mrf.mxu0
        %v2382 = vadd.f32 0.0, %v2381
        %2383 = vmatprep.mubr.f32.mxu0 0.0
        %2384 = vmatmul.mubr.f32.gmra.mxu0 %v2204
        %v2385 = vpop.f32.mrf.mxu0
        %v2386 = vadd.f32 0.0, %v2385
        %v2387 = vpop.f32.mrf.mxu0
        %v2388 = vadd.f32 0.0, %v2387
        %2389 = vmatprep.mubr.f32.mxu0 0.0
        %2390 = vmatmul.mubr.f32.gmra.mxu0 %v2207
        %v2391 = vpop.f32.mrf.mxu0
        %v2392 = vadd.f32 0.0, %v2391
        %v2393 = vpop.f32.mrf.mxu0
        %v2394 = vadd.f32 0.0, %v2393
        %2395 = vmatprep.mubr.f32.mxu0 0.0
        %2396 = vmatmul.mubr.f32.gmra.mxu0 %v2210
        %v2397 = vpop.f32.mrf.mxu0
        %v2398 = vadd.f32 0.0, %v2397
        %v2399 = vpop.f32.mrf.mxu0
        %v2400 = vadd.f32 0.0, %v2399
        %2401 = vdwg.mxu0
        %v2402 = vadd.f32 %v2139, %v2291
        %v2403 = vadd.f32 %v2140, %v2293
        %v2404 = vadd.f32 %v2141, %v2380
        %v2405 = vadd.f32 %v2142, %v2382
        %v2406 = vadd.f32 %v2143, %v2297
        %v2407 = vadd.f32 %v2144, %v2299
        %v2408 = vadd.f32 %v2145, %v2386
        %v2409 = vadd.f32 %v2146, %v2388
        %v2410 = vadd.f32 %v2147, %v2303
        %v2411 = vadd.f32 %v2148, %v2305
        %v2412 = vadd.f32 %v2149, %v2392
        %v2413 = vadd.f32 %v2150, %v2394
        %v2414 = vadd.f32 %v2151, %v2309
        %v2415 = vadd.f32 %v2152, %v2311
        %v2416 = vadd.f32 %v2153, %v2398
        %v2417 = vadd.f32 %v2154, %v2400
        %2418 = vrot.lane.b32.xlu0 %v505, 112
        %v2419 = vpop.permute.xlu0 %2418
        %2420 = vrot.lane.b32.xlu0 %v647, 112
        %v2421 = vpop.permute.xlu0 %2420
        %2422 = vrot.lane.b32.xlu0 %v506, 112
        %v2423 = vpop.permute.xlu0 %2422
        %2424 = vrot.lane.b32.xlu0 %v648, 112
        %v2425 = vpop.permute.xlu0 %2424
        %vm2426 = vcmp.lt.s32.totalorder %v660, 112
        %v2427 = vsel %vm2426, %v2423, %v2425
        %v2428 = vsel %vm2426, %v2421, %v2423
        %v2429 = vsel %vm2426, %v2419, %v2421
        %v2430 = vsel %vm2426, %v2425, %v2419
        %s2431 = scalar_lea.vmem %s11, 28
        %v2432 = vld [vmem:[%s2431] sm:$0xf]
        %v2434 = vlaneseq
        %v2435 = vshrl.u32 %v2434, 7
        %v2436 = vsub.s32 0, %v2435
        %v2437 = vrot.slane %v2432, %v2436
        %v2438 = vlaneseq
        %v2439 = vshrl.u32 %v2438, 7
        %v2440 = vsub.s32 1, %v2439
        %v2441 = vrot.slane %v2432, %v2440
        %v2442 = vlaneseq
        %v2443 = vshrl.u32 %v2442, 7
        %v2444 = vsub.s32 2, %v2443
        %v2445 = vrot.slane %v2432, %v2444
        %v2446 = vlaneseq
        %v2447 = vshrl.u32 %v2446, 7
        %v2448 = vsub.s32 3, %v2447
        %v2449 = vrot.slane %v2432, %v2448
        %v2454 = vmul.f32 %v2429, %v2437
        %v2455 = vmul.f32 %v2428, %v2441
        %v2456 = vmul.f32 %v2427, %v2445
        %v2457 = vmul.f32 %v2430, %v2449
        %s2458 = scalar_lea.vmem %s7, 224
        %v2459 = vld [vmem:[%s2458] sm:$0xff]
        %v2460 = vld [vmem:[%s2458 + $0x8] sm:$0xff]
        %v2461 = vld [vmem:[%s2458 + $0x10] sm:$0xff]
        %v2462 = vld [vmem:[%s2458 + $0x18] sm:$0xff]
        %v2464 = vsel %vm741, %v2459, 0
        %v2467 = vsel %vm741, %v2460, 0
        %v2470 = vsel %vm741, %v2461, 0
        %v2473 = vsel %vm741, %v2462, 0
        %v2476 = vsel %vm754, %v2454, 0
        %v2479 = vsel %vm754, %v2455, 0
        %v2482 = vsel %vm754, %v2456, 0
        %v2485 = vsel %vm754, %v2457, 0
        %2487 = vmatprep.subr.mxu0 0.0
        %2488 = vmatpush1.msra.mxu0 0.0
        %2489 = vmatprep.subr.mxu0 0.0
        %2490 = vmatpush1.msra.mxu0 0.0
        %2491 = vmatprep.subr.mxu0 0.0
        %2492 = vmatpush1.msra.mxu0 0.0
        %2493 = vmatprep.subr.mxu0 0.0
        %2494 = vmatpush1.msra.mxu0 0.0
        %2495 = vmatprep.subr.mxu0 0.0
        %2496 = vmatpush1.msra.mxu0 0.0
        %2497 = vmatprep.subr.mxu0 0.0
        %2498 = vmatpush1.msra.mxu0 0.0
        %2499 = vmatprep.subr.mxu0 0.0
        %2500 = vmatpush1.msra.mxu0 0.0
        %2501 = vmatprep.subr.mxu0 0.0
        %2502 = vmatpush1.msra.mxu0 0.0
        %2503 = vmatprep.subr.mxu0 0.0
        %2504 = vmatpush1.msra.mxu0 0.0
        %2505 = vmatprep.subr.mxu0 0.0
        %2506 = vmatpush1.msra.mxu0 0.0
        %2507 = vmatprep.subr.mxu0 0.0
        %2508 = vmatpush1.msra.mxu0 0.0
        %2509 = vmatprep.subr.mxu0 0.0
        %2510 = vmatpush1.msra.mxu0 0.0
        %2511 = vmatprep.subr.mxu0 0.0
        %2512 = vmatpush1.msra.mxu0 0.0
        %2513 = vmatprep.subr.mxu0 0.0
        %2514 = vmatpush1.msra.mxu0 0.0
        %2515 = vmatprep.subr.mxu0 0.0
        %2516 = vmatpush1.msra.mxu0 0.0
        %2517 = vmatprep.subr.mxu0 %v2479
        %2518 = vmatpush1.msra.mxu0 %v2476
        %2519 = vmatprep.subr.mxu0 0.0
        %2520 = vmatpush2.msra.mxu0 0.0
        %2521 = vmatprep.subr.mxu0 0.0
        %2522 = vmatpush2.msra.mxu0 0.0
        %2523 = vmatprep.subr.mxu0 0.0
        %2524 = vmatpush2.msra.mxu0 0.0
        %2525 = vmatprep.subr.mxu0 0.0
        %2526 = vmatpush2.msra.mxu0 0.0
        %2527 = vmatprep.subr.mxu0 0.0
        %2528 = vmatpush2.msra.mxu0 0.0
        %2529 = vmatprep.subr.mxu0 0.0
        %2530 = vmatpush2.msra.mxu0 0.0
        %2531 = vmatprep.subr.mxu0 0.0
        %2532 = vmatpush2.msra.mxu0 0.0
        %2533 = vmatprep.subr.mxu0 0.0
        %2534 = vmatpush2.msra.mxu0 0.0
        %2535 = vmatprep.subr.mxu0 0.0
        %2536 = vmatpush2.msra.mxu0 0.0
        %2537 = vmatprep.subr.mxu0 0.0
        %2538 = vmatpush2.msra.mxu0 0.0
        %2539 = vmatprep.subr.mxu0 0.0
        %2540 = vmatpush2.msra.mxu0 0.0
        %2541 = vmatprep.subr.mxu0 0.0
        %2542 = vmatpush2.msra.mxu0 0.0
        %2543 = vmatprep.subr.mxu0 0.0
        %2544 = vmatpush2.msra.mxu0 0.0
        %2545 = vmatprep.subr.mxu0 0.0
        %2546 = vmatpush2.msra.mxu0 0.0
        %2547 = vmatprep.subr.mxu0 0.0
        %2548 = vmatpush2.msra.mxu0 0.0
        %2549 = vmatprep.subr.mxu0 0.0
        %2550 = vmatpush2.msra.mxu0 0.0
        %2551 = vmatprep.mubr.f32.mxu0 0.0
        %2552 = vmatmul.mubr.f32.gmra.mxu0 %v2464
        %v2553 = vpop.f32.mrf.mxu0
        %v2554 = vadd.f32 0.0, %v2553
        %v2555 = vpop.f32.mrf.mxu0
        %v2556 = vadd.f32 0.0, %v2555
        %2557 = vmatprep.mubr.f32.mxu0 0.0
        %2558 = vmatmul.mubr.f32.gmra.mxu0 %v2467
        %v2559 = vpop.f32.mrf.mxu0
        %v2560 = vadd.f32 0.0, %v2559
        %v2561 = vpop.f32.mrf.mxu0
        %v2562 = vadd.f32 0.0, %v2561
        %2563 = vmatprep.mubr.f32.mxu0 0.0
        %2564 = vmatmul.mubr.f32.gmra.mxu0 %v2470
        %v2565 = vpop.f32.mrf.mxu0
        %v2566 = vadd.f32 0.0, %v2565
        %v2567 = vpop.f32.mrf.mxu0
        %v2568 = vadd.f32 0.0, %v2567
        %2569 = vmatprep.mubr.f32.mxu0 0.0
        %2570 = vmatmul.mubr.f32.gmra.mxu0 %v2473
        %v2571 = vpop.f32.mrf.mxu0
        %v2572 = vadd.f32 0.0, %v2571
        %v2573 = vpop.f32.mrf.mxu0
        %v2574 = vadd.f32 0.0, %v2573
        %2575 = vdwg.mxu0
        %2576 = vmatprep.subr.mxu0 0.0
        %2577 = vmatpush1.msra.mxu0 0.0
        %2578 = vmatprep.subr.mxu0 0.0
        %2579 = vmatpush1.msra.mxu0 0.0
        %2580 = vmatprep.subr.mxu0 0.0
        %2581 = vmatpush1.msra.mxu0 0.0
        %2582 = vmatprep.subr.mxu0 0.0
        %2583 = vmatpush1.msra.mxu0 0.0
        %2584 = vmatprep.subr.mxu0 0.0
        %2585 = vmatpush1.msra.mxu0 0.0
        %2586 = vmatprep.subr.mxu0 0.0
        %2587 = vmatpush1.msra.mxu0 0.0
        %2588 = vmatprep.subr.mxu0 0.0
        %2589 = vmatpush1.msra.mxu0 0.0
        %2590 = vmatprep.subr.mxu0 0.0
        %2591 = vmatpush1.msra.mxu0 0.0
        %2592 = vmatprep.subr.mxu0 0.0
        %2593 = vmatpush1.msra.mxu0 0.0
        %2594 = vmatprep.subr.mxu0 0.0
        %2595 = vmatpush1.msra.mxu0 0.0
        %2596 = vmatprep.subr.mxu0 0.0
        %2597 = vmatpush1.msra.mxu0 0.0
        %2598 = vmatprep.subr.mxu0 0.0
        %2599 = vmatpush1.msra.mxu0 0.0
        %2600 = vmatprep.subr.mxu0 0.0
        %2601 = vmatpush1.msra.mxu0 0.0
        %2602 = vmatprep.subr.mxu0 0.0
        %2603 = vmatpush1.msra.mxu0 0.0
        %2604 = vmatprep.subr.mxu0 0.0
        %2605 = vmatpush1.msra.mxu0 0.0
        %2606 = vmatprep.subr.mxu0 %v2485
        %2607 = vmatpush1.msra.mxu0 %v2482
        %2608 = vmatprep.subr.mxu0 0.0
        %2609 = vmatpush2.msra.mxu0 0.0
        %2610 = vmatprep.subr.mxu0 0.0
        %2611 = vmatpush2.msra.mxu0 0.0
        %2612 = vmatprep.subr.mxu0 0.0
        %2613 = vmatpush2.msra.mxu0 0.0
        %2614 = vmatprep.subr.mxu0 0.0
        %2615 = vmatpush2.msra.mxu0 0.0
        %2616 = vmatprep.subr.mxu0 0.0
        %2617 = vmatpush2.msra.mxu0 0.0
        %2618 = vmatprep.subr.mxu0 0.0
        %2619 = vmatpush2.msra.mxu0 0.0
        %2620 = vmatprep.subr.mxu0 0.0
        %2621 = vmatpush2.msra.mxu0 0.0
        %2622 = vmatprep.subr.mxu0 0.0
        %2623 = vmatpush2.msra.mxu0 0.0
        %2624 = vmatprep.subr.mxu0 0.0
        %2625 = vmatpush2.msra.mxu0 0.0
        %2626 = vmatprep.subr.mxu0 0.0
        %2627 = vmatpush2.msra.mxu0 0.0
        %2628 = vmatprep.subr.mxu0 0.0
        %2629 = vmatpush2.msra.mxu0 0.0
        %2630 = vmatprep.subr.mxu0 0.0
        %2631 = vmatpush2.msra.mxu0 0.0
        %2632 = vmatprep.subr.mxu0 0.0
        %2633 = vmatpush2.msra.mxu0 0.0
        %2634 = vmatprep.subr.mxu0 0.0
        %2635 = vmatpush2.msra.mxu0 0.0
        %2636 = vmatprep.subr.mxu0 0.0
        %2637 = vmatpush2.msra.mxu0 0.0
        %2638 = vmatprep.subr.mxu0 0.0
        %2639 = vmatpush2.msra.mxu0 0.0
        %2640 = vmatprep.mubr.f32.mxu0 0.0
        %2641 = vmatmul.mubr.f32.gmra.mxu0 %v2464
        %v2642 = vpop.f32.mrf.mxu0
        %v2643 = vadd.f32 0.0, %v2642
        %v2644 = vpop.f32.mrf.mxu0
        %v2645 = vadd.f32 0.0, %v2644
        %2646 = vmatprep.mubr.f32.mxu0 0.0
        %2647 = vmatmul.mubr.f32.gmra.mxu0 %v2467
        %v2648 = vpop.f32.mrf.mxu0
        %v2649 = vadd.f32 0.0, %v2648
        %v2650 = vpop.f32.mrf.mxu0
        %v2651 = vadd.f32 0.0, %v2650
        %2652 = vmatprep.mubr.f32.mxu0 0.0
        %2653 = vmatmul.mubr.f32.gmra.mxu0 %v2470
        %v2654 = vpop.f32.mrf.mxu0
        %v2655 = vadd.f32 0.0, %v2654
        %v2656 = vpop.f32.mrf.mxu0
        %v2657 = vadd.f32 0.0, %v2656
        %2658 = vmatprep.mubr.f32.mxu0 0.0
        %2659 = vmatmul.mubr.f32.gmra.mxu0 %v2473
        %v2660 = vpop.f32.mrf.mxu0
        %v2661 = vadd.f32 0.0, %v2660
        %v2662 = vpop.f32.mrf.mxu0
        %v2663 = vadd.f32 0.0, %v2662
        %2664 = vdwg.mxu0
        %v2665 = vadd.f32 %v2402, %v2554
        %v2666 = vadd.f32 %v2403, %v2556
        %v2667 = vadd.f32 %v2404, %v2643
        %v2668 = vadd.f32 %v2405, %v2645
        %v2669 = vadd.f32 %v2406, %v2560
        %v2670 = vadd.f32 %v2407, %v2562
        %v2671 = vadd.f32 %v2408, %v2649
        %v2672 = vadd.f32 %v2409, %v2651
        %v2673 = vadd.f32 %v2410, %v2566
        %v2674 = vadd.f32 %v2411, %v2568
        %v2675 = vadd.f32 %v2412, %v2655
        %v2676 = vadd.f32 %v2413, %v2657
        %v2677 = vadd.f32 %v2414, %v2572
        %v2678 = vadd.f32 %v2415, %v2574
        %v2679 = vadd.f32 %v2416, %v2661
        %v2680 = vadd.f32 %v2417, %v2663
        %2681 = vrot.lane.b32.xlu0 %v505, 111
        %v2682 = vpop.permute.xlu0 %2681
        %2683 = vrot.lane.b32.xlu0 %v647, 111
        %v2684 = vpop.permute.xlu0 %2683
        %2685 = vrot.lane.b32.xlu0 %v506, 111
        %v2686 = vpop.permute.xlu0 %2685
        %2687 = vrot.lane.b32.xlu0 %v648, 111
        %v2688 = vpop.permute.xlu0 %2687
        %vm2689 = vcmp.lt.s32.totalorder %v660, 111
        %v2690 = vsel %vm2689, %v2686, %v2688
        %v2691 = vsel %vm2689, %v2684, %v2686
        %v2692 = vsel %vm2689, %v2682, %v2684
        %v2693 = vsel %vm2689, %v2688, %v2682
        %s2694 = scalar_lea.vmem %s11, 32
        %v2695 = vld [vmem:[%s2694] sm:$0xf]
        %v2697 = vlaneseq
        %v2698 = vshrl.u32 %v2697, 7
        %v2699 = vsub.s32 0, %v2698
        %v2700 = vrot.slane %v2695, %v2699
        %v2701 = vlaneseq
        %v2702 = vshrl.u32 %v2701, 7
        %v2703 = vsub.s32 1, %v2702
        %v2704 = vrot.slane %v2695, %v2703
        %v2705 = vlaneseq
        %v2706 = vshrl.u32 %v2705, 7
        %v2707 = vsub.s32 2, %v2706
        %v2708 = vrot.slane %v2695, %v2707
        %v2709 = vlaneseq
        %v2710 = vshrl.u32 %v2709, 7
        %v2711 = vsub.s32 3, %v2710
        %v2712 = vrot.slane %v2695, %v2711
        %v2717 = vmul.f32 %v2692, %v2700
        %v2718 = vmul.f32 %v2691, %v2704
        %v2719 = vmul.f32 %v2690, %v2708
        %v2720 = vmul.f32 %v2693, %v2712
        %s2721 = scalar_lea.vmem %s7, 256
        %v2722 = vld [vmem:[%s2721] sm:$0xff]
        %v2723 = vld [vmem:[%s2721 + $0x8] sm:$0xff]
        %v2724 = vld [vmem:[%s2721 + $0x10] sm:$0xff]
        %v2725 = vld [vmem:[%s2721 + $0x18] sm:$0xff]
        %v2727 = vsel %vm741, %v2722, 0
        %v2730 = vsel %vm741, %v2723, 0
        %v2733 = vsel %vm741, %v2724, 0
        %v2736 = vsel %vm741, %v2725, 0
        %v2739 = vsel %vm754, %v2717, 0
        %v2742 = vsel %vm754, %v2718, 0
        %v2745 = vsel %vm754, %v2719, 0
        %v2748 = vsel %vm754, %v2720, 0
        %2750 = vmatprep.subr.mxu0 0.0
        %2751 = vmatpush1.msra.mxu0 0.0
        %2752 = vmatprep.subr.mxu0 0.0
        %2753 = vmatpush1.msra.mxu0 0.0
        %2754 = vmatprep.subr.mxu0 0.0
        %2755 = vmatpush1.msra.mxu0 0.0
        %2756 = vmatprep.subr.mxu0 0.0
        %2757 = vmatpush1.msra.mxu0 0.0
        %2758 = vmatprep.subr.mxu0 0.0
        %2759 = vmatpush1.msra.mxu0 0.0
        %2760 = vmatprep.subr.mxu0 0.0
        %2761 = vmatpush1.msra.mxu0 0.0
        %2762 = vmatprep.subr.mxu0 0.0
        %2763 = vmatpush1.msra.mxu0 0.0
        %2764 = vmatprep.subr.mxu0 0.0
        %2765 = vmatpush1.msra.mxu0 0.0
        %2766 = vmatprep.subr.mxu0 0.0
        %2767 = vmatpush1.msra.mxu0 0.0
        %2768 = vmatprep.subr.mxu0 0.0
        %2769 = vmatpush1.msra.mxu0 0.0
        %2770 = vmatprep.subr.mxu0 0.0
        %2771 = vmatpush1.msra.mxu0 0.0
        %2772 = vmatprep.subr.mxu0 0.0
        %2773 = vmatpush1.msra.mxu0 0.0
        %2774 = vmatprep.subr.mxu0 0.0
        %2775 = vmatpush1.msra.mxu0 0.0
        %2776 = vmatprep.subr.mxu0 0.0
        %2777 = vmatpush1.msra.mxu0 0.0
        %2778 = vmatprep.subr.mxu0 0.0
        %2779 = vmatpush1.msra.mxu0 0.0
        %2780 = vmatprep.subr.mxu0 %v2742
        %2781 = vmatpush1.msra.mxu0 %v2739
        %2782 = vmatprep.subr.mxu0 0.0
        %2783 = vmatpush2.msra.mxu0 0.0
        %2784 = vmatprep.subr.mxu0 0.0
        %2785 = vmatpush2.msra.mxu0 0.0
        %2786 = vmatprep.subr.mxu0 0.0
        %2787 = vmatpush2.msra.mxu0 0.0
        %2788 = vmatprep.subr.mxu0 0.0
        %2789 = vmatpush2.msra.mxu0 0.0
        %2790 = vmatprep.subr.mxu0 0.0
        %2791 = vmatpush2.msra.mxu0 0.0
        %2792 = vmatprep.subr.mxu0 0.0
        %2793 = vmatpush2.msra.mxu0 0.0
        %2794 = vmatprep.subr.mxu0 0.0
        %2795 = vmatpush2.msra.mxu0 0.0
        %2796 = vmatprep.subr.mxu0 0.0
        %2797 = vmatpush2.msra.mxu0 0.0
        %2798 = vmatprep.subr.mxu0 0.0
        %2799 = vmatpush2.msra.mxu0 0.0
        %2800 = vmatprep.subr.mxu0 0.0
        %2801 = vmatpush2.msra.mxu0 0.0
        %2802 = vmatprep.subr.mxu0 0.0
        %2803 = vmatpush2.msra.mxu0 0.0
        %2804 = vmatprep.subr.mxu0 0.0
        %2805 = vmatpush2.msra.mxu0 0.0
        %2806 = vmatprep.subr.mxu0 0.0
        %2807 = vmatpush2.msra.mxu0 0.0
        %2808 = vmatprep.subr.mxu0 0.0
        %2809 = vmatpush2.msra.mxu0 0.0
        %2810 = vmatprep.subr.mxu0 0.0
        %2811 = vmatpush2.msra.mxu0 0.0
        %2812 = vmatprep.subr.mxu0 0.0
        %2813 = vmatpush2.msra.mxu0 0.0
        %2814 = vmatprep.mubr.f32.mxu0 0.0
        %2815 = vmatmul.mubr.f32.gmra.mxu0 %v2727
        %v2816 = vpop.f32.mrf.mxu0
        %v2817 = vadd.f32 0.0, %v2816
        %v2818 = vpop.f32.mrf.mxu0
        %v2819 = vadd.f32 0.0, %v2818
        %2820 = vmatprep.mubr.f32.mxu0 0.0
        %2821 = vmatmul.mubr.f32.gmra.mxu0 %v2730
        %v2822 = vpop.f32.mrf.mxu0
        %v2823 = vadd.f32 0.0, %v2822
        %v2824 = vpop.f32.mrf.mxu0
        %v2825 = vadd.f32 0.0, %v2824
        %2826 = vmatprep.mubr.f32.mxu0 0.0
        %2827 = vmatmul.mubr.f32.gmra.mxu0 %v2733
        %v2828 = vpop.f32.mrf.mxu0
        %v2829 = vadd.f32 0.0, %v2828
        %v2830 = vpop.f32.mrf.mxu0
        %v2831 = vadd.f32 0.0, %v2830
        %2832 = vmatprep.mubr.f32.mxu0 0.0
        %2833 = vmatmul.mubr.f32.gmra.mxu0 %v2736
        %v2834 = vpop.f32.mrf.mxu0
        %v2835 = vadd.f32 0.0, %v2834
        %v2836 = vpop.f32.mrf.mxu0
        %v2837 = vadd.f32 0.0, %v2836
        %2838 = vdwg.mxu0
        %2839 = vmatprep.subr.mxu0 0.0
        %2840 = vmatpush1.msra.mxu0 0.0
        %2841 = vmatprep.subr.mxu0 0.0
        %2842 = vmatpush1.msra.mxu0 0.0
        %2843 = vmatprep.subr.mxu0 0.0
        %2844 = vmatpush1.msra.mxu0 0.0
        %2845 = vmatprep.subr.mxu0 0.0
        %2846 = vmatpush1.msra.mxu0 0.0
        %2847 = vmatprep.subr.mxu0 0.0
        %2848 = vmatpush1.msra.mxu0 0.0
        %2849 = vmatprep.subr.mxu0 0.0
        %2850 = vmatpush1.msra.mxu0 0.0
        %2851 = vmatprep.subr.mxu0 0.0
        %2852 = vmatpush1.msra.mxu0 0.0
        %2853 = vmatprep.subr.mxu0 0.0
        %2854 = vmatpush1.msra.mxu0 0.0
        %2855 = vmatprep.subr.mxu0 0.0
        %2856 = vmatpush1.msra.mxu0 0.0
        %2857 = vmatprep.subr.mxu0 0.0
        %2858 = vmatpush1.msra.mxu0 0.0
        %2859 = vmatprep.subr.mxu0 0.0
        %2860 = vmatpush1.msra.mxu0 0.0
        %2861 = vmatprep.subr.mxu0 0.0
        %2862 = vmatpush1.msra.mxu0 0.0
        %2863 = vmatprep.subr.mxu0 0.0
        %2864 = vmatpush1.msra.mxu0 0.0
        %2865 = vmatprep.subr.mxu0 0.0
        %2866 = vmatpush1.msra.mxu0 0.0
        %2867 = vmatprep.subr.mxu0 0.0
        %2868 = vmatpush1.msra.mxu0 0.0
        %2869 = vmatprep.subr.mxu0 %v2748
        %2870 = vmatpush1.msra.mxu0 %v2745
        %2871 = vmatprep.subr.mxu0 0.0
        %2872 = vmatpush2.msra.mxu0 0.0
        %2873 = vmatprep.subr.mxu0 0.0
        %2874 = vmatpush2.msra.mxu0 0.0
        %2875 = vmatprep.subr.mxu0 0.0
        %2876 = vmatpush2.msra.mxu0 0.0
        %2877 = vmatprep.subr.mxu0 0.0
        %2878 = vmatpush2.msra.mxu0 0.0
        %2879 = vmatprep.subr.mxu0 0.0
        %2880 = vmatpush2.msra.mxu0 0.0
        %2881 = vmatprep.subr.mxu0 0.0
        %2882 = vmatpush2.msra.mxu0 0.0
        %2883 = vmatprep.subr.mxu0 0.0
        %2884 = vmatpush2.msra.mxu0 0.0
        %2885 = vmatprep.subr.mxu0 0.0
        %2886 = vmatpush2.msra.mxu0 0.0
        %2887 = vmatprep.subr.mxu0 0.0
        %2888 = vmatpush2.msra.mxu0 0.0
        %2889 = vmatprep.subr.mxu0 0.0
        %2890 = vmatpush2.msra.mxu0 0.0
        %2891 = vmatprep.subr.mxu0 0.0
        %2892 = vmatpush2.msra.mxu0 0.0
        %2893 = vmatprep.subr.mxu0 0.0
        %2894 = vmatpush2.msra.mxu0 0.0
        %2895 = vmatprep.subr.mxu0 0.0
        %2896 = vmatpush2.msra.mxu0 0.0
        %2897 = vmatprep.subr.mxu0 0.0
        %2898 = vmatpush2.msra.mxu0 0.0
        %2899 = vmatprep.subr.mxu0 0.0
        %2900 = vmatpush2.msra.mxu0 0.0
        %2901 = vmatprep.subr.mxu0 0.0
        %2902 = vmatpush2.msra.mxu0 0.0
        %2903 = vmatprep.mubr.f32.mxu0 0.0
        %2904 = vmatmul.mubr.f32.gmra.mxu0 %v2727
        %v2905 = vpop.f32.mrf.mxu0
        %v2906 = vadd.f32 0.0, %v2905
        %v2907 = vpop.f32.mrf.mxu0
        %v2908 = vadd.f32 0.0, %v2907
        %2909 = vmatprep.mubr.f32.mxu0 0.0
        %2910 = vmatmul.mubr.f32.gmra.mxu0 %v2730
        %v2911 = vpop.f32.mrf.mxu0
        %v2912 = vadd.f32 0.0, %v2911
        %v2913 = vpop.f32.mrf.mxu0
        %v2914 = vadd.f32 0.0, %v2913
        %2915 = vmatprep.mubr.f32.mxu0 0.0
        %2916 = vmatmul.mubr.f32.gmra.mxu0 %v2733
        %v2917 = vpop.f32.mrf.mxu0
        %v2918 = vadd.f32 0.0, %v2917
        %v2919 = vpop.f32.mrf.mxu0
        %v2920 = vadd.f32 0.0, %v2919
        %2921 = vmatprep.mubr.f32.mxu0 0.0
        %2922 = vmatmul.mubr.f32.gmra.mxu0 %v2736
        %v2923 = vpop.f32.mrf.mxu0
        %v2924 = vadd.f32 0.0, %v2923
        %v2925 = vpop.f32.mrf.mxu0
        %v2926 = vadd.f32 0.0, %v2925
        %2927 = vdwg.mxu0
        %v2928 = vadd.f32 %v2665, %v2817
        %v2929 = vadd.f32 %v2666, %v2819
        %v2930 = vadd.f32 %v2667, %v2906
        %v2931 = vadd.f32 %v2668, %v2908
        %v2932 = vadd.f32 %v2669, %v2823
        %v2933 = vadd.f32 %v2670, %v2825
        %v2934 = vadd.f32 %v2671, %v2912
        %v2935 = vadd.f32 %v2672, %v2914
        %v2936 = vadd.f32 %v2673, %v2829
        %v2937 = vadd.f32 %v2674, %v2831
        %v2938 = vadd.f32 %v2675, %v2918
        %v2939 = vadd.f32 %v2676, %v2920
        %v2940 = vadd.f32 %v2677, %v2835
        %v2941 = vadd.f32 %v2678, %v2837
        %v2942 = vadd.f32 %v2679, %v2924
        %v2943 = vadd.f32 %v2680, %v2926
        %v2944 = vld [vmem:[%s8] sm:$0xff]
        %v2945 = vld [vmem:[%s8 + $0x8] sm:$0xff]
        %v2946 = vld [vmem:[%s8 + $0x10] sm:$0xff]
        %v2947 = vld [vmem:[%s8 + $0x18] sm:$0xff]
        %v2948 = vadd.f32 %v2944, %v641
        %v2949 = vadd.f32 %v2945, %v642
        %v2950 = vadd.f32 %v2946, %v643
        %v2951 = vadd.f32 %v2947, %v644
        %2953 = vset.pattern.permute.xlu0 0
        %2954 = vperm.xlu0 %2953, %v2948
        %v2955 = vpop.permute.xlu0 %2954
        %2958 = vset.pattern.permute.xlu0 0
        %2959 = vperm.xlu0 %2958, %v2949
        %v2960 = vpop.permute.xlu0 %2959
        %2963 = vset.pattern.permute.xlu0 0
        %2964 = vperm.xlu0 %2963, %v2950
        %v2965 = vpop.permute.xlu0 %2964
        %2968 = vset.pattern.permute.xlu0 0
        %2969 = vperm.xlu0 %2968, %v2951
        %v2970 = vpop.permute.xlu0 %2969
        %v2972 = vadd.f32 %v2928, %v2955
        %v2973 = vadd.f32 %v2929, %v2955
        %v2974 = vadd.f32 %v2930, %v2955
        %v2975 = vadd.f32 %v2931, %v2955
        %v2976 = vadd.f32 %v2932, %v2960
        %v2977 = vadd.f32 %v2933, %v2960
        %v2978 = vadd.f32 %v2934, %v2960
        %v2979 = vadd.f32 %v2935, %v2960
        %v2980 = vadd.f32 %v2936, %v2965
        %v2981 = vadd.f32 %v2937, %v2965
        %v2982 = vadd.f32 %v2938, %v2965
        %v2983 = vadd.f32 %v2939, %v2965
        %v2984 = vadd.f32 %v2940, %v2970
        %v2985 = vadd.f32 %v2941, %v2970
        %v2986 = vadd.f32 %v2942, %v2970
        %v2987 = vadd.f32 %v2943, %v2970
        %v2988 = vxor.u32 %v2972, 2147483648
        %v2989 = vxor.u32 %v2973, 2147483648
        %v2990 = vxor.u32 %v2974, 2147483648
        %v2991 = vxor.u32 %v2975, 2147483648
        %v2992 = vxor.u32 %v2976, 2147483648
        %v2993 = vxor.u32 %v2977, 2147483648
        %v2994 = vxor.u32 %v2978, 2147483648
        %v2995 = vxor.u32 %v2979, 2147483648
        %v2996 = vxor.u32 %v2980, 2147483648
        %v2997 = vxor.u32 %v2981, 2147483648
        %v2998 = vxor.u32 %v2982, 2147483648
        %v2999 = vxor.u32 %v2983, 2147483648
        %v3000 = vxor.u32 %v2984, 2147483648
        %v3001 = vxor.u32 %v2985, 2147483648
        %v3002 = vxor.u32 %v2986, 2147483648
        %v3003 = vxor.u32 %v2987, 2147483648
        %v3004 = vmul.f32 %v2988, 1.442695
        %v3005 = vpow.pop %v3004
        %v3006 = vmul.f32 %v2989, 1.442695
        %v3007 = vpow.pop %v3006
        %v3008 = vmul.f32 %v2990, 1.442695
        %v3009 = vpow.pop %v3008
        %v3010 = vmul.f32 %v2991, 1.442695
        %v3011 = vpow.pop %v3010
        %v3012 = vmul.f32 %v2992, 1.442695
        %v3013 = vpow.pop %v3012
        %v3014 = vmul.f32 %v2993, 1.442695
        %v3015 = vpow.pop %v3014
        %v3016 = vmul.f32 %v2994, 1.442695
        %v3017 = vpow.pop %v3016
        %v3018 = vmul.f32 %v2995, 1.442695
        %v3019 = vpow.pop %v3018
        %v3020 = vmul.f32 %v2996, 1.442695
        %v3021 = vpow.pop %v3020
        %v3022 = vmul.f32 %v2997, 1.442695
        %v3023 = vpow.pop %v3022
        %v3024 = vmul.f32 %v2998, 1.442695
        %v3025 = vpow.pop %v3024
        %v3026 = vmul.f32 %v2999, 1.442695
        %v3027 = vpow.pop %v3026
        %v3028 = vmul.f32 %v3000, 1.442695
        %v3029 = vpow.pop %v3028
        %v3030 = vmul.f32 %v3001, 1.442695
        %v3031 = vpow.pop %v3030
        %v3032 = vmul.f32 %v3002, 1.442695
        %v3033 = vpow.pop %v3032
        %v3034 = vmul.f32 %v3003, 1.442695
        %v3035 = vpow.pop %v3034
        %v3036 = vadd.f32 %v3005, 1.0
        %v3037 = vadd.f32 %v3007, 1.0
        %v3038 = vadd.f32 %v3009, 1.0
        %v3039 = vadd.f32 %v3011, 1.0
        %v3040 = vadd.f32 %v3013, 1.0
        %v3041 = vadd.f32 %v3015, 1.0
        %v3042 = vadd.f32 %v3017, 1.0
        %v3043 = vadd.f32 %v3019, 1.0
        %v3044 = vadd.f32 %v3021, 1.0
        %v3045 = vadd.f32 %v3023, 1.0
        %v3046 = vadd.f32 %v3025, 1.0
        %v3047 = vadd.f32 %v3027, 1.0
        %v3048 = vadd.f32 %v3029, 1.0
        %v3049 = vadd.f32 %v3031, 1.0
        %v3050 = vadd.f32 %v3033, 1.0
        %v3051 = vadd.f32 %v3035, 1.0
        %v3052 = vrcp.pop %v3036
        %v3053 = vmul.f32 1.0, %v3052
        %v3054 = vrcp.pop %v3037
        %v3055 = vmul.f32 1.0, %v3054
        %v3056 = vrcp.pop %v3038
        %v3057 = vmul.f32 1.0, %v3056
        %v3058 = vrcp.pop %v3039
        %v3059 = vmul.f32 1.0, %v3058
        %v3060 = vrcp.pop %v3040
        %v3061 = vmul.f32 1.0, %v3060
        %v3062 = vrcp.pop %v3041
        %v3063 = vmul.f32 1.0, %v3062
        %v3064 = vrcp.pop %v3042
        %v3065 = vmul.f32 1.0, %v3064
        %v3066 = vrcp.pop %v3043
        %v3067 = vmul.f32 1.0, %v3066
        %v3068 = vrcp.pop %v3044
        %v3069 = vmul.f32 1.0, %v3068
        %v3070 = vrcp.pop %v3045
        %v3071 = vmul.f32 1.0, %v3070
        %v3072 = vrcp.pop %v3046
        %v3073 = vmul.f32 1.0, %v3072
        %v3074 = vrcp.pop %v3047
        %v3075 = vmul.f32 1.0, %v3074
        %v3076 = vrcp.pop %v3048
        %v3077 = vmul.f32 1.0, %v3076
        %v3078 = vrcp.pop %v3049
        %v3079 = vmul.f32 1.0, %v3078
        %v3080 = vrcp.pop %v3050
        %v3081 = vmul.f32 1.0, %v3080
        %v3082 = vrcp.pop %v3051
        %v3083 = vmul.f32 1.0, %v3082
        %v3084 = vmul.f32 %v2972, %v3053
        %v3085 = vmul.f32 %v2973, %v3055
        %v3086 = vmul.f32 %v2974, %v3057
        %v3087 = vmul.f32 %v2975, %v3059
        %v3088 = vmul.f32 %v2976, %v3061
        %v3089 = vmul.f32 %v2977, %v3063
        %v3090 = vmul.f32 %v2978, %v3065
        %v3091 = vmul.f32 %v2979, %v3067
        %v3092 = vmul.f32 %v2980, %v3069
        %v3093 = vmul.f32 %v2981, %v3071
        %v3094 = vmul.f32 %v2982, %v3073
        %v3095 = vmul.f32 %v2983, %v3075
        %v3096 = vmul.f32 %v2984, %v3077
        %v3097 = vmul.f32 %v2985, %v3079
        %v3098 = vmul.f32 %v2986, %v3081
        %v3099 = vmul.f32 %v2987, %v3083
        %3100 = vrot.lane.b32.xlu0 %v3084, 17
        %v3101 = vpop.permute.xlu0 %3100
        %3102 = vrot.lane.b32.xlu0 %v3088, 17
        %v3103 = vpop.permute.xlu0 %3102
        %3104 = vrot.lane.b32.xlu0 %v3092, 17
        %v3105 = vpop.permute.xlu0 %3104
        %3106 = vrot.lane.b32.xlu0 %v3096, 17
        %v3107 = vpop.permute.xlu0 %3106
        %3108 = vrot.lane.b32.xlu0 %v3085, 17
        %v3109 = vpop.permute.xlu0 %3108
        %3110 = vrot.lane.b32.xlu0 %v3089, 17
        %v3111 = vpop.permute.xlu0 %3110
        %3112 = vrot.lane.b32.xlu0 %v3093, 17
        %v3113 = vpop.permute.xlu0 %3112
        %3114 = vrot.lane.b32.xlu0 %v3097, 17
        %v3115 = vpop.permute.xlu0 %3114
        %3116 = vrot.lane.b32.xlu0 %v3086, 17
        %v3117 = vpop.permute.xlu0 %3116
        %3118 = vrot.lane.b32.xlu0 %v3090, 17
        %v3119 = vpop.permute.xlu0 %3118
        %3120 = vrot.lane.b32.xlu0 %v3094, 17
        %v3121 = vpop.permute.xlu0 %3120
        %3122 = vrot.lane.b32.xlu0 %v3098, 17
        %v3123 = vpop.permute.xlu0 %3122
        %3124 = vrot.lane.b32.xlu0 %v3087, 17
        %v3125 = vpop.permute.xlu0 %3124
        %3126 = vrot.lane.b32.xlu0 %v3091, 17
        %v3127 = vpop.permute.xlu0 %3126
        %3128 = vrot.lane.b32.xlu0 %v3095, 17
        %v3129 = vpop.permute.xlu0 %3128
        %3130 = vrot.lane.b32.xlu0 %v3099, 17
        %v3131 = vpop.permute.xlu0 %3130
        %v3132 = vsel %vm661, %v3117, %v3125
        %v3133 = vsel %vm661, %v3119, %v3127
        %v3134 = vsel %vm661, %v3121, %v3129
        %v3135 = vsel %vm661, %v3123, %v3131
        %v3136 = vsel %vm661, %v3109, %v3117
        %v3137 = vsel %vm661, %v3111, %v3119
        %v3138 = vsel %vm661, %v3113, %v3121
        %v3139 = vsel %vm661, %v3115, %v3123
        %v3140 = vsel %vm661, %v3101, %v3109
        %v3141 = vsel %vm661, %v3103, %v3111
        %v3142 = vsel %vm661, %v3105, %v3113
        %v3143 = vsel %vm661, %v3107, %v3115
        %v3144 = vsel %vm661, %v3125, %v3101
        %v3145 = vsel %vm661, %v3127, %v3103
        %v3146 = vsel %vm661, %v3129, %v3105
        %v3147 = vsel %vm661, %v3131, %v3107
        %v3148 = vmul.f32 %v3144, %v671
        %v3149 = vmul.f32 %v3140, %v675
        %v3150 = vmul.f32 %v3136, %v679
        %v3151 = vmul.f32 %v3132, %v683
        %v3152 = vmul.f32 %v3145, %v671
        %v3153 = vmul.f32 %v3141, %v675
        %v3154 = vmul.f32 %v3137, %v679
        %v3155 = vmul.f32 %v3133, %v683
        %v3156 = vmul.f32 %v3146, %v671
        %v3157 = vmul.f32 %v3142, %v675
        %v3158 = vmul.f32 %v3138, %v679
        %v3159 = vmul.f32 %v3134, %v683
        %v3160 = vmul.f32 %v3147, %v671
        %v3161 = vmul.f32 %v3143, %v675
        %v3162 = vmul.f32 %v3139, %v679
        %v3163 = vmul.f32 %v3135, %v683
        %v3164 = vld [vmem:[%s9] sm:$0xf]
        %3165 = vrot.lane.b32.xlu0 %v3084, 16
        %v3166 = vpop.permute.xlu0 %3165
        %3167 = vrot.lane.b32.xlu0 %v3088, 16
        %v3168 = vpop.permute.xlu0 %3167
        %3169 = vrot.lane.b32.xlu0 %v3092, 16
        %v3170 = vpop.permute.xlu0 %3169
        %3171 = vrot.lane.b32.xlu0 %v3096, 16
        %v3172 = vpop.permute.xlu0 %3171
        %3173 = vrot.lane.b32.xlu0 %v3085, 16
        %v3174 = vpop.permute.xlu0 %3173
        %3175 = vrot.lane.b32.xlu0 %v3089, 16
        %v3176 = vpop.permute.xlu0 %3175
        %3177 = vrot.lane.b32.xlu0 %v3093, 16
        %v3178 = vpop.permute.xlu0 %3177
        %3179 = vrot.lane.b32.xlu0 %v3097, 16
        %v3180 = vpop.permute.xlu0 %3179
        %3181 = vrot.lane.b32.xlu0 %v3086, 16
        %v3182 = vpop.permute.xlu0 %3181
        %3183 = vrot.lane.b32.xlu0 %v3090, 16
        %v3184 = vpop.permute.xlu0 %3183
        %3185 = vrot.lane.b32.xlu0 %v3094, 16
        %v3186 = vpop.permute.xlu0 %3185
        %3187 = vrot.lane.b32.xlu0 %v3098, 16
        %v3188 = vpop.permute.xlu0 %3187
        %3189 = vrot.lane.b32.xlu0 %v3087, 16
        %v3190 = vpop.permute.xlu0 %3189
        %3191 = vrot.lane.b32.xlu0 %v3091, 16
        %v3192 = vpop.permute.xlu0 %3191
        %3193 = vrot.lane.b32.xlu0 %v3095, 16
        %v3194 = vpop.permute.xlu0 %3193
        %3195 = vrot.lane.b32.xlu0 %v3099, 16
        %v3196 = vpop.permute.xlu0 %3195
        %v3197 = vsel %vm704, %v3182, %v3190
        %v3198 = vsel %vm704, %v3184, %v3192
        %v3199 = vsel %vm704, %v3186, %v3194
        %v3200 = vsel %vm704, %v3188, %v3196
        %v3201 = vsel %vm704, %v3174, %v3182
        %v3202 = vsel %vm704, %v3176, %v3184
        %v3203 = vsel %vm704, %v3178, %v3186
        %v3204 = vsel %vm704, %v3180, %v3188
        %v3205 = vsel %vm704, %v3166, %v3174
        %v3206 = vsel %vm704, %v3168, %v3176
        %v3207 = vsel %vm704, %v3170, %v3178
        %v3208 = vsel %vm704, %v3172, %v3180
        %v3209 = vsel %vm704, %v3190, %v3166
        %v3210 = vsel %vm704, %v3192, %v3168
        %v3211 = vsel %vm704, %v3194, %v3170
        %v3212 = vsel %vm704, %v3196, %v3172
        %v3213 = vmul.f32 %v3209, %v715
        %v3214 = vmul.f32 %v3205, %v719
        %v3215 = vmul.f32 %v3201, %v723
        %v3216 = vmul.f32 %v3197, %v727
        %v3217 = vmul.f32 %v3210, %v715
        %v3218 = vmul.f32 %v3206, %v719
        %v3219 = vmul.f32 %v3202, %v723
        %v3220 = vmul.f32 %v3198, %v727
        %v3221 = vmul.f32 %v3211, %v715
        %v3222 = vmul.f32 %v3207, %v719
        %v3223 = vmul.f32 %v3203, %v723
        %v3224 = vmul.f32 %v3199, %v727
        %v3225 = vmul.f32 %v3212, %v715
        %v3226 = vmul.f32 %v3208, %v719
        %v3227 = vmul.f32 %v3204, %v723
        %v3228 = vmul.f32 %v3200, %v727
        %s3229 = scalar_lea.vmem %s9, 4
        %v3230 = vld [vmem:[%s3229] sm:$0xf]
        %v3232 = vsel %vm519, %v3230, 0
        %3234 = vmatprep.subr.mxu0 0.0
        %3235 = vmatpush1.msra.mxu0 0.0
        %3236 = vmatprep.subr.mxu0 0.0
        %3237 = vmatpush1.msra.mxu0 0.0
        %3238 = vmatprep.subr.mxu0 0.0
        %3239 = vmatpush1.msra.mxu0 0.0
        %3240 = vmatprep.subr.mxu0 0.0
        %3241 = vmatpush1.msra.mxu0 0.0
        %3242 = vmatprep.subr.mxu0 0.0
        %3243 = vmatpush1.msra.mxu0 0.0
        %3244 = vmatprep.subr.mxu0 0.0
        %3245 = vmatpush1.msra.mxu0 0.0
        %3246 = vmatprep.subr.mxu0 0.0
        %3247 = vmatpush1.msra.mxu0 0.0
        %3248 = vmatprep.subr.mxu0 0.0
        %3249 = vmatpush1.msra.mxu0 0.0
        %3250 = vmatprep.subr.mxu0 0.0
        %3251 = vmatpush1.msra.mxu0 0.0
        %3252 = vmatprep.subr.mxu0 0.0
        %3253 = vmatpush1.msra.mxu0 0.0
        %3254 = vmatprep.subr.mxu0 0.0
        %3255 = vmatpush1.msra.mxu0 0.0
        %3256 = vmatprep.subr.mxu0 0.0
        %3257 = vmatpush1.msra.mxu0 0.0
        %3258 = vmatprep.subr.mxu0 %v3226
        %3259 = vmatpush1.msra.mxu0 %v3225
        %3260 = vmatprep.subr.mxu0 %v3222
        %3261 = vmatpush1.msra.mxu0 %v3221
        %3262 = vmatprep.subr.mxu0 %v3218
        %3263 = vmatpush1.msra.mxu0 %v3217
        %3264 = vmatprep.subr.mxu0 %v3214
        %3265 = vmatpush1.msra.mxu0 %v3213
        %3266 = vmatprep.subr.mxu0 0.0
        %3267 = vmatpush2.msra.mxu0 0.0
        %3268 = vmatprep.subr.mxu0 0.0
        %3269 = vmatpush2.msra.mxu0 0.0
        %3270 = vmatprep.subr.mxu0 0.0
        %3271 = vmatpush2.msra.mxu0 0.0
        %3272 = vmatprep.subr.mxu0 0.0
        %3273 = vmatpush2.msra.mxu0 0.0
        %3274 = vmatprep.subr.mxu0 0.0
        %3275 = vmatpush2.msra.mxu0 0.0
        %3276 = vmatprep.subr.mxu0 0.0
        %3277 = vmatpush2.msra.mxu0 0.0
        %3278 = vmatprep.subr.mxu0 0.0
        %3279 = vmatpush2.msra.mxu0 0.0
        %3280 = vmatprep.subr.mxu0 0.0
        %3281 = vmatpush2.msra.mxu0 0.0
        %3282 = vmatprep.subr.mxu0 0.0
        %3283 = vmatpush2.msra.mxu0 0.0
        %3284 = vmatprep.subr.mxu0 0.0
        %3285 = vmatpush2.msra.mxu0 0.0
        %3286 = vmatprep.subr.mxu0 0.0
        %3287 = vmatpush2.msra.mxu0 0.0
        %3288 = vmatprep.subr.mxu0 0.0
        %3289 = vmatpush2.msra.mxu0 0.0
        %3290 = vmatprep.subr.mxu0 0.0
        %3291 = vmatpush2.msra.mxu0 0.0
        %3292 = vmatprep.subr.mxu0 0.0
        %3293 = vmatpush2.msra.mxu0 0.0
        %3294 = vmatprep.subr.mxu0 0.0
        %3295 = vmatpush2.msra.mxu0 0.0
        %3296 = vmatprep.subr.mxu0 0.0
        %3297 = vmatpush2.msra.mxu0 0.0
        %3298 = vmatprep.mubr.f32.mxu0 0.0
        %3299 = vmatmul.mubr.f32.gmra.mxu0 %v3232
        %v3300 = vpop.f32.mrf.mxu0
        %v3301 = vadd.f32 0.0, %v3300
        %v3302 = vpop.f32.mrf.mxu0
        %v3303 = vadd.f32 0.0, %v3302
        %3304 = vdwg.mxu0
        %3305 = vmatprep.subr.mxu0 0.0
        %3306 = vmatpush1.msra.mxu0 0.0
        %3307 = vmatprep.subr.mxu0 0.0
        %3308 = vmatpush1.msra.mxu0 0.0
        %3309 = vmatprep.subr.mxu0 0.0
        %3310 = vmatpush1.msra.mxu0 0.0
        %3311 = vmatprep.subr.mxu0 0.0
        %3312 = vmatpush1.msra.mxu0 0.0
        %3313 = vmatprep.subr.mxu0 0.0
        %3314 = vmatpush1.msra.mxu0 0.0
        %3315 = vmatprep.subr.mxu0 0.0
        %3316 = vmatpush1.msra.mxu0 0.0
        %3317 = vmatprep.subr.mxu0 0.0
        %3318 = vmatpush1.msra.mxu0 0.0
        %3319 = vmatprep.subr.mxu0 0.0
        %3320 = vmatpush1.msra.mxu0 0.0
        %3321 = vmatprep.subr.mxu0 0.0
        %3322 = vmatpush1.msra.mxu0 0.0
        %3323 = vmatprep.subr.mxu0 0.0
        %3324 = vmatpush1.msra.mxu0 0.0
        %3325 = vmatprep.subr.mxu0 0.0
        %3326 = vmatpush1.msra.mxu0 0.0
        %3327 = vmatprep.subr.mxu0 0.0
        %3328 = vmatpush1.msra.mxu0 0.0
        %3329 = vmatprep.subr.mxu0 %v3228
        %3330 = vmatpush1.msra.mxu0 %v3227
        %3331 = vmatprep.subr.mxu0 %v3224
        %3332 = vmatpush1.msra.mxu0 %v3223
        %3333 = vmatprep.subr.mxu0 %v3220
        %3334 = vmatpush1.msra.mxu0 %v3219
        %3335 = vmatprep.subr.mxu0 %v3216
        %3336 = vmatpush1.msra.mxu0 %v3215
        %3337 = vmatprep.subr.mxu0 0.0
        %3338 = vmatpush2.msra.mxu0 0.0
        %3339 = vmatprep.subr.mxu0 0.0
        %3340 = vmatpush2.msra.mxu0 0.0
        %3341 = vmatprep.subr.mxu0 0.0
        %3342 = vmatpush2.msra.mxu0 0.0
        %3343 = vmatprep.subr.mxu0 0.0
        %3344 = vmatpush2.msra.mxu0 0.0
        %3345 = vmatprep.subr.mxu0 0.0
        %3346 = vmatpush2.msra.mxu0 0.0
        %3347 = vmatprep.subr.mxu0 0.0
        %3348 = vmatpush2.msra.mxu0 0.0
        %3349 = vmatprep.subr.mxu0 0.0
        %3350 = vmatpush2.msra.mxu0 0.0
        %3351 = vmatprep.subr.mxu0 0.0
        %3352 = vmatpush2.msra.mxu0 0.0
        %3353 = vmatprep.subr.mxu0 0.0
        %3354 = vmatpush2.msra.mxu0 0.0
        %3355 = vmatprep.subr.mxu0 0.0
        %3356 = vmatpush2.msra.mxu0 0.0
        %3357 = vmatprep.subr.mxu0 0.0
        %3358 = vmatpush2.msra.mxu0 0.0
        %3359 = vmatprep.subr.mxu0 0.0
        %3360 = vmatpush2.msra.mxu0 0.0
        %3361 = vmatprep.subr.mxu0 0.0
        %3362 = vmatpush2.msra.mxu0 0.0
        %3363 = vmatprep.subr.mxu0 0.0
        %3364 = vmatpush2.msra.mxu0 0.0
        %3365 = vmatprep.subr.mxu0 0.0
        %3366 = vmatpush2.msra.mxu0 0.0
        %3367 = vmatprep.subr.mxu0 0.0
        %3368 = vmatpush2.msra.mxu0 0.0
        %3369 = vmatprep.mubr.f32.mxu0 0.0
        %3370 = vmatmul.mubr.f32.gmra.mxu0 %v3232
        %v3371 = vpop.f32.mrf.mxu0
        %v3372 = vadd.f32 0.0, %v3371
        %v3373 = vpop.f32.mrf.mxu0
        %v3374 = vadd.f32 0.0, %v3373
        %3375 = vdwg.mxu0
        %v3377 = vsel %vm519, %v3164, 0
        %3379 = vmatprep.subr.mxu0 0.0
        %3380 = vmatpush1.msra.mxu0 0.0
        %3381 = vmatprep.subr.mxu0 0.0
        %3382 = vmatpush1.msra.mxu0 0.0
        %3383 = vmatprep.subr.mxu0 0.0
        %3384 = vmatpush1.msra.mxu0 0.0
        %3385 = vmatprep.subr.mxu0 0.0
        %3386 = vmatpush1.msra.mxu0 0.0
        %3387 = vmatprep.subr.mxu0 0.0
        %3388 = vmatpush1.msra.mxu0 0.0
        %3389 = vmatprep.subr.mxu0 0.0
        %3390 = vmatpush1.msra.mxu0 0.0
        %3391 = vmatprep.subr.mxu0 0.0
        %3392 = vmatpush1.msra.mxu0 0.0
        %3393 = vmatprep.subr.mxu0 0.0
        %3394 = vmatpush1.msra.mxu0 0.0
        %3395 = vmatprep.subr.mxu0 0.0
        %3396 = vmatpush1.msra.mxu0 0.0
        %3397 = vmatprep.subr.mxu0 0.0
        %3398 = vmatpush1.msra.mxu0 0.0
        %3399 = vmatprep.subr.mxu0 0.0
        %3400 = vmatpush1.msra.mxu0 0.0
        %3401 = vmatprep.subr.mxu0 0.0
        %3402 = vmatpush1.msra.mxu0 0.0
        %3403 = vmatprep.subr.mxu0 %v3161
        %3404 = vmatpush1.msra.mxu0 %v3160
        %3405 = vmatprep.subr.mxu0 %v3157
        %3406 = vmatpush1.msra.mxu0 %v3156
        %3407 = vmatprep.subr.mxu0 %v3153
        %3408 = vmatpush1.msra.mxu0 %v3152
        %3409 = vmatprep.subr.mxu0 %v3149
        %3410 = vmatpush1.msra.mxu0 %v3148
        %3411 = vmatprep.subr.mxu0 0.0
        %3412 = vmatpush2.msra.mxu0 0.0
        %3413 = vmatprep.subr.mxu0 0.0
        %3414 = vmatpush2.msra.mxu0 0.0
        %3415 = vmatprep.subr.mxu0 0.0
        %3416 = vmatpush2.msra.mxu0 0.0
        %3417 = vmatprep.subr.mxu0 0.0
        %3418 = vmatpush2.msra.mxu0 0.0
        %3419 = vmatprep.subr.mxu0 0.0
        %3420 = vmatpush2.msra.mxu0 0.0
        %3421 = vmatprep.subr.mxu0 0.0
        %3422 = vmatpush2.msra.mxu0 0.0
        %3423 = vmatprep.subr.mxu0 0.0
        %3424 = vmatpush2.msra.mxu0 0.0
        %3425 = vmatprep.subr.mxu0 0.0
        %3426 = vmatpush2.msra.mxu0 0.0
        %3427 = vmatprep.subr.mxu0 0.0
        %3428 = vmatpush2.msra.mxu0 0.0
        %3429 = vmatprep.subr.mxu0 0.0
        %3430 = vmatpush2.msra.mxu0 0.0
        %3431 = vmatprep.subr.mxu0 0.0
        %3432 = vmatpush2.msra.mxu0 0.0
        %3433 = vmatprep.subr.mxu0 0.0
        %3434 = vmatpush2.msra.mxu0 0.0
        %3435 = vmatprep.subr.mxu0 0.0
        %3436 = vmatpush2.msra.mxu0 0.0
        %3437 = vmatprep.subr.mxu0 0.0
        %3438 = vmatpush2.msra.mxu0 0.0
        %3439 = vmatprep.subr.mxu0 0.0
        %3440 = vmatpush2.msra.mxu0 0.0
        %3441 = vmatprep.subr.mxu0 0.0
        %3442 = vmatpush2.msra.mxu0 0.0
        %3443 = vmatprep.mubr.f32.mxu0 0.0
        %3444 = vmatmul.mubr.f32.gmra.mxu0 %v3377
        %v3445 = vpop.f32.mrf.mxu0
        %v3446 = vadd.f32 %v3301, %v3445
        %v3447 = vpop.f32.mrf.mxu0
        %v3448 = vadd.f32 %v3303, %v3447
        %3449 = vdwg.mxu0
        %3450 = vmatprep.subr.mxu0 0.0
        %3451 = vmatpush1.msra.mxu0 0.0
        %3452 = vmatprep.subr.mxu0 0.0
        %3453 = vmatpush1.msra.mxu0 0.0
        %3454 = vmatprep.subr.mxu0 0.0
        %3455 = vmatpush1.msra.mxu0 0.0
        %3456 = vmatprep.subr.mxu0 0.0
        %3457 = vmatpush1.msra.mxu0 0.0
        %3458 = vmatprep.subr.mxu0 0.0
        %3459 = vmatpush1.msra.mxu0 0.0
        %3460 = vmatprep.subr.mxu0 0.0
        %3461 = vmatpush1.msra.mxu0 0.0
        %3462 = vmatprep.subr.mxu0 0.0
        %3463 = vmatpush1.msra.mxu0 0.0
        %3464 = vmatprep.subr.mxu0 0.0
        %3465 = vmatpush1.msra.mxu0 0.0
        %3466 = vmatprep.subr.mxu0 0.0
        %3467 = vmatpush1.msra.mxu0 0.0
        %3468 = vmatprep.subr.mxu0 0.0
        %3469 = vmatpush1.msra.mxu0 0.0
        %3470 = vmatprep.subr.mxu0 0.0
        %3471 = vmatpush1.msra.mxu0 0.0
        %3472 = vmatprep.subr.mxu0 0.0
        %3473 = vmatpush1.msra.mxu0 0.0
        %3474 = vmatprep.subr.mxu0 %v3163
        %3475 = vmatpush1.msra.mxu0 %v3162
        %3476 = vmatprep.subr.mxu0 %v3159
        %3477 = vmatpush1.msra.mxu0 %v3158
        %3478 = vmatprep.subr.mxu0 %v3155
        %3479 = vmatpush1.msra.mxu0 %v3154
        %3480 = vmatprep.subr.mxu0 %v3151
        %3481 = vmatpush1.msra.mxu0 %v3150
        %3482 = vmatprep.subr.mxu0 0.0
        %3483 = vmatpush2.msra.mxu0 0.0
        %3484 = vmatprep.subr.mxu0 0.0
        %3485 = vmatpush2.msra.mxu0 0.0
        %3486 = vmatprep.subr.mxu0 0.0
        %3487 = vmatpush2.msra.mxu0 0.0
        %3488 = vmatprep.subr.mxu0 0.0
        %3489 = vmatpush2.msra.mxu0 0.0
        %3490 = vmatprep.subr.mxu0 0.0
        %3491 = vmatpush2.msra.mxu0 0.0
        %3492 = vmatprep.subr.mxu0 0.0
        %3493 = vmatpush2.msra.mxu0 0.0
        %3494 = vmatprep.subr.mxu0 0.0
        %3495 = vmatpush2.msra.mxu0 0.0
        %3496 = vmatprep.subr.mxu0 0.0
        %3497 = vmatpush2.msra.mxu0 0.0
        %3498 = vmatprep.subr.mxu0 0.0
        %3499 = vmatpush2.msra.mxu0 0.0
        %3500 = vmatprep.subr.mxu0 0.0
        %3501 = vmatpush2.msra.mxu0 0.0
        %3502 = vmatprep.subr.mxu0 0.0
        %3503 = vmatpush2.msra.mxu0 0.0
        %3504 = vmatprep.subr.mxu0 0.0
        %3505 = vmatpush2.msra.mxu0 0.0
        %3506 = vmatprep.subr.mxu0 0.0
        %3507 = vmatpush2.msra.mxu0 0.0
        %3508 = vmatprep.subr.mxu0 0.0
        %3509 = vmatpush2.msra.mxu0 0.0
        %3510 = vmatprep.subr.mxu0 0.0
        %3511 = vmatpush2.msra.mxu0 0.0
        %3512 = vmatprep.subr.mxu0 0.0
        %3513 = vmatpush2.msra.mxu0 0.0
        %3514 = vmatprep.mubr.f32.mxu0 0.0
        %3515 = vmatmul.mubr.f32.gmra.mxu0 %v3377
        %v3516 = vpop.f32.mrf.mxu0
        %v3517 = vadd.f32 %v3372, %v3516
        %v3518 = vpop.f32.mrf.mxu0
        %v3519 = vadd.f32 %v3374, %v3518
        %3520 = vdwg.mxu0
        %3521 = vrot.lane.b32.xlu0 %v3084, 15
        %v3522 = vpop.permute.xlu0 %3521
        %3523 = vrot.lane.b32.xlu0 %v3088, 15
        %v3524 = vpop.permute.xlu0 %3523
        %3525 = vrot.lane.b32.xlu0 %v3092, 15
        %v3526 = vpop.permute.xlu0 %3525
        %3527 = vrot.lane.b32.xlu0 %v3096, 15
        %v3528 = vpop.permute.xlu0 %3527
        %3529 = vrot.lane.b32.xlu0 %v3085, 15
        %v3530 = vpop.permute.xlu0 %3529
        %3531 = vrot.lane.b32.xlu0 %v3089, 15
        %v3532 = vpop.permute.xlu0 %3531
        %3533 = vrot.lane.b32.xlu0 %v3093, 15
        %v3534 = vpop.permute.xlu0 %3533
        %3535 = vrot.lane.b32.xlu0 %v3097, 15
        %v3536 = vpop.permute.xlu0 %3535
        %3537 = vrot.lane.b32.xlu0 %v3086, 15
        %v3538 = vpop.permute.xlu0 %3537
        %3539 = vrot.lane.b32.xlu0 %v3090, 15
        %v3540 = vpop.permute.xlu0 %3539
        %3541 = vrot.lane.b32.xlu0 %v3094, 15
        %v3542 = vpop.permute.xlu0 %3541
        %3543 = vrot.lane.b32.xlu0 %v3098, 15
        %v3544 = vpop.permute.xlu0 %3543
        %3545 = vrot.lane.b32.xlu0 %v3087, 15
        %v3546 = vpop.permute.xlu0 %3545
        %3547 = vrot.lane.b32.xlu0 %v3091, 15
        %v3548 = vpop.permute.xlu0 %3547
        %3549 = vrot.lane.b32.xlu0 %v3095, 15
        %v3550 = vpop.permute.xlu0 %3549
        %3551 = vrot.lane.b32.xlu0 %v3099, 15
        %v3552 = vpop.permute.xlu0 %3551
        %v3553 = vsel %vm1155, %v3538, %v3546
        %v3554 = vsel %vm1155, %v3540, %v3548
        %v3555 = vsel %vm1155, %v3542, %v3550
        %v3556 = vsel %vm1155, %v3544, %v3552
        %v3557 = vsel %vm1155, %v3530, %v3538
        %v3558 = vsel %vm1155, %v3532, %v3540
        %v3559 = vsel %vm1155, %v3534, %v3542
        %v3560 = vsel %vm1155, %v3536, %v3544
        %v3561 = vsel %vm1155, %v3522, %v3530
        %v3562 = vsel %vm1155, %v3524, %v3532
        %v3563 = vsel %vm1155, %v3526, %v3534
        %v3564 = vsel %vm1155, %v3528, %v3536
        %v3565 = vsel %vm1155, %v3546, %v3522
        %v3566 = vsel %vm1155, %v3548, %v3524
        %v3567 = vsel %vm1155, %v3550, %v3526
        %v3568 = vsel %vm1155, %v3552, %v3528
        %v3569 = vmul.f32 %v3565, %v1166
        %v3570 = vmul.f32 %v3561, %v1170
        %v3571 = vmul.f32 %v3557, %v1174
        %v3572 = vmul.f32 %v3553, %v1178
        %v3573 = vmul.f32 %v3566, %v1166
        %v3574 = vmul.f32 %v3562, %v1170
        %v3575 = vmul.f32 %v3558, %v1174
        %v3576 = vmul.f32 %v3554, %v1178
        %v3577 = vmul.f32 %v3567, %v1166
        %v3578 = vmul.f32 %v3563, %v1170
        %v3579 = vmul.f32 %v3559, %v1174
        %v3580 = vmul.f32 %v3555, %v1178
        %v3581 = vmul.f32 %v3568, %v1166
        %v3582 = vmul.f32 %v3564, %v1170
        %v3583 = vmul.f32 %v3560, %v1174
        %v3584 = vmul.f32 %v3556, %v1178
        %s3585 = scalar_lea.vmem %s9, 8
        %v3586 = vld [vmem:[%s3585] sm:$0xf]
        %v3588 = vsel %vm519, %v3586, 0
        %3590 = vmatprep.subr.mxu0 0.0
        %3591 = vmatpush1.msra.mxu0 0.0
        %3592 = vmatprep.subr.mxu0 0.0
        %3593 = vmatpush1.msra.mxu0 0.0
        %3594 = vmatprep.subr.mxu0 0.0
        %3595 = vmatpush1.msra.mxu0 0.0
        %3596 = vmatprep.subr.mxu0 0.0
        %3597 = vmatpush1.msra.mxu0 0.0
        %3598 = vmatprep.subr.mxu0 0.0
        %3599 = vmatpush1.msra.mxu0 0.0
        %3600 = vmatprep.subr.mxu0 0.0
        %3601 = vmatpush1.msra.mxu0 0.0
        %3602 = vmatprep.subr.mxu0 0.0
        %3603 = vmatpush1.msra.mxu0 0.0
        %3604 = vmatprep.subr.mxu0 0.0
        %3605 = vmatpush1.msra.mxu0 0.0
        %3606 = vmatprep.subr.mxu0 0.0
        %3607 = vmatpush1.msra.mxu0 0.0
        %3608 = vmatprep.subr.mxu0 0.0
        %3609 = vmatpush1.msra.mxu0 0.0
        %3610 = vmatprep.subr.mxu0 0.0
        %3611 = vmatpush1.msra.mxu0 0.0
        %3612 = vmatprep.subr.mxu0 0.0
        %3613 = vmatpush1.msra.mxu0 0.0
        %3614 = vmatprep.subr.mxu0 %v3582
        %3615 = vmatpush1.msra.mxu0 %v3581
        %3616 = vmatprep.subr.mxu0 %v3578
        %3617 = vmatpush1.msra.mxu0 %v3577
        %3618 = vmatprep.subr.mxu0 %v3574
        %3619 = vmatpush1.msra.mxu0 %v3573
        %3620 = vmatprep.subr.mxu0 %v3570
        %3621 = vmatpush1.msra.mxu0 %v3569
        %3622 = vmatprep.subr.mxu0 0.0
        %3623 = vmatpush2.msra.mxu0 0.0
        %3624 = vmatprep.subr.mxu0 0.0
        %3625 = vmatpush2.msra.mxu0 0.0
        %3626 = vmatprep.subr.mxu0 0.0
        %3627 = vmatpush2.msra.mxu0 0.0
        %3628 = vmatprep.subr.mxu0 0.0
        %3629 = vmatpush2.msra.mxu0 0.0
        %3630 = vmatprep.subr.mxu0 0.0
        %3631 = vmatpush2.msra.mxu0 0.0
        %3632 = vmatprep.subr.mxu0 0.0
        %3633 = vmatpush2.msra.mxu0 0.0
        %3634 = vmatprep.subr.mxu0 0.0
        %3635 = vmatpush2.msra.mxu0 0.0
        %3636 = vmatprep.subr.mxu0 0.0
        %3637 = vmatpush2.msra.mxu0 0.0
        %3638 = vmatprep.subr.mxu0 0.0
        %3639 = vmatpush2.msra.mxu0 0.0
        %3640 = vmatprep.subr.mxu0 0.0
        %3641 = vmatpush2.msra.mxu0 0.0
        %3642 = vmatprep.subr.mxu0 0.0
        %3643 = vmatpush2.msra.mxu0 0.0
        %3644 = vmatprep.subr.mxu0 0.0
        %3645 = vmatpush2.msra.mxu0 0.0
        %3646 = vmatprep.subr.mxu0 0.0
        %3647 = vmatpush2.msra.mxu0 0.0
        %3648 = vmatprep.subr.mxu0 0.0
        %3649 = vmatpush2.msra.mxu0 0.0
        %3650 = vmatprep.subr.mxu0 0.0
        %3651 = vmatpush2.msra.mxu0 0.0
        %3652 = vmatprep.subr.mxu0 0.0
        %3653 = vmatpush2.msra.mxu0 0.0
        %3654 = vmatprep.mubr.f32.mxu0 0.0
        %3655 = vmatmul.mubr.f32.gmra.mxu0 %v3588
        %v3656 = vpop.f32.mrf.mxu0
        %v3657 = vadd.f32 0.0, %v3656
        %v3658 = vpop.f32.mrf.mxu0
        %v3659 = vadd.f32 0.0, %v3658
        %3660 = vdwg.mxu0
        %3661 = vmatprep.subr.mxu0 0.0
        %3662 = vmatpush1.msra.mxu0 0.0
        %3663 = vmatprep.subr.mxu0 0.0
        %3664 = vmatpush1.msra.mxu0 0.0
        %3665 = vmatprep.subr.mxu0 0.0
        %3666 = vmatpush1.msra.mxu0 0.0
        %3667 = vmatprep.subr.mxu0 0.0
        %3668 = vmatpush1.msra.mxu0 0.0
        %3669 = vmatprep.subr.mxu0 0.0
        %3670 = vmatpush1.msra.mxu0 0.0
        %3671 = vmatprep.subr.mxu0 0.0
        %3672 = vmatpush1.msra.mxu0 0.0
        %3673 = vmatprep.subr.mxu0 0.0
        %3674 = vmatpush1.msra.mxu0 0.0
        %3675 = vmatprep.subr.mxu0 0.0
        %3676 = vmatpush1.msra.mxu0 0.0
        %3677 = vmatprep.subr.mxu0 0.0
        %3678 = vmatpush1.msra.mxu0 0.0
        %3679 = vmatprep.subr.mxu0 0.0
        %3680 = vmatpush1.msra.mxu0 0.0
        %3681 = vmatprep.subr.mxu0 0.0
        %3682 = vmatpush1.msra.mxu0 0.0
        %3683 = vmatprep.subr.mxu0 0.0
        %3684 = vmatpush1.msra.mxu0 0.0
        %3685 = vmatprep.subr.mxu0 %v3584
        %3686 = vmatpush1.msra.mxu0 %v3583
        %3687 = vmatprep.subr.mxu0 %v3580
        %3688 = vmatpush1.msra.mxu0 %v3579
        %3689 = vmatprep.subr.mxu0 %v3576
        %3690 = vmatpush1.msra.mxu0 %v3575
        %3691 = vmatprep.subr.mxu0 %v3572
        %3692 = vmatpush1.msra.mxu0 %v3571
        %3693 = vmatprep.subr.mxu0 0.0
        %3694 = vmatpush2.msra.mxu0 0.0
        %3695 = vmatprep.subr.mxu0 0.0
        %3696 = vmatpush2.msra.mxu0 0.0
        %3697 = vmatprep.subr.mxu0 0.0
        %3698 = vmatpush2.msra.mxu0 0.0
        %3699 = vmatprep.subr.mxu0 0.0
        %3700 = vmatpush2.msra.mxu0 0.0
        %3701 = vmatprep.subr.mxu0 0.0
        %3702 = vmatpush2.msra.mxu0 0.0
        %3703 = vmatprep.subr.mxu0 0.0
        %3704 = vmatpush2.msra.mxu0 0.0
        %3705 = vmatprep.subr.mxu0 0.0
        %3706 = vmatpush2.msra.mxu0 0.0
        %3707 = vmatprep.subr.mxu0 0.0
        %3708 = vmatpush2.msra.mxu0 0.0
        %3709 = vmatprep.subr.mxu0 0.0
        %3710 = vmatpush2.msra.mxu0 0.0
        %3711 = vmatprep.subr.mxu0 0.0
        %3712 = vmatpush2.msra.mxu0 0.0
        %3713 = vmatprep.subr.mxu0 0.0
        %3714 = vmatpush2.msra.mxu0 0.0
        %3715 = vmatprep.subr.mxu0 0.0
        %3716 = vmatpush2.msra.mxu0 0.0
        %3717 = vmatprep.subr.mxu0 0.0
        %3718 = vmatpush2.msra.mxu0 0.0
        %3719 = vmatprep.subr.mxu0 0.0
        %3720 = vmatpush2.msra.mxu0 0.0
        %3721 = vmatprep.subr.mxu0 0.0
        %3722 = vmatpush2.msra.mxu0 0.0
        %3723 = vmatprep.subr.mxu0 0.0
        %3724 = vmatpush2.msra.mxu0 0.0
        %3725 = vmatprep.mubr.f32.mxu0 0.0
        %3726 = vmatmul.mubr.f32.gmra.mxu0 %v3588
        %v3727 = vpop.f32.mrf.mxu0
        %v3728 = vadd.f32 0.0, %v3727
        %v3729 = vpop.f32.mrf.mxu0
        %v3730 = vadd.f32 0.0, %v3729
        %3731 = vdwg.mxu0
        %v3732 = vadd.f32 %v3446, %v3657
        %v3733 = vadd.f32 %v3448, %v3659
        %v3734 = vadd.f32 %v3517, %v3728
        %v3735 = vadd.f32 %v3519, %v3730
        %3736 = vrot.lane.b32.xlu0 %v3084, 1
        %v3737 = vpop.permute.xlu0 %3736
        %3738 = vrot.lane.b32.xlu0 %v3088, 1
        %v3739 = vpop.permute.xlu0 %3738
        %3740 = vrot.lane.b32.xlu0 %v3092, 1
        %v3741 = vpop.permute.xlu0 %3740
        %3742 = vrot.lane.b32.xlu0 %v3096, 1
        %v3743 = vpop.permute.xlu0 %3742
        %3744 = vrot.lane.b32.xlu0 %v3085, 1
        %v3745 = vpop.permute.xlu0 %3744
        %3746 = vrot.lane.b32.xlu0 %v3089, 1
        %v3747 = vpop.permute.xlu0 %3746
        %3748 = vrot.lane.b32.xlu0 %v3093, 1
        %v3749 = vpop.permute.xlu0 %3748
        %3750 = vrot.lane.b32.xlu0 %v3097, 1
        %v3751 = vpop.permute.xlu0 %3750
        %3752 = vrot.lane.b32.xlu0 %v3086, 1
        %v3753 = vpop.permute.xlu0 %3752
        %3754 = vrot.lane.b32.xlu0 %v3090, 1
        %v3755 = vpop.permute.xlu0 %3754
        %3756 = vrot.lane.b32.xlu0 %v3094, 1
        %v3757 = vpop.permute.xlu0 %3756
        %3758 = vrot.lane.b32.xlu0 %v3098, 1
        %v3759 = vpop.permute.xlu0 %3758
        %3760 = vrot.lane.b32.xlu0 %v3087, 1
        %v3761 = vpop.permute.xlu0 %3760
        %3762 = vrot.lane.b32.xlu0 %v3091, 1
        %v3763 = vpop.permute.xlu0 %3762
        %3764 = vrot.lane.b32.xlu0 %v3095, 1
        %v3765 = vpop.permute.xlu0 %3764
        %3766 = vrot.lane.b32.xlu0 %v3099, 1
        %v3767 = vpop.permute.xlu0 %3766
        %v3768 = vsel %vm1418, %v3753, %v3761
        %v3769 = vsel %vm1418, %v3755, %v3763
        %v3770 = vsel %vm1418, %v3757, %v3765
        %v3771 = vsel %vm1418, %v3759, %v3767
        %v3772 = vsel %vm1418, %v3745, %v3753
        %v3773 = vsel %vm1418, %v3747, %v3755
        %v3774 = vsel %vm1418, %v3749, %v3757
        %v3775 = vsel %vm1418, %v3751, %v3759
        %v3776 = vsel %vm1418, %v3737, %v3745
        %v3777 = vsel %vm1418, %v3739, %v3747
        %v3778 = vsel %vm1418, %v3741, %v3749
        %v3779 = vsel %vm1418, %v3743, %v3751
        %v3780 = vsel %vm1418, %v3761, %v3737
        %v3781 = vsel %vm1418, %v3763, %v3739
        %v3782 = vsel %vm1418, %v3765, %v3741
        %v3783 = vsel %vm1418, %v3767, %v3743
        %v3784 = vmul.f32 %v3780, %v1429
        %v3785 = vmul.f32 %v3776, %v1433
        %v3786 = vmul.f32 %v3772, %v1437
        %v3787 = vmul.f32 %v3768, %v1441
        %v3788 = vmul.f32 %v3781, %v1429
        %v3789 = vmul.f32 %v3777, %v1433
        %v3790 = vmul.f32 %v3773, %v1437
        %v3791 = vmul.f32 %v3769, %v1441
        %v3792 = vmul.f32 %v3782, %v1429
        %v3793 = vmul.f32 %v3778, %v1433
        %v3794 = vmul.f32 %v3774, %v1437
        %v3795 = vmul.f32 %v3770, %v1441
        %v3796 = vmul.f32 %v3783, %v1429
        %v3797 = vmul.f32 %v3779, %v1433
        %v3798 = vmul.f32 %v3775, %v1437
        %v3799 = vmul.f32 %v3771, %v1441
        %s3800 = scalar_lea.vmem %s9, 12
        %v3801 = vld [vmem:[%s3800] sm:$0xf]
        %v3803 = vsel %vm519, %v3801, 0
        %3805 = vmatprep.subr.mxu0 0.0
        %3806 = vmatpush1.msra.mxu0 0.0
        %3807 = vmatprep.subr.mxu0 0.0
        %3808 = vmatpush1.msra.mxu0 0.0
        %3809 = vmatprep.subr.mxu0 0.0
        %3810 = vmatpush1.msra.mxu0 0.0
        %3811 = vmatprep.subr.mxu0 0.0
        %3812 = vmatpush1.msra.mxu0 0.0
        %3813 = vmatprep.subr.mxu0 0.0
        %3814 = vmatpush1.msra.mxu0 0.0
        %3815 = vmatprep.subr.mxu0 0.0
        %3816 = vmatpush1.msra.mxu0 0.0
        %3817 = vmatprep.subr.mxu0 0.0
        %3818 = vmatpush1.msra.mxu0 0.0
        %3819 = vmatprep.subr.mxu0 0.0
        %3820 = vmatpush1.msra.mxu0 0.0
        %3821 = vmatprep.subr.mxu0 0.0
        %3822 = vmatpush1.msra.mxu0 0.0
        %3823 = vmatprep.subr.mxu0 0.0
        %3824 = vmatpush1.msra.mxu0 0.0
        %3825 = vmatprep.subr.mxu0 0.0
        %3826 = vmatpush1.msra.mxu0 0.0
        %3827 = vmatprep.subr.mxu0 0.0
        %3828 = vmatpush1.msra.mxu0 0.0
        %3829 = vmatprep.subr.mxu0 %v3797
        %3830 = vmatpush1.msra.mxu0 %v3796
        %3831 = vmatprep.subr.mxu0 %v3793
        %3832 = vmatpush1.msra.mxu0 %v3792
        %3833 = vmatprep.subr.mxu0 %v3789
        %3834 = vmatpush1.msra.mxu0 %v3788
        %3835 = vmatprep.subr.mxu0 %v3785
        %3836 = vmatpush1.msra.mxu0 %v3784
        %3837 = vmatprep.subr.mxu0 0.0
        %3838 = vmatpush2.msra.mxu0 0.0
        %3839 = vmatprep.subr.mxu0 0.0
        %3840 = vmatpush2.msra.mxu0 0.0
        %3841 = vmatprep.subr.mxu0 0.0
        %3842 = vmatpush2.msra.mxu0 0.0
        %3843 = vmatprep.subr.mxu0 0.0
        %3844 = vmatpush2.msra.mxu0 0.0
        %3845 = vmatprep.subr.mxu0 0.0
        %3846 = vmatpush2.msra.mxu0 0.0
        %3847 = vmatprep.subr.mxu0 0.0
        %3848 = vmatpush2.msra.mxu0 0.0
        %3849 = vmatprep.subr.mxu0 0.0
        %3850 = vmatpush2.msra.mxu0 0.0
        %3851 = vmatprep.subr.mxu0 0.0
        %3852 = vmatpush2.msra.mxu0 0.0
        %3853 = vmatprep.subr.mxu0 0.0
        %3854 = vmatpush2.msra.mxu0 0.0
        %3855 = vmatprep.subr.mxu0 0.0
        %3856 = vmatpush2.msra.mxu0 0.0
        %3857 = vmatprep.subr.mxu0 0.0
        %3858 = vmatpush2.msra.mxu0 0.0
        %3859 = vmatprep.subr.mxu0 0.0
        %3860 = vmatpush2.msra.mxu0 0.0
        %3861 = vmatprep.subr.mxu0 0.0
        %3862 = vmatpush2.msra.mxu0 0.0
        %3863 = vmatprep.subr.mxu0 0.0
        %3864 = vmatpush2.msra.mxu0 0.0
        %3865 = vmatprep.subr.mxu0 0.0
        %3866 = vmatpush2.msra.mxu0 0.0
        %3867 = vmatprep.subr.mxu0 0.0
        %3868 = vmatpush2.msra.mxu0 0.0
        %3869 = vmatprep.mubr.f32.mxu0 0.0
        %3870 = vmatmul.mubr.f32.gmra.mxu0 %v3803
        %v3871 = vpop.f32.mrf.mxu0
        %v3872 = vadd.f32 0.0, %v3871
        %v3873 = vpop.f32.mrf.mxu0
        %v3874 = vadd.f32 0.0, %v3873
        %3875 = vdwg.mxu0
        %3876 = vmatprep.subr.mxu0 0.0
        %3877 = vmatpush1.msra.mxu0 0.0
        %3878 = vmatprep.subr.mxu0 0.0
        %3879 = vmatpush1.msra.mxu0 0.0
        %3880 = vmatprep.subr.mxu0 0.0
        %3881 = vmatpush1.msra.mxu0 0.0
        %3882 = vmatprep.subr.mxu0 0.0
        %3883 = vmatpush1.msra.mxu0 0.0
        %3884 = vmatprep.subr.mxu0 0.0
        %3885 = vmatpush1.msra.mxu0 0.0
        %3886 = vmatprep.subr.mxu0 0.0
        %3887 = vmatpush1.msra.mxu0 0.0
        %3888 = vmatprep.subr.mxu0 0.0
        %3889 = vmatpush1.msra.mxu0 0.0
        %3890 = vmatprep.subr.mxu0 0.0
        %3891 = vmatpush1.msra.mxu0 0.0
        %3892 = vmatprep.subr.mxu0 0.0
        %3893 = vmatpush1.msra.mxu0 0.0
        %3894 = vmatprep.subr.mxu0 0.0
        %3895 = vmatpush1.msra.mxu0 0.0
        %3896 = vmatprep.subr.mxu0 0.0
        %3897 = vmatpush1.msra.mxu0 0.0
        %3898 = vmatprep.subr.mxu0 0.0
        %3899 = vmatpush1.msra.mxu0 0.0
        %3900 = vmatprep.subr.mxu0 %v3799
        %3901 = vmatpush1.msra.mxu0 %v3798
        %3902 = vmatprep.subr.mxu0 %v3795
        %3903 = vmatpush1.msra.mxu0 %v3794
        %3904 = vmatprep.subr.mxu0 %v3791
        %3905 = vmatpush1.msra.mxu0 %v3790
        %3906 = vmatprep.subr.mxu0 %v3787
        %3907 = vmatpush1.msra.mxu0 %v3786
        %3908 = vmatprep.subr.mxu0 0.0
        %3909 = vmatpush2.msra.mxu0 0.0
        %3910 = vmatprep.subr.mxu0 0.0
        %3911 = vmatpush2.msra.mxu0 0.0
        %3912 = vmatprep.subr.mxu0 0.0
        %3913 = vmatpush2.msra.mxu0 0.0
        %3914 = vmatprep.subr.mxu0 0.0
        %3915 = vmatpush2.msra.mxu0 0.0
        %3916 = vmatprep.subr.mxu0 0.0
        %3917 = vmatpush2.msra.mxu0 0.0
        %3918 = vmatprep.subr.mxu0 0.0
        %3919 = vmatpush2.msra.mxu0 0.0
        %3920 = vmatprep.subr.mxu0 0.0
        %3921 = vmatpush2.msra.mxu0 0.0
        %3922 = vmatprep.subr.mxu0 0.0
        %3923 = vmatpush2.msra.mxu0 0.0
        %3924 = vmatprep.subr.mxu0 0.0
        %3925 = vmatpush2.msra.mxu0 0.0
        %3926 = vmatprep.subr.mxu0 0.0
        %3927 = vmatpush2.msra.mxu0 0.0
        %3928 = vmatprep.subr.mxu0 0.0
        %3929 = vmatpush2.msra.mxu0 0.0
        %3930 = vmatprep.subr.mxu0 0.0
        %3931 = vmatpush2.msra.mxu0 0.0
        %3932 = vmatprep.subr.mxu0 0.0
        %3933 = vmatpush2.msra.mxu0 0.0
        %3934 = vmatprep.subr.mxu0 0.0
        %3935 = vmatpush2.msra.mxu0 0.0
        %3936 = vmatprep.subr.mxu0 0.0
        %3937 = vmatpush2.msra.mxu0 0.0
        %3938 = vmatprep.subr.mxu0 0.0
        %3939 = vmatpush2.msra.mxu0 0.0
        %3940 = vmatprep.mubr.f32.mxu0 0.0
        %3941 = vmatmul.mubr.f32.gmra.mxu0 %v3803
        %v3942 = vpop.f32.mrf.mxu0
        %v3943 = vadd.f32 0.0, %v3942
        %v3944 = vpop.f32.mrf.mxu0
        %v3945 = vadd.f32 0.0, %v3944
        %3946 = vdwg.mxu0
        %v3947 = vadd.f32 %v3732, %v3872
        %v3948 = vadd.f32 %v3733, %v3874
        %v3949 = vadd.f32 %v3734, %v3943
        %v3950 = vadd.f32 %v3735, %v3945
        %s3951 = scalar_lea.vmem %s9, 16
        %v3952 = vld [vmem:[%s3951] sm:$0xf]
        %v3954 = vsel %vm519, %v3952, 0
        %3956 = vmatprep.subr.mxu0 0.0
        %3957 = vmatpush1.msra.mxu0 0.0
        %3958 = vmatprep.subr.mxu0 0.0
        %3959 = vmatpush1.msra.mxu0 0.0
        %3960 = vmatprep.subr.mxu0 0.0
        %3961 = vmatpush1.msra.mxu0 0.0
        %3962 = vmatprep.subr.mxu0 0.0
        %3963 = vmatpush1.msra.mxu0 0.0
        %3964 = vmatprep.subr.mxu0 0.0
        %3965 = vmatpush1.msra.mxu0 0.0
        %3966 = vmatprep.subr.mxu0 0.0
        %3967 = vmatpush1.msra.mxu0 0.0
        %3968 = vmatprep.subr.mxu0 0.0
        %3969 = vmatpush1.msra.mxu0 0.0
        %3970 = vmatprep.subr.mxu0 0.0
        %3971 = vmatpush1.msra.mxu0 0.0
        %3972 = vmatprep.subr.mxu0 0.0
        %3973 = vmatpush1.msra.mxu0 0.0
        %3974 = vmatprep.subr.mxu0 0.0
        %3975 = vmatpush1.msra.mxu0 0.0
        %3976 = vmatprep.subr.mxu0 0.0
        %3977 = vmatpush1.msra.mxu0 0.0
        %3978 = vmatprep.subr.mxu0 0.0
        %3979 = vmatpush1.msra.mxu0 0.0
        %3980 = vmatprep.subr.mxu0 %v3097
        %3981 = vmatpush1.msra.mxu0 %v3096
        %3982 = vmatprep.subr.mxu0 %v3093
        %3983 = vmatpush1.msra.mxu0 %v3092
        %3984 = vmatprep.subr.mxu0 %v3089
        %3985 = vmatpush1.msra.mxu0 %v3088
        %3986 = vmatprep.subr.mxu0 %v3085
        %3987 = vmatpush1.msra.mxu0 %v3084
        %3988 = vmatprep.subr.mxu0 0.0
        %3989 = vmatpush2.msra.mxu0 0.0
        %3990 = vmatprep.subr.mxu0 0.0
        %3991 = vmatpush2.msra.mxu0 0.0
        %3992 = vmatprep.subr.mxu0 0.0
        %3993 = vmatpush2.msra.mxu0 0.0
        %3994 = vmatprep.subr.mxu0 0.0
        %3995 = vmatpush2.msra.mxu0 0.0
        %3996 = vmatprep.subr.mxu0 0.0
        %3997 = vmatpush2.msra.mxu0 0.0
        %3998 = vmatprep.subr.mxu0 0.0
        %3999 = vmatpush2.msra.mxu0 0.0
        %4000 = vmatprep.subr.mxu0 0.0
        %4001 = vmatpush2.msra.mxu0 0.0
        %4002 = vmatprep.subr.mxu0 0.0
        %4003 = vmatpush2.msra.mxu0 0.0
        %4004 = vmatprep.subr.mxu0 0.0
        %4005 = vmatpush2.msra.mxu0 0.0
        %4006 = vmatprep.subr.mxu0 0.0
        %4007 = vmatpush2.msra.mxu0 0.0
        %4008 = vmatprep.subr.mxu0 0.0
        %4009 = vmatpush2.msra.mxu0 0.0
        %4010 = vmatprep.subr.mxu0 0.0
        %4011 = vmatpush2.msra.mxu0 0.0
        %4012 = vmatprep.subr.mxu0 0.0
        %4013 = vmatpush2.msra.mxu0 0.0
        %4014 = vmatprep.subr.mxu0 0.0
        %4015 = vmatpush2.msra.mxu0 0.0
        %4016 = vmatprep.subr.mxu0 0.0
        %4017 = vmatpush2.msra.mxu0 0.0
        %4018 = vmatprep.subr.mxu0 0.0
        %4019 = vmatpush2.msra.mxu0 0.0
        %4020 = vmatprep.mubr.f32.mxu0 0.0
        %4021 = vmatmul.mubr.f32.gmra.mxu0 %v3954
        %v4022 = vpop.f32.mrf.mxu0
        %v4023 = vadd.f32 0.0, %v4022
        %v4024 = vpop.f32.mrf.mxu0
        %v4025 = vadd.f32 0.0, %v4024
        %4026 = vdwg.mxu0
        %4027 = vmatprep.subr.mxu0 0.0
        %4028 = vmatpush1.msra.mxu0 0.0
        %4029 = vmatprep.subr.mxu0 0.0
        %4030 = vmatpush1.msra.mxu0 0.0
        %4031 = vmatprep.subr.mxu0 0.0
        %4032 = vmatpush1.msra.mxu0 0.0
        %4033 = vmatprep.subr.mxu0 0.0
        %4034 = vmatpush1.msra.mxu0 0.0
        %4035 = vmatprep.subr.mxu0 0.0
        %4036 = vmatpush1.msra.mxu0 0.0
        %4037 = vmatprep.subr.mxu0 0.0
        %4038 = vmatpush1.msra.mxu0 0.0
        %4039 = vmatprep.subr.mxu0 0.0
        %4040 = vmatpush1.msra.mxu0 0.0
        %4041 = vmatprep.subr.mxu0 0.0
        %4042 = vmatpush1.msra.mxu0 0.0
        %4043 = vmatprep.subr.mxu0 0.0
        %4044 = vmatpush1.msra.mxu0 0.0
        %4045 = vmatprep.subr.mxu0 0.0
        %4046 = vmatpush1.msra.mxu0 0.0
        %4047 = vmatprep.subr.mxu0 0.0
        %4048 = vmatpush1.msra.mxu0 0.0
        %4049 = vmatprep.subr.mxu0 0.0
        %4050 = vmatpush1.msra.mxu0 0.0
        %4051 = vmatprep.subr.mxu0 %v3099
        %4052 = vmatpush1.msra.mxu0 %v3098
        %4053 = vmatprep.subr.mxu0 %v3095
        %4054 = vmatpush1.msra.mxu0 %v3094
        %4055 = vmatprep.subr.mxu0 %v3091
        %4056 = vmatpush1.msra.mxu0 %v3090
        %4057 = vmatprep.subr.mxu0 %v3087
        %4058 = vmatpush1.msra.mxu0 %v3086
        %4059 = vmatprep.subr.mxu0 0.0
        %4060 = vmatpush2.msra.mxu0 0.0
        %4061 = vmatprep.subr.mxu0 0.0
        %4062 = vmatpush2.msra.mxu0 0.0
        %4063 = vmatprep.subr.mxu0 0.0
        %4064 = vmatpush2.msra.mxu0 0.0
        %4065 = vmatprep.subr.mxu0 0.0
        %4066 = vmatpush2.msra.mxu0 0.0
        %4067 = vmatprep.subr.mxu0 0.0
        %4068 = vmatpush2.msra.mxu0 0.0
        %4069 = vmatprep.subr.mxu0 0.0
        %4070 = vmatpush2.msra.mxu0 0.0
        %4071 = vmatprep.subr.mxu0 0.0
        %4072 = vmatpush2.msra.mxu0 0.0
        %4073 = vmatprep.subr.mxu0 0.0
        %4074 = vmatpush2.msra.mxu0 0.0
        %4075 = vmatprep.subr.mxu0 0.0
        %4076 = vmatpush2.msra.mxu0 0.0
        %4077 = vmatprep.subr.mxu0 0.0
        %4078 = vmatpush2.msra.mxu0 0.0
        %4079 = vmatprep.subr.mxu0 0.0
        %4080 = vmatpush2.msra.mxu0 0.0
        %4081 = vmatprep.subr.mxu0 0.0
        %4082 = vmatpush2.msra.mxu0 0.0
        %4083 = vmatprep.subr.mxu0 0.0
        %4084 = vmatpush2.msra.mxu0 0.0
        %4085 = vmatprep.subr.mxu0 0.0
        %4086 = vmatpush2.msra.mxu0 0.0
        %4087 = vmatprep.subr.mxu0 0.0
        %4088 = vmatpush2.msra.mxu0 0.0
        %4089 = vmatprep.subr.mxu0 0.0
        %4090 = vmatpush2.msra.mxu0 0.0
        %4091 = vmatprep.mubr.f32.mxu0 0.0
        %4092 = vmatmul.mubr.f32.gmra.mxu0 %v3954
        %v4093 = vpop.f32.mrf.mxu0
        %v4094 = vadd.f32 0.0, %v4093
        %v4095 = vpop.f32.mrf.mxu0
        %v4096 = vadd.f32 0.0, %v4095
        %4097 = vdwg.mxu0
        %v4098 = vadd.f32 %v3947, %v4023
        %v4099 = vadd.f32 %v3948, %v4025
        %v4100 = vadd.f32 %v3949, %v4094
        %v4101 = vadd.f32 %v3950, %v4096
        %4102 = vrot.lane.b32.xlu0 %v3084, 127
        %v4103 = vpop.permute.xlu0 %4102
        %4104 = vrot.lane.b32.xlu0 %v3088, 127
        %v4105 = vpop.permute.xlu0 %4104
        %4106 = vrot.lane.b32.xlu0 %v3092, 127
        %v4107 = vpop.permute.xlu0 %4106
        %4108 = vrot.lane.b32.xlu0 %v3096, 127
        %v4109 = vpop.permute.xlu0 %4108
        %4110 = vrot.lane.b32.xlu0 %v3085, 127
        %v4111 = vpop.permute.xlu0 %4110
        %4112 = vrot.lane.b32.xlu0 %v3089, 127
        %v4113 = vpop.permute.xlu0 %4112
        %4114 = vrot.lane.b32.xlu0 %v3093, 127
        %v4115 = vpop.permute.xlu0 %4114
        %4116 = vrot.lane.b32.xlu0 %v3097, 127
        %v4117 = vpop.permute.xlu0 %4116
        %4118 = vrot.lane.b32.xlu0 %v3086, 127
        %v4119 = vpop.permute.xlu0 %4118
        %4120 = vrot.lane.b32.xlu0 %v3090, 127
        %v4121 = vpop.permute.xlu0 %4120
        %4122 = vrot.lane.b32.xlu0 %v3094, 127
        %v4123 = vpop.permute.xlu0 %4122
        %4124 = vrot.lane.b32.xlu0 %v3098, 127
        %v4125 = vpop.permute.xlu0 %4124
        %4126 = vrot.lane.b32.xlu0 %v3087, 127
        %v4127 = vpop.permute.xlu0 %4126
        %4128 = vrot.lane.b32.xlu0 %v3091, 127
        %v4129 = vpop.permute.xlu0 %4128
        %4130 = vrot.lane.b32.xlu0 %v3095, 127
        %v4131 = vpop.permute.xlu0 %4130
        %4132 = vrot.lane.b32.xlu0 %v3099, 127
        %v4133 = vpop.permute.xlu0 %4132
        %v4134 = vsel %vm1900, %v4119, %v4127
        %v4135 = vsel %vm1900, %v4121, %v4129
        %v4136 = vsel %vm1900, %v4123, %v4131
        %v4137 = vsel %vm1900, %v4125, %v4133
        %v4138 = vsel %vm1900, %v4111, %v4119
        %v4139 = vsel %vm1900, %v4113, %v4121
        %v4140 = vsel %vm1900, %v4115, %v4123
        %v4141 = vsel %vm1900, %v4117, %v4125
        %v4142 = vsel %vm1900, %v4103, %v4111
        %v4143 = vsel %vm1900, %v4105, %v4113
        %v4144 = vsel %vm1900, %v4107, %v4115
        %v4145 = vsel %vm1900, %v4109, %v4117
        %v4146 = vsel %vm1900, %v4127, %v4103
        %v4147 = vsel %vm1900, %v4129, %v4105
        %v4148 = vsel %vm1900, %v4131, %v4107
        %v4149 = vsel %vm1900, %v4133, %v4109
        %v4150 = vmul.f32 %v4142, %v1911
        %v4151 = vmul.f32 %v4138, %v1915
        %v4152 = vmul.f32 %v4134, %v1919
        %v4153 = vmul.f32 %v4146, %v1923
        %v4154 = vmul.f32 %v4143, %v1911
        %v4155 = vmul.f32 %v4139, %v1915
        %v4156 = vmul.f32 %v4135, %v1919
        %v4157 = vmul.f32 %v4147, %v1923
        %v4158 = vmul.f32 %v4144, %v1911
        %v4159 = vmul.f32 %v4140, %v1915
        %v4160 = vmul.f32 %v4136, %v1919
        %v4161 = vmul.f32 %v4148, %v1923
        %v4162 = vmul.f32 %v4145, %v1911
        %v4163 = vmul.f32 %v4141, %v1915
        %v4164 = vmul.f32 %v4137, %v1919
        %v4165 = vmul.f32 %v4149, %v1923
        %s4166 = scalar_lea.vmem %s9, 20
        %v4167 = vld [vmem:[%s4166] sm:$0xf]
        %v4169 = vsel %vm519, %v4167, 0
        %4171 = vmatprep.subr.mxu0 0.0
        %4172 = vmatpush1.msra.mxu0 0.0
        %4173 = vmatprep.subr.mxu0 0.0
        %4174 = vmatpush1.msra.mxu0 0.0
        %4175 = vmatprep.subr.mxu0 0.0
        %4176 = vmatpush1.msra.mxu0 0.0
        %4177 = vmatprep.subr.mxu0 0.0
        %4178 = vmatpush1.msra.mxu0 0.0
        %4179 = vmatprep.subr.mxu0 0.0
        %4180 = vmatpush1.msra.mxu0 0.0
        %4181 = vmatprep.subr.mxu0 0.0
        %4182 = vmatpush1.msra.mxu0 0.0
        %4183 = vmatprep.subr.mxu0 0.0
        %4184 = vmatpush1.msra.mxu0 0.0
        %4185 = vmatprep.subr.mxu0 0.0
        %4186 = vmatpush1.msra.mxu0 0.0
        %4187 = vmatprep.subr.mxu0 0.0
        %4188 = vmatpush1.msra.mxu0 0.0
        %4189 = vmatprep.subr.mxu0 0.0
        %4190 = vmatpush1.msra.mxu0 0.0
        %4191 = vmatprep.subr.mxu0 0.0
        %4192 = vmatpush1.msra.mxu0 0.0
        %4193 = vmatprep.subr.mxu0 0.0
        %4194 = vmatpush1.msra.mxu0 0.0
        %4195 = vmatprep.subr.mxu0 %v4163
        %4196 = vmatpush1.msra.mxu0 %v4162
        %4197 = vmatprep.subr.mxu0 %v4159
        %4198 = vmatpush1.msra.mxu0 %v4158
        %4199 = vmatprep.subr.mxu0 %v4155
        %4200 = vmatpush1.msra.mxu0 %v4154
        %4201 = vmatprep.subr.mxu0 %v4151
        %4202 = vmatpush1.msra.mxu0 %v4150
        %4203 = vmatprep.subr.mxu0 0.0
        %4204 = vmatpush2.msra.mxu0 0.0
        %4205 = vmatprep.subr.mxu0 0.0
        %4206 = vmatpush2.msra.mxu0 0.0
        %4207 = vmatprep.subr.mxu0 0.0
        %4208 = vmatpush2.msra.mxu0 0.0
        %4209 = vmatprep.subr.mxu0 0.0
        %4210 = vmatpush2.msra.mxu0 0.0
        %4211 = vmatprep.subr.mxu0 0.0
        %4212 = vmatpush2.msra.mxu0 0.0
        %4213 = vmatprep.subr.mxu0 0.0
        %4214 = vmatpush2.msra.mxu0 0.0
        %4215 = vmatprep.subr.mxu0 0.0
        %4216 = vmatpush2.msra.mxu0 0.0
        %4217 = vmatprep.subr.mxu0 0.0
        %4218 = vmatpush2.msra.mxu0 0.0
        %4219 = vmatprep.subr.mxu0 0.0
        %4220 = vmatpush2.msra.mxu0 0.0
        %4221 = vmatprep.subr.mxu0 0.0
        %4222 = vmatpush2.msra.mxu0 0.0
        %4223 = vmatprep.subr.mxu0 0.0
        %4224 = vmatpush2.msra.mxu0 0.0
        %4225 = vmatprep.subr.mxu0 0.0
        %4226 = vmatpush2.msra.mxu0 0.0
        %4227 = vmatprep.subr.mxu0 0.0
        %4228 = vmatpush2.msra.mxu0 0.0
        %4229 = vmatprep.subr.mxu0 0.0
        %4230 = vmatpush2.msra.mxu0 0.0
        %4231 = vmatprep.subr.mxu0 0.0
        %4232 = vmatpush2.msra.mxu0 0.0
        %4233 = vmatprep.subr.mxu0 0.0
        %4234 = vmatpush2.msra.mxu0 0.0
        %4235 = vmatprep.mubr.f32.mxu0 0.0
        %4236 = vmatmul.mubr.f32.gmra.mxu0 %v4169
        %v4237 = vpop.f32.mrf.mxu0
        %v4238 = vadd.f32 0.0, %v4237
        %v4239 = vpop.f32.mrf.mxu0
        %v4240 = vadd.f32 0.0, %v4239
        %4241 = vdwg.mxu0
        %4242 = vmatprep.subr.mxu0 0.0
        %4243 = vmatpush1.msra.mxu0 0.0
        %4244 = vmatprep.subr.mxu0 0.0
        %4245 = vmatpush1.msra.mxu0 0.0
        %4246 = vmatprep.subr.mxu0 0.0
        %4247 = vmatpush1.msra.mxu0 0.0
        %4248 = vmatprep.subr.mxu0 0.0
        %4249 = vmatpush1.msra.mxu0 0.0
        %4250 = vmatprep.subr.mxu0 0.0
        %4251 = vmatpush1.msra.mxu0 0.0
        %4252 = vmatprep.subr.mxu0 0.0
        %4253 = vmatpush1.msra.mxu0 0.0
        %4254 = vmatprep.subr.mxu0 0.0
        %4255 = vmatpush1.msra.mxu0 0.0
        %4256 = vmatprep.subr.mxu0 0.0
        %4257 = vmatpush1.msra.mxu0 0.0
        %4258 = vmatprep.subr.mxu0 0.0
        %4259 = vmatpush1.msra.mxu0 0.0
        %4260 = vmatprep.subr.mxu0 0.0
        %4261 = vmatpush1.msra.mxu0 0.0
        %4262 = vmatprep.subr.mxu0 0.0
        %4263 = vmatpush1.msra.mxu0 0.0
        %4264 = vmatprep.subr.mxu0 0.0
        %4265 = vmatpush1.msra.mxu0 0.0
        %4266 = vmatprep.subr.mxu0 %v4165
        %4267 = vmatpush1.msra.mxu0 %v4164
        %4268 = vmatprep.subr.mxu0 %v4161
        %4269 = vmatpush1.msra.mxu0 %v4160
        %4270 = vmatprep.subr.mxu0 %v4157
        %4271 = vmatpush1.msra.mxu0 %v4156
        %4272 = vmatprep.subr.mxu0 %v4153
        %4273 = vmatpush1.msra.mxu0 %v4152
        %4274 = vmatprep.subr.mxu0 0.0
        %4275 = vmatpush2.msra.mxu0 0.0
        %4276 = vmatprep.subr.mxu0 0.0
        %4277 = vmatpush2.msra.mxu0 0.0
        %4278 = vmatprep.subr.mxu0 0.0
        %4279 = vmatpush2.msra.mxu0 0.0
        %4280 = vmatprep.subr.mxu0 0.0
        %4281 = vmatpush2.msra.mxu0 0.0
        %4282 = vmatprep.subr.mxu0 0.0
        %4283 = vmatpush2.msra.mxu0 0.0
        %4284 = vmatprep.subr.mxu0 0.0
        %4285 = vmatpush2.msra.mxu0 0.0
        %4286 = vmatprep.subr.mxu0 0.0
        %4287 = vmatpush2.msra.mxu0 0.0
        %4288 = vmatprep.subr.mxu0 0.0
        %4289 = vmatpush2.msra.mxu0 0.0
        %4290 = vmatprep.subr.mxu0 0.0
        %4291 = vmatpush2.msra.mxu0 0.0
        %4292 = vmatprep.subr.mxu0 0.0
        %4293 = vmatpush2.msra.mxu0 0.0
        %4294 = vmatprep.subr.mxu0 0.0
        %4295 = vmatpush2.msra.mxu0 0.0
        %4296 = vmatprep.subr.mxu0 0.0
        %4297 = vmatpush2.msra.mxu0 0.0
        %4298 = vmatprep.subr.mxu0 0.0
        %4299 = vmatpush2.msra.mxu0 0.0
        %4300 = vmatprep.subr.mxu0 0.0
        %4301 = vmatpush2.msra.mxu0 0.0
        %4302 = vmatprep.subr.mxu0 0.0
        %4303 = vmatpush2.msra.mxu0 0.0
        %4304 = vmatprep.subr.mxu0 0.0
        %4305 = vmatpush2.msra.mxu0 0.0
        %4306 = vmatprep.mubr.f32.mxu0 0.0
        %4307 = vmatmul.mubr.f32.gmra.mxu0 %v4169
        %v4308 = vpop.f32.mrf.mxu0
        %v4309 = vadd.f32 0.0, %v4308
        %v4310 = vpop.f32.mrf.mxu0
        %v4311 = vadd.f32 0.0, %v4310
        %4312 = vdwg.mxu0
        %v4313 = vadd.f32 %v4098, %v4238
        %v4314 = vadd.f32 %v4099, %v4240
        %v4315 = vadd.f32 %v4100, %v4309
        %v4316 = vadd.f32 %v4101, %v4311
        %4317 = vrot.lane.b32.xlu0 %v3084, 113
        %v4318 = vpop.permute.xlu0 %4317
        %4319 = vrot.lane.b32.xlu0 %v3088, 113
        %v4320 = vpop.permute.xlu0 %4319
        %4321 = vrot.lane.b32.xlu0 %v3092, 113
        %v4322 = vpop.permute.xlu0 %4321
        %4323 = vrot.lane.b32.xlu0 %v3096, 113
        %v4324 = vpop.permute.xlu0 %4323
        %4325 = vrot.lane.b32.xlu0 %v3085, 113
        %v4326 = vpop.permute.xlu0 %4325
        %4327 = vrot.lane.b32.xlu0 %v3089, 113
        %v4328 = vpop.permute.xlu0 %4327
        %4329 = vrot.lane.b32.xlu0 %v3093, 113
        %v4330 = vpop.permute.xlu0 %4329
        %4331 = vrot.lane.b32.xlu0 %v3097, 113
        %v4332 = vpop.permute.xlu0 %4331
        %4333 = vrot.lane.b32.xlu0 %v3086, 113
        %v4334 = vpop.permute.xlu0 %4333
        %4335 = vrot.lane.b32.xlu0 %v3090, 113
        %v4336 = vpop.permute.xlu0 %4335
        %4337 = vrot.lane.b32.xlu0 %v3094, 113
        %v4338 = vpop.permute.xlu0 %4337
        %4339 = vrot.lane.b32.xlu0 %v3098, 113
        %v4340 = vpop.permute.xlu0 %4339
        %4341 = vrot.lane.b32.xlu0 %v3087, 113
        %v4342 = vpop.permute.xlu0 %4341
        %4343 = vrot.lane.b32.xlu0 %v3091, 113
        %v4344 = vpop.permute.xlu0 %4343
        %4345 = vrot.lane.b32.xlu0 %v3095, 113
        %v4346 = vpop.permute.xlu0 %4345
        %4347 = vrot.lane.b32.xlu0 %v3099, 113
        %v4348 = vpop.permute.xlu0 %4347
        %v4349 = vsel %vm2163, %v4334, %v4342
        %v4350 = vsel %vm2163, %v4336, %v4344
        %v4351 = vsel %vm2163, %v4338, %v4346
        %v4352 = vsel %vm2163, %v4340, %v4348
        %v4353 = vsel %vm2163, %v4326, %v4334
        %v4354 = vsel %vm2163, %v4328, %v4336
        %v4355 = vsel %vm2163, %v4330, %v4338
        %v4356 = vsel %vm2163, %v4332, %v4340
        %v4357 = vsel %vm2163, %v4318, %v4326
        %v4358 = vsel %vm2163, %v4320, %v4328
        %v4359 = vsel %vm2163, %v4322, %v4330
        %v4360 = vsel %vm2163, %v4324, %v4332
        %v4361 = vsel %vm2163, %v4342, %v4318
        %v4362 = vsel %vm2163, %v4344, %v4320
        %v4363 = vsel %vm2163, %v4346, %v4322
        %v4364 = vsel %vm2163, %v4348, %v4324
        %v4365 = vmul.f32 %v4357, %v2174
        %v4366 = vmul.f32 %v4353, %v2178
        %v4367 = vmul.f32 %v4349, %v2182
        %v4368 = vmul.f32 %v4361, %v2186
        %v4369 = vmul.f32 %v4358, %v2174
        %v4370 = vmul.f32 %v4354, %v2178
        %v4371 = vmul.f32 %v4350, %v2182
        %v4372 = vmul.f32 %v4362, %v2186
        %v4373 = vmul.f32 %v4359, %v2174
        %v4374 = vmul.f32 %v4355, %v2178
        %v4375 = vmul.f32 %v4351, %v2182
        %v4376 = vmul.f32 %v4363, %v2186
        %v4377 = vmul.f32 %v4360, %v2174
        %v4378 = vmul.f32 %v4356, %v2178
        %v4379 = vmul.f32 %v4352, %v2182
        %v4380 = vmul.f32 %v4364, %v2186
        %s4381 = scalar_lea.vmem %s9, 24
        %v4382 = vld [vmem:[%s4381] sm:$0xf]
        %v4384 = vsel %vm519, %v4382, 0
        %4386 = vmatprep.subr.mxu0 0.0
        %4387 = vmatpush1.msra.mxu0 0.0
        %4388 = vmatprep.subr.mxu0 0.0
        %4389 = vmatpush1.msra.mxu0 0.0
        %4390 = vmatprep.subr.mxu0 0.0
        %4391 = vmatpush1.msra.mxu0 0.0
        %4392 = vmatprep.subr.mxu0 0.0
        %4393 = vmatpush1.msra.mxu0 0.0
        %4394 = vmatprep.subr.mxu0 0.0
        %4395 = vmatpush1.msra.mxu0 0.0
        %4396 = vmatprep.subr.mxu0 0.0
        %4397 = vmatpush1.msra.mxu0 0.0
        %4398 = vmatprep.subr.mxu0 0.0
        %4399 = vmatpush1.msra.mxu0 0.0
        %4400 = vmatprep.subr.mxu0 0.0
        %4401 = vmatpush1.msra.mxu0 0.0
        %4402 = vmatprep.subr.mxu0 0.0
        %4403 = vmatpush1.msra.mxu0 0.0
        %4404 = vmatprep.subr.mxu0 0.0
        %4405 = vmatpush1.msra.mxu0 0.0
        %4406 = vmatprep.subr.mxu0 0.0
        %4407 = vmatpush1.msra.mxu0 0.0
        %4408 = vmatprep.subr.mxu0 0.0
        %4409 = vmatpush1.msra.mxu0 0.0
        %4410 = vmatprep.subr.mxu0 %v4378
        %4411 = vmatpush1.msra.mxu0 %v4377
        %4412 = vmatprep.subr.mxu0 %v4374
        %4413 = vmatpush1.msra.mxu0 %v4373
        %4414 = vmatprep.subr.mxu0 %v4370
        %4415 = vmatpush1.msra.mxu0 %v4369
        %4416 = vmatprep.subr.mxu0 %v4366
        %4417 = vmatpush1.msra.mxu0 %v4365
        %4418 = vmatprep.subr.mxu0 0.0
        %4419 = vmatpush2.msra.mxu0 0.0
        %4420 = vmatprep.subr.mxu0 0.0
        %4421 = vmatpush2.msra.mxu0 0.0
        %4422 = vmatprep.subr.mxu0 0.0
        %4423 = vmatpush2.msra.mxu0 0.0
        %4424 = vmatprep.subr.mxu0 0.0
        %4425 = vmatpush2.msra.mxu0 0.0
        %4426 = vmatprep.subr.mxu0 0.0
        %4427 = vmatpush2.msra.mxu0 0.0
        %4428 = vmatprep.subr.mxu0 0.0
        %4429 = vmatpush2.msra.mxu0 0.0
        %4430 = vmatprep.subr.mxu0 0.0
        %4431 = vmatpush2.msra.mxu0 0.0
        %4432 = vmatprep.subr.mxu0 0.0
        %4433 = vmatpush2.msra.mxu0 0.0
        %4434 = vmatprep.subr.mxu0 0.0
        %4435 = vmatpush2.msra.mxu0 0.0
        %4436 = vmatprep.subr.mxu0 0.0
        %4437 = vmatpush2.msra.mxu0 0.0
        %4438 = vmatprep.subr.mxu0 0.0
        %4439 = vmatpush2.msra.mxu0 0.0
        %4440 = vmatprep.subr.mxu0 0.0
        %4441 = vmatpush2.msra.mxu0 0.0
        %4442 = vmatprep.subr.mxu0 0.0
        %4443 = vmatpush2.msra.mxu0 0.0
        %4444 = vmatprep.subr.mxu0 0.0
        %4445 = vmatpush2.msra.mxu0 0.0
        %4446 = vmatprep.subr.mxu0 0.0
        %4447 = vmatpush2.msra.mxu0 0.0
        %4448 = vmatprep.subr.mxu0 0.0
        %4449 = vmatpush2.msra.mxu0 0.0
        %4450 = vmatprep.mubr.f32.mxu0 0.0
        %4451 = vmatmul.mubr.f32.gmra.mxu0 %v4384
        %v4452 = vpop.f32.mrf.mxu0
        %v4453 = vadd.f32 0.0, %v4452
        %v4454 = vpop.f32.mrf.mxu0
        %v4455 = vadd.f32 0.0, %v4454
        %4456 = vdwg.mxu0
        %4457 = vmatprep.subr.mxu0 0.0
        %4458 = vmatpush1.msra.mxu0 0.0
        %4459 = vmatprep.subr.mxu0 0.0
        %4460 = vmatpush1.msra.mxu0 0.0
        %4461 = vmatprep.subr.mxu0 0.0
        %4462 = vmatpush1.msra.mxu0 0.0
        %4463 = vmatprep.subr.mxu0 0.0
        %4464 = vmatpush1.msra.mxu0 0.0
        %4465 = vmatprep.subr.mxu0 0.0
        %4466 = vmatpush1.msra.mxu0 0.0
        %4467 = vmatprep.subr.mxu0 0.0
        %4468 = vmatpush1.msra.mxu0 0.0
        %4469 = vmatprep.subr.mxu0 0.0
        %4470 = vmatpush1.msra.mxu0 0.0
        %4471 = vmatprep.subr.mxu0 0.0
        %4472 = vmatpush1.msra.mxu0 0.0
        %4473 = vmatprep.subr.mxu0 0.0
        %4474 = vmatpush1.msra.mxu0 0.0
        %4475 = vmatprep.subr.mxu0 0.0
        %4476 = vmatpush1.msra.mxu0 0.0
        %4477 = vmatprep.subr.mxu0 0.0
        %4478 = vmatpush1.msra.mxu0 0.0
        %4479 = vmatprep.subr.mxu0 0.0
        %4480 = vmatpush1.msra.mxu0 0.0
        %4481 = vmatprep.subr.mxu0 %v4380
        %4482 = vmatpush1.msra.mxu0 %v4379
        %4483 = vmatprep.subr.mxu0 %v4376
        %4484 = vmatpush1.msra.mxu0 %v4375
        %4485 = vmatprep.subr.mxu0 %v4372
        %4486 = vmatpush1.msra.mxu0 %v4371
        %4487 = vmatprep.subr.mxu0 %v4368
        %4488 = vmatpush1.msra.mxu0 %v4367
        %4489 = vmatprep.subr.mxu0 0.0
        %4490 = vmatpush2.msra.mxu0 0.0
        %4491 = vmatprep.subr.mxu0 0.0
        %4492 = vmatpush2.msra.mxu0 0.0
        %4493 = vmatprep.subr.mxu0 0.0
        %4494 = vmatpush2.msra.mxu0 0.0
        %4495 = vmatprep.subr.mxu0 0.0
        %4496 = vmatpush2.msra.mxu0 0.0
        %4497 = vmatprep.subr.mxu0 0.0
        %4498 = vmatpush2.msra.mxu0 0.0
        %4499 = vmatprep.subr.mxu0 0.0
        %4500 = vmatpush2.msra.mxu0 0.0
        %4501 = vmatprep.subr.mxu0 0.0
        %4502 = vmatpush2.msra.mxu0 0.0
        %4503 = vmatprep.subr.mxu0 0.0
        %4504 = vmatpush2.msra.mxu0 0.0
        %4505 = vmatprep.subr.mxu0 0.0
        %4506 = vmatpush2.msra.mxu0 0.0
        %4507 = vmatprep.subr.mxu0 0.0
        %4508 = vmatpush2.msra.mxu0 0.0
        %4509 = vmatprep.subr.mxu0 0.0
        %4510 = vmatpush2.msra.mxu0 0.0
        %4511 = vmatprep.subr.mxu0 0.0
        %4512 = vmatpush2.msra.mxu0 0.0
        %4513 = vmatprep.subr.mxu0 0.0
        %4514 = vmatpush2.msra.mxu0 0.0
        %4515 = vmatprep.subr.mxu0 0.0
        %4516 = vmatpush2.msra.mxu0 0.0
        %4517 = vmatprep.subr.mxu0 0.0
        %4518 = vmatpush2.msra.mxu0 0.0
        %4519 = vmatprep.subr.mxu0 0.0
        %4520 = vmatpush2.msra.mxu0 0.0
        %4521 = vmatprep.mubr.f32.mxu0 0.0
        %4522 = vmatmul.mubr.f32.gmra.mxu0 %v4384
        %v4523 = vpop.f32.mrf.mxu0
        %v4524 = vadd.f32 0.0, %v4523
        %v4525 = vpop.f32.mrf.mxu0
        %v4526 = vadd.f32 0.0, %v4525
        %4527 = vdwg.mxu0
        %v4528 = vadd.f32 %v4313, %v4453
        %v4529 = vadd.f32 %v4314, %v4455
        %v4530 = vadd.f32 %v4315, %v4524
        %v4531 = vadd.f32 %v4316, %v4526
        %4532 = vrot.lane.b32.xlu0 %v3084, 112
        %v4533 = vpop.permute.xlu0 %4532
        %4534 = vrot.lane.b32.xlu0 %v3088, 112
        %v4535 = vpop.permute.xlu0 %4534
        %4536 = vrot.lane.b32.xlu0 %v3092, 112
        %v4537 = vpop.permute.xlu0 %4536
        %4538 = vrot.lane.b32.xlu0 %v3096, 112
        %v4539 = vpop.permute.xlu0 %4538
        %4540 = vrot.lane.b32.xlu0 %v3085, 112
        %v4541 = vpop.permute.xlu0 %4540
        %4542 = vrot.lane.b32.xlu0 %v3089, 112
        %v4543 = vpop.permute.xlu0 %4542
        %4544 = vrot.lane.b32.xlu0 %v3093, 112
        %v4545 = vpop.permute.xlu0 %4544
        %4546 = vrot.lane.b32.xlu0 %v3097, 112
        %v4547 = vpop.permute.xlu0 %4546
        %4548 = vrot.lane.b32.xlu0 %v3086, 112
        %v4549 = vpop.permute.xlu0 %4548
        %4550 = vrot.lane.b32.xlu0 %v3090, 112
        %v4551 = vpop.permute.xlu0 %4550
        %4552 = vrot.lane.b32.xlu0 %v3094, 112
        %v4553 = vpop.permute.xlu0 %4552
        %4554 = vrot.lane.b32.xlu0 %v3098, 112
        %v4555 = vpop.permute.xlu0 %4554
        %4556 = vrot.lane.b32.xlu0 %v3087, 112
        %v4557 = vpop.permute.xlu0 %4556
        %4558 = vrot.lane.b32.xlu0 %v3091, 112
        %v4559 = vpop.permute.xlu0 %4558
        %4560 = vrot.lane.b32.xlu0 %v3095, 112
        %v4561 = vpop.permute.xlu0 %4560
        %4562 = vrot.lane.b32.xlu0 %v3099, 112
        %v4563 = vpop.permute.xlu0 %4562
        %v4564 = vsel %vm2426, %v4549, %v4557
        %v4565 = vsel %vm2426, %v4551, %v4559
        %v4566 = vsel %vm2426, %v4553, %v4561
        %v4567 = vsel %vm2426, %v4555, %v4563
        %v4568 = vsel %vm2426, %v4541, %v4549
        %v4569 = vsel %vm2426, %v4543, %v4551
        %v4570 = vsel %vm2426, %v4545, %v4553
        %v4571 = vsel %vm2426, %v4547, %v4555
        %v4572 = vsel %vm2426, %v4533, %v4541
        %v4573 = vsel %vm2426, %v4535, %v4543
        %v4574 = vsel %vm2426, %v4537, %v4545
        %v4575 = vsel %vm2426, %v4539, %v4547
        %v4576 = vsel %vm2426, %v4557, %v4533
        %v4577 = vsel %vm2426, %v4559, %v4535
        %v4578 = vsel %vm2426, %v4561, %v4537
        %v4579 = vsel %vm2426, %v4563, %v4539
        %v4580 = vmul.f32 %v4572, %v2437
        %v4581 = vmul.f32 %v4568, %v2441
        %v4582 = vmul.f32 %v4564, %v2445
        %v4583 = vmul.f32 %v4576, %v2449
        %v4584 = vmul.f32 %v4573, %v2437
        %v4585 = vmul.f32 %v4569, %v2441
        %v4586 = vmul.f32 %v4565, %v2445
        %v4587 = vmul.f32 %v4577, %v2449
        %v4588 = vmul.f32 %v4574, %v2437
        %v4589 = vmul.f32 %v4570, %v2441
        %v4590 = vmul.f32 %v4566, %v2445
        %v4591 = vmul.f32 %v4578, %v2449
        %v4592 = vmul.f32 %v4575, %v2437
        %v4593 = vmul.f32 %v4571, %v2441
        %v4594 = vmul.f32 %v4567, %v2445
        %v4595 = vmul.f32 %v4579, %v2449
        %s4596 = scalar_lea.vmem %s9, 28
        %v4597 = vld [vmem:[%s4596] sm:$0xf]
        %v4599 = vsel %vm519, %v4597, 0
        %4601 = vmatprep.subr.mxu0 0.0
        %4602 = vmatpush1.msra.mxu0 0.0
        %4603 = vmatprep.subr.mxu0 0.0
        %4604 = vmatpush1.msra.mxu0 0.0
        %4605 = vmatprep.subr.mxu0 0.0
        %4606 = vmatpush1.msra.mxu0 0.0
        %4607 = vmatprep.subr.mxu0 0.0
        %4608 = vmatpush1.msra.mxu0 0.0
        %4609 = vmatprep.subr.mxu0 0.0
        %4610 = vmatpush1.msra.mxu0 0.0
        %4611 = vmatprep.subr.mxu0 0.0
        %4612 = vmatpush1.msra.mxu0 0.0
        %4613 = vmatprep.subr.mxu0 0.0
        %4614 = vmatpush1.msra.mxu0 0.0
        %4615 = vmatprep.subr.mxu0 0.0
        %4616 = vmatpush1.msra.mxu0 0.0
        %4617 = vmatprep.subr.mxu0 0.0
        %4618 = vmatpush1.msra.mxu0 0.0
        %4619 = vmatprep.subr.mxu0 0.0
        %4620 = vmatpush1.msra.mxu0 0.0
        %4621 = vmatprep.subr.mxu0 0.0
        %4622 = vmatpush1.msra.mxu0 0.0
        %4623 = vmatprep.subr.mxu0 0.0
        %4624 = vmatpush1.msra.mxu0 0.0
        %4625 = vmatprep.subr.mxu0 %v4593
        %4626 = vmatpush1.msra.mxu0 %v4592
        %4627 = vmatprep.subr.mxu0 %v4589
        %4628 = vmatpush1.msra.mxu0 %v4588
        %4629 = vmatprep.subr.mxu0 %v4585
        %4630 = vmatpush1.msra.mxu0 %v4584
        %4631 = vmatprep.subr.mxu0 %v4581
        %4632 = vmatpush1.msra.mxu0 %v4580
        %4633 = vmatprep.subr.mxu0 0.0
        %4634 = vmatpush2.msra.mxu0 0.0
        %4635 = vmatprep.subr.mxu0 0.0
        %4636 = vmatpush2.msra.mxu0 0.0
        %4637 = vmatprep.subr.mxu0 0.0
        %4638 = vmatpush2.msra.mxu0 0.0
        %4639 = vmatprep.subr.mxu0 0.0
        %4640 = vmatpush2.msra.mxu0 0.0
        %4641 = vmatprep.subr.mxu0 0.0
        %4642 = vmatpush2.msra.mxu0 0.0
        %4643 = vmatprep.subr.mxu0 0.0
        %4644 = vmatpush2.msra.mxu0 0.0
        %4645 = vmatprep.subr.mxu0 0.0
        %4646 = vmatpush2.msra.mxu0 0.0
        %4647 = vmatprep.subr.mxu0 0.0
        %4648 = vmatpush2.msra.mxu0 0.0
        %4649 = vmatprep.subr.mxu0 0.0
        %4650 = vmatpush2.msra.mxu0 0.0
        %4651 = vmatprep.subr.mxu0 0.0
        %4652 = vmatpush2.msra.mxu0 0.0
        %4653 = vmatprep.subr.mxu0 0.0
        %4654 = vmatpush2.msra.mxu0 0.0
        %4655 = vmatprep.subr.mxu0 0.0
        %4656 = vmatpush2.msra.mxu0 0.0
        %4657 = vmatprep.subr.mxu0 0.0
        %4658 = vmatpush2.msra.mxu0 0.0
        %4659 = vmatprep.subr.mxu0 0.0
        %4660 = vmatpush2.msra.mxu0 0.0
        %4661 = vmatprep.subr.mxu0 0.0
        %4662 = vmatpush2.msra.mxu0 0.0
        %4663 = vmatprep.subr.mxu0 0.0
        %4664 = vmatpush2.msra.mxu0 0.0
        %4665 = vmatprep.mubr.f32.mxu0 0.0
        %4666 = vmatmul.mubr.f32.gmra.mxu0 %v4599
        %v4667 = vpop.f32.mrf.mxu0
        %v4668 = vadd.f32 0.0, %v4667
        %v4669 = vpop.f32.mrf.mxu0
        %v4670 = vadd.f32 0.0, %v4669
        %4671 = vdwg.mxu0
        %4672 = vmatprep.subr.mxu0 0.0
        %4673 = vmatpush1.msra.mxu0 0.0
        %4674 = vmatprep.subr.mxu0 0.0
        %4675 = vmatpush1.msra.mxu0 0.0
        %4676 = vmatprep.subr.mxu0 0.0
        %4677 = vmatpush1.msra.mxu0 0.0
        %4678 = vmatprep.subr.mxu0 0.0
        %4679 = vmatpush1.msra.mxu0 0.0
        %4680 = vmatprep.subr.mxu0 0.0
        %4681 = vmatpush1.msra.mxu0 0.0
        %4682 = vmatprep.subr.mxu0 0.0
        %4683 = vmatpush1.msra.mxu0 0.0
        %4684 = vmatprep.subr.mxu0 0.0
        %4685 = vmatpush1.msra.mxu0 0.0
        %4686 = vmatprep.subr.mxu0 0.0
        %4687 = vmatpush1.msra.mxu0 0.0
        %4688 = vmatprep.subr.mxu0 0.0
        %4689 = vmatpush1.msra.mxu0 0.0
        %4690 = vmatprep.subr.mxu0 0.0
        %4691 = vmatpush1.msra.mxu0 0.0
        %4692 = vmatprep.subr.mxu0 0.0
        %4693 = vmatpush1.msra.mxu0 0.0
        %4694 = vmatprep.subr.mxu0 0.0
        %4695 = vmatpush1.msra.mxu0 0.0
        %4696 = vmatprep.subr.mxu0 %v4595
        %4697 = vmatpush1.msra.mxu0 %v4594
        %4698 = vmatprep.subr.mxu0 %v4591
        %4699 = vmatpush1.msra.mxu0 %v4590
        %4700 = vmatprep.subr.mxu0 %v4587
        %4701 = vmatpush1.msra.mxu0 %v4586
        %4702 = vmatprep.subr.mxu0 %v4583
        %4703 = vmatpush1.msra.mxu0 %v4582
        %4704 = vmatprep.subr.mxu0 0.0
        %4705 = vmatpush2.msra.mxu0 0.0
        %4706 = vmatprep.subr.mxu0 0.0
        %4707 = vmatpush2.msra.mxu0 0.0
        %4708 = vmatprep.subr.mxu0 0.0
        %4709 = vmatpush2.msra.mxu0 0.0
        %4710 = vmatprep.subr.mxu0 0.0
        %4711 = vmatpush2.msra.mxu0 0.0
        %4712 = vmatprep.subr.mxu0 0.0
        %4713 = vmatpush2.msra.mxu0 0.0
        %4714 = vmatprep.subr.mxu0 0.0
        %4715 = vmatpush2.msra.mxu0 0.0
        %4716 = vmatprep.subr.mxu0 0.0
        %4717 = vmatpush2.msra.mxu0 0.0
        %4718 = vmatprep.subr.mxu0 0.0
        %4719 = vmatpush2.msra.mxu0 0.0
        %4720 = vmatprep.subr.mxu0 0.0
        %4721 = vmatpush2.msra.mxu0 0.0
        %4722 = vmatprep.subr.mxu0 0.0
        %4723 = vmatpush2.msra.mxu0 0.0
        %4724 = vmatprep.subr.mxu0 0.0
        %4725 = vmatpush2.msra.mxu0 0.0
        %4726 = vmatprep.subr.mxu0 0.0
        %4727 = vmatpush2.msra.mxu0 0.0
        %4728 = vmatprep.subr.mxu0 0.0
        %4729 = vmatpush2.msra.mxu0 0.0
        %4730 = vmatprep.subr.mxu0 0.0
        %4731 = vmatpush2.msra.mxu0 0.0
        %4732 = vmatprep.subr.mxu0 0.0
        %4733 = vmatpush2.msra.mxu0 0.0
        %4734 = vmatprep.subr.mxu0 0.0
        %4735 = vmatpush2.msra.mxu0 0.0
        %4736 = vmatprep.mubr.f32.mxu0 0.0
        %4737 = vmatmul.mubr.f32.gmra.mxu0 %v4599
        %v4738 = vpop.f32.mrf.mxu0
        %v4739 = vadd.f32 0.0, %v4738
        %v4740 = vpop.f32.mrf.mxu0
        %v4741 = vadd.f32 0.0, %v4740
        %4742 = vdwg.mxu0
        %v4743 = vadd.f32 %v4528, %v4668
        %v4744 = vadd.f32 %v4529, %v4670
        %v4745 = vadd.f32 %v4530, %v4739
        %v4746 = vadd.f32 %v4531, %v4741
        %4747 = vrot.lane.b32.xlu0 %v3084, 111
        %v4748 = vpop.permute.xlu0 %4747
        %4749 = vrot.lane.b32.xlu0 %v3088, 111
        %v4750 = vpop.permute.xlu0 %4749
        %4751 = vrot.lane.b32.xlu0 %v3092, 111
        %v4752 = vpop.permute.xlu0 %4751
        %4753 = vrot.lane.b32.xlu0 %v3096, 111
        %v4754 = vpop.permute.xlu0 %4753
        %4755 = vrot.lane.b32.xlu0 %v3085, 111
        %v4756 = vpop.permute.xlu0 %4755
        %4757 = vrot.lane.b32.xlu0 %v3089, 111
        %v4758 = vpop.permute.xlu0 %4757
        %4759 = vrot.lane.b32.xlu0 %v3093, 111
        %v4760 = vpop.permute.xlu0 %4759
        %4761 = vrot.lane.b32.xlu0 %v3097, 111
        %v4762 = vpop.permute.xlu0 %4761
        %4763 = vrot.lane.b32.xlu0 %v3086, 111
        %v4764 = vpop.permute.xlu0 %4763
        %4765 = vrot.lane.b32.xlu0 %v3090, 111
        %v4766 = vpop.permute.xlu0 %4765
        %4767 = vrot.lane.b32.xlu0 %v3094, 111
        %v4768 = vpop.permute.xlu0 %4767
        %4769 = vrot.lane.b32.xlu0 %v3098, 111
        %v4770 = vpop.permute.xlu0 %4769
        %4771 = vrot.lane.b32.xlu0 %v3087, 111
        %v4772 = vpop.permute.xlu0 %4771
        %4773 = vrot.lane.b32.xlu0 %v3091, 111
        %v4774 = vpop.permute.xlu0 %4773
        %4775 = vrot.lane.b32.xlu0 %v3095, 111
        %v4776 = vpop.permute.xlu0 %4775
        %4777 = vrot.lane.b32.xlu0 %v3099, 111
        %v4778 = vpop.permute.xlu0 %4777
        %v4779 = vsel %vm2689, %v4764, %v4772
        %v4780 = vsel %vm2689, %v4766, %v4774
        %v4781 = vsel %vm2689, %v4768, %v4776
        %v4782 = vsel %vm2689, %v4770, %v4778
        %v4783 = vsel %vm2689, %v4756, %v4764
        %v4784 = vsel %vm2689, %v4758, %v4766
        %v4785 = vsel %vm2689, %v4760, %v4768
        %v4786 = vsel %vm2689, %v4762, %v4770
        %v4787 = vsel %vm2689, %v4748, %v4756
        %v4788 = vsel %vm2689, %v4750, %v4758
        %v4789 = vsel %vm2689, %v4752, %v4760
        %v4790 = vsel %vm2689, %v4754, %v4762
        %v4791 = vsel %vm2689, %v4772, %v4748
        %v4792 = vsel %vm2689, %v4774, %v4750
        %v4793 = vsel %vm2689, %v4776, %v4752
        %v4794 = vsel %vm2689, %v4778, %v4754
        %v4795 = vmul.f32 %v4787, %v2700
        %v4796 = vmul.f32 %v4783, %v2704
        %v4797 = vmul.f32 %v4779, %v2708
        %v4798 = vmul.f32 %v4791, %v2712
        %v4799 = vmul.f32 %v4788, %v2700
        %v4800 = vmul.f32 %v4784, %v2704
        %v4801 = vmul.f32 %v4780, %v2708
        %v4802 = vmul.f32 %v4792, %v2712
        %v4803 = vmul.f32 %v4789, %v2700
        %v4804 = vmul.f32 %v4785, %v2704
        %v4805 = vmul.f32 %v4781, %v2708
        %v4806 = vmul.f32 %v4793, %v2712
        %v4807 = vmul.f32 %v4790, %v2700
        %v4808 = vmul.f32 %v4786, %v2704
        %v4809 = vmul.f32 %v4782, %v2708
        %v4810 = vmul.f32 %v4794, %v2712
        %s4811 = scalar_lea.vmem %s9, 32
        %v4812 = vld [vmem:[%s4811] sm:$0xf]
        %v4814 = vsel %vm519, %v4812, 0
        %4816 = vmatprep.subr.mxu0 0.0
        %4817 = vmatpush1.msra.mxu0 0.0
        %4818 = vmatprep.subr.mxu0 0.0
        %4819 = vmatpush1.msra.mxu0 0.0
        %4820 = vmatprep.subr.mxu0 0.0
        %4821 = vmatpush1.msra.mxu0 0.0
        %4822 = vmatprep.subr.mxu0 0.0
        %4823 = vmatpush1.msra.mxu0 0.0
        %4824 = vmatprep.subr.mxu0 0.0
        %4825 = vmatpush1.msra.mxu0 0.0
        %4826 = vmatprep.subr.mxu0 0.0
        %4827 = vmatpush1.msra.mxu0 0.0
        %4828 = vmatprep.subr.mxu0 0.0
        %4829 = vmatpush1.msra.mxu0 0.0
        %4830 = vmatprep.subr.mxu0 0.0
        %4831 = vmatpush1.msra.mxu0 0.0
        %4832 = vmatprep.subr.mxu0 0.0
        %4833 = vmatpush1.msra.mxu0 0.0
        %4834 = vmatprep.subr.mxu0 0.0
        %4835 = vmatpush1.msra.mxu0 0.0
        %4836 = vmatprep.subr.mxu0 0.0
        %4837 = vmatpush1.msra.mxu0 0.0
        %4838 = vmatprep.subr.mxu0 0.0
        %4839 = vmatpush1.msra.mxu0 0.0
        %4840 = vmatprep.subr.mxu0 %v4808
        %4841 = vmatpush1.msra.mxu0 %v4807
        %4842 = vmatprep.subr.mxu0 %v4804
        %4843 = vmatpush1.msra.mxu0 %v4803
        %4844 = vmatprep.subr.mxu0 %v4800
        %4845 = vmatpush1.msra.mxu0 %v4799
        %4846 = vmatprep.subr.mxu0 %v4796
        %4847 = vmatpush1.msra.mxu0 %v4795
        %4848 = vmatprep.subr.mxu0 0.0
        %4849 = vmatpush2.msra.mxu0 0.0
        %4850 = vmatprep.subr.mxu0 0.0
        %4851 = vmatpush2.msra.mxu0 0.0
        %4852 = vmatprep.subr.mxu0 0.0
        %4853 = vmatpush2.msra.mxu0 0.0
        %4854 = vmatprep.subr.mxu0 0.0
        %4855 = vmatpush2.msra.mxu0 0.0
        %4856 = vmatprep.subr.mxu0 0.0
        %4857 = vmatpush2.msra.mxu0 0.0
        %4858 = vmatprep.subr.mxu0 0.0
        %4859 = vmatpush2.msra.mxu0 0.0
        %4860 = vmatprep.subr.mxu0 0.0
        %4861 = vmatpush2.msra.mxu0 0.0
        %4862 = vmatprep.subr.mxu0 0.0
        %4863 = vmatpush2.msra.mxu0 0.0
        %4864 = vmatprep.subr.mxu0 0.0
        %4865 = vmatpush2.msra.mxu0 0.0
        %4866 = vmatprep.subr.mxu0 0.0
        %4867 = vmatpush2.msra.mxu0 0.0
        %4868 = vmatprep.subr.mxu0 0.0
        %4869 = vmatpush2.msra.mxu0 0.0
        %4870 = vmatprep.subr.mxu0 0.0
        %4871 = vmatpush2.msra.mxu0 0.0
        %4872 = vmatprep.subr.mxu0 0.0
        %4873 = vmatpush2.msra.mxu0 0.0
        %4874 = vmatprep.subr.mxu0 0.0
        %4875 = vmatpush2.msra.mxu0 0.0
        %4876 = vmatprep.subr.mxu0 0.0
        %4877 = vmatpush2.msra.mxu0 0.0
        %4878 = vmatprep.subr.mxu0 0.0
        %4879 = vmatpush2.msra.mxu0 0.0
        %4880 = vmatprep.mubr.f32.mxu0 0.0
        %4881 = vmatmul.mubr.f32.gmra.mxu0 %v4814
        %v4882 = vpop.f32.mrf.mxu0
        %v4883 = vadd.f32 0.0, %v4882
        %v4884 = vpop.f32.mrf.mxu0
        %v4885 = vadd.f32 0.0, %v4884
        %4886 = vdwg.mxu0
        %4887 = vmatprep.subr.mxu0 0.0
        %4888 = vmatpush1.msra.mxu0 0.0
        %4889 = vmatprep.subr.mxu0 0.0
        %4890 = vmatpush1.msra.mxu0 0.0
        %4891 = vmatprep.subr.mxu0 0.0
        %4892 = vmatpush1.msra.mxu0 0.0
        %4893 = vmatprep.subr.mxu0 0.0
        %4894 = vmatpush1.msra.mxu0 0.0
        %4895 = vmatprep.subr.mxu0 0.0
        %4896 = vmatpush1.msra.mxu0 0.0
        %4897 = vmatprep.subr.mxu0 0.0
        %4898 = vmatpush1.msra.mxu0 0.0
        %4899 = vmatprep.subr.mxu0 0.0
        %4900 = vmatpush1.msra.mxu0 0.0
        %4901 = vmatprep.subr.mxu0 0.0
        %4902 = vmatpush1.msra.mxu0 0.0
        %4903 = vmatprep.subr.mxu0 0.0
        %4904 = vmatpush1.msra.mxu0 0.0
        %4905 = vmatprep.subr.mxu0 0.0
        %4906 = vmatpush1.msra.mxu0 0.0
        %4907 = vmatprep.subr.mxu0 0.0
        %4908 = vmatpush1.msra.mxu0 0.0
        %4909 = vmatprep.subr.mxu0 0.0
        %4910 = vmatpush1.msra.mxu0 0.0
        %4911 = vmatprep.subr.mxu0 %v4810
        %4912 = vmatpush1.msra.mxu0 %v4809
        %4913 = vmatprep.subr.mxu0 %v4806
        %4914 = vmatpush1.msra.mxu0 %v4805
        %4915 = vmatprep.subr.mxu0 %v4802
        %4916 = vmatpush1.msra.mxu0 %v4801
        %4917 = vmatprep.subr.mxu0 %v4798
        %4918 = vmatpush1.msra.mxu0 %v4797
        %4919 = vmatprep.subr.mxu0 0.0
        %4920 = vmatpush2.msra.mxu0 0.0
        %4921 = vmatprep.subr.mxu0 0.0
        %4922 = vmatpush2.msra.mxu0 0.0
        %4923 = vmatprep.subr.mxu0 0.0
        %4924 = vmatpush2.msra.mxu0 0.0
        %4925 = vmatprep.subr.mxu0 0.0
        %4926 = vmatpush2.msra.mxu0 0.0
        %4927 = vmatprep.subr.mxu0 0.0
        %4928 = vmatpush2.msra.mxu0 0.0
        %4929 = vmatprep.subr.mxu0 0.0
        %4930 = vmatpush2.msra.mxu0 0.0
        %4931 = vmatprep.subr.mxu0 0.0
        %4932 = vmatpush2.msra.mxu0 0.0
        %4933 = vmatprep.subr.mxu0 0.0
        %4934 = vmatpush2.msra.mxu0 0.0
        %4935 = vmatprep.subr.mxu0 0.0
        %4936 = vmatpush2.msra.mxu0 0.0
        %4937 = vmatprep.subr.mxu0 0.0
        %4938 = vmatpush2.msra.mxu0 0.0
        %4939 = vmatprep.subr.mxu0 0.0
        %4940 = vmatpush2.msra.mxu0 0.0
        %4941 = vmatprep.subr.mxu0 0.0
        %4942 = vmatpush2.msra.mxu0 0.0
        %4943 = vmatprep.subr.mxu0 0.0
        %4944 = vmatpush2.msra.mxu0 0.0
        %4945 = vmatprep.subr.mxu0 0.0
        %4946 = vmatpush2.msra.mxu0 0.0
        %4947 = vmatprep.subr.mxu0 0.0
        %4948 = vmatpush2.msra.mxu0 0.0
        %4949 = vmatprep.subr.mxu0 0.0
        %4950 = vmatpush2.msra.mxu0 0.0
        %4951 = vmatprep.mubr.f32.mxu0 0.0
        %4952 = vmatmul.mubr.f32.gmra.mxu0 %v4814
        %v4953 = vpop.f32.mrf.mxu0
        %v4954 = vadd.f32 0.0, %v4953
        %v4955 = vpop.f32.mrf.mxu0
        %v4956 = vadd.f32 0.0, %v4955
        %4957 = vdwg.mxu0
        %v4958 = vadd.f32 %v4743, %v4883
        %v4959 = vadd.f32 %v4744, %v4885
        %v4960 = vadd.f32 %v4745, %v4954
        %v4961 = vadd.f32 %v4746, %v4956
        %v4962 = vld [vmem:[%s10] sm:$0xf]
        %4964 = vset.pattern.permute.xlu0 0
        %4965 = vperm.xlu0 %4964, %v4962
        %v4966 = vpop.permute.xlu0 %4965
        %v4968 = vadd.f32 %v4958, %v4966
        %v4969 = vadd.f32 %v4959, %v4966
        %v4970 = vadd.f32 %v4960, %v4966
        %v4971 = vadd.f32 %v4961, %v4966
        %s4972 = smul.u32 %s26, 5
        %s4973 = sld [smem:[#allocation3 + %s4972]]
        %s4974 = sadd.s32 %s4972, 1
        %s4975 = sld [smem:[#allocation3 + %s4974]]
        %s4976 = sadd.s32 %s4972, 2
        %s4977 = sld [smem:[#allocation3 + %s4976]]
        %s4978 = sadd.s32 %s4972, 3
        %s4979 = sld [smem:[#allocation3 + %s4978]]
        %s4980 = sadd.s32 %s4972, 4
        %s4981 = sld [smem:[#allocation3 + %s4980]]
        %v4982 = vstv %s4975
        %v4983 = vmul.f32 %v4982, %v4968
        %v4984 = vmul.f32 %v4982, %v4969
        %v4985 = vmul.f32 %v4982, %v4970
        %v4986 = vmul.f32 %v4982, %v4971
        %v4991 = vcombine.low %v4983, %v4984
        %v4992 = vcombine.low %v4985, %v4986
        %v4995 = vsub.f32 %v505, %v4991
        %v4996 = vsub.f32 %v506, %v4992
        %v4997 = vstv %s4973
        %v4998 = vmul.f32 %v4995, %v4997
        %v4999 = vmul.f32 %v4996, %v4997
        %v5000 = vmax.f32 %v4998, -1.0
        %v5001 = vmax.f32 %v4999, -1.0
        %v5002 = vmin.f32 %v5000, 1.0
        %v5003 = vmin.f32 %v5001, 1.0
        %v5004 = vstv %s4977
        %v5005 = vmul.f32 %v5004, %v5002
        %v5006 = vmul.f32 %v5004, %v5003
        %v5007 = vstv %s4979
        %v5008 = vmul.f32 %v5007, %v505
        %v5009 = vmul.f32 %v5007, %v506
        %v5010 = vadd.f32 %v5005, %v5008
        %v5011 = vadd.f32 %v5006, %v5009
        %v5012 = vld [vmem:[%s481] sm:$0xff]
        %v5013 = vld [vmem:[%s481 + $0x8] sm:$0xff]
        %v5014 = vstv %s4981
        %v5015 = vmul.f32 %v5014, %v5012
        %v5016 = vmul.f32 %v5014, %v5013
        %v5017 = vadd.f32 %v5010, %v5015
        %v5018 = vadd.f32 %v5011, %v5016
        %5019 = vst [vmem:[#allocation2] sm:$0xff] %v5017
        %5020 = vst [vmem:[#allocation2 + $0x8] sm:$0xff] %v5018
        %p5021 = scmp.eq.s32.totalorder %s26, 9
        // Predicated region
        $region85: #{defense_diff_forward.1} parent=75 // pred_check
          %p5022 = pneg %p5021
        $region86: #{defense_diff_forward.1} parent=75 // pred_check_branch
          %5024 = sbr.rel (%p5022) target = $region88
        $region87: #{defense_diff_forward.1} parent=75 // pred_region
          %v5025 = vmul.f32 %v5017, 0.5
          %v5026 = vmul.f32 %v5018, 0.5
          %v5027 = vadd.f32 %v5025, 0.5
          %v5028 = vadd.f32 %v5026, 0.5
          %v5029 = vld [vmem:[%s13] sm:$0x1]
          %v5030 = vld [vmem:[%s12] sm:$0xff]
          %v5031 = vld [vmem:[%s12 + $0x8] sm:$0xff]
          %v5032 = vld [vmem:[%s12 + $0x10] sm:$0xff]
          %v5033 = vld [vmem:[%s12 + $0x18] sm:$0xff]
          %v5034 = vld [vmem:[%s12 + $0x20] sm:$0xff]
          %v5035 = vld [vmem:[%s12 + $0x28] sm:$0xff]
          %v5036 = vld [vmem:[%s12 + $0x30] sm:$0xff]
          %v5037 = vld [vmem:[%s12 + $0x38] sm:$0xff]
          %v5038 = vld [vmem:[%s12 + $0x40] sm:$0xff]
          %v5039 = vld [vmem:[%s12 + $0x48] sm:$0xff]
          %v5040 = vld [vmem:[%s12 + $0x50] sm:$0xff]
          %v5041 = vld [vmem:[%s12 + $0x58] sm:$0xff]
          %v5042 = vld [vmem:[%s12 + $0x60] sm:$0xff]
          %v5043 = vld [vmem:[%s12 + $0x68] sm:$0xff]
          %v5044 = vld [vmem:[%s12 + $0x70] sm:$0xff]
          %v5045 = vld [vmem:[%s12 + $0x78] sm:$0xff]
          %v5046 = vld [vmem:[%s12 + $0x80] sm:$0xff]
          %v5047 = vld [vmem:[%s12 + $0x88] sm:$0xff]
          %v5048 = vld [vmem:[%s12 + $0x90] sm:$0xff]
          %v5049 = vld [vmem:[%s12 + $0x98] sm:$0xff]
          %v5050 = vld [vmem:[%s12 + $0xa0] sm:$0xff]
          %v5051 = vld [vmem:[%s12 + $0xa8] sm:$0xff]
          %v5052 = vld [vmem:[%s12 + $0xb0] sm:$0xff]
          %v5053 = vld [vmem:[%s12 + $0xb8] sm:$0xff]
          %v5054 = vld [vmem:[%s12 + $0xc0] sm:$0xff]
          %v5055 = vld [vmem:[%s12 + $0xc8] sm:$0xff]
          %v5056 = vld [vmem:[%s12 + $0xd0] sm:$0xff]
          %v5057 = vld [vmem:[%s12 + $0xd8] sm:$0xff]
          %v5058 = vld [vmem:[%s12 + $0xe0] sm:$0xff]
          %v5059 = vld [vmem:[%s12 + $0xe8] sm:$0xff]
          %v5060 = vld [vmem:[%s12 + $0xf0] sm:$0xff]
          %v5061 = vld [vmem:[%s12 + $0xf8] sm:$0xff]
          %v5062 = vld [vmem:[%s12 + $0x100] sm:$0xff]
          %v5063 = vld [vmem:[%s12 + $0x108] sm:$0xff]
          %v5064 = vld [vmem:[%s12 + $0x110] sm:$0xff]
          %v5065 = vld [vmem:[%s12 + $0x118] sm:$0xff]
          %v5066 = vld [vmem:[%s12 + $0x120] sm:$0xff]
          %v5067 = vld [vmem:[%s12 + $0x128] sm:$0xff]
          %v5068 = vld [vmem:[%s12 + $0x130] sm:$0xff]
          %v5069 = vld [vmem:[%s12 + $0x138] sm:$0xff]
          %v5070 = vld [vmem:[%s12 + $0x140] sm:$0xff]
          %v5071 = vld [vmem:[%s12 + $0x148] sm:$0xff]
          %v5072 = vld [vmem:[%s12 + $0x150] sm:$0xff]
          %v5073 = vld [vmem:[%s12 + $0x158] sm:$0xff]
          %v5074 = vld [vmem:[%s12 + $0x160] sm:$0xff]
          %v5075 = vld [vmem:[%s12 + $0x168] sm:$0xff]
          %v5076 = vld [vmem:[%s12 + $0x170] sm:$0xff]
          %v5077 = vld [vmem:[%s12 + $0x178] sm:$0xff]
          %v5078 = vld [vmem:[%s12 + $0x180] sm:$0xff]
          %v5079 = vld [vmem:[%s12 + $0x188] sm:$0xff]
          %v5080 = vld [vmem:[%s12 + $0x190] sm:$0xff]
          %v5081 = vld [vmem:[%s12 + $0x198] sm:$0xff]
          %v5082 = vld [vmem:[%s12 + $0x1a0] sm:$0xff]
          %v5083 = vld [vmem:[%s12 + $0x1a8] sm:$0xff]
          %v5084 = vld [vmem:[%s12 + $0x1b0] sm:$0xff]
          %v5085 = vld [vmem:[%s12 + $0x1b8] sm:$0xff]
          %v5086 = vld [vmem:[%s12 + $0x1c0] sm:$0xff]
          %v5087 = vld [vmem:[%s12 + $0x1c8] sm:$0xff]
          %v5088 = vld [vmem:[%s12 + $0x1d0] sm:$0xff]
          %v5089 = vld [vmem:[%s12 + $0x1d8] sm:$0xff]
          %v5090 = vld [vmem:[%s12 + $0x1e0] sm:$0xff]
          %v5091 = vld [vmem:[%s12 + $0x1e8] sm:$0xff]
          %v5092 = vld [vmem:[%s12 + $0x1f0] sm:$0xff]
          %v5093 = vld [vmem:[%s12 + $0x1f8] sm:$0xff]
          %v5096 = vlaneseq
          %v5097 = vshrl.u32 %v5096, 7
          %v5098 = vsub.s32 0, %v5097
          %v5099 = vrot.slane %v5027, %v5098
          %v5100 = vlaneseq
          %v5101 = vshrl.u32 %v5100, 7
          %v5102 = vsub.s32 4, %v5101
          %v5103 = vrot.slane %v5027, %v5102
          %v5104 = vlaneseq
          %v5105 = vshrl.u32 %v5104, 7
          %v5106 = vsub.s32 0, %v5105
          %v5107 = vrot.slane %v5028, %v5106
          %v5108 = vlaneseq
          %v5109 = vshrl.u32 %v5108, 7
          %v5110 = vsub.s32 4, %v5109
          %v5111 = vrot.slane %v5028, %v5110
          %5116 = vmatprep.subr.mxu0 0.0
          %5117 = vmatpush1.msra.mxu0 %v5045
          %5118 = vmatprep.subr.mxu0 0.0
          %5119 = vmatpush1.msra.mxu0 %v5044
          %5120 = vmatprep.subr.mxu0 0.0
          %5121 = vmatpush1.msra.mxu0 %v5043
          %5122 = vmatprep.subr.mxu0 0.0
          %5123 = vmatpush1.msra.mxu0 %v5042
          %5124 = vmatprep.subr.mxu0 0.0
          %5125 = vmatpush1.msra.mxu0 %v5041
          %5126 = vmatprep.subr.mxu0 0.0
          %5127 = vmatpush1.msra.mxu0 %v5040
          %5128 = vmatprep.subr.mxu0 0.0
          %5129 = vmatpush1.msra.mxu0 %v5039
          %5130 = vmatprep.subr.mxu0 0.0
          %5131 = vmatpush1.msra.mxu0 %v5038
          %5132 = vmatprep.subr.mxu0 0.0
          %5133 = vmatpush1.msra.mxu0 %v5037
          %5134 = vmatprep.subr.mxu0 0.0
          %5135 = vmatpush1.msra.mxu0 %v5036
          %5136 = vmatprep.subr.mxu0 0.0
          %5137 = vmatpush1.msra.mxu0 %v5035
          %5138 = vmatprep.subr.mxu0 0.0
          %5139 = vmatpush1.msra.mxu0 %v5034
          %5140 = vmatprep.subr.mxu0 0.0
          %5141 = vmatpush1.msra.mxu0 %v5033
          %5142 = vmatprep.subr.mxu0 0.0
          %5143 = vmatpush1.msra.mxu0 %v5032
          %5144 = vmatprep.subr.mxu0 0.0
          %5145 = vmatpush1.msra.mxu0 %v5031
          %5146 = vmatprep.subr.mxu0 0.0
          %5147 = vmatpush1.msra.mxu0 %v5030
          %5148 = vmatprep.subr.mxu0 0.0
          %5149 = vmatpush2.msra.mxu0 %v5061
          %5150 = vmatprep.subr.mxu0 0.0
          %5151 = vmatpush2.msra.mxu0 %v5060
          %5152 = vmatprep.subr.mxu0 0.0
          %5153 = vmatpush2.msra.mxu0 %v5059
          %5154 = vmatprep.subr.mxu0 0.0
          %5155 = vmatpush2.msra.mxu0 %v5058
          %5156 = vmatprep.subr.mxu0 0.0
          %5157 = vmatpush2.msra.mxu0 %v5057
          %5158 = vmatprep.subr.mxu0 0.0
          %5159 = vmatpush2.msra.mxu0 %v5056
          %5160 = vmatprep.subr.mxu0 0.0
          %5161 = vmatpush2.msra.mxu0 %v5055
          %5162 = vmatprep.subr.mxu0 0.0
          %5163 = vmatpush2.msra.mxu0 %v5054
          %5164 = vmatprep.subr.mxu0 0.0
          %5165 = vmatpush2.msra.mxu0 %v5053
          %5166 = vmatprep.subr.mxu0 0.0
          %5167 = vmatpush2.msra.mxu0 %v5052
          %5168 = vmatprep.subr.mxu0 0.0
          %5169 = vmatpush2.msra.mxu0 %v5051
          %5170 = vmatprep.subr.mxu0 0.0
          %5171 = vmatpush2.msra.mxu0 %v5050
          %5172 = vmatprep.subr.mxu0 0.0
          %5173 = vmatpush2.msra.mxu0 %v5049
          %5174 = vmatprep.subr.mxu0 0.0
          %5175 = vmatpush2.msra.mxu0 %v5048
          %5176 = vmatprep.subr.mxu0 0.0
          %5177 = vmatpush2.msra.mxu0 %v5047
          %5178 = vmatprep.subr.mxu0 0.0
          %5179 = vmatpush2.msra.mxu0 %v5046
          %5180 = vmatprep.mubr.f32.mxu0 %v5103
          %5181 = vmatmul.mubr.f32.gmra.mxu0 %v5099
          %v5182 = vpop.f32.mrf.mxu0
          %v5183 = vadd.f32 0.0, %v5182
          %v5184 = vpop.f32.mrf.mxu0
          %5185 = vdwg.mxu0
          %5186 = vmatprep.subr.mxu0 0.0
          %5187 = vmatpush1.msra.mxu0 %v5077
          %5188 = vmatprep.subr.mxu0 0.0
          %5189 = vmatpush1.msra.mxu0 %v5076
          %5190 = vmatprep.subr.mxu0 0.0
          %5191 = vmatpush1.msra.mxu0 %v5075
          %5192 = vmatprep.subr.mxu0 0.0
          %5193 = vmatpush1.msra.mxu0 %v5074
          %5194 = vmatprep.subr.mxu0 0.0
          %5195 = vmatpush1.msra.mxu0 %v5073
          %5196 = vmatprep.subr.mxu0 0.0
          %5197 = vmatpush1.msra.mxu0 %v5072
          %5198 = vmatprep.subr.mxu0 0.0
          %5199 = vmatpush1.msra.mxu0 %v5071
          %5200 = vmatprep.subr.mxu0 0.0
          %5201 = vmatpush1.msra.mxu0 %v5070
          %5202 = vmatprep.subr.mxu0 0.0
          %5203 = vmatpush1.msra.mxu0 %v5069
          %5204 = vmatprep.subr.mxu0 0.0
          %5205 = vmatpush1.msra.mxu0 %v5068
          %5206 = vmatprep.subr.mxu0 0.0
          %5207 = vmatpush1.msra.mxu0 %v5067
          %5208 = vmatprep.subr.mxu0 0.0
          %5209 = vmatpush1.msra.mxu0 %v5066
          %5210 = vmatprep.subr.mxu0 0.0
          %5211 = vmatpush1.msra.mxu0 %v5065
          %5212 = vmatprep.subr.mxu0 0.0
          %5213 = vmatpush1.msra.mxu0 %v5064
          %5214 = vmatprep.subr.mxu0 0.0
          %5215 = vmatpush1.msra.mxu0 %v5063
          %5216 = vmatprep.subr.mxu0 0.0
          %5217 = vmatpush1.msra.mxu0 %v5062
          %5218 = vmatprep.subr.mxu0 0.0
          %5219 = vmatpush2.msra.mxu0 %v5093
          %5220 = vmatprep.subr.mxu0 0.0
          %5221 = vmatpush2.msra.mxu0 %v5092
          %5222 = vmatprep.subr.mxu0 0.0
          %5223 = vmatpush2.msra.mxu0 %v5091
          %5224 = vmatprep.subr.mxu0 0.0
          %5225 = vmatpush2.msra.mxu0 %v5090
          %5226 = vmatprep.subr.mxu0 0.0
          %5227 = vmatpush2.msra.mxu0 %v5089
          %5228 = vmatprep.subr.mxu0 0.0
          %5229 = vmatpush2.msra.mxu0 %v5088
          %5230 = vmatprep.subr.mxu0 0.0
          %5231 = vmatpush2.msra.mxu0 %v5087
          %5232 = vmatprep.subr.mxu0 0.0
          %5233 = vmatpush2.msra.mxu0 %v5086
          %5234 = vmatprep.subr.mxu0 0.0
          %5235 = vmatpush2.msra.mxu0 %v5085
          %5236 = vmatprep.subr.mxu0 0.0
          %5237 = vmatpush2.msra.mxu0 %v5084
          %5238 = vmatprep.subr.mxu0 0.0
          %5239 = vmatpush2.msra.mxu0 %v5083
          %5240 = vmatprep.subr.mxu0 0.0
          %5241 = vmatpush2.msra.mxu0 %v5082
          %5242 = vmatprep.subr.mxu0 0.0
          %5243 = vmatpush2.msra.mxu0 %v5081
          %5244 = vmatprep.subr.mxu0 0.0
          %5245 = vmatpush2.msra.mxu0 %v5080
          %5246 = vmatprep.subr.mxu0 0.0
          %5247 = vmatpush2.msra.mxu0 %v5079
          %5248 = vmatprep.subr.mxu0 0.0
          %5249 = vmatpush2.msra.mxu0 %v5078
          %5250 = vmatprep.mubr.f32.mxu0 %v5111
          %5251 = vmatmul.mubr.f32.gmra.mxu0 %v5107
          %v5252 = vpop.f32.mrf.mxu0
          %v5253 = vadd.f32 %v5183, %v5252
          %v5254 = vpop.f32.mrf.mxu0
          %5255 = vdwg.mxu0
          %v5256 = vadd.f32 %v5029, %v5253
          %s5257 = scalar_lea.vmem %s12, 512
          %v5258 = vld [vmem:[%s5257] sm:$0xff]
          %v5259 = vld [vmem:[%s5257 + $0x8] sm:$0xff]
          %v5260 = vld [vmem:[%s5257 + $0x10] sm:$0xff]
          %v5261 = vld [vmem:[%s5257 + $0x18] sm:$0xff]
          %v5262 = vld [vmem:[%s5257 + $0x20] sm:$0xff]
          %v5263 = vld [vmem:[%s5257 + $0x28] sm:$0xff]
          %v5264 = vld [vmem:[%s5257 + $0x30] sm:$0xff]
          %v5265 = vld [vmem:[%s5257 + $0x38] sm:$0xff]
          %v5266 = vld [vmem:[%s5257 + $0x40] sm:$0xff]
          %v5267 = vld [vmem:[%s5257 + $0x48] sm:$0xff]
          %v5268 = vld [vmem:[%s5257 + $0x50] sm:$0xff]
          %v5269 = vld [vmem:[%s5257 + $0x58] sm:$0xff]
          %v5270 = vld [vmem:[%s5257 + $0x60] sm:$0xff]
          %v5271 = vld [vmem:[%s5257 + $0x68] sm:$0xff]
          %v5272 = vld [vmem:[%s5257 + $0x70] sm:$0xff]
          %v5273 = vld [vmem:[%s5257 + $0x78] sm:$0xff]
          %v5274 = vld [vmem:[%s5257 + $0x80] sm:$0xff]
          %v5275 = vld [vmem:[%s5257 + $0x88] sm:$0xff]
          %v5276 = vld [vmem:[%s5257 + $0x90] sm:$0xff]
          %v5277 = vld [vmem:[%s5257 + $0x98] sm:$0xff]
          %v5278 = vld [vmem:[%s5257 + $0xa0] sm:$0xff]
          %v5279 = vld [vmem:[%s5257 + $0xa8] sm:$0xff]
          %v5280 = vld [vmem:[%s5257 + $0xb0] sm:$0xff]
          %v5281 = vld [vmem:[%s5257 + $0xb8] sm:$0xff]
          %v5282 = vld [vmem:[%s5257 + $0xc0] sm:$0xff]
          %v5283 = vld [vmem:[%s5257 + $0xc8] sm:$0xff]
          %v5284 = vld [vmem:[%s5257 + $0xd0] sm:$0xff]
          %v5285 = vld [vmem:[%s5257 + $0xd8] sm:$0xff]
          %v5286 = vld [vmem:[%s5257 + $0xe0] sm:$0xff]
          %v5287 = vld [vmem:[%s5257 + $0xe8] sm:$0xff]
          %v5288 = vld [vmem:[%s5257 + $0xf0] sm:$0xff]
          %v5289 = vld [vmem:[%s5257 + $0xf8] sm:$0xff]
          %v5290 = vld [vmem:[%s5257 + $0x100] sm:$0xff]
          %v5291 = vld [vmem:[%s5257 + $0x108] sm:$0xff]
          %v5292 = vld [vmem:[%s5257 + $0x110] sm:$0xff]
          %v5293 = vld [vmem:[%s5257 + $0x118] sm:$0xff]
          %v5294 = vld [vmem:[%s5257 + $0x120] sm:$0xff]
          %v5295 = vld [vmem:[%s5257 + $0x128] sm:$0xff]
          %v5296 = vld [vmem:[%s5257 + $0x130] sm:$0xff]
          %v5297 = vld [vmem:[%s5257 + $0x138] sm:$0xff]
          %v5298 = vld [vmem:[%s5257 + $0x140] sm:$0xff]
          %v5299 = vld [vmem:[%s5257 + $0x148] sm:$0xff]
          %v5300 = vld [vmem:[%s5257 + $0x150] sm:$0xff]
          %v5301 = vld [vmem:[%s5257 + $0x158] sm:$0xff]
          %v5302 = vld [vmem:[%s5257 + $0x160] sm:$0xff]
          %v5303 = vld [vmem:[%s5257 + $0x168] sm:$0xff]
          %v5304 = vld [vmem:[%s5257 + $0x170] sm:$0xff]
          %v5305 = vld [vmem:[%s5257 + $0x178] sm:$0xff]
          %v5306 = vld [vmem:[%s5257 + $0x180] sm:$0xff]
          %v5307 = vld [vmem:[%s5257 + $0x188] sm:$0xff]
          %v5308 = vld [vmem:[%s5257 + $0x190] sm:$0xff]
          %v5309 = vld [vmem:[%s5257 + $0x198] sm:$0xff]
          %v5310 = vld [vmem:[%s5257 + $0x1a0] sm:$0xff]
          %v5311 = vld [vmem:[%s5257 + $0x1a8] sm:$0xff]
          %v5312 = vld [vmem:[%s5257 + $0x1b0] sm:$0xff]
          %v5313 = vld [vmem:[%s5257 + $0x1b8] sm:$0xff]
          %v5314 = vld [vmem:[%s5257 + $0x1c0] sm:$0xff]
          %v5315 = vld [vmem:[%s5257 + $0x1c8] sm:$0xff]
          %v5316 = vld [vmem:[%s5257 + $0x1d0] sm:$0xff]
          %v5317 = vld [vmem:[%s5257 + $0x1d8] sm:$0xff]
          %v5318 = vld [vmem:[%s5257 + $0x1e0] sm:$0xff]
          %v5319 = vld [vmem:[%s5257 + $0x1e8] sm:$0xff]
          %v5320 = vld [vmem:[%s5257 + $0x1f0] sm:$0xff]
          %v5321 = vld [vmem:[%s5257 + $0x1f8] sm:$0xff]
          %v5322 = vlaneseq
          %v5323 = vshrl.u32 %v5322, 7
          %v5324 = vsub.s32 1, %v5323
          %v5325 = vrot.slane %v5027, %v5324
          %v5326 = vlaneseq
          %v5327 = vshrl.u32 %v5326, 7
          %v5328 = vsub.s32 5, %v5327
          %v5329 = vrot.slane %v5027, %v5328
          %v5330 = vlaneseq
          %v5331 = vshrl.u32 %v5330, 7
          %v5332 = vsub.s32 1, %v5331
          %v5333 = vrot.slane %v5028, %v5332
          %v5334 = vlaneseq
          %v5335 = vshrl.u32 %v5334, 7
          %v5336 = vsub.s32 5, %v5335
          %v5337 = vrot.slane %v5028, %v5336
          %5342 = vmatprep.subr.mxu0 0.0
          %5343 = vmatpush1.msra.mxu0 %v5273
          %5344 = vmatprep.subr.mxu0 0.0
          %5345 = vmatpush1.msra.mxu0 %v5272
          %5346 = vmatprep.subr.mxu0 0.0
          %5347 = vmatpush1.msra.mxu0 %v5271
          %5348 = vmatprep.subr.mxu0 0.0
          %5349 = vmatpush1.msra.mxu0 %v5270
          %5350 = vmatprep.subr.mxu0 0.0
          %5351 = vmatpush1.msra.mxu0 %v5269
          %5352 = vmatprep.subr.mxu0 0.0
          %5353 = vmatpush1.msra.mxu0 %v5268
          %5354 = vmatprep.subr.mxu0 0.0
          %5355 = vmatpush1.msra.mxu0 %v5267
          %5356 = vmatprep.subr.mxu0 0.0
          %5357 = vmatpush1.msra.mxu0 %v5266
          %5358 = vmatprep.subr.mxu0 0.0
          %5359 = vmatpush1.msra.mxu0 %v5265
          %5360 = vmatprep.subr.mxu0 0.0
          %5361 = vmatpush1.msra.mxu0 %v5264
          %5362 = vmatprep.subr.mxu0 0.0
          %5363 = vmatpush1.msra.mxu0 %v5263
          %5364 = vmatprep.subr.mxu0 0.0
          %5365 = vmatpush1.msra.mxu0 %v5262
          %5366 = vmatprep.subr.mxu0 0.0
          %5367 = vmatpush1.msra.mxu0 %v5261
          %5368 = vmatprep.subr.mxu0 0.0
          %5369 = vmatpush1.msra.mxu0 %v5260
          %5370 = vmatprep.subr.mxu0 0.0
          %5371 = vmatpush1.msra.mxu0 %v5259
          %5372 = vmatprep.subr.mxu0 0.0
          %5373 = vmatpush1.msra.mxu0 %v5258
          %5374 = vmatprep.subr.mxu0 0.0
          %5375 = vmatpush2.msra.mxu0 %v5289
          %5376 = vmatprep.subr.mxu0 0.0
          %5377 = vmatpush2.msra.mxu0 %v5288
          %5378 = vmatprep.subr.mxu0 0.0
          %5379 = vmatpush2.msra.mxu0 %v5287
          %5380 = vmatprep.subr.mxu0 0.0
          %5381 = vmatpush2.msra.mxu0 %v5286
          %5382 = vmatprep.subr.mxu0 0.0
          %5383 = vmatpush2.msra.mxu0 %v5285
          %5384 = vmatprep.subr.mxu0 0.0
          %5385 = vmatpush2.msra.mxu0 %v5284
          %5386 = vmatprep.subr.mxu0 0.0
          %5387 = vmatpush2.msra.mxu0 %v5283
          %5388 = vmatprep.subr.mxu0 0.0
          %5389 = vmatpush2.msra.mxu0 %v5282
          %5390 = vmatprep.subr.mxu0 0.0
          %5391 = vmatpush2.msra.mxu0 %v5281
          %5392 = vmatprep.subr.mxu0 0.0
          %5393 = vmatpush2.msra.mxu0 %v5280
          %5394 = vmatprep.subr.mxu0 0.0
          %5395 = vmatpush2.msra.mxu0 %v5279
          %5396 = vmatprep.subr.mxu0 0.0
          %5397 = vmatpush2.msra.mxu0 %v5278
          %5398 = vmatprep.subr.mxu0 0.0
          %5399 = vmatpush2.msra.mxu0 %v5277
          %5400 = vmatprep.subr.mxu0 0.0
          %5401 = vmatpush2.msra.mxu0 %v5276
          %5402 = vmatprep.subr.mxu0 0.0
          %5403 = vmatpush2.msra.mxu0 %v5275
          %5404 = vmatprep.subr.mxu0 0.0
          %5405 = vmatpush2.msra.mxu0 %v5274
          %5406 = vmatprep.mubr.f32.mxu0 %v5329
          %5407 = vmatmul.mubr.f32.gmra.mxu0 %v5325
          %v5408 = vpop.f32.mrf.mxu0
          %v5409 = vadd.f32 0.0, %v5408
          %v5410 = vpop.f32.mrf.mxu0
          %5411 = vdwg.mxu0
          %5412 = vmatprep.subr.mxu0 0.0
          %5413 = vmatpush1.msra.mxu0 %v5305
          %5414 = vmatprep.subr.mxu0 0.0
          %5415 = vmatpush1.msra.mxu0 %v5304
          %5416 = vmatprep.subr.mxu0 0.0
          %5417 = vmatpush1.msra.mxu0 %v5303
          %5418 = vmatprep.subr.mxu0 0.0
          %5419 = vmatpush1.msra.mxu0 %v5302
          %5420 = vmatprep.subr.mxu0 0.0
          %5421 = vmatpush1.msra.mxu0 %v5301
          %5422 = vmatprep.subr.mxu0 0.0
          %5423 = vmatpush1.msra.mxu0 %v5300
          %5424 = vmatprep.subr.mxu0 0.0
          %5425 = vmatpush1.msra.mxu0 %v5299
          %5426 = vmatprep.subr.mxu0 0.0
          %5427 = vmatpush1.msra.mxu0 %v5298
          %5428 = vmatprep.subr.mxu0 0.0
          %5429 = vmatpush1.msra.mxu0 %v5297
          %5430 = vmatprep.subr.mxu0 0.0
          %5431 = vmatpush1.msra.mxu0 %v5296
          %5432 = vmatprep.subr.mxu0 0.0
          %5433 = vmatpush1.msra.mxu0 %v5295
          %5434 = vmatprep.subr.mxu0 0.0
          %5435 = vmatpush1.msra.mxu0 %v5294
          %5436 = vmatprep.subr.mxu0 0.0
          %5437 = vmatpush1.msra.mxu0 %v5293
          %5438 = vmatprep.subr.mxu0 0.0
          %5439 = vmatpush1.msra.mxu0 %v5292
          %5440 = vmatprep.subr.mxu0 0.0
          %5441 = vmatpush1.msra.mxu0 %v5291
          %5442 = vmatprep.subr.mxu0 0.0
          %5443 = vmatpush1.msra.mxu0 %v5290
          %5444 = vmatprep.subr.mxu0 0.0
          %5445 = vmatpush2.msra.mxu0 %v5321
          %5446 = vmatprep.subr.mxu0 0.0
          %5447 = vmatpush2.msra.mxu0 %v5320
          %5448 = vmatprep.subr.mxu0 0.0
          %5449 = vmatpush2.msra.mxu0 %v5319
          %5450 = vmatprep.subr.mxu0 0.0
          %5451 = vmatpush2.msra.mxu0 %v5318
          %5452 = vmatprep.subr.mxu0 0.0
          %5453 = vmatpush2.msra.mxu0 %v5317
          %5454 = vmatprep.subr.mxu0 0.0
          %5455 = vmatpush2.msra.mxu0 %v5316
          %5456 = vmatprep.subr.mxu0 0.0
          %5457 = vmatpush2.msra.mxu0 %v5315
          %5458 = vmatprep.subr.mxu0 0.0
          %5459 = vmatpush2.msra.mxu0 %v5314
          %5460 = vmatprep.subr.mxu0 0.0
          %5461 = vmatpush2.msra.mxu0 %v5313
          %5462 = vmatprep.subr.mxu0 0.0
          %5463 = vmatpush2.msra.mxu0 %v5312
          %5464 = vmatprep.subr.mxu0 0.0
          %5465 = vmatpush2.msra.mxu0 %v5311
          %5466 = vmatprep.subr.mxu0 0.0
          %5467 = vmatpush2.msra.mxu0 %v5310
          %5468 = vmatprep.subr.mxu0 0.0
          %5469 = vmatpush2.msra.mxu0 %v5309
          %5470 = vmatprep.subr.mxu0 0.0
          %5471 = vmatpush2.msra.mxu0 %v5308
          %5472 = vmatprep.subr.mxu0 0.0
          %5473 = vmatpush2.msra.mxu0 %v5307
          %5474 = vmatprep.subr.mxu0 0.0
          %5475 = vmatpush2.msra.mxu0 %v5306
          %5476 = vmatprep.mubr.f32.mxu0 %v5337
          %5477 = vmatmul.mubr.f32.gmra.mxu0 %v5333
          %v5478 = vpop.f32.mrf.mxu0
          %v5479 = vadd.f32 %v5409, %v5478
          %v5480 = vpop.f32.mrf.mxu0
          %5481 = vdwg.mxu0
          %v5482 = vadd.f32 %v5256, %v5479
          %s5483 = scalar_lea.vmem %s12, 1024
          %v5484 = vld [vmem:[%s5483] sm:$0xff]
          %v5485 = vld [vmem:[%s5483 + $0x8] sm:$0xff]
          %v5486 = vld [vmem:[%s5483 + $0x10] sm:$0xff]
          %v5487 = vld [vmem:[%s5483 + $0x18] sm:$0xff]
          %v5488 = vld [vmem:[%s5483 + $0x20] sm:$0xff]
          %v5489 = vld [vmem:[%s5483 + $0x28] sm:$0xff]
          %v5490 = vld [vmem:[%s5483 + $0x30] sm:$0xff]
          %v5491 = vld [vmem:[%s5483 + $0x38] sm:$0xff]
          %v5492 = vld [vmem:[%s5483 + $0x40] sm:$0xff]
          %v5493 = vld [vmem:[%s5483 + $0x48] sm:$0xff]
          %v5494 = vld [vmem:[%s5483 + $0x50] sm:$0xff]
          %v5495 = vld [vmem:[%s5483 + $0x58] sm:$0xff]
          %v5496 = vld [vmem:[%s5483 + $0x60] sm:$0xff]
          %v5497 = vld [vmem:[%s5483 + $0x68] sm:$0xff]
          %v5498 = vld [vmem:[%s5483 + $0x70] sm:$0xff]
          %v5499 = vld [vmem:[%s5483 + $0x78] sm:$0xff]
          %v5500 = vld [vmem:[%s5483 + $0x80] sm:$0xff]
          %v5501 = vld [vmem:[%s5483 + $0x88] sm:$0xff]
          %v5502 = vld [vmem:[%s5483 + $0x90] sm:$0xff]
          %v5503 = vld [vmem:[%s5483 + $0x98] sm:$0xff]
          %v5504 = vld [vmem:[%s5483 + $0xa0] sm:$0xff]
          %v5505 = vld [vmem:[%s5483 + $0xa8] sm:$0xff]
          %v5506 = vld [vmem:[%s5483 + $0xb0] sm:$0xff]
          %v5507 = vld [vmem:[%s5483 + $0xb8] sm:$0xff]
          %v5508 = vld [vmem:[%s5483 + $0xc0] sm:$0xff]
          %v5509 = vld [vmem:[%s5483 + $0xc8] sm:$0xff]
          %v5510 = vld [vmem:[%s5483 + $0xd0] sm:$0xff]
          %v5511 = vld [vmem:[%s5483 + $0xd8] sm:$0xff]
          %v5512 = vld [vmem:[%s5483 + $0xe0] sm:$0xff]
          %v5513 = vld [vmem:[%s5483 + $0xe8] sm:$0xff]
          %v5514 = vld [vmem:[%s5483 + $0xf0] sm:$0xff]
          %v5515 = vld [vmem:[%s5483 + $0xf8] sm:$0xff]
          %v5516 = vld [vmem:[%s5483 + $0x100] sm:$0xff]
          %v5517 = vld [vmem:[%s5483 + $0x108] sm:$0xff]
          %v5518 = vld [vmem:[%s5483 + $0x110] sm:$0xff]
          %v5519 = vld [vmem:[%s5483 + $0x118] sm:$0xff]
          %v5520 = vld [vmem:[%s5483 + $0x120] sm:$0xff]
          %v5521 = vld [vmem:[%s5483 + $0x128] sm:$0xff]
          %v5522 = vld [vmem:[%s5483 + $0x130] sm:$0xff]
          %v5523 = vld [vmem:[%s5483 + $0x138] sm:$0xff]
          %v5524 = vld [vmem:[%s5483 + $0x140] sm:$0xff]
          %v5525 = vld [vmem:[%s5483 + $0x148] sm:$0xff]
          %v5526 = vld [vmem:[%s5483 + $0x150] sm:$0xff]
          %v5527 = vld [vmem:[%s5483 + $0x158] sm:$0xff]
          %v5528 = vld [vmem:[%s5483 + $0x160] sm:$0xff]
          %v5529 = vld [vmem:[%s5483 + $0x168] sm:$0xff]
          %v5530 = vld [vmem:[%s5483 + $0x170] sm:$0xff]
          %v5531 = vld [vmem:[%s5483 + $0x178] sm:$0xff]
          %v5532 = vld [vmem:[%s5483 + $0x180] sm:$0xff]
          %v5533 = vld [vmem:[%s5483 + $0x188] sm:$0xff]
          %v5534 = vld [vmem:[%s5483 + $0x190] sm:$0xff]
          %v5535 = vld [vmem:[%s5483 + $0x198] sm:$0xff]
          %v5536 = vld [vmem:[%s5483 + $0x1a0] sm:$0xff]
          %v5537 = vld [vmem:[%s5483 + $0x1a8] sm:$0xff]
          %v5538 = vld [vmem:[%s5483 + $0x1b0] sm:$0xff]
          %v5539 = vld [vmem:[%s5483 + $0x1b8] sm:$0xff]
          %v5540 = vld [vmem:[%s5483 + $0x1c0] sm:$0xff]
          %v5541 = vld [vmem:[%s5483 + $0x1c8] sm:$0xff]
          %v5542 = vld [vmem:[%s5483 + $0x1d0] sm:$0xff]
          %v5543 = vld [vmem:[%s5483 + $0x1d8] sm:$0xff]
          %v5544 = vld [vmem:[%s5483 + $0x1e0] sm:$0xff]
          %v5545 = vld [vmem:[%s5483 + $0x1e8] sm:$0xff]
          %v5546 = vld [vmem:[%s5483 + $0x1f0] sm:$0xff]
          %v5547 = vld [vmem:[%s5483 + $0x1f8] sm:$0xff]
          %v5548 = vlaneseq
          %v5549 = vshrl.u32 %v5548, 7
          %v5550 = vsub.s32 2, %v5549
          %v5551 = vrot.slane %v5027, %v5550
          %v5552 = vlaneseq
          %v5553 = vshrl.u32 %v5552, 7
          %v5554 = vsub.s32 6, %v5553
          %v5555 = vrot.slane %v5027, %v5554
          %v5556 = vlaneseq
          %v5557 = vshrl.u32 %v5556, 7
          %v5558 = vsub.s32 2, %v5557
          %v5559 = vrot.slane %v5028, %v5558
          %v5560 = vlaneseq
          %v5561 = vshrl.u32 %v5560, 7
          %v5562 = vsub.s32 6, %v5561
          %v5563 = vrot.slane %v5028, %v5562
          %5568 = vmatprep.subr.mxu0 0.0
          %5569 = vmatpush1.msra.mxu0 %v5499
          %5570 = vmatprep.subr.mxu0 0.0
          %5571 = vmatpush1.msra.mxu0 %v5498
          %5572 = vmatprep.subr.mxu0 0.0
          %5573 = vmatpush1.msra.mxu0 %v5497
          %5574 = vmatprep.subr.mxu0 0.0
          %5575 = vmatpush1.msra.mxu0 %v5496
          %5576 = vmatprep.subr.mxu0 0.0
          %5577 = vmatpush1.msra.mxu0 %v5495
          %5578 = vmatprep.subr.mxu0 0.0
          %5579 = vmatpush1.msra.mxu0 %v5494
          %5580 = vmatprep.subr.mxu0 0.0
          %5581 = vmatpush1.msra.mxu0 %v5493
          %5582 = vmatprep.subr.mxu0 0.0
          %5583 = vmatpush1.msra.mxu0 %v5492
          %5584 = vmatprep.subr.mxu0 0.0
          %5585 = vmatpush1.msra.mxu0 %v5491
          %5586 = vmatprep.subr.mxu0 0.0
          %5587 = vmatpush1.msra.mxu0 %v5490
          %5588 = vmatprep.subr.mxu0 0.0
          %5589 = vmatpush1.msra.mxu0 %v5489
          %5590 = vmatprep.subr.mxu0 0.0
          %5591 = vmatpush1.msra.mxu0 %v5488
          %5592 = vmatprep.subr.mxu0 0.0
          %5593 = vmatpush1.msra.mxu0 %v5487
          %5594 = vmatprep.subr.mxu0 0.0
          %5595 = vmatpush1.msra.mxu0 %v5486
          %5596 = vmatprep.subr.mxu0 0.0
          %5597 = vmatpush1.msra.mxu0 %v5485
          %5598 = vmatprep.subr.mxu0 0.0
          %5599 = vmatpush1.msra.mxu0 %v5484
          %5600 = vmatprep.subr.mxu0 0.0
          %5601 = vmatpush2.msra.mxu0 %v5515
          %5602 = vmatprep.subr.mxu0 0.0
          %5603 = vmatpush2.msra.mxu0 %v5514
          %5604 = vmatprep.subr.mxu0 0.0
          %5605 = vmatpush2.msra.mxu0 %v5513
          %5606 = vmatprep.subr.mxu0 0.0
          %5607 = vmatpush2.msra.mxu0 %v5512
          %5608 = vmatprep.subr.mxu0 0.0
          %5609 = vmatpush2.msra.mxu0 %v5511
          %5610 = vmatprep.subr.mxu0 0.0
          %5611 = vmatpush2.msra.mxu0 %v5510
          %5612 = vmatprep.subr.mxu0 0.0
          %5613 = vmatpush2.msra.mxu0 %v5509
          %5614 = vmatprep.subr.mxu0 0.0
          %5615 = vmatpush2.msra.mxu0 %v5508
          %5616 = vmatprep.subr.mxu0 0.0
          %5617 = vmatpush2.msra.mxu0 %v5507
          %5618 = vmatprep.subr.mxu0 0.0
          %5619 = vmatpush2.msra.mxu0 %v5506
          %5620 = vmatprep.subr.mxu0 0.0
          %5621 = vmatpush2.msra.mxu0 %v5505
          %5622 = vmatprep.subr.mxu0 0.0
          %5623 = vmatpush2.msra.mxu0 %v5504
          %5624 = vmatprep.subr.mxu0 0.0
          %5625 = vmatpush2.msra.mxu0 %v5503
          %5626 = vmatprep.subr.mxu0 0.0
          %5627 = vmatpush2.msra.mxu0 %v5502
          %5628 = vmatprep.subr.mxu0 0.0
          %5629 = vmatpush2.msra.mxu0 %v5501
          %5630 = vmatprep.subr.mxu0 0.0
          %5631 = vmatpush2.msra.mxu0 %v5500
          %5632 = vmatprep.mubr.f32.mxu0 %v5555
          %5633 = vmatmul.mubr.f32.gmra.mxu0 %v5551
          %v5634 = vpop.f32.mrf.mxu0
          %v5635 = vadd.f32 0.0, %v5634
          %v5636 = vpop.f32.mrf.mxu0
          %5637 = vdwg.mxu0
          %5638 = vmatprep.subr.mxu0 0.0
          %5639 = vmatpush1.msra.mxu0 %v5531
          %5640 = vmatprep.subr.mxu0 0.0
          %5641 = vmatpush1.msra.mxu0 %v5530
          %5642 = vmatprep.subr.mxu0 0.0
          %5643 = vmatpush1.msra.mxu0 %v5529
          %5644 = vmatprep.subr.mxu0 0.0
          %5645 = vmatpush1.msra.mxu0 %v5528
          %5646 = vmatprep.subr.mxu0 0.0
          %5647 = vmatpush1.msra.mxu0 %v5527
          %5648 = vmatprep.subr.mxu0 0.0
          %5649 = vmatpush1.msra.mxu0 %v5526
          %5650 = vmatprep.subr.mxu0 0.0
          %5651 = vmatpush1.msra.mxu0 %v5525
          %5652 = vmatprep.subr.mxu0 0.0
          %5653 = vmatpush1.msra.mxu0 %v5524
          %5654 = vmatprep.subr.mxu0 0.0
          %5655 = vmatpush1.msra.mxu0 %v5523
          %5656 = vmatprep.subr.mxu0 0.0
          %5657 = vmatpush1.msra.mxu0 %v5522
          %5658 = vmatprep.subr.mxu0 0.0
          %5659 = vmatpush1.msra.mxu0 %v5521
          %5660 = vmatprep.subr.mxu0 0.0
          %5661 = vmatpush1.msra.mxu0 %v5520
          %5662 = vmatprep.subr.mxu0 0.0
          %5663 = vmatpush1.msra.mxu0 %v5519
          %5664 = vmatprep.subr.mxu0 0.0
          %5665 = vmatpush1.msra.mxu0 %v5518
          %5666 = vmatprep.subr.mxu0 0.0
          %5667 = vmatpush1.msra.mxu0 %v5517
          %5668 = vmatprep.subr.mxu0 0.0
          %5669 = vmatpush1.msra.mxu0 %v5516
          %5670 = vmatprep.subr.mxu0 0.0
          %5671 = vmatpush2.msra.mxu0 %v5547
          %5672 = vmatprep.subr.mxu0 0.0
          %5673 = vmatpush2.msra.mxu0 %v5546
          %5674 = vmatprep.subr.mxu0 0.0
          %5675 = vmatpush2.msra.mxu0 %v5545
          %5676 = vmatprep.subr.mxu0 0.0
          %5677 = vmatpush2.msra.mxu0 %v5544
          %5678 = vmatprep.subr.mxu0 0.0
          %5679 = vmatpush2.msra.mxu0 %v5543
          %5680 = vmatprep.subr.mxu0 0.0
          %5681 = vmatpush2.msra.mxu0 %v5542
          %5682 = vmatprep.subr.mxu0 0.0
          %5683 = vmatpush2.msra.mxu0 %v5541
          %5684 = vmatprep.subr.mxu0 0.0
          %5685 = vmatpush2.msra.mxu0 %v5540
          %5686 = vmatprep.subr.mxu0 0.0
          %5687 = vmatpush2.msra.mxu0 %v5539
          %5688 = vmatprep.subr.mxu0 0.0
          %5689 = vmatpush2.msra.mxu0 %v5538
          %5690 = vmatprep.subr.mxu0 0.0
          %5691 = vmatpush2.msra.mxu0 %v5537
          %5692 = vmatprep.subr.mxu0 0.0
          %5693 = vmatpush2.msra.mxu0 %v5536
          %5694 = vmatprep.subr.mxu0 0.0
          %5695 = vmatpush2.msra.mxu0 %v5535
          %5696 = vmatprep.subr.mxu0 0.0
          %5697 = vmatpush2.msra.mxu0 %v5534
          %5698 = vmatprep.subr.mxu0 0.0
          %5699 = vmatpush2.msra.mxu0 %v5533
          %5700 = vmatprep.subr.mxu0 0.0
          %5701 = vmatpush2.msra.mxu0 %v5532
          %5702 = vmatprep.mubr.f32.mxu0 %v5563
          %5703 = vmatmul.mubr.f32.gmra.mxu0 %v5559
          %v5704 = vpop.f32.mrf.mxu0
          %v5705 = vadd.f32 %v5635, %v5704
          %v5706 = vpop.f32.mrf.mxu0
          %5707 = vdwg.mxu0
          %v5708 = vadd.f32 %v5482, %v5705
          %s5709 = scalar_lea.vmem %s12, 1536
          %v5710 = vld [vmem:[%s5709] sm:$0xff]
          %v5711 = vld [vmem:[%s5709 + $0x8] sm:$0xff]
          %v5712 = vld [vmem:[%s5709 + $0x10] sm:$0xff]
          %v5713 = vld [vmem:[%s5709 + $0x18] sm:$0xff]
          %v5714 = vld [vmem:[%s5709 + $0x20] sm:$0xff]
          %v5715 = vld [vmem:[%s5709 + $0x28] sm:$0xff]
          %v5716 = vld [vmem:[%s5709 + $0x30] sm:$0xff]
          %v5717 = vld [vmem:[%s5709 + $0x38] sm:$0xff]
          %v5718 = vld [vmem:[%s5709 + $0x40] sm:$0xff]
          %v5719 = vld [vmem:[%s5709 + $0x48] sm:$0xff]
          %v5720 = vld [vmem:[%s5709 + $0x50] sm:$0xff]
          %v5721 = vld [vmem:[%s5709 + $0x58] sm:$0xff]
          %v5722 = vld [vmem:[%s5709 + $0x60] sm:$0xff]
          %v5723 = vld [vmem:[%s5709 + $0x68] sm:$0xff]
          %v5724 = vld [vmem:[%s5709 + $0x70] sm:$0xff]
          %v5725 = vld [vmem:[%s5709 + $0x78] sm:$0xff]
          %v5726 = vld [vmem:[%s5709 + $0x80] sm:$0xff]
          %v5727 = vld [vmem:[%s5709 + $0x88] sm:$0xff]
          %v5728 = vld [vmem:[%s5709 + $0x90] sm:$0xff]
          %v5729 = vld [vmem:[%s5709 + $0x98] sm:$0xff]
          %v5730 = vld [vmem:[%s5709 + $0xa0] sm:$0xff]
          %v5731 = vld [vmem:[%s5709 + $0xa8] sm:$0xff]
          %v5732 = vld [vmem:[%s5709 + $0xb0] sm:$0xff]
          %v5733 = vld [vmem:[%s5709 + $0xb8] sm:$0xff]
          %v5734 = vld [vmem:[%s5709 + $0xc0] sm:$0xff]
          %v5735 = vld [vmem:[%s5709 + $0xc8] sm:$0xff]
          %v5736 = vld [vmem:[%s5709 + $0xd0] sm:$0xff]
          %v5737 = vld [vmem:[%s5709 + $0xd8] sm:$0xff]
          %v5738 = vld [vmem:[%s5709 + $0xe0] sm:$0xff]
          %v5739 = vld [vmem:[%s5709 + $0xe8] sm:$0xff]
          %v5740 = vld [vmem:[%s5709 + $0xf0] sm:$0xff]
          %v5741 = vld [vmem:[%s5709 + $0xf8] sm:$0xff]
          %v5742 = vld [vmem:[%s5709 + $0x100] sm:$0xff]
          %v5743 = vld [vmem:[%s5709 + $0x108] sm:$0xff]
          %v5744 = vld [vmem:[%s5709 + $0x110] sm:$0xff]
          %v5745 = vld [vmem:[%s5709 + $0x118] sm:$0xff]
          %v5746 = vld [vmem:[%s5709 + $0x120] sm:$0xff]
          %v5747 = vld [vmem:[%s5709 + $0x128] sm:$0xff]
          %v5748 = vld [vmem:[%s5709 + $0x130] sm:$0xff]
          %v5749 = vld [vmem:[%s5709 + $0x138] sm:$0xff]
          %v5750 = vld [vmem:[%s5709 + $0x140] sm:$0xff]
          %v5751 = vld [vmem:[%s5709 + $0x148] sm:$0xff]
          %v5752 = vld [vmem:[%s5709 + $0x150] sm:$0xff]
          %v5753 = vld [vmem:[%s5709 + $0x158] sm:$0xff]
          %v5754 = vld [vmem:[%s5709 + $0x160] sm:$0xff]
          %v5755 = vld [vmem:[%s5709 + $0x168] sm:$0xff]
          %v5756 = vld [vmem:[%s5709 + $0x170] sm:$0xff]
          %v5757 = vld [vmem:[%s5709 + $0x178] sm:$0xff]
          %v5758 = vld [vmem:[%s5709 + $0x180] sm:$0xff]
          %v5759 = vld [vmem:[%s5709 + $0x188] sm:$0xff]
          %v5760 = vld [vmem:[%s5709 + $0x190] sm:$0xff]
          %v5761 = vld [vmem:[%s5709 + $0x198] sm:$0xff]
          %v5762 = vld [vmem:[%s5709 + $0x1a0] sm:$0xff]
          %v5763 = vld [vmem:[%s5709 + $0x1a8] sm:$0xff]
          %v5764 = vld [vmem:[%s5709 + $0x1b0] sm:$0xff]
          %v5765 = vld [vmem:[%s5709 + $0x1b8] sm:$0xff]
          %v5766 = vld [vmem:[%s5709 + $0x1c0] sm:$0xff]
          %v5767 = vld [vmem:[%s5709 + $0x1c8] sm:$0xff]
          %v5768 = vld [vmem:[%s5709 + $0x1d0] sm:$0xff]
          %v5769 = vld [vmem:[%s5709 + $0x1d8] sm:$0xff]
          %v5770 = vld [vmem:[%s5709 + $0x1e0] sm:$0xff]
          %v5771 = vld [vmem:[%s5709 + $0x1e8] sm:$0xff]
          %v5772 = vld [vmem:[%s5709 + $0x1f0] sm:$0xff]
          %v5773 = vld [vmem:[%s5709 + $0x1f8] sm:$0xff]
          %v5774 = vlaneseq
          %v5775 = vshrl.u32 %v5774, 7
          %v5776 = vsub.s32 3, %v5775
          %v5777 = vrot.slane %v5027, %v5776
          %v5778 = vlaneseq
          %v5779 = vshrl.u32 %v5778, 7
          %v5780 = vsub.s32 7, %v5779
          %v5781 = vrot.slane %v5027, %v5780
          %v5782 = vlaneseq
          %v5783 = vshrl.u32 %v5782, 7
          %v5784 = vsub.s32 3, %v5783
          %v5785 = vrot.slane %v5028, %v5784
          %v5786 = vlaneseq
          %v5787 = vshrl.u32 %v5786, 7
          %v5788 = vsub.s32 7, %v5787
          %v5789 = vrot.slane %v5028, %v5788
          %5794 = vmatprep.subr.mxu0 0.0
          %5795 = vmatpush1.msra.mxu0 %v5725
          %5796 = vmatprep.subr.mxu0 0.0
          %5797 = vmatpush1.msra.mxu0 %v5724
          %5798 = vmatprep.subr.mxu0 0.0
          %5799 = vmatpush1.msra.mxu0 %v5723
          %5800 = vmatprep.subr.mxu0 0.0
          %5801 = vmatpush1.msra.mxu0 %v5722
          %5802 = vmatprep.subr.mxu0 0.0
          %5803 = vmatpush1.msra.mxu0 %v5721
          %5804 = vmatprep.subr.mxu0 0.0
          %5805 = vmatpush1.msra.mxu0 %v5720
          %5806 = vmatprep.subr.mxu0 0.0
          %5807 = vmatpush1.msra.mxu0 %v5719
          %5808 = vmatprep.subr.mxu0 0.0
          %5809 = vmatpush1.msra.mxu0 %v5718
          %5810 = vmatprep.subr.mxu0 0.0
          %5811 = vmatpush1.msra.mxu0 %v5717
          %5812 = vmatprep.subr.mxu0 0.0
          %5813 = vmatpush1.msra.mxu0 %v5716
          %5814 = vmatprep.subr.mxu0 0.0
          %5815 = vmatpush1.msra.mxu0 %v5715
          %5816 = vmatprep.subr.mxu0 0.0
          %5817 = vmatpush1.msra.mxu0 %v5714
          %5818 = vmatprep.subr.mxu0 0.0
          %5819 = vmatpush1.msra.mxu0 %v5713
          %5820 = vmatprep.subr.mxu0 0.0
          %5821 = vmatpush1.msra.mxu0 %v5712
          %5822 = vmatprep.subr.mxu0 0.0
          %5823 = vmatpush1.msra.mxu0 %v5711
          %5824 = vmatprep.subr.mxu0 0.0
          %5825 = vmatpush1.msra.mxu0 %v5710
          %5826 = vmatprep.subr.mxu0 0.0
          %5827 = vmatpush2.msra.mxu0 %v5741
          %5828 = vmatprep.subr.mxu0 0.0
          %5829 = vmatpush2.msra.mxu0 %v5740
          %5830 = vmatprep.subr.mxu0 0.0
          %5831 = vmatpush2.msra.mxu0 %v5739
          %5832 = vmatprep.subr.mxu0 0.0
          %5833 = vmatpush2.msra.mxu0 %v5738
          %5834 = vmatprep.subr.mxu0 0.0
          %5835 = vmatpush2.msra.mxu0 %v5737
          %5836 = vmatprep.subr.mxu0 0.0
          %5837 = vmatpush2.msra.mxu0 %v5736
          %5838 = vmatprep.subr.mxu0 0.0
          %5839 = vmatpush2.msra.mxu0 %v5735
          %5840 = vmatprep.subr.mxu0 0.0
          %5841 = vmatpush2.msra.mxu0 %v5734
          %5842 = vmatprep.subr.mxu0 0.0
          %5843 = vmatpush2.msra.mxu0 %v5733
          %5844 = vmatprep.subr.mxu0 0.0
          %5845 = vmatpush2.msra.mxu0 %v5732
          %5846 = vmatprep.subr.mxu0 0.0
          %5847 = vmatpush2.msra.mxu0 %v5731
          %5848 = vmatprep.subr.mxu0 0.0
          %5849 = vmatpush2.msra.mxu0 %v5730
          %5850 = vmatprep.subr.mxu0 0.0
          %5851 = vmatpush2.msra.mxu0 %v5729
          %5852 = vmatprep.subr.mxu0 0.0
          %5853 = vmatpush2.msra.mxu0 %v5728
          %5854 = vmatprep.subr.mxu0 0.0
          %5855 = vmatpush2.msra.mxu0 %v5727
          %5856 = vmatprep.subr.mxu0 0.0
          %5857 = vmatpush2.msra.mxu0 %v5726
          %5858 = vmatprep.mubr.f32.mxu0 %v5781
          %5859 = vmatmul.mubr.f32.gmra.mxu0 %v5777
          %v5860 = vpop.f32.mrf.mxu0
          %v5861 = vadd.f32 0.0, %v5860
          %v5862 = vpop.f32.mrf.mxu0
          %5863 = vdwg.mxu0
          %5864 = vmatprep.subr.mxu0 0.0
          %5865 = vmatpush1.msra.mxu0 %v5757
          %5866 = vmatprep.subr.mxu0 0.0
          %5867 = vmatpush1.msra.mxu0 %v5756
          %5868 = vmatprep.subr.mxu0 0.0
          %5869 = vmatpush1.msra.mxu0 %v5755
          %5870 = vmatprep.subr.mxu0 0.0
          %5871 = vmatpush1.msra.mxu0 %v5754
          %5872 = vmatprep.subr.mxu0 0.0
          %5873 = vmatpush1.msra.mxu0 %v5753
          %5874 = vmatprep.subr.mxu0 0.0
          %5875 = vmatpush1.msra.mxu0 %v5752
          %5876 = vmatprep.subr.mxu0 0.0
          %5877 = vmatpush1.msra.mxu0 %v5751
          %5878 = vmatprep.subr.mxu0 0.0
          %5879 = vmatpush1.msra.mxu0 %v5750
          %5880 = vmatprep.subr.mxu0 0.0
          %5881 = vmatpush1.msra.mxu0 %v5749
          %5882 = vmatprep.subr.mxu0 0.0
          %5883 = vmatpush1.msra.mxu0 %v5748
          %5884 = vmatprep.subr.mxu0 0.0
          %5885 = vmatpush1.msra.mxu0 %v5747
          %5886 = vmatprep.subr.mxu0 0.0
          %5887 = vmatpush1.msra.mxu0 %v5746
          %5888 = vmatprep.subr.mxu0 0.0
          %5889 = vmatpush1.msra.mxu0 %v5745
          %5890 = vmatprep.subr.mxu0 0.0
          %5891 = vmatpush1.msra.mxu0 %v5744
          %5892 = vmatprep.subr.mxu0 0.0
          %5893 = vmatpush1.msra.mxu0 %v5743
          %5894 = vmatprep.subr.mxu0 0.0
          %5895 = vmatpush1.msra.mxu0 %v5742
          %5896 = vmatprep.subr.mxu0 0.0
          %5897 = vmatpush2.msra.mxu0 %v5773
          %5898 = vmatprep.subr.mxu0 0.0
          %5899 = vmatpush2.msra.mxu0 %v5772
          %5900 = vmatprep.subr.mxu0 0.0
          %5901 = vmatpush2.msra.mxu0 %v5771
          %5902 = vmatprep.subr.mxu0 0.0
          %5903 = vmatpush2.msra.mxu0 %v5770
          %5904 = vmatprep.subr.mxu0 0.0
          %5905 = vmatpush2.msra.mxu0 %v5769
          %5906 = vmatprep.subr.mxu0 0.0
          %5907 = vmatpush2.msra.mxu0 %v5768
          %5908 = vmatprep.subr.mxu0 0.0
          %5909 = vmatpush2.msra.mxu0 %v5767
          %5910 = vmatprep.subr.mxu0 0.0
          %5911 = vmatpush2.msra.mxu0 %v5766
          %5912 = vmatprep.subr.mxu0 0.0
          %5913 = vmatpush2.msra.mxu0 %v5765
          %5914 = vmatprep.subr.mxu0 0.0
          %5915 = vmatpush2.msra.mxu0 %v5764
          %5916 = vmatprep.subr.mxu0 0.0
          %5917 = vmatpush2.msra.mxu0 %v5763
          %5918 = vmatprep.subr.mxu0 0.0
          %5919 = vmatpush2.msra.mxu0 %v5762
          %5920 = vmatprep.subr.mxu0 0.0
          %5921 = vmatpush2.msra.mxu0 %v5761
          %5922 = vmatprep.subr.mxu0 0.0
          %5923 = vmatpush2.msra.mxu0 %v5760
          %5924 = vmatprep.subr.mxu0 0.0
          %5925 = vmatpush2.msra.mxu0 %v5759
          %5926 = vmatprep.subr.mxu0 0.0
          %5927 = vmatpush2.msra.mxu0 %v5758
          %5928 = vmatprep.mubr.f32.mxu0 %v5789
          %5929 = vmatmul.mubr.f32.gmra.mxu0 %v5785
          %v5930 = vpop.f32.mrf.mxu0
          %v5931 = vadd.f32 %v5861, %v5930
          %v5932 = vpop.f32.mrf.mxu0
          %5933 = vdwg.mxu0
          %v5934 = vadd.f32 %v5708, %v5931
          %vm5935 = vcmask 155648
          %5936 = vst.msk [vmem:[%s14] sm:$0x1] %vm5935, %v5934
        $region88: #{defense_diff_forward.1} parent=75 // pred_fallthru
          _
        // Predicated region
        $region89: #{defense_diff_forward.1} parent=75 // pred_check
          %p5937 = pneg %p343
        $region90: #{defense_diff_forward.1} parent=75 // pred_check_branch
          %5939 = sbr.rel (%p5937) target = $region92
        $region91: #{defense_diff_forward.1} parent=75 // pred_region
          _
        $region92: #{defense_diff_forward.1} parent=75 // pred_fallthru
          _
        // Predicated region
        $region93: #{defense_diff_forward.1} parent=75 // pred_check
          %p5940 = pneg %p343
        $region94: #{defense_diff_forward.1} parent=75 // pred_check_branch
          %5942 = sbr.rel (%p5940) target = $region96
        $region95: #{defense_diff_forward.1} parent=75 // pred_region
          _
        $region96: #{defense_diff_forward.1} parent=75 // pred_fallthru
          _
      $region76: #{defense_diff_forward.1} parent=5 // pred_fallthru
        _
      %p5943 = scmp.le.s32.totalorder 2, %s21
      // Predicated region
      $region97: #{defense_diff_forward.1} parent=5 // pred_check
        %p5944 = pneg %p5943
      $region98: #{defense_diff_forward.1} parent=5 // pred_check_branch
        %5946 = sbr.rel (%p5944) target = $region100
      $region99: #{defense_diff_forward.1} parent=5 // pred_region
        %s5947 = ssub.s32 %s21, 2
      $region100: #{defense_diff_forward.1} parent=5 // pred_fallthru
        _
    $region6: #{defense_diff_forward.1} parent=1 // loop_footer
      %s25 = sadd.s32 1, %s21
    $region7: #{defense_diff_forward.1} parent=1 // loop_footer_branch
      %20 = sbr.rel target = $region3
    $region8: #{defense_diff_forward.1} parent=1 // loop_exit
      _
    %5948 = vsyncpa [#allocation4], 1
    %s5949 = scalar_lea.sflag [#allocation4], 1
    %5950 = vsyncpa %s5949, 1

</llo_original>
